<compile_context>
chip_gen: v6e
topology: v6e:2x2x1
jax: 0.10.0
libtpu: 0.0.40
codegen_flags: <defaults>
</compile_context>

<pallas_src>
import jax
import jax.numpy as jnp
from jax.experimental import pallas as pl
from jax.experimental.pallas import tpu as pltpu

_EPS = 1e-5
_LANES = 128


def _round_up(n, m):
    return (n + m - 1) // m * m


def _vmem_limit_bytes():
    """~15% headroom under the physical VMEM of whatever chip we compile for."""
    try:
        return int(0.85 * pltpu.get_tpu_info().vmem_capacity_bytes)
    except Exception:
        return None  # fall back to the compiler default


# --------------------------- pass 1: conv1 + per-sample BN1 partial stats ---------------------------
def _conv1_packed_kernel(x_ref, w_ref, raw_ref, st_ref):
    """Conv1 as ONE matmul: the 9 taps were packed into a single lane-dense K block (small Cin).

    x_ref  : (1, H, W, K1)   bf16   K1 = round_up(9*Cin, 128)
    w_ref  : (K1, Cpo)       bf16
    raw_ref: (1, H, W, Cpo)  bf16   raw conv1 output (pre-BN)
    st_ref : (1, 2, Cpo)     f32    per-sample [sum, sum-of-squares]
    """
    _, H, W, K1 = x_ref.shape
    Cpo = w_ref.shape[1]
    acc = jnp.dot(x_ref[...].reshape(H * W, K1), w_ref[...],
                  preferred_element_type=jnp.float32)
    raw_ref[...] = acc.reshape(1, H, W, Cpo).astype(raw_ref.dtype)
    s = jnp.sum(acc, axis=0, keepdims=True)
    sq = jnp.sum(acc * acc, axis=0, keepdims=True)
    st_ref[...] = jnp.concatenate([s, sq], axis=0).reshape(1, 2, Cpo)


def _conv1_taps_kernel(xp_ref, w_ref, raw_ref, st_ref):
    """Conv1 as 9 shifted accumulated matmuls (no im2col scratch), for large Cin.

    xp_ref : (1, H+2, W+2, Cpi) bf16 (spatial halo pre-padded, channels lane-padded)
    w_ref  : (9, Cpi, Cpo)      bf16
    """
    _, Hp, Wp, Cpi = xp_ref.shape
    H, W = Hp - 2, Wp - 2
    Cpo = w_ref.shape[-1]
    acc = jnp.zeros((H * W, Cpo), jnp.float32)
    for ky in range(3):
        for kx in range(3):
            tap = xp_ref[:, ky:ky + H, kx:kx + W, :].reshape(H * W, Cpi)
            acc = acc + jnp.dot(tap, w_ref[ky * 3 + kx],
                                preferred_element_type=jnp.float32)
    raw_ref[...] = acc.reshape(1, H, W, Cpo).astype(raw_ref.dtype)
    s = jnp.sum(acc, axis=0, keepdims=True)
    sq = jnp.sum(acc * acc, axis=0, keepdims=True)
    st_ref[...] = jnp.concatenate([s, sq], axis=0).reshape(1, 2, Cpo)


# ---------------- pass 2: BN1+ReLU -> conv2 (9 accumulated matmuls) + BN2 partial stats ----------------
def _conv2_kernel(raw1_ref, bn1_ref, w_ref, raw2_ref, st_ref, yp_ref):
    """
    raw1_ref: (1, H, W, Cpo)     bf16  raw conv1 output
    bn1_ref : (2, Cpo)           f32   [scale1, shift1] (batch stats + affine folded to one FMA)
    w_ref   : (9, Cpo, Cpo)      bf16  conv2 taps
    raw2_ref: (1, H, W, Cpo)     bf16  raw conv2 output
    st_ref  : (1, 2, Cpo)        f32   per-sample [sum, sum-of-squares]
    yp_ref  : (1, H+2, W+2, Cpo) bf16  scratch: padded BN1(ReLU) activation (border-only zeroing)
    """
    _, H, W, Cpo = raw1_ref.shape
    Hp, Wp = H + 2, W + 2
    scale = bn1_ref[0:1, :]
    shift = bn1_ref[1:2, :]
    y1 = jnp.maximum(
        raw1_ref[...].astype(jnp.float32).reshape(H * W, Cpo) * scale + shift, 0.0)

    # zero only the 1-pixel border each step (scratch is per-core and reused), then interior
    yp_ref[:, 0:1, :, :] = jnp.zeros((1, 1, Wp, Cpo), yp_ref.dtype)
    yp_ref[:, Hp - 1:Hp, :, :] = jnp.zeros((1, 1, Wp, Cpo), yp_ref.dtype)
    yp_ref[:, :, 0:1, :] = jnp.zeros((1, Hp, 1, Cpo), yp_ref.dtype)
    yp_ref[:, :, Wp - 1:Wp, :] = jnp.zeros((1, Hp, 1, Cpo), yp_ref.dtype)
    yp_ref[:, 1:H + 1, 1:W + 1, :] = y1.reshape(1, H, W, Cpo).astype(yp_ref.dtype)

    acc = jnp.zeros((H * W, Cpo), jnp.float32)
    for ky in range(3):
        for kx in range(3):
            tap = yp_ref[:, ky:ky + H, kx:kx + W, :].reshape(H * W, Cpo)
            acc = acc + jnp.dot(tap, w_ref[ky * 3 + kx],
                                preferred_element_type=jnp.float32)
    raw2_ref[...] = acc.reshape(1, H, W, Cpo).astype(raw2_ref.dtype)
    s = jnp.sum(acc, axis=0, keepdims=True)
    sq = jnp.sum(acc * acc, axis=0, keepdims=True)
    st_ref[...] = jnp.concatenate([s, sq], axis=0).reshape(1, 2, Cpo)


# ------------------------------ pass 3: BN2+ReLU -> x, 2x2 maxpool -> p ------------------------------
def _bn_relu_pool_kernel(raw2_ref, bn2_ref, x_ref, p_ref):
    _, H, W, Cpo = raw2_ref.shape
    scale = bn2_ref[0:1, :]
    shift = bn2_ref[1:2, :]
    y2 = jnp.maximum(
        raw2_ref[...].astype(jnp.float32).reshape(H * W, Cpo) * scale + shift, 0.0)
    x_ref[...] = y2.reshape(1, H, W, Cpo)                       # lane-dense store
    # 2x2 stride-2 max pool (even H, W), lane-dense pairing
    wpair = y2.reshape(H * (W // 2), 2 * Cpo)
    wmax = jnp.maximum(wpair[:, :Cpo], wpair[:, Cpo:])          # (H*W/2, Cpo)
    half = (W // 2) * Cpo
    hpair = wmax.reshape(H // 2, 2 * half)
    hmax = jnp.maximum(hpair[:, :half], hpair[:, half:])        # (H/2, W/2*Cpo)
    p_ref[...] = hmax.reshape(1, H // 2, W // 2, Cpo)


def _fold_bn(stats, gamma, beta, count, cout, cpo):
    """Fold training-mode batch stats + affine into one per-channel FMA: y = x*scale + shift.

    NOTE: single-pass variance (E[x^2]-E[x]^2, clamped at 0) is adequate here because the
    conv outputs are O(1); use a two-pass form if reused on unnormalized data.
    """
    s = jnp.sum(stats, axis=0)                       # (2, Cpo): [sum, sumsq] over the batch
    mean = s[0] / count
    var = jnp.maximum(s[1] / count - mean * mean, 0.0)
    g = jnp.pad(gamma.astype(jnp.float32), (0, cpo - cout))
    b = jnp.pad(beta.astype(jnp.float32), (0, cpo - cout))
    scale = g * jax.lax.rsqrt(var + _EPS)
    shift = b - mean * scale
    return jnp.stack([scale, shift], axis=0)         # (2, Cpo) f32


@jax.jit
def encoder_block_forward(x_nchw, w1, b1, g1, bt1, w2, b2, g2, bt2):
    """encoder_block.forward with PyTorch-layout parameters.

    x_nchw: (N, Cin, H, W); w*: OIHW conv weights; b*: conv biases (unused — a per-channel
    constant added before training-mode BN is cancelled exactly by the mean subtraction);
    g*/bt*: BatchNorm weight/bias.  Returns (x, p), both NCHW f32.
    """
    del b1, b2
    N, Cin, H, W = x_nchw.shape
    Cout = w1.shape[0]
    assert H % 2 == 0 and W % 2 == 0, "MaxPool2d(2) path assumes even spatial dims"
    Cpi = _round_up(Cin, _LANES)
    Cpo = _round_up(Cout, _LANES)
    NHW = N * H * W
    vmem_limit = _vmem_limit_bytes()

    # NCHW -> NHWC, bf16 (halves input DMA; it is the MXU operand dtype anyway), spatial halo pad.
    x = jnp.transpose(x_nchw, (0, 2, 3, 1)).astype(jnp.bfloat16)
    xp = jnp.pad(x, ((0, 0), (1, 1), (1, 1), (0, 0)))

    packed = 9 * Cin <= _LANES
    if packed:
        # small Cin: pack the nine taps' channels into ONE 128-lane K block (wrapper-side im2col)
        K1 = _LANES
        taps = [xp[:, ky:ky + H, kx:kx + W, :] for ky in range(3) for kx in range(3)]
        conv1_in = jnp.pad(jnp.concatenate(taps, axis=-1),
                           ((0, 0), (0, 0), (0, 0), (0, K1 - 9 * Cin)))
        w1p = jnp.transpose(w1, (2, 3, 1, 0)).reshape(9 * Cin, Cout)        # (ky,kx,ci) x Cout
        w1p = jnp.pad(w1p, ((0, K1 - 9 * Cin), (0, Cpo - Cout))).astype(jnp.bfloat16)
        conv1_specs = [pl.BlockSpec((1, H, W, K1), lambda n: (n, 0, 0, 0)),
                       pl.BlockSpec((K1, Cpo), lambda n: (0, 0))]
        conv1_kernel = _conv1_packed_kernel
        k1 = K1
    else:
        # large Cin: lane-pad channels, conv1 = 9 accumulated matmuls in-kernel (no scratch)
        conv1_in = jnp.pad(xp, ((0, 0), (0, 0), (0, 0), (0, Cpi - Cin)))
        w1p = jnp.transpose(w1, (2, 3, 1, 0))                               # (3,3,Cin,Cout)
        w1p = jnp.pad(w1p, ((0, 0), (0, 0), (0, Cpi - Cin), (0, Cpo - Cout)))
        w1p = w1p.reshape(9, Cpi, Cpo).astype(jnp.bfloat16)
        conv1_specs = [pl.BlockSpec((1, H + 2, W + 2, Cpi), lambda n: (n, 0, 0, 0)),
                       pl.BlockSpec((9, Cpi, Cpo), lambda n: (0, 0, 0))]
        conv1_kernel = _conv1_taps_kernel
        k1 = 9 * Cpi

    w2p = jnp.transpose(w2, (2, 3, 1, 0))
    w2p = jnp.pad(w2p, ((0, 0), (0, 0), (0, Cpo - Cout), (0, Cpo - Cout)))
    w2p = w2p.reshape(9, Cpo, Cpo).astype(jnp.bfloat16)

    raw_sd = jax.ShapeDtypeStruct((N, H, W, Cpo), jnp.bfloat16)
    st_sd = jax.ShapeDtypeStruct((N, 2, Cpo), jnp.float32)
    raw_spec = pl.BlockSpec((1, H, W, Cpo), lambda n: (n, 0, 0, 0))
    st_spec = pl.BlockSpec((1, 2, Cpo), lambda n: (n, 0, 0))
    bn_spec = pl.BlockSpec((2, Cpo), lambda n: (0, 0))
    cparams = pltpu.CompilerParams(dimension_semantics=("parallel",),
                                   vmem_limit_bytes=vmem_limit)

    # ---- pass 1: conv1 + per-sample BN1 partial stats -------------------------------------
    raw1, st1 = pl.pallas_call(
        conv1_kernel,
        grid_spec=pltpu.PrefetchScalarGridSpec(
            num_scalar_prefetch=0, grid=(N,),
            in_specs=conv1_specs, out_specs=(raw_spec, st_spec)),
        out_shape=(raw_sd, st_sd),
        compiler_params=cparams,
        cost_estimate=pl.CostEstimate(
            flops=2 * NHW * k1 * Cpo, transcendentals=0,
            bytes_accessed=conv1_in.size * 2 + w1p.size * 2 + NHW * Cpo * 2 + N * 2 * Cpo * 4),
    )(conv1_in, w1p)
    bn1 = _fold_bn(st1, g1, bt1, NHW, Cout, Cpo)     # tiny O(C) XLA ops (the BN barrier)

    # ---- pass 2: BN1+ReLU -> conv2 (9 accumulated matmuls) + per-sample BN2 stats ---------
    raw2, st2 = pl.pallas_call(
        _conv2_kernel,
        grid_spec=pltpu.PrefetchScalarGridSpec(
            num_scalar_prefetch=0, grid=(N,),
            in_specs=[raw_spec, bn_spec,
                      pl.BlockSpec((9, Cpo, Cpo), lambda n: (0, 0, 0))],
            out_specs=(raw_spec, st_spec),
            scratch_shapes=[pltpu.VMEM((1, H + 2, W + 2, Cpo), jnp.bfloat16)]),
        out_shape=(raw_sd, st_sd),
        compiler_params=cparams,
        cost_estimate=pl.CostEstimate(
            flops=2 * NHW * 9 * Cpo * Cpo + 6 * NHW * Cpo, transcendentals=0,
            bytes_accessed=2 * NHW * Cpo * 2 + w2p.size * 2 + N * 2 * Cpo * 4 + 2 * Cpo * 4),
    )(raw1, bn1, w2p)
    bn2 = _fold_bn(st2, g2, bt2, NHW, Cout, Cpo)

    # ---- pass 3: BN2+ReLU -> x, 2x2 maxpool -> p -------------------------------------------
    x_out, p_out = pl.pallas_call(
        _bn_relu_pool_kernel,
        grid_spec=pltpu.PrefetchScalarGridSpec(
            num_scalar_prefetch=0, grid=(N,),
            in_specs=[raw_spec, bn_spec],
            out_specs=(pl.BlockSpec((1, H, W, Cpo), lambda n: (n, 0, 0, 0)),
                       pl.BlockSpec((1, H // 2, W // 2, Cpo), lambda n: (n, 0, 0, 0)))),
        out_shape=(jax.ShapeDtypeStruct((N, H, W, Cpo), jnp.float32),
                   jax.ShapeDtypeStruct((N, H // 2, W // 2, Cpo), jnp.float32)),
        compiler_params=cparams,
        cost_estimate=pl.CostEstimate(
            flops=5 * NHW * Cpo, transcendentals=0,
            bytes_accessed=NHW * Cpo * (2 + 4) + (NHW // 4) * Cpo * 4),
    )(raw2, bn2)

    # drop lane padding, return in PyTorch's NCHW convention
    x_out = jnp.transpose(x_out[..., :Cout], (0, 3, 1, 2))
    p_out = jnp.transpose(p_out[..., :Cout], (0, 3, 1, 2))
    return x_out, p_out


# ------------------------------ pure-JAX f32 reference (for checking) ---------------------
def _reference(x_nchw, w1_oihw, b1, g1, bt1, w2_oihw, b2, g2, bt2):
    def conv(x, w, b):
        y = jax.lax.conv_general_dilated(
            x, w, window_strides=(1, 1), padding="SAME",
            dimension_numbers=("NCHW", "OIHW", "NCHW"))
        return y + b[None, :, None, None]

    def bn_relu(x, g, bt):
        mean = jnp.mean(x, axis=(0, 2, 3), keepdims=True)
        var = jnp.mean((x - mean) ** 2, axis=(0, 2, 3), keepdims=True)
        y = (x - mean) * jax.lax.rsqrt(var + _EPS)
        y = y * g[None, :, None, None] + bt[None, :, None, None]
        return jnp.maximum(y, 0.0)

    y = bn_relu(conv(x_nchw, w1_oihw, b1), g1, bt1)
    y = bn_relu(conv(y, w2_oihw, b2), g2, bt2)
    p = jax.lax.reduce_window(y, -jnp.inf, jax.lax.max,
                              window_dimensions=(1, 1, 2, 2),
                              window_strides=(1, 1, 2, 2), padding="VALID")
    return y, p


def _make_params(key, in_c, out_c):
    ks = jax.random.split(key, 8)
    s1 = 1.0 / (in_c * 9.0) ** 0.5
    s2 = 1.0 / (out_c * 9.0) ** 0.5
    w1 = jax.random.uniform(ks[0], (out_c, in_c, 3, 3), jnp.float32, -s1, s1)   # OIHW
    b1 = jax.random.uniform(ks[1], (out_c,), jnp.float32, -s1, s1)
    w2 = jax.random.uniform(ks[2], (out_c, out_c, 3, 3), jnp.float32, -s2, s2)
    b2 = jax.random.uniform(ks[3], (out_c,), jnp.float32, -s2, s2)
    g1 = 1.0 + 0.1 * jax.random.normal(ks[4], (out_c,), jnp.float32)
    bt1 = 0.1 * jax.random.normal(ks[5], (out_c,), jnp.float32)
    g2 = 1.0 + 0.1 * jax.random.normal(ks[6], (out_c,), jnp.float32)
    bt2 = 0.1 * jax.random.normal(ks[7], (out_c,), jnp.float32)
    return w1, b1, g1, bt1, w2, b2, g2, bt2


def _check(key, N, in_c, out_c, H, W):
    k_x, k_p = jax.random.split(key)
    x = jax.random.normal(k_x, (N, in_c, H, W), jnp.float32)
    params = _make_params(k_p, in_c, out_c)

    x_out, p_out = encoder_block_forward(x, *params)
    jax.block_until_ready((x_out, p_out))

    x_ref, p_ref = _reference(x, *params)
    assert x_out.shape == (N, out_c, H, W)
    assert p_out.shape == (N, out_c, H // 2, W // 2)
    # bf16 MXU operands / bf16 HBM intermediates (f32 accumulation and statistics) give
    # ~1e-2-level error vs the pure-f32 reference; 5e-2 bounds it while catching real bugs.
    assert jnp.allclose(x_out, x_ref, atol=5e-2, rtol=5e-2), "conv_block output mismatch"
    assert jnp.allclose(p_out, p_ref, atol=5e-2, rtol=5e-2), "pooled output mismatch"


if __name__ == "__main__":
    key = jax.random.PRNGKey(0)
    k0, k1 = jax.random.split(key)

    # primary check: small Cin -> packed single-matmul conv1 path
    _check(k0, N=2, in_c=4, out_c=8, H=16, W=16)
    # secondary check: larger Cin -> 9-accumulated-matmul conv1 path
    _check(k1, N=1, in_c=16, out_c=8, H=8, W=8)

    print("KERNEL_OK")
</pallas_src>

<mosaic_0001>
module attributes {stable_mosaic.version = 11 : i64} {
  func.func @_conv1_packed_kernel(%arg0: i32, %arg1: memref<1x16x16x128xbf16, #tpu.memory_space<vmem>>, %arg2: memref<128x128xbf16, #tpu.memory_space<vmem>>, %arg3: memref<1x16x16x128xbf16, #tpu.memory_space<vmem>>, %arg4: memref<1x2x128xf32, #tpu.memory_space<vmem>>) attributes {dimension_semantics = [#tpu.dimension_semantics<parallel>], iteration_bounds = array<i64: 2>, scalar_prefetch = 0 : i64, scratch_operands = 0 : i64, tpu.core_type = #tpu.core_type<tc>, window_params = [{transform_indices = @transform_0, window_bounds = array<i64: 1, 16, 16, 128>}, {pipeline_mode = #tpu.pipeline_mode<synchronous>, transform_indices = @transform_1, window_bounds = array<i64: 128, 128>}, {transform_indices = @transform_2, window_bounds = array<i64: 1, 16, 16, 128>}, {transform_indices = @transform_3, window_bounds = array<i64: 1, 2, 128>}]} {
    %c0 = arith.constant 0 : index
    %c0_0 = arith.constant 0 : index
    %c0_1 = arith.constant 0 : index
    %c0_2 = arith.constant 0 : index
    %0 = vector.load %arg1[%c0, %c0_0, %c0_1, %c0_2] : memref<1x16x16x128xbf16, #tpu.memory_space<vmem>>, vector<1x16x16x128xbf16>
    %1 = vector.shape_cast %0 : vector<1x16x16x128xbf16> to vector<256x128xbf16>
    %c0_3 = arith.constant 0 : index
    %c0_4 = arith.constant 0 : index
    %2 = vector.load %arg2[%c0_3, %c0_4] : memref<128x128xbf16, #tpu.memory_space<vmem>>, vector<128x128xbf16>
    %cst = arith.constant dense<0.000000e+00> : vector<256x128xf32>
    %3 = tpu.matmul %1, %2, %cst {dimension_numbers = #tpu.dot_dimension_numbers<[1], [0], [0], [1], [0, 0, 1, 1], [], []>} : vector<256x128xbf16>, vector<128x128xbf16>, vector<256x128xf32> -> vector<256x128xf32>
    %4 = vector.shape_cast %3 : vector<256x128xf32> to vector<1x16x16x128xf32>
    %5 = arith.truncf %4 : vector<1x16x16x128xf32> to vector<1x16x16x128xbf16>
    %c0_5 = arith.constant 0 : index
    %c0_6 = arith.constant 0 : index
    %c0_7 = arith.constant 0 : index
    %c0_8 = arith.constant 0 : index
    %6 = vector.load %arg3[%c0_5, %c0_6, %c0_7, %c0_8] : memref<1x16x16x128xbf16, #tpu.memory_space<vmem>>, vector<1x16x16x128xbf16>
    tpu.vector_store %arg3[%c0_5, %c0_6, %c0_7, %c0_8], %5 {strides = array<i32>} : memref<1x16x16x128xbf16, #tpu.memory_space<vmem>>, vector<1x16x16x128xbf16>,
    %cst_9 = arith.constant dense<0.000000e+00> : vector<128xf32>
    %7 = vector.multi_reduction <add>, %3, %cst_9 [0] : vector<256x128xf32> to vector<128xf32>
    %8 = vector.shape_cast %7 : vector<128xf32> to vector<1x128xf32>
    %9 = arith.mulf %3, %3 : vector<256x128xf32>
    %cst_10 = arith.constant dense<0.000000e+00> : vector<128xf32>
    %10 = vector.multi_reduction <add>, %9, %cst_10 [0] : vector<256x128xf32> to vector<128xf32>
    %11 = vector.shape_cast %10 : vector<128xf32> to vector<1x128xf32>
    %12 = tpu.concatenate %8, %11 in 0 : vector<1x128xf32>, vector<1x128xf32> -> vector<2x128xf32>
    %13 = vector.shape_cast %12 : vector<2x128xf32> to vector<1x2x128xf32>
    %c0_11 = arith.constant 0 : index
    %c0_12 = arith.constant 0 : index
    %c0_13 = arith.constant 0 : index
    %14 = vector.load %arg4[%c0_11, %c0_12, %c0_13] : memref<1x2x128xf32, #tpu.memory_space<vmem>>, vector<1x2x128xf32>
    tpu.vector_store %arg4[%c0_11, %c0_12, %c0_13], %13 {strides = array<i32>} : memref<1x2x128xf32, #tpu.memory_space<vmem>>, vector<1x2x128xf32>,
    return
  }
  func.func @transform_0(%arg0: i32) -> (i32, i32, i32, i32) {
    %c0_i32 = arith.constant 0 : i32
    %c0_i32_0 = arith.constant 0 : i32
    %c0_i32_1 = arith.constant 0 : i32
    %c0_i32_2 = arith.constant 0 : i32
    return %arg0, %c0_i32, %c0_i32_0, %c0_i32_1 : i32, i32, i32, i32
  }
  func.func @transform_1(%arg0: i32) -> (i32, i32) {
    %c0_i32 = arith.constant 0 : i32
    %c0_i32_0 = arith.constant 0 : i32
    %c0_i32_1 = arith.constant 0 : i32
    return %c0_i32, %c0_i32_0 : i32, i32
  }
  func.func @transform_2(%arg0: i32) -> (i32, i32, i32, i32) {
    %c0_i32 = arith.constant 0 : i32
    %c0_i32_0 = arith.constant 0 : i32
    %c0_i32_1 = arith.constant 0 : i32
    %c0_i32_2 = arith.constant 0 : i32
    return %arg0, %c0_i32, %c0_i32_0, %c0_i32_1 : i32, i32, i32, i32
  }
  func.func @transform_3(%arg0: i32) -> (i32, i32, i32) {
    %c0_i32 = arith.constant 0 : i32
    %c0_i32_0 = arith.constant 0 : i32
    %c0_i32_1 = arith.constant 0 : i32
    return %arg0, %c0_i32, %c0_i32_0 : i32, i32, i32
  }
}

module attributes {stable_mosaic.version = 11 : i64} {
  func.func @_conv2_kernel(%arg0: i32, %arg1: memref<1x16x16x128xbf16, #tpu.memory_space<vmem>>, %arg2: memref<2x128xf32, #tpu.memory_space<vmem>>, %arg3: memref<9x128x128xbf16, #tpu.memory_space<vmem>>, %arg4: memref<1x16x16x128xbf16, #tpu.memory_space<vmem>>, %arg5: memref<1x2x128xf32, #tpu.memory_space<vmem>>, %arg6: memref<1x18x18x128xbf16, #tpu.memory_space<vmem>>) attributes {dimension_semantics = [#tpu.dimension_semantics<parallel>], iteration_bounds = array<i64: 2>, scalar_prefetch = 0 : i64, scratch_operands = 1 : i64, tpu.core_type = #tpu.core_type<tc>, window_params = [{transform_indices = @transform_0, window_bounds = array<i64: 1, 16, 16, 128>}, {pipeline_mode = #tpu.pipeline_mode<synchronous>, transform_indices = @transform_1, window_bounds = array<i64: 2, 128>}, {pipeline_mode = #tpu.pipeline_mode<synchronous>, transform_indices = @transform_2, window_bounds = array<i64: 9, 128, 128>}, {transform_indices = @transform_3, window_bounds = array<i64: 1, 16, 16, 128>}, {transform_indices = @transform_4, window_bounds = array<i64: 1, 2, 128>}]} {
    %c0 = arith.constant 0 : index
    %c0_0 = arith.constant 0 : index
    %0 = vector.load %arg2[%c0, %c0_0] : memref<2x128xf32, #tpu.memory_space<vmem>>, vector<1x128xf32>
    %c1 = arith.constant 1 : index
    %c0_1 = arith.constant 0 : index
    %1 = vector.load %arg2[%c1, %c0_1] : memref<2x128xf32, #tpu.memory_space<vmem>>, vector<1x128xf32>
    %c0_2 = arith.constant 0 : index
    %c0_3 = arith.constant 0 : index
    %c0_4 = arith.constant 0 : index
    %c0_5 = arith.constant 0 : index
    %2 = vector.load %arg1[%c0_2, %c0_3, %c0_4, %c0_5] : memref<1x16x16x128xbf16, #tpu.memory_space<vmem>>, vector<1x16x16x128xbf16>
    %3 = arith.extf %2 : vector<1x16x16x128xbf16> to vector<1x16x16x128xf32>
    %4 = vector.shape_cast %3 : vector<1x16x16x128xf32> to vector<256x128xf32>
    %5 = vector.broadcast %0 : vector<1x128xf32> to vector<256x128xf32>
    %6 = arith.mulf %4, %5 : vector<256x128xf32>
    %7 = vector.broadcast %1 : vector<1x128xf32> to vector<256x128xf32>
    %8 = arith.addf %6, %7 : vector<256x128xf32>
    %cst = arith.constant 0.000000e+00 : f32
    %9 = vector.broadcast %cst : f32 to vector<256x128xf32>
    %10 = arith.maximumf %8, %9 : vector<256x128xf32>
    %cst_6 = arith.constant 0.000000e+00 : bf16
    %11 = vector.broadcast %cst_6 : bf16 to vector<1x1x18x128xbf16>
    %c0_7 = arith.constant 0 : index
    %c0_8 = arith.constant 0 : index
    %c0_9 = arith.constant 0 : index
    %c0_10 = arith.constant 0 : index
    %12 = vector.load %arg6[%c0_7, %c0_8, %c0_9, %c0_10] : memref<1x18x18x128xbf16, #tpu.memory_space<vmem>>, vector<1x1x18x128xbf16>
    tpu.vector_store %arg6[%c0_7, %c0_8, %c0_9, %c0_10], %11 {strides = array<i32>} : memref<1x18x18x128xbf16, #tpu.memory_space<vmem>>, vector<1x1x18x128xbf16>,
    %cst_11 = arith.constant 0.000000e+00 : bf16
    %13 = vector.broadcast %cst_11 : bf16 to vector<1x1x18x128xbf16>
    %c0_12 = arith.constant 0 : index
    %c17 = arith.constant 17 : index
    %c0_13 = arith.constant 0 : index
    %c0_14 = arith.constant 0 : index
    %14 = vector.load %arg6[%c0_12, %c17, %c0_13, %c0_14] : memref<1x18x18x128xbf16, #tpu.memory_space<vmem>>, vector<1x1x18x128xbf16>
    tpu.vector_store %arg6[%c0_12, %c17, %c0_13, %c0_14], %13 {strides = array<i32>} : memref<1x18x18x128xbf16, #tpu.memory_space<vmem>>, vector<1x1x18x128xbf16>,
    %cst_15 = arith.constant 0.000000e+00 : bf16
    %15 = vector.broadcast %cst_15 : bf16 to vector<1x18x1x128xbf16>
    %c0_16 = arith.constant 0 : index
    %c0_17 = arith.constant 0 : index
    %c0_18 = arith.constant 0 : index
    %c0_19 = arith.constant 0 : index
    %16 = vector.load %arg6[%c0_16, %c0_17, %c0_18, %c0_19] : memref<1x18x18x128xbf16, #tpu.memory_space<vmem>>, vector<1x18x1x128xbf16>
    tpu.vector_store %arg6[%c0_16, %c0_17, %c0_18, %c0_19], %15 {strides = array<i32>} : memref<1x18x18x128xbf16, #tpu.memory_space<vmem>>, vector<1x18x1x128xbf16>,
    %cst_20 = arith.constant 0.000000e+00 : bf16
    %17 = vector.broadcast %cst_20 : bf16 to vector<1x18x1x128xbf16>
    %c0_21 = arith.constant 0 : index
    %c0_22 = arith.constant 0 : index
    %c17_23 = arith.constant 17 : index
    %c0_24 = arith.constant 0 : index
    %18 = vector.load %arg6[%c0_21, %c0_22, %c17_23, %c0_24] : memref<1x18x18x128xbf16, #tpu.memory_space<vmem>>, vector<1x18x1x128xbf16>
    tpu.vector_store %arg6[%c0_21, %c0_22, %c17_23, %c0_24], %17 {strides = array<i32>} : memref<1x18x18x128xbf16, #tpu.memory_space<vmem>>, vector<1x18x1x128xbf16>,
    %19 = vector.shape_cast %10 : vector<256x128xf32> to vector<1x16x16x128xf32>
    %20 = arith.truncf %19 : vector<1x16x16x128xf32> to vector<1x16x16x128xbf16>
    %c0_25 = arith.constant 0 : index
    %c1_26 = arith.constant 1 : index
    %c1_27 = arith.constant 1 : index
    %c0_28 = arith.constant 0 : index
    %21 = vector.load %arg6[%c0_25, %c1_26, %c1_27, %c0_28] : memref<1x18x18x128xbf16, #tpu.memory_space<vmem>>, vector<1x16x16x128xbf16>
    tpu.vector_store %arg6[%c0_25, %c1_26, %c1_27, %c0_28], %20 {strides = array<i32>} : memref<1x18x18x128xbf16, #tpu.memory_space<vmem>>, vector<1x16x16x128xbf16>,
    %cst_29 = arith.constant 0.000000e+00 : f32
    %22 = vector.broadcast %cst_29 : f32 to vector<256x128xf32>
    %c0_30 = arith.constant 0 : index
    %c0_31 = arith.constant 0 : index
    %c0_32 = arith.constant 0 : index
    %c0_33 = arith.constant 0 : index
    %23 = vector.load %arg6[%c0_30, %c0_31, %c0_32, %c0_33] : memref<1x18x18x128xbf16, #tpu.memory_space<vmem>>, vector<1x16x16x128xbf16>
    %24 = vector.shape_cast %23 : vector<1x16x16x128xbf16> to vector<256x128xbf16>
    %c0_34 = arith.constant 0 : index
    %c0_35 = arith.constant 0 : index
    %c0_36 = arith.constant 0 : index
    %25 = vector.load %arg3[%c0_34, %c0_35, %c0_36] : memref<9x128x128xbf16, #tpu.memory_space<vmem>>, vector<1x128x128xbf16>
    %26 = vector.shape_cast %25 : vector<1x128x128xbf16> to vector<128x128xbf16>
    %cst_37 = arith.constant dense<0.000000e+00> : vector<256x128xf32>
    %27 = tpu.matmul %24, %26, %cst_37 {dimension_numbers = #tpu.dot_dimension_numbers<[1], [0], [0], [1], [0, 0, 1, 1], [], []>} : vector<256x128xbf16>, vector<128x128xbf16>, vector<256x128xf32> -> vector<256x128xf32>
    %28 = arith.addf %22, %27 : vector<256x128xf32>
    %c0_38 = arith.constant 0 : index
    %c0_39 = arith.constant 0 : index
    %c1_40 = arith.constant 1 : index
    %c0_41 = arith.constant 0 : index
    %29 = vector.load %arg6[%c0_38, %c0_39, %c1_40, %c0_41] : memref<1x18x18x128xbf16, #tpu.memory_space<vmem>>, vector<1x16x16x128xbf16>
    %30 = vector.shape_cast %29 : vector<1x16x16x128xbf16> to vector<256x128xbf16>
    %c1_42 = arith.constant 1 : index
    %c0_43 = arith.constant 0 : index
    %c0_44 = arith.constant 0 : index
    %31 = vector.load %arg3[%c1_42, %c0_43, %c0_44] : memref<9x128x128xbf16, #tpu.memory_space<vmem>>, vector<1x128x128xbf16>
    %32 = vector.shape_cast %31 : vector<1x128x128xbf16> to vector<128x128xbf16>
    %cst_45 = arith.constant dense<0.000000e+00> : vector<256x128xf32>
    %33 = tpu.matmul %30, %32, %cst_45 {dimension_numbers = #tpu.dot_dimension_numbers<[1], [0], [0], [1], [0, 0, 1, 1], [], []>} : vector<256x128xbf16>, vector<128x128xbf16>, vector<256x128xf32> -> vector<256x128xf32>
    %34 = arith.addf %28, %33 : vector<256x128xf32>
    %c0_46 = arith.constant 0 : index
    %c0_47 = arith.constant 0 : index
    %c2 = arith.constant 2 : index
    %c0_48 = arith.constant 0 : index
    %35 = vector.load %arg6[%c0_46, %c0_47, %c2, %c0_48] : memref<1x18x18x128xbf16, #tpu.memory_space<vmem>>, vector<1x16x16x128xbf16>
    %36 = vector.shape_cast %35 : vector<1x16x16x128xbf16> to vector<256x128xbf16>
    %c2_49 = arith.constant 2 : index
    %c0_50 = arith.constant 0 : index
    %c0_51 = arith.constant 0 : index
    %37 = vector.load %arg3[%c2_49, %c0_50, %c0_51] : memref<9x128x128xbf16, #tpu.memory_space<vmem>>, vector<1x128x128xbf16>
    %38 = vector.shape_cast %37 : vector<1x128x128xbf16> to vector<128x128xbf16>
    %cst_52 = arith.constant dense<0.000000e+00> : vector<256x128xf32>
    %39 = tpu.matmul %36, %38, %cst_52 {dimension_numbers = #tpu.dot_dimension_numbers<[1], [0], [0], [1], [0, 0, 1, 1], [], []>} : vector<256x128xbf16>, vector<128x128xbf16>, vector<256x128xf32> -> vector<256x128xf32>
    %40 = arith.addf %34, %39 : vector<256x128xf32>
    %c0_53 = arith.constant 0 : index
    %c1_54 = arith.constant 1 : index
    %c0_55 = arith.constant 0 : index
    %c0_56 = arith.constant 0 : index
    %41 = vector.load %arg6[%c0_53, %c1_54, %c0_55, %c0_56] : memref<1x18x18x128xbf16, #tpu.memory_space<vmem>>, vector<1x16x16x128xbf16>
    %42 = vector.shape_cast %41 : vector<1x16x16x128xbf16> to vector<256x128xbf16>
    %c3 = arith.constant 3 : index
    %c0_57 = arith.constant 0 : index
    %c0_58 = arith.constant 0 : index
    %43 = vector.load %arg3[%c3, %c0_57, %c0_58] : memref<9x128x128xbf16, #tpu.memory_space<vmem>>, vector<1x128x128xbf16>
    %44 = vector.shape_cast %43 : vector<1x128x128xbf16> to vector<128x128xbf16>
    %cst_59 = arith.constant dense<0.000000e+00> : vector<256x128xf32>
    %45 = tpu.matmul %42, %44, %cst_59 {dimension_numbers = #tpu.dot_dimension_numbers<[1], [0], [0], [1], [0, 0, 1, 1], [], []>} : vector<256x128xbf16>, vector<128x128xbf16>, vector<256x128xf32> -> vector<256x128xf32>
    %46 = arith.addf %40, %45 : vector<256x128xf32>
    %c0_60 = arith.constant 0 : index
    %c1_61 = arith.constant 1 : index
    %c1_62 = arith.constant 1 : index
    %c0_63 = arith.constant 0 : index
    %47 = vector.load %arg6[%c0_60, %c1_61, %c1_62, %c0_63] : memref<1x18x18x128xbf16, #tpu.memory_space<vmem>>, vector<1x16x16x128xbf16>
    %48 = vector.shape_cast %47 : vector<1x16x16x128xbf16> to vector<256x128xbf16>
    %c4 = arith.constant 4 : index
    %c0_64 = arith.constant 0 : index
    %c0_65 = arith.constant 0 : index
    %49 = vector.load %arg3[%c4, %c0_64, %c0_65] : memref<9x128x128xbf16, #tpu.memory_space<vmem>>, vector<1x128x128xbf16>
    %50 = vector.shape_cast %49 : vector<1x128x128xbf16> to vector<128x128xbf16>
    %cst_66 = arith.constant dense<0.000000e+00> : vector<256x128xf32>
    %51 = tpu.matmul %48, %50, %cst_66 {dimension_numbers = #tpu.dot_dimension_numbers<[1], [0], [0], [1], [0, 0, 1, 1], [], []>} : vector<256x128xbf16>, vector<128x128xbf16>, vector<256x128xf32> -> vector<256x128xf32>
    %52 = arith.addf %46, %51 : vector<256x128xf32>
    %c0_67 = arith.constant 0 : index
    %c1_68 = arith.constant 1 : index
    %c2_69 = arith.constant 2 : index
    %c0_70 = arith.constant 0 : index
    %53 = vector.load %arg6[%c0_67, %c1_68, %c2_69, %c0_70] : memref<1x18x18x128xbf16, #tpu.memory_space<vmem>>, vector<1x16x16x128xbf16>
    %54 = vector.shape_cast %53 : vector<1x16x16x128xbf16> to vector<256x128xbf16>
    %c5 = arith.constant 5 : index
    %c0_71 = arith.constant 0 : index
    %c0_72 = arith.constant 0 : index
    %55 = vector.load %arg3[%c5, %c0_71, %c0_72] : memref<9x128x128xbf16, #tpu.memory_space<vmem>>, vector<1x128x128xbf16>
    %56 = vector.shape_cast %55 : vector<1x128x128xbf16> to vector<128x128xbf16>
    %cst_73 = arith.constant dense<0.000000e+00> : vector<256x128xf32>
    %57 = tpu.matmul %54, %56, %cst_73 {dimension_numbers = #tpu.dot_dimension_numbers<[1], [0], [0], [1], [0, 0, 1, 1], [], []>} : vector<256x128xbf16>, vector<128x128xbf16>, vector<256x128xf32> -> vector<256x128xf32>
    %58 = arith.addf %52, %57 : vector<256x128xf32>
    %c0_74 = arith.constant 0 : index
    %c2_75 = arith.constant 2 : index
    %c0_76 = arith.constant 0 : index
    %c0_77 = arith.constant 0 : index
    %59 = vector.load %arg6[%c0_74, %c2_75, %c0_76, %c0_77] : memref<1x18x18x128xbf16, #tpu.memory_space<vmem>>, vector<1x16x16x128xbf16>
    %60 = vector.shape_cast %59 : vector<1x16x16x128xbf16> to vector<256x128xbf16>
    %c6 = arith.constant 6 : index
    %c0_78 = arith.constant 0 : index
    %c0_79 = arith.constant 0 : index
    %61 = vector.load %arg3[%c6, %c0_78, %c0_79] : memref<9x128x128xbf16, #tpu.memory_space<vmem>>, vector<1x128x128xbf16>
    %62 = vector.shape_cast %61 : vector<1x128x128xbf16> to vector<128x128xbf16>
    %cst_80 = arith.constant dense<0.000000e+00> : vector<256x128xf32>
    %63 = tpu.matmul %60, %62, %cst_80 {dimension_numbers = #tpu.dot_dimension_numbers<[1], [0], [0], [1], [0, 0, 1, 1], [], []>} : vector<256x128xbf16>, vector<128x128xbf16>, vector<256x128xf32> -> vector<256x128xf32>
    %64 = arith.addf %58, %63 : vector<256x128xf32>
    %c0_81 = arith.constant 0 : index
    %c2_82 = arith.constant 2 : index
    %c1_83 = arith.constant 1 : index
    %c0_84 = arith.constant 0 : index
    %65 = vector.load %arg6[%c0_81, %c2_82, %c1_83, %c0_84] : memref<1x18x18x128xbf16, #tpu.memory_space<vmem>>, vector<1x16x16x128xbf16>
    %66 = vector.shape_cast %65 : vector<1x16x16x128xbf16> to vector<256x128xbf16>
    %c7 = arith.constant 7 : index
    %c0_85 = arith.constant 0 : index
    %c0_86 = arith.constant 0 : index
    %67 = vector.load %arg3[%c7, %c0_85, %c0_86] : memref<9x128x128xbf16, #tpu.memory_space<vmem>>, vector<1x128x128xbf16>
    %68 = vector.shape_cast %67 : vector<1x128x128xbf16> to vector<128x128xbf16>
    %cst_87 = arith.constant dense<0.000000e+00> : vector<256x128xf32>
    %69 = tpu.matmul %66, %68, %cst_87 {dimension_numbers = #tpu.dot_dimension_numbers<[1], [0], [0], [1], [0, 0, 1, 1], [], []>} : vector<256x128xbf16>, vector<128x128xbf16>, vector<256x128xf32> -> vector<256x128xf32>
    %70 = arith.addf %64, %69 : vector<256x128xf32>
    %c0_88 = arith.constant 0 : index
    %c2_89 = arith.constant 2 : index
    %c2_90 = arith.constant 2 : index
    %c0_91 = arith.constant 0 : index
    %71 = vector.load %arg6[%c0_88, %c2_89, %c2_90, %c0_91] : memref<1x18x18x128xbf16, #tpu.memory_space<vmem>>, vector<1x16x16x128xbf16>
    %72 = vector.shape_cast %71 : vector<1x16x16x128xbf16> to vector<256x128xbf16>
    %c8 = arith.constant 8 : index
    %c0_92 = arith.constant 0 : index
    %c0_93 = arith.constant 0 : index
    %73 = vector.load %arg3[%c8, %c0_92, %c0_93] : memref<9x128x128xbf16, #tpu.memory_space<vmem>>, vector<1x128x128xbf16>
    %74 = vector.shape_cast %73 : vector<1x128x128xbf16> to vector<128x128xbf16>
    %cst_94 = arith.constant dense<0.000000e+00> : vector<256x128xf32>
    %75 = tpu.matmul %72, %74, %cst_94 {dimension_numbers = #tpu.dot_dimension_numbers<[1], [0], [0], [1], [0, 0, 1, 1], [], []>} : vector<256x128xbf16>, vector<128x128xbf16>, vector<256x128xf32> -> vector<256x128xf32>
    %76 = arith.addf %70, %75 : vector<256x128xf32>
    %77 = vector.shape_cast %76 : vector<256x128xf32> to vector<1x16x16x128xf32>
    %78 = arith.truncf %77 : vector<1x16x16x128xf32> to vector<1x16x16x128xbf16>
    %c0_95 = arith.constant 0 : index
    %c0_96 = arith.constant 0 : index
    %c0_97 = arith.constant 0 : index
    %c0_98 = arith.constant 0 : index
    %79 = vector.load %arg4[%c0_95, %c0_96, %c0_97, %c0_98] : memref<1x16x16x128xbf16, #tpu.memory_space<vmem>>, vector<1x16x16x128xbf16>
    tpu.vector_store %arg4[%c0_95, %c0_96, %c0_97, %c0_98], %78 {strides = array<i32>} : memref<1x16x16x128xbf16, #tpu.memory_space<vmem>>, vector<1x16x16x128xbf16>,
    %cst_99 = arith.constant dense<0.000000e+00> : vector<128xf32>
    %80 = vector.multi_reduction <add>, %76, %cst_99 [0] : vector<256x128xf32> to vector<128xf32>
    %81 = vector.shape_cast %80 : vector<128xf32> to vector<1x128xf32>
    %82 = arith.mulf %76, %76 : vector<256x128xf32>
    %cst_100 = arith.constant dense<0.000000e+00> : vector<128xf32>
    %83 = vector.multi_reduction <add>, %82, %cst_100 [0] : vector<256x128xf32> to vector<128xf32>
    %84 = vector.shape_cast %83 : vector<128xf32> to vector<1x128xf32>
    %85 = tpu.concatenate %81, %84 in 0 : vector<1x128xf32>, vector<1x128xf32> -> vector<2x128xf32>
    %86 = vector.shape_cast %85 : vector<2x128xf32> to vector<1x2x128xf32>
    %c0_101 = arith.constant 0 : index
    %c0_102 = arith.constant 0 : index
    %c0_103 = arith.constant 0 : index
    %87 = vector.load %arg5[%c0_101, %c0_102, %c0_103] : memref<1x2x128xf32, #tpu.memory_space<vmem>>, vector<1x2x128xf32>
    tpu.vector_store %arg5[%c0_101, %c0_102, %c0_103], %86 {strides = array<i32>} : memref<1x2x128xf32, #tpu.memory_space<vmem>>, vector<1x2x128xf32>,
    return
  }
  func.func @transform_0(%arg0: i32) -> (i32, i32, i32, i32) {
    %c0_i32 = arith.constant 0 : i32
    %c0_i32_0 = arith.constant 0 : i32
    %c0_i32_1 = arith.constant 0 : i32
    %c0_i32_2 = arith.constant 0 : i32
    return %arg0, %c0_i32, %c0_i32_0, %c0_i32_1 : i32, i32, i32, i32
  }
  func.func @transform_1(%arg0: i32) -> (i32, i32) {
    %c0_i32 = arith.constant 0 : i32
    %c0_i32_0 = arith.constant 0 : i32
    %c0_i32_1 = arith.constant 0 : i32
    return %c0_i32, %c0_i32_0 : i32, i32
  }
  func.func @transform_2(%arg0: i32) -> (i32, i32, i32) {
    %c0_i32 = arith.constant 0 : i32
    %c0_i32_0 = arith.constant 0 : i32
    %c0_i32_1 = arith.constant 0 : i32
    %c0_i32_2 = arith.constant 0 : i32
    return %c0_i32, %c0_i32_0, %c0_i32_1 : i32, i32, i32
  }
  func.func @transform_3(%arg0: i32) -> (i32, i32, i32, i32) {
    %c0_i32 = arith.constant 0 : i32
    %c0_i32_0 = arith.constant 0 : i32
    %c0_i32_1 = arith.constant 0 : i32
    %c0_i32_2 = arith.constant 0 : i32
    return %arg0, %c0_i32, %c0_i32_0, %c0_i32_1 : i32, i32, i32, i32
  }
  func.func @transform_4(%arg0: i32) -> (i32, i32, i32) {
    %c0_i32 = arith.constant 0 : i32
    %c0_i32_0 = arith.constant 0 : i32
    %c0_i32_1 = arith.constant 0 : i32
    return %arg0, %c0_i32, %c0_i32_0 : i32, i32, i32
  }
}

module attributes {stable_mosaic.version = 11 : i64} {
  func.func @_bn_relu_pool_kernel(%arg0: i32, %arg1: memref<1x16x16x128xbf16, #tpu.memory_space<vmem>>, %arg2: memref<2x128xf32, #tpu.memory_space<vmem>>, %arg3: memref<1x16x16x128xf32, #tpu.memory_space<vmem>>, %arg4: memref<1x8x8x128xf32, #tpu.memory_space<vmem>>) attributes {dimension_semantics = [#tpu.dimension_semantics<parallel>], iteration_bounds = array<i64: 2>, scalar_prefetch = 0 : i64, scratch_operands = 0 : i64, tpu.core_type = #tpu.core_type<tc>, window_params = [{transform_indices = @transform_0, window_bounds = array<i64: 1, 16, 16, 128>}, {pipeline_mode = #tpu.pipeline_mode<synchronous>, transform_indices = @transform_1, window_bounds = array<i64: 2, 128>}, {transform_indices = @transform_2, window_bounds = array<i64: 1, 16, 16, 128>}, {transform_indices = @transform_3, window_bounds = array<i64: 1, 8, 8, 128>}]} {
    %c0 = arith.constant 0 : index
    %c0_0 = arith.constant 0 : index
    %0 = vector.load %arg2[%c0, %c0_0] : memref<2x128xf32, #tpu.memory_space<vmem>>, vector<1x128xf32>
    %c1 = arith.constant 1 : index
    %c0_1 = arith.constant 0 : index
    %1 = vector.load %arg2[%c1, %c0_1] : memref<2x128xf32, #tpu.memory_space<vmem>>, vector<1x128xf32>
    %c0_2 = arith.constant 0 : index
    %c0_3 = arith.constant 0 : index
    %c0_4 = arith.constant 0 : index
    %c0_5 = arith.constant 0 : index
    %2 = vector.load %arg1[%c0_2, %c0_3, %c0_4, %c0_5] : memref<1x16x16x128xbf16, #tpu.memory_space<vmem>>, vector<1x16x16x128xbf16>
    %3 = arith.extf %2 : vector<1x16x16x128xbf16> to vector<1x16x16x128xf32>
    %4 = vector.shape_cast %3 : vector<1x16x16x128xf32> to vector<256x128xf32>
    %5 = vector.broadcast %0 : vector<1x128xf32> to vector<256x128xf32>
    %6 = arith.mulf %4, %5 : vector<256x128xf32>
    %7 = vector.broadcast %1 : vector<1x128xf32> to vector<256x128xf32>
    %8 = arith.addf %6, %7 : vector<256x128xf32>
    %cst = arith.constant 0.000000e+00 : f32
    %9 = vector.broadcast %cst : f32 to vector<256x128xf32>
    %10 = arith.maximumf %8, %9 : vector<256x128xf32>
    %11 = vector.shape_cast %10 : vector<256x128xf32> to vector<1x16x16x128xf32>
    %c0_6 = arith.constant 0 : index
    %c0_7 = arith.constant 0 : index
    %c0_8 = arith.constant 0 : index
    %c0_9 = arith.constant 0 : index
    %12 = vector.load %arg3[%c0_6, %c0_7, %c0_8, %c0_9] : memref<1x16x16x128xf32, #tpu.memory_space<vmem>>, vector<1x16x16x128xf32>
    tpu.vector_store %arg3[%c0_6, %c0_7, %c0_8, %c0_9], %11 {strides = array<i32>} : memref<1x16x16x128xf32, #tpu.memory_space<vmem>>, vector<1x16x16x128xf32>,
    %13 = vector.shape_cast %10 : vector<256x128xf32> to vector<128x256xf32>
    %14 = vector.extract_strided_slice %13 {offsets = [0, 0], sizes = [128, 128], strides = [1, 1]} : vector<128x256xf32> to vector<128x128xf32>
    %15 = vector.extract_strided_slice %13 {offsets = [0, 128], sizes = [128, 128], strides = [1, 1]} : vector<128x256xf32> to vector<128x128xf32>
    %16 = arith.maximumf %14, %15 : vector<128x128xf32>
    %17 = vector.shape_cast %16 : vector<128x128xf32> to vector<8x2048xf32>
    %18 = vector.extract_strided_slice %17 {offsets = [0, 0], sizes = [8, 1024], strides = [1, 1]} : vector<8x2048xf32> to vector<8x1024xf32>
    %19 = vector.extract_strided_slice %17 {offsets = [0, 1024], sizes = [8, 1024], strides = [1, 1]} : vector<8x2048xf32> to vector<8x1024xf32>
    %20 = arith.maximumf %18, %19 : vector<8x1024xf32>
    %21 = vector.shape_cast %20 : vector<8x1024xf32> to vector<1x8x8x128xf32>
    %c0_10 = arith.constant 0 : index
    %c0_11 = arith.constant 0 : index
    %c0_12 = arith.constant 0 : index
    %c0_13 = arith.constant 0 : index
    %22 = vector.load %arg4[%c0_10, %c0_11, %c0_12, %c0_13] : memref<1x8x8x128xf32, #tpu.memory_space<vmem>>, vector<1x8x8x128xf32>
    tpu.vector_store %arg4[%c0_10, %c0_11, %c0_12, %c0_13], %21 {strides = array<i32>} : memref<1x8x8x128xf32, #tpu.memory_space<vmem>>, vector<1x8x8x128xf32>,
    return
  }
  func.func @transform_0(%arg0: i32) -> (i32, i32, i32, i32) {
    %c0_i32 = arith.constant 0 : i32
    %c0_i32_0 = arith.constant 0 : i32
    %c0_i32_1 = arith.constant 0 : i32
    %c0_i32_2 = arith.constant 0 : i32
    return %arg0, %c0_i32, %c0_i32_0, %c0_i32_1 : i32, i32, i32, i32
  }
  func.func @transform_1(%arg0: i32) -> (i32, i32) {
    %c0_i32 = arith.constant 0 : i32
    %c0_i32_0 = arith.constant 0 : i32
    %c0_i32_1 = arith.constant 0 : i32
    return %c0_i32, %c0_i32_0 : i32, i32
  }
  func.func @transform_2(%arg0: i32) -> (i32, i32, i32, i32) {
    %c0_i32 = arith.constant 0 : i32
    %c0_i32_0 = arith.constant 0 : i32
    %c0_i32_1 = arith.constant 0 : i32
    %c0_i32_2 = arith.constant 0 : i32
    return %arg0, %c0_i32, %c0_i32_0, %c0_i32_1 : i32, i32, i32, i32
  }
  func.func @transform_3(%arg0: i32) -> (i32, i32, i32, i32) {
    %c0_i32 = arith.constant 0 : i32
    %c0_i32_0 = arith.constant 0 : i32
    %c0_i32_1 = arith.constant 0 : i32
    %c0_i32_2 = arith.constant 0 : i32
    return %arg0, %c0_i32, %c0_i32_0, %c0_i32_1 : i32, i32, i32, i32
  }
}

</mosaic_0001>

<llo_original>
// kernel: encoder_block_forward.3
$region0: #{encoder_block_forward.3}
  #allocation0 [shape = 'u32[]', space=smem, size = 0x4, offset = 0x4, fixed_abs, tag = 'smem constant byte address 0x4 - core index']
  #allocation1 [shape = 'u32[144,128]{1,0:T(1,128)}', space=vmem, size = 0x12000, scoped, tag = 'internal scratch']
  %s0 = inlined_call_operand.vmem [shape: bf16[2,16,16,128], index: 0, kind: input, shape index: {}]
  %s1 = inlined_call_operand.vmem [shape: bf16[128,128], index: 1, kind: input, shape index: {}]
  %s2 = inlined_call_operand.vmem [shape: bf16[2,16,16,128], index: 2, kind: output, shape index: {0}]
  %s3 = inlined_call_operand.vmem [shape: f32[2,2,128], index: 3, kind: output, shape index: {1}]
  %4 = xla_tuple %s2, %s3
  %s5 = sld [smem:[#allocation0]]
  $region49: #{encoder_block_forward.3} parent=0
    _
  %s7 = ssub.s32 1, %s5
  %s8 = scalar_select 0, %s7, %s5
  loop: start=0, step=1, limit=4
  $region2: #{encoder_block_forward.3} parent=0 // loop_pre_header
    _
  $region3: #{encoder_block_forward.3} parent=0 // loop_header
    %s10 = sphi 0, %s14
    %p11 = scmp.ge.s32.totalorder %s10, 4
    %s20 = sphi 0, %s22
    %s23 = sphi 0, %s20
    %s24 = sphi 0, %s23
    %s40 = sphi 0, %s24
    %s44 = sphi 0, %s44
    %s46 = sphi 0, %s44
    %s47 = sphi 0, %s46
    %s61 = sphi 0, %s47
    %s67 = sphi 0, %s69
    %s70 = sphi 0, %s67
    %s71 = sphi 0, %s70
    %s87 = sphi 0, %s71
    %s93 = sphi 0, %s95
    %s96 = sphi 0, %s93
    %s97 = sphi 0, %s96
    %s113 = sphi 0, %s97
  $region4: #{encoder_block_forward.3} parent=0 // loop_header_branch
    %13 = sbr.rel (%p11) target = $region8
  $region5: #{encoder_block_forward.3} parent=0 // loop_body
    %s15 = ssub.s32 %s10, 1
    %s16 = ssub.s32 %s10, 2
    %s17 = sadd.s32 %s10, 1
    %s18 = ssub.s32 %s10, %s17
    %p19 = scmp.eq.s32.totalorder %s18, 0
    %s21 = sadd.s32 %s20, 1
    %s22 = scalar_select %p19, %s20, %s21
    %p25 = pneg %p19
    %p26 = scmp.eq.s32.totalorder %s10, 1
    %p27 = por %p25, %p26
    %p28 = scmp.ne.s32.totalorder %s20, %s23
    %p29 = scmp.eq.s32.totalorder %s10, 0
    %p30 = por %p28, %p29
    %p31 = scmp.ne.s32.totalorder %s20, %s23
    %p32 = scmp.eq.s32.totalorder %s15, 1
    %p33 = por %p31, %p32
    %p34 = scmp.ne.s32.totalorder %s23, %s24
    %p35 = scmp.eq.s32.totalorder %s15, 0
    %p36 = por %p34, %p35
    %p37 = scmp.ne.s32.totalorder %s23, %s24
    %p38 = scmp.eq.s32.totalorder %s16, 1
    %p39 = por %p37, %p38
    %p41 = scmp.ne.s32.totalorder %s24, %s40
    %p42 = scmp.eq.s32.totalorder %s16, 0
    %p43 = por %p41, %p42
    %s45 = sadd.s32 %s44, 1
    %p48 = scmp.eq.s32.totalorder %s10, 1
    %p49 = scmp.ne.s32.totalorder %s44, %s46
    %p50 = scmp.eq.s32.totalorder %s10, 0
    %p51 = por %p49, %p50
    %p52 = scmp.ne.s32.totalorder %s44, %s46
    %p53 = scmp.eq.s32.totalorder %s15, 1
    %p54 = por %p52, %p53
    %p55 = scmp.ne.s32.totalorder %s46, %s47
    %p56 = scmp.eq.s32.totalorder %s15, 0
    %p57 = por %p55, %p56
    %p58 = scmp.ne.s32.totalorder %s46, %s47
    %p59 = scmp.eq.s32.totalorder %s16, 1
    %p60 = por %p58, %p59
    %p62 = scmp.ne.s32.totalorder %s47, %s61
    %p63 = scmp.eq.s32.totalorder %s16, 0
    %p64 = por %p62, %p63
    %s65 = ssub.s32 %s10, %s17
    %p66 = scmp.eq.s32.totalorder %s65, 0
    %s68 = sadd.s32 %s67, 1
    %s69 = scalar_select %p66, %s67, %s68
    %p72 = pneg %p66
    %p73 = scmp.eq.s32.totalorder %s10, 1
    %p74 = por %p72, %p73
    %p75 = scmp.ne.s32.totalorder %s67, %s70
    %p76 = scmp.eq.s32.totalorder %s10, 0
    %p77 = por %p75, %p76
    %p78 = scmp.ne.s32.totalorder %s67, %s70
    %p79 = scmp.eq.s32.totalorder %s15, 1
    %p80 = por %p78, %p79
    %p81 = scmp.ne.s32.totalorder %s70, %s71
    %p82 = scmp.eq.s32.totalorder %s15, 0
    %p83 = por %p81, %p82
    %p84 = scmp.ne.s32.totalorder %s70, %s71
    %p85 = scmp.eq.s32.totalorder %s16, 1
    %p86 = por %p84, %p85
    %p88 = scmp.ne.s32.totalorder %s71, %s87
    %p89 = scmp.eq.s32.totalorder %s16, 0
    %p90 = por %p88, %p89
    %s91 = ssub.s32 %s10, %s17
    %p92 = scmp.eq.s32.totalorder %s91, 0
    %s94 = sadd.s32 %s93, 1
    %s95 = scalar_select %p92, %s93, %s94
    %p98 = pneg %p92
    %p99 = scmp.eq.s32.totalorder %s10, 1
    %p100 = por %p98, %p99
    %p101 = scmp.ne.s32.totalorder %s93, %s96
    %p102 = scmp.eq.s32.totalorder %s10, 0
    %p103 = por %p101, %p102
    %p104 = scmp.ne.s32.totalorder %s93, %s96
    %p105 = scmp.eq.s32.totalorder %s15, 1
    %p106 = por %p104, %p105
    %p107 = scmp.ne.s32.totalorder %s96, %s97
    %p108 = scmp.eq.s32.totalorder %s15, 0
    %p109 = por %p107, %p108
    %p110 = scmp.ne.s32.totalorder %s96, %s97
    %p111 = scmp.eq.s32.totalorder %s16, 1
    %p112 = por %p110, %p111
    %p114 = scmp.ne.s32.totalorder %s97, %s113
    %p115 = scmp.eq.s32.totalorder %s16, 0
    %p116 = por %p114, %p115
    %p117 = scmp.le.s32.totalorder 1, %s10
    %p118 = scmp.lt.s32.totalorder %s10, 3
    %p119 = pnand %p117, %p118
    %p120 = pneg %p119
    // Predicated region
    $region9: #{encoder_block_forward.3} parent=5 // pred_check
      _
    $region10: #{encoder_block_forward.3} parent=5 // pred_check_branch
      %122 = sbr.rel (%p119) target = $region12
    $region11: #{encoder_block_forward.3} parent=5 // pred_region
      %s123 = ssub.s32 %s10, 1
      // Predicated region
      $region13: #{encoder_block_forward.3} parent=11 // pred_check
        %p124 = pneg %p57
      $region14: #{encoder_block_forward.3} parent=11 // pred_check_branch
        %126 = sbr.rel (%p124) target = $region16
      $region15: #{encoder_block_forward.3} parent=11 // pred_region
        _
      $region16: #{encoder_block_forward.3} parent=11 // pred_fallthru
        _
    $region12: #{encoder_block_forward.3} parent=5 // pred_fallthru
      _
    %p127 = scmp.lt.s32.totalorder %s10, 2
    // Predicated region
    $region17: #{encoder_block_forward.3} parent=5 // pred_check
      %p128 = pneg %p127
    $region18: #{encoder_block_forward.3} parent=5 // pred_check_branch
      %130 = sbr.rel (%p128) target = $region20
    $region19: #{encoder_block_forward.3} parent=5 // pred_region
      // Predicated region
      $region21: #{encoder_block_forward.3} parent=19 // pred_check
        %p131 = pneg %p30
      $region22: #{encoder_block_forward.3} parent=19 // pred_check_branch
        %133 = sbr.rel (%p131) target = $region24
      $region23: #{encoder_block_forward.3} parent=19 // pred_region
        %p134 = scmp.lt.s32.totalorder %s10, 1
        %s135 = scalar_select %p134, %s10, 1
        %s136 = smul.addr %s135, 32
        %s137 = smul.addr %s136, 4
        %s138 = scalar_lea.vmem %s0, %s137
      $region24: #{encoder_block_forward.3} parent=19 // pred_fallthru
        _
    $region20: #{encoder_block_forward.3} parent=5 // pred_fallthru
      _
    %p139 = scmp.le.s32.totalorder 1, %s10
    %p140 = scmp.lt.s32.totalorder %s10, 3
    %p141 = pnand %p139, %p140
    %p142 = pneg %p141
    // Predicated region
    $region25: #{encoder_block_forward.3} parent=5 // pred_check
      _
    $region26: #{encoder_block_forward.3} parent=5 // pred_check_branch
      %144 = sbr.rel (%p141) target = $region28
    $region27: #{encoder_block_forward.3} parent=5 // pred_region
      %s145 = ssub.s32 %s10, 1
      %p146 = scmp.lt.s32.totalorder %s15, 1
      %s147 = scalar_select %p146, %s15, 1
      %s148 = smul.addr %s147, 32
      %s149 = smul.addr %s148, 4
      %s150 = scalar_lea.vmem %s0, %s149
      %p151 = pneg %p36
      %p152 = pneg %p33
      %p153 = pneg %p57
      %p154 = pneg %p54
      %p155 = pneg %p83
      %p156 = pneg %p80
      %p157 = scmp.lt.s32.totalorder %s15, 1
      %s158 = scalar_select %p157, %s15, 1
      %s159 = smul.addr %s158, 32
      %s160 = smul.addr %s159, 4
      %s161 = scalar_lea.vmem %s2, %s160
      %p162 = pneg %p109
      %p163 = pneg %p106
      %p164 = scmp.lt.s32.totalorder %s15, 1
      %s165 = scalar_select %p164, %s15, 1
      %s166 = smul.addr %s165, 2
      %s167 = scalar_lea.vmem %s3, %s166
      %p168 = scmp.lt.s32.totalorder %s15, 1
      %s169 = scalar_select %p168, %s15, 1
      %s170 = smul.addr %s169, 32
      %s171 = smul.addr %s170, 4
      %s172 = scalar_lea.vmem %s0, %s171
      %p173 = scmp.lt.s32.totalorder %s15, 1
      %s174 = scalar_select %p173, %s15, 1
      %s175 = smul.addr %s174, 32
      %s176 = smul.addr %s175, 4
      %s177 = scalar_lea.vmem %s2, %s176
      %p178 = scmp.lt.s32.totalorder %s15, 1
      %s179 = scalar_select %p178, %s15, 1
      %s180 = smul.addr %s179, 2
      %s181 = scalar_lea.vmem %s3, %s180
      %v183 = vld [vmem:[%s172] sm:$0xf]
      %v184 = vld [vmem:[%s172 + $0x4] sm:$0xf]
      %v185 = vld [vmem:[%s172 + $0x8] sm:$0xf]
      %v186 = vld [vmem:[%s172 + $0xc] sm:$0xf]
      %v187 = vld [vmem:[%s172 + $0x10] sm:$0xf]
      %v188 = vld [vmem:[%s172 + $0x14] sm:$0xf]
      %v189 = vld [vmem:[%s172 + $0x18] sm:$0xf]
      %v190 = vld [vmem:[%s172 + $0x1c] sm:$0xf]
      %v191 = vld [vmem:[%s172 + $0x20] sm:$0xf]
      %v192 = vld [vmem:[%s172 + $0x24] sm:$0xf]
      %v193 = vld [vmem:[%s172 + $0x28] sm:$0xf]
      %v194 = vld [vmem:[%s172 + $0x2c] sm:$0xf]
      %v195 = vld [vmem:[%s172 + $0x30] sm:$0xf]
      %v196 = vld [vmem:[%s172 + $0x34] sm:$0xf]
      %v197 = vld [vmem:[%s172 + $0x38] sm:$0xf]
      %v198 = vld [vmem:[%s172 + $0x3c] sm:$0xf]
      %v199 = vld [vmem:[%s172 + $0x40] sm:$0xf]
      %v200 = vld [vmem:[%s172 + $0x44] sm:$0xf]
      %v201 = vld [vmem:[%s172 + $0x48] sm:$0xf]
      %v202 = vld [vmem:[%s172 + $0x4c] sm:$0xf]
      %v203 = vld [vmem:[%s172 + $0x50] sm:$0xf]
      %v204 = vld [vmem:[%s172 + $0x54] sm:$0xf]
      %v205 = vld [vmem:[%s172 + $0x58] sm:$0xf]
      %v206 = vld [vmem:[%s172 + $0x5c] sm:$0xf]
      %v207 = vld [vmem:[%s172 + $0x60] sm:$0xf]
      %v208 = vld [vmem:[%s172 + $0x64] sm:$0xf]
      %v209 = vld [vmem:[%s172 + $0x68] sm:$0xf]
      %v210 = vld [vmem:[%s172 + $0x6c] sm:$0xf]
      %v211 = vld [vmem:[%s172 + $0x70] sm:$0xf]
      %v212 = vld [vmem:[%s172 + $0x74] sm:$0xf]
      %v213 = vld [vmem:[%s172 + $0x78] sm:$0xf]
      %v214 = vld [vmem:[%s172 + $0x7c] sm:$0xf]
      %v215 = vld [vmem:[%s1] sm:$0xf]
      %v216 = vld [vmem:[%s1 + $0x4] sm:$0xf]
      %v217 = vld [vmem:[%s1 + $0x8] sm:$0xf]
      %v218 = vld [vmem:[%s1 + $0xc] sm:$0xf]
      %v219 = vld [vmem:[%s1 + $0x10] sm:$0xf]
      %v220 = vld [vmem:[%s1 + $0x14] sm:$0xf]
      %v221 = vld [vmem:[%s1 + $0x18] sm:$0xf]
      %v222 = vld [vmem:[%s1 + $0x1c] sm:$0xf]
      %v223 = vld [vmem:[%s1 + $0x20] sm:$0xf]
      %v224 = vld [vmem:[%s1 + $0x24] sm:$0xf]
      %v225 = vld [vmem:[%s1 + $0x28] sm:$0xf]
      %v226 = vld [vmem:[%s1 + $0x2c] sm:$0xf]
      %v227 = vld [vmem:[%s1 + $0x30] sm:$0xf]
      %v228 = vld [vmem:[%s1 + $0x34] sm:$0xf]
      %v229 = vld [vmem:[%s1 + $0x38] sm:$0xf]
      %v230 = vld [vmem:[%s1 + $0x3c] sm:$0xf]
      %v263 = vunpack.c.l.b16 %v183
      %v264 = vunpack.c.l.b16 %v184
      %v265 = vunpack.c.l.b16 %v185
      %v266 = vunpack.c.l.b16 %v186
      %v267 = vunpack.c.l.b16 %v187
      %v268 = vunpack.c.l.b16 %v188
      %v269 = vunpack.c.l.b16 %v189
      %v270 = vunpack.c.l.b16 %v190
      %v271 = vunpack.c.l.b16 %v191
      %v272 = vunpack.c.l.b16 %v192
      %v273 = vunpack.c.l.b16 %v193
      %v274 = vunpack.c.l.b16 %v194
      %v275 = vunpack.c.l.b16 %v195
      %v276 = vunpack.c.l.b16 %v196
      %v277 = vunpack.c.l.b16 %v197
      %v278 = vunpack.c.l.b16 %v198
      %v279 = vunpack.c.l.b16 %v199
      %v280 = vunpack.c.l.b16 %v200
      %v281 = vunpack.c.l.b16 %v201
      %v282 = vunpack.c.l.b16 %v202
      %v283 = vunpack.c.l.b16 %v203
      %v284 = vunpack.c.l.b16 %v204
      %v285 = vunpack.c.l.b16 %v205
      %v286 = vunpack.c.l.b16 %v206
      %v287 = vunpack.c.l.b16 %v207
      %v288 = vunpack.c.l.b16 %v208
      %v289 = vunpack.c.l.b16 %v209
      %v290 = vunpack.c.l.b16 %v210
      %v291 = vunpack.c.l.b16 %v211
      %v292 = vunpack.c.l.b16 %v212
      %v293 = vunpack.c.l.b16 %v213
      %v294 = vunpack.c.l.b16 %v214
      %v295 = vpack.c.b16 %v264, %v263
      %v296 = vpack.c.b16 %v266, %v265
      %v297 = vpack.c.b16 %v268, %v267
      %v298 = vpack.c.b16 %v270, %v269
      %v299 = vpack.c.b16 %v272, %v271
      %v300 = vpack.c.b16 %v274, %v273
      %v301 = vpack.c.b16 %v276, %v275
      %v302 = vpack.c.b16 %v278, %v277
      %v303 = vpack.c.b16 %v280, %v279
      %v304 = vpack.c.b16 %v282, %v281
      %v305 = vpack.c.b16 %v284, %v283
      %v306 = vpack.c.b16 %v286, %v285
      %v307 = vpack.c.b16 %v288, %v287
      %v308 = vpack.c.b16 %v290, %v289
      %v309 = vpack.c.b16 %v292, %v291
      %v310 = vpack.c.b16 %v294, %v293
      %v343 = vunpack.c.l.b16 %v215
      %v344 = vunpack.c.l.b16 %v216
      %v345 = vunpack.c.l.b16 %v217
      %v346 = vunpack.c.l.b16 %v218
      %v347 = vunpack.c.l.b16 %v219
      %v348 = vunpack.c.l.b16 %v220
      %v349 = vunpack.c.l.b16 %v221
      %v350 = vunpack.c.l.b16 %v222
      %v351 = vunpack.c.l.b16 %v223
      %v352 = vunpack.c.l.b16 %v224
      %v353 = vunpack.c.l.b16 %v225
      %v354 = vunpack.c.l.b16 %v226
      %v355 = vunpack.c.l.b16 %v227
      %v356 = vunpack.c.l.b16 %v228
      %v357 = vunpack.c.l.b16 %v229
      %v358 = vunpack.c.l.b16 %v230
      %v359 = vpack.c.b16 %v344, %v343
      %v360 = vpack.c.b16 %v346, %v345
      %v361 = vpack.c.b16 %v348, %v347
      %v362 = vpack.c.b16 %v350, %v349
      %v363 = vpack.c.b16 %v352, %v351
      %v364 = vpack.c.b16 %v354, %v353
      %v365 = vpack.c.b16 %v356, %v355
      %v366 = vpack.c.b16 %v358, %v357
      %375 = vmatprep.subr.bf16.mxu0 0
      %376 = vmatpush1.bf16.msra.mxu0 %v366
      %377 = vmatprep.subr.bf16.mxu0 0
      %378 = vmatpush1.bf16.msra.mxu0 %v365
      %379 = vmatprep.subr.bf16.mxu0 0
      %380 = vmatpush1.bf16.msra.mxu0 %v364
      %381 = vmatprep.subr.bf16.mxu0 0
      %382 = vmatpush1.bf16.msra.mxu0 %v363
      %383 = vmatprep.subr.bf16.mxu0 0
      %384 = vmatpush1.bf16.msra.mxu0 %v362
      %385 = vmatprep.subr.bf16.mxu0 0
      %386 = vmatpush1.bf16.msra.mxu0 %v361
      %387 = vmatprep.subr.bf16.mxu0 0
      %388 = vmatpush1.bf16.msra.mxu0 %v360
      %389 = vmatprep.subr.bf16.mxu0 0
      %390 = vmatpush1.bf16.msra.mxu0 %v359
      %391 = vmatprep.subr.bf16.mxu0 0
      %392 = vmatpush2.bf16.msra.mxu0 0
      %393 = vmatprep.subr.bf16.mxu0 0
      %394 = vmatpush2.bf16.msra.mxu0 0
      %395 = vmatprep.subr.bf16.mxu0 0
      %396 = vmatpush2.bf16.msra.mxu0 0
      %397 = vmatprep.subr.bf16.mxu0 0
      %398 = vmatpush2.bf16.msra.mxu0 0
      %399 = vmatprep.subr.bf16.mxu0 0
      %400 = vmatpush2.bf16.msra.mxu0 0
      %401 = vmatprep.subr.bf16.mxu0 0
      %402 = vmatpush2.bf16.msra.mxu0 0
      %403 = vmatprep.subr.bf16.mxu0 0
      %404 = vmatpush2.bf16.msra.mxu0 0
      %405 = vmatprep.subr.bf16.mxu0 0
      %406 = vmatpush2.bf16.msra.mxu0 0
      %407 = vmatprep.mubr.bf16.mxu0 0
      %408 = vmatmul.mubr.bf16.gmra.mxu0 %v295
      %v409 = vpop.f32.mrf.mxu0
      %v410 = vadd.f32 0.0, %v409
      %v411 = vpop.f32.mrf.mxu0
      %v412 = vpop.f32.mrf.mxu0
      %v413 = vadd.f32 0.0, %v412
      %v414 = vpop.f32.mrf.mxu0
      %415 = vmatprep.mubr.bf16.mxu0 0
      %416 = vmatmul.mubr.bf16.gmra.mxu0 %v296
      %v417 = vpop.f32.mrf.mxu0
      %v418 = vadd.f32 0.0, %v417
      %v419 = vpop.f32.mrf.mxu0
      %v420 = vpop.f32.mrf.mxu0
      %v421 = vadd.f32 0.0, %v420
      %v422 = vpop.f32.mrf.mxu0
      %423 = vmatprep.mubr.bf16.mxu0 0
      %424 = vmatmul.mubr.bf16.gmra.mxu0 %v297
      %v425 = vpop.f32.mrf.mxu0
      %v426 = vadd.f32 0.0, %v425
      %v427 = vpop.f32.mrf.mxu0
      %v428 = vpop.f32.mrf.mxu0
      %v429 = vadd.f32 0.0, %v428
      %v430 = vpop.f32.mrf.mxu0
      %431 = vmatprep.mubr.bf16.mxu0 0
      %432 = vmatmul.mubr.bf16.gmra.mxu0 %v298
      %v433 = vpop.f32.mrf.mxu0
      %v434 = vadd.f32 0.0, %v433
      %v435 = vpop.f32.mrf.mxu0
      %v436 = vpop.f32.mrf.mxu0
      %v437 = vadd.f32 0.0, %v436
      %v438 = vpop.f32.mrf.mxu0
      %439 = vmatprep.mubr.bf16.mxu0 0
      %440 = vmatmul.mubr.bf16.gmra.mxu0 %v299
      %v441 = vpop.f32.mrf.mxu0
      %v442 = vadd.f32 0.0, %v441
      %v443 = vpop.f32.mrf.mxu0
      %v444 = vpop.f32.mrf.mxu0
      %v445 = vadd.f32 0.0, %v444
      %v446 = vpop.f32.mrf.mxu0
      %447 = vmatprep.mubr.bf16.mxu0 0
      %448 = vmatmul.mubr.bf16.gmra.mxu0 %v300
      %v449 = vpop.f32.mrf.mxu0
      %v450 = vadd.f32 0.0, %v449
      %v451 = vpop.f32.mrf.mxu0
      %v452 = vpop.f32.mrf.mxu0
      %v453 = vadd.f32 0.0, %v452
      %v454 = vpop.f32.mrf.mxu0
      %455 = vmatprep.mubr.bf16.mxu0 0
      %456 = vmatmul.mubr.bf16.gmra.mxu0 %v301
      %v457 = vpop.f32.mrf.mxu0
      %v458 = vadd.f32 0.0, %v457
      %v459 = vpop.f32.mrf.mxu0
      %v460 = vpop.f32.mrf.mxu0
      %v461 = vadd.f32 0.0, %v460
      %v462 = vpop.f32.mrf.mxu0
      %463 = vmatprep.mubr.bf16.mxu0 0
      %464 = vmatmul.mubr.bf16.gmra.mxu0 %v302
      %v465 = vpop.f32.mrf.mxu0
      %v466 = vadd.f32 0.0, %v465
      %v467 = vpop.f32.mrf.mxu0
      %v468 = vpop.f32.mrf.mxu0
      %v469 = vadd.f32 0.0, %v468
      %v470 = vpop.f32.mrf.mxu0
      %471 = vmatprep.mubr.bf16.mxu0 0
      %472 = vmatmul.mubr.bf16.gmra.mxu0 %v303
      %v473 = vpop.f32.mrf.mxu0
      %v474 = vadd.f32 0.0, %v473
      %v475 = vpop.f32.mrf.mxu0
      %v476 = vpop.f32.mrf.mxu0
      %v477 = vadd.f32 0.0, %v476
      %v478 = vpop.f32.mrf.mxu0
      %479 = vmatprep.mubr.bf16.mxu0 0
      %480 = vmatmul.mubr.bf16.gmra.mxu0 %v304
      %v481 = vpop.f32.mrf.mxu0
      %v482 = vadd.f32 0.0, %v481
      %v483 = vpop.f32.mrf.mxu0
      %v484 = vpop.f32.mrf.mxu0
      %v485 = vadd.f32 0.0, %v484
      %v486 = vpop.f32.mrf.mxu0
      %487 = vmatprep.mubr.bf16.mxu0 0
      %488 = vmatmul.mubr.bf16.gmra.mxu0 %v305
      %v489 = vpop.f32.mrf.mxu0
      %v490 = vadd.f32 0.0, %v489
      %v491 = vpop.f32.mrf.mxu0
      %v492 = vpop.f32.mrf.mxu0
      %v493 = vadd.f32 0.0, %v492
      %v494 = vpop.f32.mrf.mxu0
      %495 = vmatprep.mubr.bf16.mxu0 0
      %496 = vmatmul.mubr.bf16.gmra.mxu0 %v306
      %v497 = vpop.f32.mrf.mxu0
      %v498 = vadd.f32 0.0, %v497
      %v499 = vpop.f32.mrf.mxu0
      %v500 = vpop.f32.mrf.mxu0
      %v501 = vadd.f32 0.0, %v500
      %v502 = vpop.f32.mrf.mxu0
      %503 = vmatprep.mubr.bf16.mxu0 0
      %504 = vmatmul.mubr.bf16.gmra.mxu0 %v307
      %v505 = vpop.f32.mrf.mxu0
      %v506 = vadd.f32 0.0, %v505
      %v507 = vpop.f32.mrf.mxu0
      %v508 = vpop.f32.mrf.mxu0
      %v509 = vadd.f32 0.0, %v508
      %v510 = vpop.f32.mrf.mxu0
      %511 = vmatprep.mubr.bf16.mxu0 0
      %512 = vmatmul.mubr.bf16.gmra.mxu0 %v308
      %v513 = vpop.f32.mrf.mxu0
      %v514 = vadd.f32 0.0, %v513
      %v515 = vpop.f32.mrf.mxu0
      %v516 = vpop.f32.mrf.mxu0
      %v517 = vadd.f32 0.0, %v516
      %v518 = vpop.f32.mrf.mxu0
      %519 = vmatprep.mubr.bf16.mxu0 0
      %520 = vmatmul.mubr.bf16.gmra.mxu0 %v309
      %v521 = vpop.f32.mrf.mxu0
      %v522 = vadd.f32 0.0, %v521
      %v523 = vpop.f32.mrf.mxu0
      %v524 = vpop.f32.mrf.mxu0
      %v525 = vadd.f32 0.0, %v524
      %v526 = vpop.f32.mrf.mxu0
      %527 = vmatprep.mubr.bf16.mxu0 0
      %528 = vmatmul.mubr.bf16.gmra.mxu0 %v310
      %v529 = vpop.f32.mrf.mxu0
      %v530 = vadd.f32 0.0, %v529
      %v531 = vpop.f32.mrf.mxu0
      %v532 = vpop.f32.mrf.mxu0
      %v533 = vadd.f32 0.0, %v532
      %v534 = vpop.f32.mrf.mxu0
      %535 = vdwg.mxu0
      %v536 = vpack.c.bf16 %v413, %v410
      %v537 = vpack.c.bf16 %v421, %v418
      %v538 = vpack.c.bf16 %v429, %v426
      %v539 = vpack.c.bf16 %v437, %v434
      %v540 = vpack.c.bf16 %v445, %v442
      %v541 = vpack.c.bf16 %v453, %v450
      %v542 = vpack.c.bf16 %v461, %v458
      %v543 = vpack.c.bf16 %v469, %v466
      %v544 = vpack.c.bf16 %v477, %v474
      %v545 = vpack.c.bf16 %v485, %v482
      %v546 = vpack.c.bf16 %v493, %v490
      %v547 = vpack.c.bf16 %v501, %v498
      %v548 = vpack.c.bf16 %v509, %v506
      %v549 = vpack.c.bf16 %v517, %v514
      %v550 = vpack.c.bf16 %v525, %v522
      %v551 = vpack.c.bf16 %v533, %v530
      %v568 = vunpack.c.l.b16 %v536
      %v569 = vunpack.c.h.b16 %v536
      %v570 = vunpack.c.l.b16 %v537
      %v571 = vunpack.c.h.b16 %v537
      %v572 = vunpack.c.l.b16 %v538
      %v573 = vunpack.c.h.b16 %v538
      %v574 = vunpack.c.l.b16 %v539
      %v575 = vunpack.c.h.b16 %v539
      %v576 = vunpack.c.l.b16 %v540
      %v577 = vunpack.c.h.b16 %v540
      %v578 = vunpack.c.l.b16 %v541
      %v579 = vunpack.c.h.b16 %v541
      %v580 = vunpack.c.l.b16 %v542
      %v581 = vunpack.c.h.b16 %v542
      %v582 = vunpack.c.l.b16 %v543
      %v583 = vunpack.c.h.b16 %v543
      %v584 = vunpack.c.l.b16 %v544
      %v585 = vunpack.c.h.b16 %v544
      %v586 = vunpack.c.l.b16 %v545
      %v587 = vunpack.c.h.b16 %v545
      %v588 = vunpack.c.l.b16 %v546
      %v589 = vunpack.c.h.b16 %v546
      %v590 = vunpack.c.l.b16 %v547
      %v591 = vunpack.c.h.b16 %v547
      %v592 = vunpack.c.l.b16 %v548
      %v593 = vunpack.c.h.b16 %v548
      %v594 = vunpack.c.l.b16 %v549
      %v595 = vunpack.c.h.b16 %v549
      %v596 = vunpack.c.l.b16 %v550
      %v597 = vunpack.c.h.b16 %v550
      %v598 = vunpack.c.l.b16 %v551
      %v599 = vunpack.c.h.b16 %v551
      %v600 = vpack.c.b16 %v568, %v568
      %v601 = vpack.c.b16 %v569, %v569
      %v602 = vpack.c.b16 %v570, %v570
      %v603 = vpack.c.b16 %v571, %v571
      %v604 = vpack.c.b16 %v572, %v572
      %v605 = vpack.c.b16 %v573, %v573
      %v606 = vpack.c.b16 %v574, %v574
      %v607 = vpack.c.b16 %v575, %v575
      %v608 = vpack.c.b16 %v576, %v576
      %v609 = vpack.c.b16 %v577, %v577
      %v610 = vpack.c.b16 %v578, %v578
      %v611 = vpack.c.b16 %v579, %v579
      %v612 = vpack.c.b16 %v580, %v580
      %v613 = vpack.c.b16 %v581, %v581
      %v614 = vpack.c.b16 %v582, %v582
      %v615 = vpack.c.b16 %v583, %v583
      %v616 = vpack.c.b16 %v584, %v584
      %v617 = vpack.c.b16 %v585, %v585
      %v618 = vpack.c.b16 %v586, %v586
      %v619 = vpack.c.b16 %v587, %v587
      %v620 = vpack.c.b16 %v588, %v588
      %v621 = vpack.c.b16 %v589, %v589
      %v622 = vpack.c.b16 %v590, %v590
      %v623 = vpack.c.b16 %v591, %v591
      %v624 = vpack.c.b16 %v592, %v592
      %v625 = vpack.c.b16 %v593, %v593
      %v626 = vpack.c.b16 %v594, %v594
      %v627 = vpack.c.b16 %v595, %v595
      %v628 = vpack.c.b16 %v596, %v596
      %v629 = vpack.c.b16 %v597, %v597
      %v630 = vpack.c.b16 %v598, %v598
      %v631 = vpack.c.b16 %v599, %v599
      %664 = vst [vmem:[%s177] sm:$0xf] %v600
      %665 = vst [vmem:[%s177 + $0x4] sm:$0xf] %v601
      %666 = vst [vmem:[%s177 + $0x8] sm:$0xf] %v602
      %667 = vst [vmem:[%s177 + $0xc] sm:$0xf] %v603
      %668 = vst [vmem:[%s177 + $0x10] sm:$0xf] %v604
      %669 = vst [vmem:[%s177 + $0x14] sm:$0xf] %v605
      %670 = vst [vmem:[%s177 + $0x18] sm:$0xf] %v606
      %671 = vst [vmem:[%s177 + $0x1c] sm:$0xf] %v607
      %672 = vst [vmem:[%s177 + $0x20] sm:$0xf] %v608
      %673 = vst [vmem:[%s177 + $0x24] sm:$0xf] %v609
      %674 = vst [vmem:[%s177 + $0x28] sm:$0xf] %v610
      %675 = vst [vmem:[%s177 + $0x2c] sm:$0xf] %v611
      %676 = vst [vmem:[%s177 + $0x30] sm:$0xf] %v612
      %677 = vst [vmem:[%s177 + $0x34] sm:$0xf] %v613
      %678 = vst [vmem:[%s177 + $0x38] sm:$0xf] %v614
      %679 = vst [vmem:[%s177 + $0x3c] sm:$0xf] %v615
      %680 = vst [vmem:[%s177 + $0x40] sm:$0xf] %v616
      %681 = vst [vmem:[%s177 + $0x44] sm:$0xf] %v617
      %682 = vst [vmem:[%s177 + $0x48] sm:$0xf] %v618
      %683 = vst [vmem:[%s177 + $0x4c] sm:$0xf] %v619
      %684 = vst [vmem:[%s177 + $0x50] sm:$0xf] %v620
      %685 = vst [vmem:[%s177 + $0x54] sm:$0xf] %v621
      %686 = vst [vmem:[%s177 + $0x58] sm:$0xf] %v622
      %687 = vst [vmem:[%s177 + $0x5c] sm:$0xf] %v623
      %688 = vst [vmem:[%s177 + $0x60] sm:$0xf] %v624
      %689 = vst [vmem:[%s177 + $0x64] sm:$0xf] %v625
      %690 = vst [vmem:[%s177 + $0x68] sm:$0xf] %v626
      %691 = vst [vmem:[%s177 + $0x6c] sm:$0xf] %v627
      %692 = vst [vmem:[%s177 + $0x70] sm:$0xf] %v628
      %693 = vst [vmem:[%s177 + $0x74] sm:$0xf] %v629
      %694 = vst [vmem:[%s177 + $0x78] sm:$0xf] %v630
      %695 = vst [vmem:[%s177 + $0x7c] sm:$0xf] %v631
      %v696 = vadd.f32 %v410, %v413
      %v697 = vadd.f32 %v696, %v418
      %v698 = vadd.f32 %v697, %v421
      %v699 = vadd.f32 %v698, %v426
      %v700 = vadd.f32 %v699, %v429
      %v701 = vadd.f32 %v700, %v434
      %v702 = vadd.f32 %v701, %v437
      %v703 = vadd.f32 %v702, %v442
      %v704 = vadd.f32 %v703, %v445
      %v705 = vadd.f32 %v704, %v450
      %v706 = vadd.f32 %v705, %v453
      %v707 = vadd.f32 %v706, %v458
      %v708 = vadd.f32 %v707, %v461
      %v709 = vadd.f32 %v708, %v466
      %v710 = vadd.f32 %v709, %v469
      %v711 = vadd.f32 %v710, %v474
      %v712 = vadd.f32 %v711, %v477
      %v713 = vadd.f32 %v712, %v482
      %v714 = vadd.f32 %v713, %v485
      %v715 = vadd.f32 %v714, %v490
      %v716 = vadd.f32 %v715, %v493
      %v717 = vadd.f32 %v716, %v498
      %v718 = vadd.f32 %v717, %v501
      %v719 = vadd.f32 %v718, %v506
      %v720 = vadd.f32 %v719, %v509
      %v721 = vadd.f32 %v720, %v514
      %v722 = vadd.f32 %v721, %v517
      %v723 = vadd.f32 %v722, %v522
      %v724 = vadd.f32 %v723, %v525
      %v725 = vadd.f32 %v724, %v530
      %v726 = vadd.f32 %v725, %v533
      %v727 = vrot.slane %v726, 4
      %v728 = vadd.f32 %v726, %v727
      %v729 = vrot.slane %v728, 2
      %v730 = vadd.f32 %v728, %v729
      %v731 = vrot.slane %v730, 1
      %v732 = vadd.f32 %v730, %v731
      %v733 = vmul.f32 %v410, %v410
      %v734 = vmul.f32 %v413, %v413
      %v735 = vmul.f32 %v418, %v418
      %v736 = vmul.f32 %v421, %v421
      %v737 = vmul.f32 %v426, %v426
      %v738 = vmul.f32 %v429, %v429
      %v739 = vmul.f32 %v434, %v434
      %v740 = vmul.f32 %v437, %v437
      %v741 = vmul.f32 %v442, %v442
      %v742 = vmul.f32 %v445, %v445
      %v743 = vmul.f32 %v450, %v450
      %v744 = vmul.f32 %v453, %v453
      %v745 = vmul.f32 %v458, %v458
      %v746 = vmul.f32 %v461, %v461
      %v747 = vmul.f32 %v466, %v466
      %v748 = vmul.f32 %v469, %v469
      %v749 = vmul.f32 %v474, %v474
      %v750 = vmul.f32 %v477, %v477
      %v751 = vmul.f32 %v482, %v482
      %v752 = vmul.f32 %v485, %v485
      %v753 = vmul.f32 %v490, %v490
      %v754 = vmul.f32 %v493, %v493
      %v755 = vmul.f32 %v498, %v498
      %v756 = vmul.f32 %v501, %v501
      %v757 = vmul.f32 %v506, %v506
      %v758 = vmul.f32 %v509, %v509
      %v759 = vmul.f32 %v514, %v514
      %v760 = vmul.f32 %v517, %v517
      %v761 = vmul.f32 %v522, %v522
      %v762 = vmul.f32 %v525, %v525
      %v763 = vmul.f32 %v530, %v530
      %v764 = vmul.f32 %v533, %v533
      %v765 = vadd.f32 %v733, %v734
      %v766 = vadd.f32 %v765, %v735
      %v767 = vadd.f32 %v766, %v736
      %v768 = vadd.f32 %v767, %v737
      %v769 = vadd.f32 %v768, %v738
      %v770 = vadd.f32 %v769, %v739
      %v771 = vadd.f32 %v770, %v740
      %v772 = vadd.f32 %v771, %v741
      %v773 = vadd.f32 %v772, %v742
      %v774 = vadd.f32 %v773, %v743
      %v775 = vadd.f32 %v774, %v744
      %v776 = vadd.f32 %v775, %v745
      %v777 = vadd.f32 %v776, %v746
      %v778 = vadd.f32 %v777, %v747
      %v779 = vadd.f32 %v778, %v748
      %v780 = vadd.f32 %v779, %v749
      %v781 = vadd.f32 %v780, %v750
      %v782 = vadd.f32 %v781, %v751
      %v783 = vadd.f32 %v782, %v752
      %v784 = vadd.f32 %v783, %v753
      %v785 = vadd.f32 %v784, %v754
      %v786 = vadd.f32 %v785, %v755
      %v787 = vadd.f32 %v786, %v756
      %v788 = vadd.f32 %v787, %v757
      %v789 = vadd.f32 %v788, %v758
      %v790 = vadd.f32 %v789, %v759
      %v791 = vadd.f32 %v790, %v760
      %v792 = vadd.f32 %v791, %v761
      %v793 = vadd.f32 %v792, %v762
      %v794 = vadd.f32 %v793, %v763
      %v795 = vadd.f32 %v794, %v764
      %v796 = vrot.slane %v795, 4
      %v797 = vadd.f32 %v795, %v796
      %v798 = vrot.slane %v797, 2
      %v799 = vadd.f32 %v797, %v798
      %v800 = vrot.slane %v799, 1
      %v801 = vadd.f32 %v799, %v800
      %vm802 = vcmask 1040384
      %v803 = vsel %vm802, %v732, %v801
      %804 = vst [vmem:[%s181] sm:$0x3] %v803
      %p805 = scmp.lt.s32.totalorder %s15, 1
      %s806 = scalar_select %p805, %s15, 1
      %s807 = smul.addr %s806, 32
      %s808 = smul.addr %s807, 4
      %s809 = scalar_lea.vmem %s2, %s808
      %p810 = scmp.lt.s32.totalorder %s15, 1
      %s811 = scalar_select %p810, %s15, 1
      %s812 = smul.addr %s811, 2
      %s813 = scalar_lea.vmem %s3, %s812
      // Predicated region
      $region29: #{encoder_block_forward.3} parent=27 // pred_check
        %p814 = pneg %p80
      $region30: #{encoder_block_forward.3} parent=27 // pred_check_branch
        %816 = sbr.rel (%p814) target = $region32
      $region31: #{encoder_block_forward.3} parent=27 // pred_region
        _
      $region32: #{encoder_block_forward.3} parent=27 // pred_fallthru
        _
      // Predicated region
      $region33: #{encoder_block_forward.3} parent=27 // pred_check
        %p817 = pneg %p106
      $region34: #{encoder_block_forward.3} parent=27 // pred_check_branch
        %819 = sbr.rel (%p817) target = $region36
      $region35: #{encoder_block_forward.3} parent=27 // pred_region
        _
      $region36: #{encoder_block_forward.3} parent=27 // pred_fallthru
        _
    $region28: #{encoder_block_forward.3} parent=5 // pred_fallthru
      _
    %p820 = scmp.le.s32.totalorder 2, %s10
    // Predicated region
    $region37: #{encoder_block_forward.3} parent=5 // pred_check
      %p821 = pneg %p820
    $region38: #{encoder_block_forward.3} parent=5 // pred_check_branch
      %823 = sbr.rel (%p821) target = $region40
    $region39: #{encoder_block_forward.3} parent=5 // pred_region
      %s824 = ssub.s32 %s10, 2
      // Predicated region
      $region41: #{encoder_block_forward.3} parent=39 // pred_check
        %p825 = pneg %p86
      $region42: #{encoder_block_forward.3} parent=39 // pred_check_branch
        %827 = sbr.rel (%p825) target = $region44
      $region43: #{encoder_block_forward.3} parent=39 // pred_region
        %p828 = scmp.lt.s32.totalorder %s16, 1
        %s829 = scalar_select %p828, %s16, 1
        %s830 = smul.addr %s829, 32
        %s831 = smul.addr %s830, 4
        %s832 = scalar_lea.vmem %s2, %s831
      $region44: #{encoder_block_forward.3} parent=39 // pred_fallthru
        _
      // Predicated region
      $region45: #{encoder_block_forward.3} parent=39 // pred_check
        %p833 = pneg %p112
      $region46: #{encoder_block_forward.3} parent=39 // pred_check_branch
        %835 = sbr.rel (%p833) target = $region48
      $region47: #{encoder_block_forward.3} parent=39 // pred_region
        %p836 = scmp.lt.s32.totalorder %s16, 1
        %s837 = scalar_select %p836, %s16, 1
        %s838 = smul.addr %s837, 2
        %s839 = scalar_lea.vmem %s3, %s838
      $region48: #{encoder_block_forward.3} parent=39 // pred_fallthru
        _
    $region40: #{encoder_block_forward.3} parent=5 // pred_fallthru
      _
  $region6: #{encoder_block_forward.3} parent=0 // loop_footer
    %s14 = sadd.s32 1, %s10
  $region7: #{encoder_block_forward.3} parent=0 // loop_footer_branch
    %9 = sbr.rel target = $region3
  $region8: #{encoder_block_forward.3} parent=0 // loop_exit
    _

// kernel: encoder_block_forward.5
$region0: #{encoder_block_forward.5}
  #allocation0 [shape = 'u32[]', space=smem, size = 0x4, offset = 0x4, fixed_abs, tag = 'smem constant byte address 0x4 - core index']
  #allocation1 [shape = 'u32[144,128]{1,0:T(1,128)}', space=vmem, size = 0x12000, scoped, tag = 'internal scratch']
  %s0 = inlined_call_operand.vmem [shape: bf16[2,16,16,128], index: 0, kind: input, shape index: {}]
  %s1 = inlined_call_operand.vmem [shape: f32[2,128], index: 1, kind: input, shape index: {}]
  %s2 = inlined_call_operand.vmem [shape: f32[2,16,16,128], index: 2, kind: output, shape index: {0}]
  %s3 = inlined_call_operand.vmem [shape: f32[2,8,8,128], index: 3, kind: output, shape index: {1}]
  %4 = xla_tuple %s2, %s3
  %s5 = sld [smem:[#allocation0]]
  $region49: #{encoder_block_forward.5} parent=0
    _
  %s7 = ssub.s32 1, %s5
  %s8 = scalar_select 0, %s7, %s5
  loop: start=0, step=1, limit=4
  $region2: #{encoder_block_forward.5} parent=0 // loop_pre_header
    _
  $region3: #{encoder_block_forward.5} parent=0 // loop_header
    %s10 = sphi 0, %s14
    %p11 = scmp.ge.s32.totalorder %s10, 4
    %s20 = sphi 0, %s22
    %s23 = sphi 0, %s20
    %s24 = sphi 0, %s23
    %s40 = sphi 0, %s24
    %s44 = sphi 0, %s44
    %s46 = sphi 0, %s44
    %s47 = sphi 0, %s46
    %s61 = sphi 0, %s47
    %s67 = sphi 0, %s69
    %s70 = sphi 0, %s67
    %s71 = sphi 0, %s70
    %s87 = sphi 0, %s71
    %s93 = sphi 0, %s95
    %s96 = sphi 0, %s93
    %s97 = sphi 0, %s96
    %s113 = sphi 0, %s97
  $region4: #{encoder_block_forward.5} parent=0 // loop_header_branch
    %13 = sbr.rel (%p11) target = $region8
  $region5: #{encoder_block_forward.5} parent=0 // loop_body
    %s15 = ssub.s32 %s10, 1
    %s16 = ssub.s32 %s10, 2
    %s17 = sadd.s32 %s10, 1
    %s18 = ssub.s32 %s10, %s17
    %p19 = scmp.eq.s32.totalorder %s18, 0
    %s21 = sadd.s32 %s20, 1
    %s22 = scalar_select %p19, %s20, %s21
    %p25 = pneg %p19
    %p26 = scmp.eq.s32.totalorder %s10, 1
    %p27 = por %p25, %p26
    %p28 = scmp.ne.s32.totalorder %s20, %s23
    %p29 = scmp.eq.s32.totalorder %s10, 0
    %p30 = por %p28, %p29
    %p31 = scmp.ne.s32.totalorder %s20, %s23
    %p32 = scmp.eq.s32.totalorder %s15, 1
    %p33 = por %p31, %p32
    %p34 = scmp.ne.s32.totalorder %s23, %s24
    %p35 = scmp.eq.s32.totalorder %s15, 0
    %p36 = por %p34, %p35
    %p37 = scmp.ne.s32.totalorder %s23, %s24
    %p38 = scmp.eq.s32.totalorder %s16, 1
    %p39 = por %p37, %p38
    %p41 = scmp.ne.s32.totalorder %s24, %s40
    %p42 = scmp.eq.s32.totalorder %s16, 0
    %p43 = por %p41, %p42
    %s45 = sadd.s32 %s44, 1
    %p48 = scmp.eq.s32.totalorder %s10, 1
    %p49 = scmp.ne.s32.totalorder %s44, %s46
    %p50 = scmp.eq.s32.totalorder %s10, 0
    %p51 = por %p49, %p50
    %p52 = scmp.ne.s32.totalorder %s44, %s46
    %p53 = scmp.eq.s32.totalorder %s15, 1
    %p54 = por %p52, %p53
    %p55 = scmp.ne.s32.totalorder %s46, %s47
    %p56 = scmp.eq.s32.totalorder %s15, 0
    %p57 = por %p55, %p56
    %p58 = scmp.ne.s32.totalorder %s46, %s47
    %p59 = scmp.eq.s32.totalorder %s16, 1
    %p60 = por %p58, %p59
    %p62 = scmp.ne.s32.totalorder %s47, %s61
    %p63 = scmp.eq.s32.totalorder %s16, 0
    %p64 = por %p62, %p63
    %s65 = ssub.s32 %s10, %s17
    %p66 = scmp.eq.s32.totalorder %s65, 0
    %s68 = sadd.s32 %s67, 1
    %s69 = scalar_select %p66, %s67, %s68
    %p72 = pneg %p66
    %p73 = scmp.eq.s32.totalorder %s10, 1
    %p74 = por %p72, %p73
    %p75 = scmp.ne.s32.totalorder %s67, %s70
    %p76 = scmp.eq.s32.totalorder %s10, 0
    %p77 = por %p75, %p76
    %p78 = scmp.ne.s32.totalorder %s67, %s70
    %p79 = scmp.eq.s32.totalorder %s15, 1
    %p80 = por %p78, %p79
    %p81 = scmp.ne.s32.totalorder %s70, %s71
    %p82 = scmp.eq.s32.totalorder %s15, 0
    %p83 = por %p81, %p82
    %p84 = scmp.ne.s32.totalorder %s70, %s71
    %p85 = scmp.eq.s32.totalorder %s16, 1
    %p86 = por %p84, %p85
    %p88 = scmp.ne.s32.totalorder %s71, %s87
    %p89 = scmp.eq.s32.totalorder %s16, 0
    %p90 = por %p88, %p89
    %s91 = ssub.s32 %s10, %s17
    %p92 = scmp.eq.s32.totalorder %s91, 0
    %s94 = sadd.s32 %s93, 1
    %s95 = scalar_select %p92, %s93, %s94
    %p98 = pneg %p92
    %p99 = scmp.eq.s32.totalorder %s10, 1
    %p100 = por %p98, %p99
    %p101 = scmp.ne.s32.totalorder %s93, %s96
    %p102 = scmp.eq.s32.totalorder %s10, 0
    %p103 = por %p101, %p102
    %p104 = scmp.ne.s32.totalorder %s93, %s96
    %p105 = scmp.eq.s32.totalorder %s15, 1
    %p106 = por %p104, %p105
    %p107 = scmp.ne.s32.totalorder %s96, %s97
    %p108 = scmp.eq.s32.totalorder %s15, 0
    %p109 = por %p107, %p108
    %p110 = scmp.ne.s32.totalorder %s96, %s97
    %p111 = scmp.eq.s32.totalorder %s16, 1
    %p112 = por %p110, %p111
    %p114 = scmp.ne.s32.totalorder %s97, %s113
    %p115 = scmp.eq.s32.totalorder %s16, 0
    %p116 = por %p114, %p115
    %p117 = scmp.le.s32.totalorder 1, %s10
    %p118 = scmp.lt.s32.totalorder %s10, 3
    %p119 = pnand %p117, %p118
    %p120 = pneg %p119
    // Predicated region
    $region9: #{encoder_block_forward.5} parent=5 // pred_check
      _
    $region10: #{encoder_block_forward.5} parent=5 // pred_check_branch
      %122 = sbr.rel (%p119) target = $region12
    $region11: #{encoder_block_forward.5} parent=5 // pred_region
      %s123 = ssub.s32 %s10, 1
      // Predicated region
      $region13: #{encoder_block_forward.5} parent=11 // pred_check
        %p124 = pneg %p57
      $region14: #{encoder_block_forward.5} parent=11 // pred_check_branch
        %126 = sbr.rel (%p124) target = $region16
      $region15: #{encoder_block_forward.5} parent=11 // pred_region
        _
      $region16: #{encoder_block_forward.5} parent=11 // pred_fallthru
        _
    $region12: #{encoder_block_forward.5} parent=5 // pred_fallthru
      _
    %p127 = scmp.lt.s32.totalorder %s10, 2
    // Predicated region
    $region17: #{encoder_block_forward.5} parent=5 // pred_check
      %p128 = pneg %p127
    $region18: #{encoder_block_forward.5} parent=5 // pred_check_branch
      %130 = sbr.rel (%p128) target = $region20
    $region19: #{encoder_block_forward.5} parent=5 // pred_region
      // Predicated region
      $region21: #{encoder_block_forward.5} parent=19 // pred_check
        %p131 = pneg %p30
      $region22: #{encoder_block_forward.5} parent=19 // pred_check_branch
        %133 = sbr.rel (%p131) target = $region24
      $region23: #{encoder_block_forward.5} parent=19 // pred_region
        %p134 = scmp.lt.s32.totalorder %s10, 1
        %s135 = scalar_select %p134, %s10, 1
        %s136 = smul.addr %s135, 32
        %s137 = smul.addr %s136, 4
        %s138 = scalar_lea.vmem %s0, %s137
      $region24: #{encoder_block_forward.5} parent=19 // pred_fallthru
        _
    $region20: #{encoder_block_forward.5} parent=5 // pred_fallthru
      _
    %p139 = scmp.le.s32.totalorder 1, %s10
    %p140 = scmp.lt.s32.totalorder %s10, 3
    %p141 = pnand %p139, %p140
    %p142 = pneg %p141
    // Predicated region
    $region25: #{encoder_block_forward.5} parent=5 // pred_check
      _
    $region26: #{encoder_block_forward.5} parent=5 // pred_check_branch
      %144 = sbr.rel (%p141) target = $region28
    $region27: #{encoder_block_forward.5} parent=5 // pred_region
      %s145 = ssub.s32 %s10, 1
      %p146 = scmp.lt.s32.totalorder %s15, 1
      %s147 = scalar_select %p146, %s15, 1
      %s148 = smul.addr %s147, 32
      %s149 = smul.addr %s148, 4
      %s150 = scalar_lea.vmem %s0, %s149
      %p151 = pneg %p36
      %p152 = pneg %p33
      %p153 = pneg %p57
      %p154 = pneg %p54
      %p155 = pneg %p83
      %p156 = pneg %p80
      %p157 = scmp.lt.s32.totalorder %s15, 1
      %s158 = scalar_select %p157, %s15, 1
      %s159 = smul.addr %s158, 32
      %s160 = smul.addr %s159, 8
      %s161 = scalar_lea.vmem %s2, %s160
      %p162 = pneg %p109
      %p163 = pneg %p106
      %p164 = scmp.lt.s32.totalorder %s15, 1
      %s165 = scalar_select %p164, %s15, 1
      %s166 = smul.addr %s165, 8
      %s167 = smul.addr %s166, 8
      %s168 = scalar_lea.vmem %s3, %s167
      %p169 = scmp.lt.s32.totalorder %s15, 1
      %s170 = scalar_select %p169, %s15, 1
      %s171 = smul.addr %s170, 32
      %s172 = smul.addr %s171, 4
      %s173 = scalar_lea.vmem %s0, %s172
      %p174 = scmp.lt.s32.totalorder %s15, 1
      %s175 = scalar_select %p174, %s15, 1
      %s176 = smul.addr %s175, 32
      %s177 = smul.addr %s176, 8
      %s178 = scalar_lea.vmem %s2, %s177
      %p179 = scmp.lt.s32.totalorder %s15, 1
      %s180 = scalar_select %p179, %s15, 1
      %s181 = smul.addr %s180, 8
      %s182 = smul.addr %s181, 8
      %s183 = scalar_lea.vmem %s3, %s182
      %v184 = vld [vmem:[%s1] sm:$0x1]
      %v185 = vld [vmem:[%s1 + $0x1] sm:$0x1]
      %v186 = vld [vmem:[%s173] sm:$0xf]
      %v187 = vld [vmem:[%s173 + $0x4] sm:$0xf]
      %v188 = vld [vmem:[%s173 + $0x8] sm:$0xf]
      %v189 = vld [vmem:[%s173 + $0xc] sm:$0xf]
      %v190 = vld [vmem:[%s173 + $0x10] sm:$0xf]
      %v191 = vld [vmem:[%s173 + $0x14] sm:$0xf]
      %v192 = vld [vmem:[%s173 + $0x18] sm:$0xf]
      %v193 = vld [vmem:[%s173 + $0x1c] sm:$0xf]
      %v194 = vld [vmem:[%s173 + $0x20] sm:$0xf]
      %v195 = vld [vmem:[%s173 + $0x24] sm:$0xf]
      %v196 = vld [vmem:[%s173 + $0x28] sm:$0xf]
      %v197 = vld [vmem:[%s173 + $0x2c] sm:$0xf]
      %v198 = vld [vmem:[%s173 + $0x30] sm:$0xf]
      %v199 = vld [vmem:[%s173 + $0x34] sm:$0xf]
      %v200 = vld [vmem:[%s173 + $0x38] sm:$0xf]
      %v201 = vld [vmem:[%s173 + $0x3c] sm:$0xf]
      %v202 = vld [vmem:[%s173 + $0x40] sm:$0xf]
      %v203 = vld [vmem:[%s173 + $0x44] sm:$0xf]
      %v204 = vld [vmem:[%s173 + $0x48] sm:$0xf]
      %v205 = vld [vmem:[%s173 + $0x4c] sm:$0xf]
      %v206 = vld [vmem:[%s173 + $0x50] sm:$0xf]
      %v207 = vld [vmem:[%s173 + $0x54] sm:$0xf]
      %v208 = vld [vmem:[%s173 + $0x58] sm:$0xf]
      %v209 = vld [vmem:[%s173 + $0x5c] sm:$0xf]
      %v210 = vld [vmem:[%s173 + $0x60] sm:$0xf]
      %v211 = vld [vmem:[%s173 + $0x64] sm:$0xf]
      %v212 = vld [vmem:[%s173 + $0x68] sm:$0xf]
      %v213 = vld [vmem:[%s173 + $0x6c] sm:$0xf]
      %v214 = vld [vmem:[%s173 + $0x70] sm:$0xf]
      %v215 = vld [vmem:[%s173 + $0x74] sm:$0xf]
      %v216 = vld [vmem:[%s173 + $0x78] sm:$0xf]
      %v217 = vld [vmem:[%s173 + $0x7c] sm:$0xf]
      %v218 = vunpack.c.l.bf16 %v186
      %v219 = vunpack.c.l.bf16 %v187
      %v220 = vunpack.c.l.bf16 %v188
      %v221 = vunpack.c.l.bf16 %v189
      %v222 = vunpack.c.l.bf16 %v190
      %v223 = vunpack.c.l.bf16 %v191
      %v224 = vunpack.c.l.bf16 %v192
      %v225 = vunpack.c.l.bf16 %v193
      %v226 = vunpack.c.l.bf16 %v194
      %v227 = vunpack.c.l.bf16 %v195
      %v228 = vunpack.c.l.bf16 %v196
      %v229 = vunpack.c.l.bf16 %v197
      %v230 = vunpack.c.l.bf16 %v198
      %v231 = vunpack.c.l.bf16 %v199
      %v232 = vunpack.c.l.bf16 %v200
      %v233 = vunpack.c.l.bf16 %v201
      %v234 = vunpack.c.l.bf16 %v202
      %v235 = vunpack.c.l.bf16 %v203
      %v236 = vunpack.c.l.bf16 %v204
      %v237 = vunpack.c.l.bf16 %v205
      %v238 = vunpack.c.l.bf16 %v206
      %v239 = vunpack.c.l.bf16 %v207
      %v240 = vunpack.c.l.bf16 %v208
      %v241 = vunpack.c.l.bf16 %v209
      %v242 = vunpack.c.l.bf16 %v210
      %v243 = vunpack.c.l.bf16 %v211
      %v244 = vunpack.c.l.bf16 %v212
      %v245 = vunpack.c.l.bf16 %v213
      %v246 = vunpack.c.l.bf16 %v214
      %v247 = vunpack.c.l.bf16 %v215
      %v248 = vunpack.c.l.bf16 %v216
      %v249 = vunpack.c.l.bf16 %v217
      %v250 = vlaneseq
      %v251 = vshrl.u32 %v250, 7
      %v252 = vsub.s32 0, %v251
      %v253 = vrot.slane %v184, %v252
      %v254 = vmul.f32 %v218, %v253
      %v255 = vmul.f32 %v219, %v253
      %v256 = vmul.f32 %v220, %v253
      %v257 = vmul.f32 %v221, %v253
      %v258 = vmul.f32 %v222, %v253
      %v259 = vmul.f32 %v223, %v253
      %v260 = vmul.f32 %v224, %v253
      %v261 = vmul.f32 %v225, %v253
      %v262 = vmul.f32 %v226, %v253
      %v263 = vmul.f32 %v227, %v253
      %v264 = vmul.f32 %v228, %v253
      %v265 = vmul.f32 %v229, %v253
      %v266 = vmul.f32 %v230, %v253
      %v267 = vmul.f32 %v231, %v253
      %v268 = vmul.f32 %v232, %v253
      %v269 = vmul.f32 %v233, %v253
      %v270 = vmul.f32 %v234, %v253
      %v271 = vmul.f32 %v235, %v253
      %v272 = vmul.f32 %v236, %v253
      %v273 = vmul.f32 %v237, %v253
      %v274 = vmul.f32 %v238, %v253
      %v275 = vmul.f32 %v239, %v253
      %v276 = vmul.f32 %v240, %v253
      %v277 = vmul.f32 %v241, %v253
      %v278 = vmul.f32 %v242, %v253
      %v279 = vmul.f32 %v243, %v253
      %v280 = vmul.f32 %v244, %v253
      %v281 = vmul.f32 %v245, %v253
      %v282 = vmul.f32 %v246, %v253
      %v283 = vmul.f32 %v247, %v253
      %v284 = vmul.f32 %v248, %v253
      %v285 = vmul.f32 %v249, %v253
      %v286 = vlaneseq
      %v287 = vshrl.u32 %v286, 7
      %v288 = vsub.s32 0, %v287
      %v289 = vrot.slane %v185, %v288
      %v290 = vadd.f32 %v254, %v289
      %v291 = vadd.f32 %v255, %v289
      %v292 = vadd.f32 %v256, %v289
      %v293 = vadd.f32 %v257, %v289
      %v294 = vadd.f32 %v258, %v289
      %v295 = vadd.f32 %v259, %v289
      %v296 = vadd.f32 %v260, %v289
      %v297 = vadd.f32 %v261, %v289
      %v298 = vadd.f32 %v262, %v289
      %v299 = vadd.f32 %v263, %v289
      %v300 = vadd.f32 %v264, %v289
      %v301 = vadd.f32 %v265, %v289
      %v302 = vadd.f32 %v266, %v289
      %v303 = vadd.f32 %v267, %v289
      %v304 = vadd.f32 %v268, %v289
      %v305 = vadd.f32 %v269, %v289
      %v306 = vadd.f32 %v270, %v289
      %v307 = vadd.f32 %v271, %v289
      %v308 = vadd.f32 %v272, %v289
      %v309 = vadd.f32 %v273, %v289
      %v310 = vadd.f32 %v274, %v289
      %v311 = vadd.f32 %v275, %v289
      %v312 = vadd.f32 %v276, %v289
      %v313 = vadd.f32 %v277, %v289
      %v314 = vadd.f32 %v278, %v289
      %v315 = vadd.f32 %v279, %v289
      %v316 = vadd.f32 %v280, %v289
      %v317 = vadd.f32 %v281, %v289
      %v318 = vadd.f32 %v282, %v289
      %v319 = vadd.f32 %v283, %v289
      %v320 = vadd.f32 %v284, %v289
      %v321 = vadd.f32 %v285, %v289
      %v322 = vmax.f32 %v290, 0.0
      %v323 = vmax.f32 %v291, 0.0
      %v324 = vmax.f32 %v292, 0.0
      %v325 = vmax.f32 %v293, 0.0
      %v326 = vmax.f32 %v294, 0.0
      %v327 = vmax.f32 %v295, 0.0
      %v328 = vmax.f32 %v296, 0.0
      %v329 = vmax.f32 %v297, 0.0
      %v330 = vmax.f32 %v298, 0.0
      %v331 = vmax.f32 %v299, 0.0
      %v332 = vmax.f32 %v300, 0.0
      %v333 = vmax.f32 %v301, 0.0
      %v334 = vmax.f32 %v302, 0.0
      %v335 = vmax.f32 %v303, 0.0
      %v336 = vmax.f32 %v304, 0.0
      %v337 = vmax.f32 %v305, 0.0
      %v338 = vmax.f32 %v306, 0.0
      %v339 = vmax.f32 %v307, 0.0
      %v340 = vmax.f32 %v308, 0.0
      %v341 = vmax.f32 %v309, 0.0
      %v342 = vmax.f32 %v310, 0.0
      %v343 = vmax.f32 %v311, 0.0
      %v344 = vmax.f32 %v312, 0.0
      %v345 = vmax.f32 %v313, 0.0
      %v346 = vmax.f32 %v314, 0.0
      %v347 = vmax.f32 %v315, 0.0
      %v348 = vmax.f32 %v316, 0.0
      %v349 = vmax.f32 %v317, 0.0
      %v350 = vmax.f32 %v318, 0.0
      %v351 = vmax.f32 %v319, 0.0
      %v352 = vmax.f32 %v320, 0.0
      %v353 = vmax.f32 %v321, 0.0
      %354 = vst [vmem:[%s178] sm:$0xff] %v322
      %355 = vst [vmem:[%s178 + $0x8] sm:$0xff] %v323
      %356 = vst [vmem:[%s178 + $0x10] sm:$0xff] %v324
      %357 = vst [vmem:[%s178 + $0x18] sm:$0xff] %v325
      %358 = vst [vmem:[%s178 + $0x20] sm:$0xff] %v326
      %359 = vst [vmem:[%s178 + $0x28] sm:$0xff] %v327
      %360 = vst [vmem:[%s178 + $0x30] sm:$0xff] %v328
      %361 = vst [vmem:[%s178 + $0x38] sm:$0xff] %v329
      %362 = vst [vmem:[%s178 + $0x40] sm:$0xff] %v330
      %363 = vst [vmem:[%s178 + $0x48] sm:$0xff] %v331
      %364 = vst [vmem:[%s178 + $0x50] sm:$0xff] %v332
      %365 = vst [vmem:[%s178 + $0x58] sm:$0xff] %v333
      %366 = vst [vmem:[%s178 + $0x60] sm:$0xff] %v334
      %367 = vst [vmem:[%s178 + $0x68] sm:$0xff] %v335
      %368 = vst [vmem:[%s178 + $0x70] sm:$0xff] %v336
      %369 = vst [vmem:[%s178 + $0x78] sm:$0xff] %v337
      %370 = vst [vmem:[%s178 + $0x80] sm:$0xff] %v338
      %371 = vst [vmem:[%s178 + $0x88] sm:$0xff] %v339
      %372 = vst [vmem:[%s178 + $0x90] sm:$0xff] %v340
      %373 = vst [vmem:[%s178 + $0x98] sm:$0xff] %v341
      %374 = vst [vmem:[%s178 + $0xa0] sm:$0xff] %v342
      %375 = vst [vmem:[%s178 + $0xa8] sm:$0xff] %v343
      %376 = vst [vmem:[%s178 + $0xb0] sm:$0xff] %v344
      %377 = vst [vmem:[%s178 + $0xb8] sm:$0xff] %v345
      %378 = vst [vmem:[%s178 + $0xc0] sm:$0xff] %v346
      %379 = vst [vmem:[%s178 + $0xc8] sm:$0xff] %v347
      %380 = vst [vmem:[%s178 + $0xd0] sm:$0xff] %v348
      %381 = vst [vmem:[%s178 + $0xd8] sm:$0xff] %v349
      %382 = vst [vmem:[%s178 + $0xe0] sm:$0xff] %v350
      %383 = vst [vmem:[%s178 + $0xe8] sm:$0xff] %v351
      %384 = vst [vmem:[%s178 + $0xf0] sm:$0xff] %v352
      %385 = vst [vmem:[%s178 + $0xf8] sm:$0xff] %v353
      %v387 = vunpack.c.l.s4 1966171168
      %v388 = vunpack.c.0.s8 %v387
      %v389 = vlaneseq
      %v390 = vshrl.u32 %v389, 7
      %v391 = vsub.s32 %v388, %v390
      %v392 = vrot.slane %v322, %v391
      %v394 = vunpack.c.l.s4 1966171168
      %v395 = vunpack.c.0.s8 %v394
      %v396 = vlaneseq
      %v397 = vshrl.u32 %v396, 7
      %v398 = vsub.s32 %v395, %v397
      %v399 = vrot.slane %v323, %v398
      %v401 = vunpack.c.l.s4 1966171168
      %v402 = vunpack.c.0.s8 %v401
      %v403 = vlaneseq
      %v404 = vshrl.u32 %v403, 7
      %v405 = vsub.s32 %v402, %v404
      %v406 = vrot.slane %v324, %v405
      %v408 = vunpack.c.l.s4 1966171168
      %v409 = vunpack.c.0.s8 %v408
      %v410 = vlaneseq
      %v411 = vshrl.u32 %v410, 7
      %v412 = vsub.s32 %v409, %v411
      %v413 = vrot.slane %v325, %v412
      %v415 = vunpack.c.l.s4 1966171168
      %v416 = vunpack.c.0.s8 %v415
      %v417 = vlaneseq
      %v418 = vshrl.u32 %v417, 7
      %v419 = vsub.s32 %v416, %v418
      %v420 = vrot.slane %v326, %v419
      %v422 = vunpack.c.l.s4 1966171168
      %v423 = vunpack.c.0.s8 %v422
      %v424 = vlaneseq
      %v425 = vshrl.u32 %v424, 7
      %v426 = vsub.s32 %v423, %v425
      %v427 = vrot.slane %v327, %v426
      %v429 = vunpack.c.l.s4 1966171168
      %v430 = vunpack.c.0.s8 %v429
      %v431 = vlaneseq
      %v432 = vshrl.u32 %v431, 7
      %v433 = vsub.s32 %v430, %v432
      %v434 = vrot.slane %v328, %v433
      %v436 = vunpack.c.l.s4 1966171168
      %v437 = vunpack.c.0.s8 %v436
      %v438 = vlaneseq
      %v439 = vshrl.u32 %v438, 7
      %v440 = vsub.s32 %v437, %v439
      %v441 = vrot.slane %v329, %v440
      %v443 = vunpack.c.l.s4 1966171168
      %v444 = vunpack.c.0.s8 %v443
      %v445 = vlaneseq
      %v446 = vshrl.u32 %v445, 7
      %v447 = vsub.s32 %v444, %v446
      %v448 = vrot.slane %v330, %v447
      %v450 = vunpack.c.l.s4 1966171168
      %v451 = vunpack.c.0.s8 %v450
      %v452 = vlaneseq
      %v453 = vshrl.u32 %v452, 7
      %v454 = vsub.s32 %v451, %v453
      %v455 = vrot.slane %v331, %v454
      %v457 = vunpack.c.l.s4 1966171168
      %v458 = vunpack.c.0.s8 %v457
      %v459 = vlaneseq
      %v460 = vshrl.u32 %v459, 7
      %v461 = vsub.s32 %v458, %v460
      %v462 = vrot.slane %v332, %v461
      %v464 = vunpack.c.l.s4 1966171168
      %v465 = vunpack.c.0.s8 %v464
      %v466 = vlaneseq
      %v467 = vshrl.u32 %v466, 7
      %v468 = vsub.s32 %v465, %v467
      %v469 = vrot.slane %v333, %v468
      %v471 = vunpack.c.l.s4 1966171168
      %v472 = vunpack.c.0.s8 %v471
      %v473 = vlaneseq
      %v474 = vshrl.u32 %v473, 7
      %v475 = vsub.s32 %v472, %v474
      %v476 = vrot.slane %v334, %v475
      %v478 = vunpack.c.l.s4 1966171168
      %v479 = vunpack.c.0.s8 %v478
      %v480 = vlaneseq
      %v481 = vshrl.u32 %v480, 7
      %v482 = vsub.s32 %v479, %v481
      %v483 = vrot.slane %v335, %v482
      %v485 = vunpack.c.l.s4 1966171168
      %v486 = vunpack.c.0.s8 %v485
      %v487 = vlaneseq
      %v488 = vshrl.u32 %v487, 7
      %v489 = vsub.s32 %v486, %v488
      %v490 = vrot.slane %v336, %v489
      %v492 = vunpack.c.l.s4 1966171168
      %v493 = vunpack.c.0.s8 %v492
      %v494 = vlaneseq
      %v495 = vshrl.u32 %v494, 7
      %v496 = vsub.s32 %v493, %v495
      %v497 = vrot.slane %v337, %v496
      %v499 = vunpack.c.l.s4 1966171168
      %v500 = vunpack.c.0.s8 %v499
      %v501 = vlaneseq
      %v502 = vshrl.u32 %v501, 7
      %v503 = vsub.s32 %v500, %v502
      %v504 = vrot.slane %v338, %v503
      %v506 = vunpack.c.l.s4 1966171168
      %v507 = vunpack.c.0.s8 %v506
      %v508 = vlaneseq
      %v509 = vshrl.u32 %v508, 7
      %v510 = vsub.s32 %v507, %v509
      %v511 = vrot.slane %v339, %v510
      %v513 = vunpack.c.l.s4 1966171168
      %v514 = vunpack.c.0.s8 %v513
      %v515 = vlaneseq
      %v516 = vshrl.u32 %v515, 7
      %v517 = vsub.s32 %v514, %v516
      %v518 = vrot.slane %v340, %v517
      %v520 = vunpack.c.l.s4 1966171168
      %v521 = vunpack.c.0.s8 %v520
      %v522 = vlaneseq
      %v523 = vshrl.u32 %v522, 7
      %v524 = vsub.s32 %v521, %v523
      %v525 = vrot.slane %v341, %v524
      %v527 = vunpack.c.l.s4 1966171168
      %v528 = vunpack.c.0.s8 %v527
      %v529 = vlaneseq
      %v530 = vshrl.u32 %v529, 7
      %v531 = vsub.s32 %v528, %v530
      %v532 = vrot.slane %v342, %v531
      %v534 = vunpack.c.l.s4 1966171168
      %v535 = vunpack.c.0.s8 %v534
      %v536 = vlaneseq
      %v537 = vshrl.u32 %v536, 7
      %v538 = vsub.s32 %v535, %v537
      %v539 = vrot.slane %v343, %v538
      %v541 = vunpack.c.l.s4 1966171168
      %v542 = vunpack.c.0.s8 %v541
      %v543 = vlaneseq
      %v544 = vshrl.u32 %v543, 7
      %v545 = vsub.s32 %v542, %v544
      %v546 = vrot.slane %v344, %v545
      %v548 = vunpack.c.l.s4 1966171168
      %v549 = vunpack.c.0.s8 %v548
      %v550 = vlaneseq
      %v551 = vshrl.u32 %v550, 7
      %v552 = vsub.s32 %v549, %v551
      %v553 = vrot.slane %v345, %v552
      %v555 = vunpack.c.l.s4 1966171168
      %v556 = vunpack.c.0.s8 %v555
      %v557 = vlaneseq
      %v558 = vshrl.u32 %v557, 7
      %v559 = vsub.s32 %v556, %v558
      %v560 = vrot.slane %v346, %v559
      %v562 = vunpack.c.l.s4 1966171168
      %v563 = vunpack.c.0.s8 %v562
      %v564 = vlaneseq
      %v565 = vshrl.u32 %v564, 7
      %v566 = vsub.s32 %v563, %v565
      %v567 = vrot.slane %v347, %v566
      %v569 = vunpack.c.l.s4 1966171168
      %v570 = vunpack.c.0.s8 %v569
      %v571 = vlaneseq
      %v572 = vshrl.u32 %v571, 7
      %v573 = vsub.s32 %v570, %v572
      %v574 = vrot.slane %v348, %v573
      %v576 = vunpack.c.l.s4 1966171168
      %v577 = vunpack.c.0.s8 %v576
      %v578 = vlaneseq
      %v579 = vshrl.u32 %v578, 7
      %v580 = vsub.s32 %v577, %v579
      %v581 = vrot.slane %v349, %v580
      %v583 = vunpack.c.l.s4 1966171168
      %v584 = vunpack.c.0.s8 %v583
      %v585 = vlaneseq
      %v586 = vshrl.u32 %v585, 7
      %v587 = vsub.s32 %v584, %v586
      %v588 = vrot.slane %v350, %v587
      %v590 = vunpack.c.l.s4 1966171168
      %v591 = vunpack.c.0.s8 %v590
      %v592 = vlaneseq
      %v593 = vshrl.u32 %v592, 7
      %v594 = vsub.s32 %v591, %v593
      %v595 = vrot.slane %v351, %v594
      %v597 = vunpack.c.l.s4 1966171168
      %v598 = vunpack.c.0.s8 %v597
      %v599 = vlaneseq
      %v600 = vshrl.u32 %v599, 7
      %v601 = vsub.s32 %v598, %v600
      %v602 = vrot.slane %v352, %v601
      %v604 = vunpack.c.l.s4 1966171168
      %v605 = vunpack.c.0.s8 %v604
      %v606 = vlaneseq
      %v607 = vshrl.u32 %v606, 7
      %v608 = vsub.s32 %v605, %v607
      %v609 = vrot.slane %v353, %v608
      %v642 = vrot.slane %v392, 4
      %v643 = vrot.slane %v399, 4
      %v644 = vrot.slane %v406, 4
      %v645 = vrot.slane %v413, 4
      %v646 = vrot.slane %v420, 4
      %v647 = vrot.slane %v427, 4
      %v648 = vrot.slane %v434, 4
      %v649 = vrot.slane %v441, 4
      %v650 = vrot.slane %v448, 4
      %v651 = vrot.slane %v455, 4
      %v652 = vrot.slane %v462, 4
      %v653 = vrot.slane %v469, 4
      %v654 = vrot.slane %v476, 4
      %v655 = vrot.slane %v483, 4
      %v656 = vrot.slane %v490, 4
      %v657 = vrot.slane %v497, 4
      %v658 = vrot.slane %v504, 4
      %v659 = vrot.slane %v511, 4
      %v660 = vrot.slane %v518, 4
      %v661 = vrot.slane %v525, 4
      %v662 = vrot.slane %v532, 4
      %v663 = vrot.slane %v539, 4
      %v664 = vrot.slane %v546, 4
      %v665 = vrot.slane %v553, 4
      %v666 = vrot.slane %v560, 4
      %v667 = vrot.slane %v567, 4
      %v668 = vrot.slane %v574, 4
      %v669 = vrot.slane %v581, 4
      %v670 = vrot.slane %v588, 4
      %v671 = vrot.slane %v595, 4
      %v672 = vrot.slane %v602, 4
      %v673 = vrot.slane %v609, 4
      %v706 = vmax.f32 %v392, %v642
      %v707 = vmax.f32 %v399, %v643
      %v708 = vmax.f32 %v406, %v644
      %v709 = vmax.f32 %v413, %v645
      %v710 = vmax.f32 %v420, %v646
      %v711 = vmax.f32 %v427, %v647
      %v712 = vmax.f32 %v434, %v648
      %v713 = vmax.f32 %v441, %v649
      %v714 = vmax.f32 %v448, %v650
      %v715 = vmax.f32 %v455, %v651
      %v716 = vmax.f32 %v462, %v652
      %v717 = vmax.f32 %v469, %v653
      %v718 = vmax.f32 %v476, %v654
      %v719 = vmax.f32 %v483, %v655
      %v720 = vmax.f32 %v490, %v656
      %v721 = vmax.f32 %v497, %v657
      %v722 = vmax.f32 %v504, %v658
      %v723 = vmax.f32 %v511, %v659
      %v724 = vmax.f32 %v518, %v660
      %v725 = vmax.f32 %v525, %v661
      %v726 = vmax.f32 %v532, %v662
      %v727 = vmax.f32 %v539, %v663
      %v728 = vmax.f32 %v546, %v664
      %v729 = vmax.f32 %v553, %v665
      %v730 = vmax.f32 %v560, %v666
      %v731 = vmax.f32 %v567, %v667
      %v732 = vmax.f32 %v574, %v668
      %v733 = vmax.f32 %v581, %v669
      %v734 = vmax.f32 %v588, %v670
      %v735 = vmax.f32 %v595, %v671
      %v736 = vmax.f32 %v602, %v672
      %v737 = vmax.f32 %v609, %v673
      %v770 = vcombine.low %v706, %v707
      %v771 = vcombine.low %v708, %v709
      %v772 = vcombine.low %v710, %v711
      %v773 = vcombine.low %v712, %v713
      %v774 = vcombine.low %v714, %v715
      %v775 = vcombine.low %v716, %v717
      %v776 = vcombine.low %v718, %v719
      %v777 = vcombine.low %v720, %v721
      %v778 = vcombine.low %v722, %v723
      %v779 = vcombine.low %v724, %v725
      %v780 = vcombine.low %v726, %v727
      %v781 = vcombine.low %v728, %v729
      %v782 = vcombine.low %v730, %v731
      %v783 = vcombine.low %v732, %v733
      %v784 = vcombine.low %v734, %v735
      %v785 = vcombine.low %v736, %v737
      %v802 = vmax.f32 %v770, %v771
      %v803 = vmax.f32 %v772, %v773
      %v804 = vmax.f32 %v774, %v775
      %v805 = vmax.f32 %v776, %v777
      %v806 = vmax.f32 %v778, %v779
      %v807 = vmax.f32 %v780, %v781
      %v808 = vmax.f32 %v782, %v783
      %v809 = vmax.f32 %v784, %v785
      %v818 = vcombine.low %v802, %v803
      %v819 = vcombine.low %v804, %v805
      %v820 = vcombine.low %v806, %v807
      %v821 = vcombine.low %v808, %v809
      %v823 = vunpack.c.l.s4 1966171168
      %v824 = vunpack.c.0.s8 %v823
      %v825 = vlaneseq
      %v826 = vshrl.u32 %v825, 7
      %v827 = vsub.s32 %v824, %v826
      %v828 = vrot.slane %v818, %v827
      %v830 = vunpack.c.l.s4 1966171168
      %v831 = vunpack.c.0.s8 %v830
      %v832 = vlaneseq
      %v833 = vshrl.u32 %v832, 7
      %v834 = vsub.s32 %v831, %v833
      %v835 = vrot.slane %v819, %v834
      %v837 = vunpack.c.l.s4 1966171168
      %v838 = vunpack.c.0.s8 %v837
      %v839 = vlaneseq
      %v840 = vshrl.u32 %v839, 7
      %v841 = vsub.s32 %v838, %v840
      %v842 = vrot.slane %v820, %v841
      %v844 = vunpack.c.l.s4 1966171168
      %v845 = vunpack.c.0.s8 %v844
      %v846 = vlaneseq
      %v847 = vshrl.u32 %v846, 7
      %v848 = vsub.s32 %v845, %v847
      %v849 = vrot.slane %v821, %v848
      %v850 = vcombine.low %v828, %v835
      %v851 = vcombine.low %v842, %v849
      %v853 = vunpack.c.l.s4 1966171168
      %v854 = vunpack.c.0.s8 %v853
      %v855 = vlaneseq
      %v856 = vshrl.u32 %v855, 7
      %v857 = vsub.s32 %v854, %v856
      %v858 = vrot.slane %v850, %v857
      %v860 = vunpack.c.l.s4 1966171168
      %v861 = vunpack.c.0.s8 %v860
      %v862 = vlaneseq
      %v863 = vshrl.u32 %v862, 7
      %v864 = vsub.s32 %v861, %v863
      %v865 = vrot.slane %v851, %v864
      %v866 = vcombine.low %v858, %v865
      %867 = vst [vmem:[%s183] ss:$8 sm:$0xf] %v866
      %868 = vst [vmem:[%s183] ss:$8 sm:$0xf0] %v866
      %v869 = vrot.slane %v802, 1
      %v870 = vrot.slane %v803, 1
      %v871 = vrot.slane %v804, 1
      %v872 = vrot.slane %v805, 1
      %v873 = vrot.slane %v806, 1
      %v874 = vrot.slane %v807, 1
      %v875 = vrot.slane %v808, 1
      %v876 = vrot.slane %v809, 1
      %v893 = vcombine.low %v869, %v870
      %v894 = vcombine.low %v871, %v872
      %v895 = vcombine.low %v873, %v874
      %v896 = vcombine.low %v875, %v876
      %v898 = vunpack.c.l.s4 1966171168
      %v899 = vunpack.c.0.s8 %v898
      %v900 = vlaneseq
      %v901 = vshrl.u32 %v900, 7
      %v902 = vsub.s32 %v899, %v901
      %v903 = vrot.slane %v893, %v902
      %v905 = vunpack.c.l.s4 1966171168
      %v906 = vunpack.c.0.s8 %v905
      %v907 = vlaneseq
      %v908 = vshrl.u32 %v907, 7
      %v909 = vsub.s32 %v906, %v908
      %v910 = vrot.slane %v894, %v909
      %v912 = vunpack.c.l.s4 1966171168
      %v913 = vunpack.c.0.s8 %v912
      %v914 = vlaneseq
      %v915 = vshrl.u32 %v914, 7
      %v916 = vsub.s32 %v913, %v915
      %v917 = vrot.slane %v895, %v916
      %v919 = vunpack.c.l.s4 1966171168
      %v920 = vunpack.c.0.s8 %v919
      %v921 = vlaneseq
      %v922 = vshrl.u32 %v921, 7
      %v923 = vsub.s32 %v920, %v922
      %v924 = vrot.slane %v896, %v923
      %v925 = vcombine.low %v903, %v910
      %v926 = vcombine.low %v917, %v924
      %v928 = vunpack.c.l.s4 1966171168
      %v929 = vunpack.c.0.s8 %v928
      %v930 = vlaneseq
      %v931 = vshrl.u32 %v930, 7
      %v932 = vsub.s32 %v929, %v931
      %v933 = vrot.slane %v925, %v932
      %v935 = vunpack.c.l.s4 1966171168
      %v936 = vunpack.c.0.s8 %v935
      %v937 = vlaneseq
      %v938 = vshrl.u32 %v937, 7
      %v939 = vsub.s32 %v936, %v938
      %v940 = vrot.slane %v926, %v939
      %v941 = vcombine.low %v933, %v940
      %s942 = scalar_lea.vmem %s183, 1
      %943 = vst [vmem:[%s942] ss:$8 sm:$0xf] %v941
      %944 = vst [vmem:[%s942] ss:$8 sm:$0xf0] %v941
      %v945 = vrot.slane %v802, 2
      %v946 = vrot.slane %v803, 2
      %v947 = vrot.slane %v804, 2
      %v948 = vrot.slane %v805, 2
      %v949 = vrot.slane %v806, 2
      %v950 = vrot.slane %v807, 2
      %v951 = vrot.slane %v808, 2
      %v952 = vrot.slane %v809, 2
      %v969 = vcombine.low %v945, %v946
      %v970 = vcombine.low %v947, %v948
      %v971 = vcombine.low %v949, %v950
      %v972 = vcombine.low %v951, %v952
      %v974 = vunpack.c.l.s4 1966171168
      %v975 = vunpack.c.0.s8 %v974
      %v976 = vlaneseq
      %v977 = vshrl.u32 %v976, 7
      %v978 = vsub.s32 %v975, %v977
      %v979 = vrot.slane %v969, %v978
      %v981 = vunpack.c.l.s4 1966171168
      %v982 = vunpack.c.0.s8 %v981
      %v983 = vlaneseq
      %v984 = vshrl.u32 %v983, 7
      %v985 = vsub.s32 %v982, %v984
      %v986 = vrot.slane %v970, %v985
      %v988 = vunpack.c.l.s4 1966171168
      %v989 = vunpack.c.0.s8 %v988
      %v990 = vlaneseq
      %v991 = vshrl.u32 %v990, 7
      %v992 = vsub.s32 %v989, %v991
      %v993 = vrot.slane %v971, %v992
      %v995 = vunpack.c.l.s4 1966171168
      %v996 = vunpack.c.0.s8 %v995
      %v997 = vlaneseq
      %v998 = vshrl.u32 %v997, 7
      %v999 = vsub.s32 %v996, %v998
      %v1000 = vrot.slane %v972, %v999
      %v1001 = vcombine.low %v979, %v986
      %v1002 = vcombine.low %v993, %v1000
      %v1004 = vunpack.c.l.s4 1966171168
      %v1005 = vunpack.c.0.s8 %v1004
      %v1006 = vlaneseq
      %v1007 = vshrl.u32 %v1006, 7
      %v1008 = vsub.s32 %v1005, %v1007
      %v1009 = vrot.slane %v1001, %v1008
      %v1011 = vunpack.c.l.s4 1966171168
      %v1012 = vunpack.c.0.s8 %v1011
      %v1013 = vlaneseq
      %v1014 = vshrl.u32 %v1013, 7
      %v1015 = vsub.s32 %v1012, %v1014
      %v1016 = vrot.slane %v1002, %v1015
      %v1017 = vcombine.low %v1009, %v1016
      %s1018 = scalar_lea.vmem %s183, 2
      %1019 = vst [vmem:[%s1018] ss:$8 sm:$0xf] %v1017
      %1020 = vst [vmem:[%s1018] ss:$8 sm:$0xf0] %v1017
      %v1021 = vrot.slane %v802, 3
      %v1022 = vrot.slane %v803, 3
      %v1023 = vrot.slane %v804, 3
      %v1024 = vrot.slane %v805, 3
      %v1025 = vrot.slane %v806, 3
      %v1026 = vrot.slane %v807, 3
      %v1027 = vrot.slane %v808, 3
      %v1028 = vrot.slane %v809, 3
      %v1045 = vcombine.low %v1021, %v1022
      %v1046 = vcombine.low %v1023, %v1024
      %v1047 = vcombine.low %v1025, %v1026
      %v1048 = vcombine.low %v1027, %v1028
      %v1050 = vunpack.c.l.s4 1966171168
      %v1051 = vunpack.c.0.s8 %v1050
      %v1052 = vlaneseq
      %v1053 = vshrl.u32 %v1052, 7
      %v1054 = vsub.s32 %v1051, %v1053
      %v1055 = vrot.slane %v1045, %v1054
      %v1057 = vunpack.c.l.s4 1966171168
      %v1058 = vunpack.c.0.s8 %v1057
      %v1059 = vlaneseq
      %v1060 = vshrl.u32 %v1059, 7
      %v1061 = vsub.s32 %v1058, %v1060
      %v1062 = vrot.slane %v1046, %v1061
      %v1064 = vunpack.c.l.s4 1966171168
      %v1065 = vunpack.c.0.s8 %v1064
      %v1066 = vlaneseq
      %v1067 = vshrl.u32 %v1066, 7
      %v1068 = vsub.s32 %v1065, %v1067
      %v1069 = vrot.slane %v1047, %v1068
      %v1071 = vunpack.c.l.s4 1966171168
      %v1072 = vunpack.c.0.s8 %v1071
      %v1073 = vlaneseq
      %v1074 = vshrl.u32 %v1073, 7
      %v1075 = vsub.s32 %v1072, %v1074
      %v1076 = vrot.slane %v1048, %v1075
      %v1077 = vcombine.low %v1055, %v1062
      %v1078 = vcombine.low %v1069, %v1076
      %v1080 = vunpack.c.l.s4 1966171168
      %v1081 = vunpack.c.0.s8 %v1080
      %v1082 = vlaneseq
      %v1083 = vshrl.u32 %v1082, 7
      %v1084 = vsub.s32 %v1081, %v1083
      %v1085 = vrot.slane %v1077, %v1084
      %v1087 = vunpack.c.l.s4 1966171168
      %v1088 = vunpack.c.0.s8 %v1087
      %v1089 = vlaneseq
      %v1090 = vshrl.u32 %v1089, 7
      %v1091 = vsub.s32 %v1088, %v1090
      %v1092 = vrot.slane %v1078, %v1091
      %v1093 = vcombine.low %v1085, %v1092
      %s1094 = scalar_lea.vmem %s183, 3
      %1095 = vst [vmem:[%s1094] ss:$8 sm:$0xf] %v1093
      %1096 = vst [vmem:[%s1094] ss:$8 sm:$0xf0] %v1093
      %v1097 = vrot.slane %v802, 4
      %v1098 = vrot.slane %v803, 4
      %v1099 = vrot.slane %v804, 4
      %v1100 = vrot.slane %v805, 4
      %v1101 = vrot.slane %v806, 4
      %v1102 = vrot.slane %v807, 4
      %v1103 = vrot.slane %v808, 4
      %v1104 = vrot.slane %v809, 4
      %v1121 = vcombine.low %v1097, %v1098
      %v1122 = vcombine.low %v1099, %v1100
      %v1123 = vcombine.low %v1101, %v1102
      %v1124 = vcombine.low %v1103, %v1104
      %v1126 = vunpack.c.l.s4 1966171168
      %v1127 = vunpack.c.0.s8 %v1126
      %v1128 = vlaneseq
      %v1129 = vshrl.u32 %v1128, 7
      %v1130 = vsub.s32 %v1127, %v1129
      %v1131 = vrot.slane %v1121, %v1130
      %v1133 = vunpack.c.l.s4 1966171168
      %v1134 = vunpack.c.0.s8 %v1133
      %v1135 = vlaneseq
      %v1136 = vshrl.u32 %v1135, 7
      %v1137 = vsub.s32 %v1134, %v1136
      %v1138 = vrot.slane %v1122, %v1137
      %v1140 = vunpack.c.l.s4 1966171168
      %v1141 = vunpack.c.0.s8 %v1140
      %v1142 = vlaneseq
      %v1143 = vshrl.u32 %v1142, 7
      %v1144 = vsub.s32 %v1141, %v1143
      %v1145 = vrot.slane %v1123, %v1144
      %v1147 = vunpack.c.l.s4 1966171168
      %v1148 = vunpack.c.0.s8 %v1147
      %v1149 = vlaneseq
      %v1150 = vshrl.u32 %v1149, 7
      %v1151 = vsub.s32 %v1148, %v1150
      %v1152 = vrot.slane %v1124, %v1151
      %v1153 = vcombine.low %v1131, %v1138
      %v1154 = vcombine.low %v1145, %v1152
      %v1156 = vunpack.c.l.s4 1966171168
      %v1157 = vunpack.c.0.s8 %v1156
      %v1158 = vlaneseq
      %v1159 = vshrl.u32 %v1158, 7
      %v1160 = vsub.s32 %v1157, %v1159
      %v1161 = vrot.slane %v1153, %v1160
      %v1163 = vunpack.c.l.s4 1966171168
      %v1164 = vunpack.c.0.s8 %v1163
      %v1165 = vlaneseq
      %v1166 = vshrl.u32 %v1165, 7
      %v1167 = vsub.s32 %v1164, %v1166
      %v1168 = vrot.slane %v1154, %v1167
      %v1169 = vcombine.low %v1161, %v1168
      %s1170 = scalar_lea.vmem %s183, 4
      %1171 = vst [vmem:[%s1170] ss:$8 sm:$0xf] %v1169
      %1172 = vst [vmem:[%s1170] ss:$8 sm:$0xf0] %v1169
      %v1173 = vrot.slane %v802, 5
      %v1174 = vrot.slane %v803, 5
      %v1175 = vrot.slane %v804, 5
      %v1176 = vrot.slane %v805, 5
      %v1177 = vrot.slane %v806, 5
      %v1178 = vrot.slane %v807, 5
      %v1179 = vrot.slane %v808, 5
      %v1180 = vrot.slane %v809, 5
      %v1197 = vcombine.low %v1173, %v1174
      %v1198 = vcombine.low %v1175, %v1176
      %v1199 = vcombine.low %v1177, %v1178
      %v1200 = vcombine.low %v1179, %v1180
      %v1202 = vunpack.c.l.s4 1966171168
      %v1203 = vunpack.c.0.s8 %v1202
      %v1204 = vlaneseq
      %v1205 = vshrl.u32 %v1204, 7
      %v1206 = vsub.s32 %v1203, %v1205
      %v1207 = vrot.slane %v1197, %v1206
      %v1209 = vunpack.c.l.s4 1966171168
      %v1210 = vunpack.c.0.s8 %v1209
      %v1211 = vlaneseq
      %v1212 = vshrl.u32 %v1211, 7
      %v1213 = vsub.s32 %v1210, %v1212
      %v1214 = vrot.slane %v1198, %v1213
      %v1216 = vunpack.c.l.s4 1966171168
      %v1217 = vunpack.c.0.s8 %v1216
      %v1218 = vlaneseq
      %v1219 = vshrl.u32 %v1218, 7
      %v1220 = vsub.s32 %v1217, %v1219
      %v1221 = vrot.slane %v1199, %v1220
      %v1223 = vunpack.c.l.s4 1966171168
      %v1224 = vunpack.c.0.s8 %v1223
      %v1225 = vlaneseq
      %v1226 = vshrl.u32 %v1225, 7
      %v1227 = vsub.s32 %v1224, %v1226
      %v1228 = vrot.slane %v1200, %v1227
      %v1229 = vcombine.low %v1207, %v1214
      %v1230 = vcombine.low %v1221, %v1228
      %v1232 = vunpack.c.l.s4 1966171168
      %v1233 = vunpack.c.0.s8 %v1232
      %v1234 = vlaneseq
      %v1235 = vshrl.u32 %v1234, 7
      %v1236 = vsub.s32 %v1233, %v1235
      %v1237 = vrot.slane %v1229, %v1236
      %v1239 = vunpack.c.l.s4 1966171168
      %v1240 = vunpack.c.0.s8 %v1239
      %v1241 = vlaneseq
      %v1242 = vshrl.u32 %v1241, 7
      %v1243 = vsub.s32 %v1240, %v1242
      %v1244 = vrot.slane %v1230, %v1243
      %v1245 = vcombine.low %v1237, %v1244
      %s1246 = scalar_lea.vmem %s183, 5
      %1247 = vst [vmem:[%s1246] ss:$8 sm:$0xf] %v1245
      %1248 = vst [vmem:[%s1246] ss:$8 sm:$0xf0] %v1245
      %v1249 = vrot.slane %v802, 6
      %v1250 = vrot.slane %v803, 6
      %v1251 = vrot.slane %v804, 6
      %v1252 = vrot.slane %v805, 6
      %v1253 = vrot.slane %v806, 6
      %v1254 = vrot.slane %v807, 6
      %v1255 = vrot.slane %v808, 6
      %v1256 = vrot.slane %v809, 6
      %v1273 = vcombine.low %v1249, %v1250
      %v1274 = vcombine.low %v1251, %v1252
      %v1275 = vcombine.low %v1253, %v1254
      %v1276 = vcombine.low %v1255, %v1256
      %v1278 = vunpack.c.l.s4 1966171168
      %v1279 = vunpack.c.0.s8 %v1278
      %v1280 = vlaneseq
      %v1281 = vshrl.u32 %v1280, 7
      %v1282 = vsub.s32 %v1279, %v1281
      %v1283 = vrot.slane %v1273, %v1282
      %v1285 = vunpack.c.l.s4 1966171168
      %v1286 = vunpack.c.0.s8 %v1285
      %v1287 = vlaneseq
      %v1288 = vshrl.u32 %v1287, 7
      %v1289 = vsub.s32 %v1286, %v1288
      %v1290 = vrot.slane %v1274, %v1289
      %v1292 = vunpack.c.l.s4 1966171168
      %v1293 = vunpack.c.0.s8 %v1292
      %v1294 = vlaneseq
      %v1295 = vshrl.u32 %v1294, 7
      %v1296 = vsub.s32 %v1293, %v1295
      %v1297 = vrot.slane %v1275, %v1296
      %v1299 = vunpack.c.l.s4 1966171168
      %v1300 = vunpack.c.0.s8 %v1299
      %v1301 = vlaneseq
      %v1302 = vshrl.u32 %v1301, 7
      %v1303 = vsub.s32 %v1300, %v1302
      %v1304 = vrot.slane %v1276, %v1303
      %v1305 = vcombine.low %v1283, %v1290
      %v1306 = vcombine.low %v1297, %v1304
      %v1308 = vunpack.c.l.s4 1966171168
      %v1309 = vunpack.c.0.s8 %v1308
      %v1310 = vlaneseq
      %v1311 = vshrl.u32 %v1310, 7
      %v1312 = vsub.s32 %v1309, %v1311
      %v1313 = vrot.slane %v1305, %v1312
      %v1315 = vunpack.c.l.s4 1966171168
      %v1316 = vunpack.c.0.s8 %v1315
      %v1317 = vlaneseq
      %v1318 = vshrl.u32 %v1317, 7
      %v1319 = vsub.s32 %v1316, %v1318
      %v1320 = vrot.slane %v1306, %v1319
      %v1321 = vcombine.low %v1313, %v1320
      %s1322 = scalar_lea.vmem %s183, 6
      %1323 = vst [vmem:[%s1322] ss:$8 sm:$0xf] %v1321
      %1324 = vst [vmem:[%s1322] ss:$8 sm:$0xf0] %v1321
      %v1325 = vrot.slane %v802, 7
      %v1326 = vrot.slane %v803, 7
      %v1327 = vrot.slane %v804, 7
      %v1328 = vrot.slane %v805, 7
      %v1329 = vrot.slane %v806, 7
      %v1330 = vrot.slane %v807, 7
      %v1331 = vrot.slane %v808, 7
      %v1332 = vrot.slane %v809, 7
      %v1349 = vcombine.low %v1325, %v1326
      %v1350 = vcombine.low %v1327, %v1328
      %v1351 = vcombine.low %v1329, %v1330
      %v1352 = vcombine.low %v1331, %v1332
      %v1354 = vunpack.c.l.s4 1966171168
      %v1355 = vunpack.c.0.s8 %v1354
      %v1356 = vlaneseq
      %v1357 = vshrl.u32 %v1356, 7
      %v1358 = vsub.s32 %v1355, %v1357
      %v1359 = vrot.slane %v1349, %v1358
      %v1361 = vunpack.c.l.s4 1966171168
      %v1362 = vunpack.c.0.s8 %v1361
      %v1363 = vlaneseq
      %v1364 = vshrl.u32 %v1363, 7
      %v1365 = vsub.s32 %v1362, %v1364
      %v1366 = vrot.slane %v1350, %v1365
      %v1368 = vunpack.c.l.s4 1966171168
      %v1369 = vunpack.c.0.s8 %v1368
      %v1370 = vlaneseq
      %v1371 = vshrl.u32 %v1370, 7
      %v1372 = vsub.s32 %v1369, %v1371
      %v1373 = vrot.slane %v1351, %v1372
      %v1375 = vunpack.c.l.s4 1966171168
      %v1376 = vunpack.c.0.s8 %v1375
      %v1377 = vlaneseq
      %v1378 = vshrl.u32 %v1377, 7
      %v1379 = vsub.s32 %v1376, %v1378
      %v1380 = vrot.slane %v1352, %v1379
      %v1381 = vcombine.low %v1359, %v1366
      %v1382 = vcombine.low %v1373, %v1380
      %v1384 = vunpack.c.l.s4 1966171168
      %v1385 = vunpack.c.0.s8 %v1384
      %v1386 = vlaneseq
      %v1387 = vshrl.u32 %v1386, 7
      %v1388 = vsub.s32 %v1385, %v1387
      %v1389 = vrot.slane %v1381, %v1388
      %v1391 = vunpack.c.l.s4 1966171168
      %v1392 = vunpack.c.0.s8 %v1391
      %v1393 = vlaneseq
      %v1394 = vshrl.u32 %v1393, 7
      %v1395 = vsub.s32 %v1392, %v1394
      %v1396 = vrot.slane %v1382, %v1395
      %v1397 = vcombine.low %v1389, %v1396
      %s1398 = scalar_lea.vmem %s183, 7
      %1399 = vst [vmem:[%s1398] ss:$8 sm:$0xf] %v1397
      %1400 = vst [vmem:[%s1398] ss:$8 sm:$0xf0] %v1397
      %p1401 = scmp.lt.s32.totalorder %s15, 1
      %s1402 = scalar_select %p1401, %s15, 1
      %s1403 = smul.addr %s1402, 32
      %s1404 = smul.addr %s1403, 8
      %s1405 = scalar_lea.vmem %s2, %s1404
      %p1406 = scmp.lt.s32.totalorder %s15, 1
      %s1407 = scalar_select %p1406, %s15, 1
      %s1408 = smul.addr %s1407, 8
      %s1409 = smul.addr %s1408, 8
      %s1410 = scalar_lea.vmem %s3, %s1409
      // Predicated region
      $region29: #{encoder_block_forward.5} parent=27 // pred_check
        %p1411 = pneg %p80
      $region30: #{encoder_block_forward.5} parent=27 // pred_check_branch
        %1413 = sbr.rel (%p1411) target = $region32
      $region31: #{encoder_block_forward.5} parent=27 // pred_region
        _
      $region32: #{encoder_block_forward.5} parent=27 // pred_fallthru
        _
      // Predicated region
      $region33: #{encoder_block_forward.5} parent=27 // pred_check
        %p1414 = pneg %p106
      $region34: #{encoder_block_forward.5} parent=27 // pred_check_branch
        %1416 = sbr.rel (%p1414) target = $region36
      $region35: #{encoder_block_forward.5} parent=27 // pred_region
        _
      $region36: #{encoder_block_forward.5} parent=27 // pred_fallthru
        _
    $region28: #{encoder_block_forward.5} parent=5 // pred_fallthru
      _
    %p1417 = scmp.le.s32.totalorder 2, %s10
    // Predicated region
    $region37: #{encoder_block_forward.5} parent=5 // pred_check
      %p1418 = pneg %p1417
    $region38: #{encoder_block_forward.5} parent=5 // pred_check_branch
      %1420 = sbr.rel (%p1418) target = $region40
    $region39: #{encoder_block_forward.5} parent=5 // pred_region
      %s1421 = ssub.s32 %s10, 2
      // Predicated region
      $region41: #{encoder_block_forward.5} parent=39 // pred_check
        %p1422 = pneg %p86
      $region42: #{encoder_block_forward.5} parent=39 // pred_check_branch
        %1424 = sbr.rel (%p1422) target = $region44
      $region43: #{encoder_block_forward.5} parent=39 // pred_region
        %p1425 = scmp.lt.s32.totalorder %s16, 1
        %s1426 = scalar_select %p1425, %s16, 1
        %s1427 = smul.addr %s1426, 32
        %s1428 = smul.addr %s1427, 8
        %s1429 = scalar_lea.vmem %s2, %s1428
      $region44: #{encoder_block_forward.5} parent=39 // pred_fallthru
        _
      // Predicated region
      $region45: #{encoder_block_forward.5} parent=39 // pred_check
        %p1430 = pneg %p112
      $region46: #{encoder_block_forward.5} parent=39 // pred_check_branch
        %1432 = sbr.rel (%p1430) target = $region48
      $region47: #{encoder_block_forward.5} parent=39 // pred_region
        %p1433 = scmp.lt.s32.totalorder %s16, 1
        %s1434 = scalar_select %p1433, %s16, 1
        %s1435 = smul.addr %s1434, 8
        %s1436 = smul.addr %s1435, 8
        %s1437 = scalar_lea.vmem %s3, %s1436
      $region48: #{encoder_block_forward.5} parent=39 // pred_fallthru
        _
    $region40: #{encoder_block_forward.5} parent=5 // pred_fallthru
      _
  $region6: #{encoder_block_forward.5} parent=0 // loop_footer
    %s14 = sadd.s32 1, %s10
  $region7: #{encoder_block_forward.5} parent=0 // loop_footer_branch
    %9 = sbr.rel target = $region3
  $region8: #{encoder_block_forward.5} parent=0 // loop_exit
    _

// kernel: encoder_block_forward.4
$region0: #{encoder_block_forward.4}
  #allocation0 [shape = 'u32[]', space=smem, size = 0x4, offset = 0x4, fixed_abs, tag = 'smem constant byte address 0x4 - core index']
  #allocation1 [shape = 'u32[144,128]{1,0:T(1,128)}', space=vmem, size = 0x12000, scoped, tag = 'internal scratch']
  #allocation2 [shape = 'bf16[1,18,18,128]{3,2,1,0:T(8,128)(2,1)}', space=vmem, size = 0x1b000, scoped, tag = 'scratch operand']
  %s0 = inlined_call_operand.vmem [shape: bf16[2,16,16,128], index: 0, kind: input, shape index: {}]
  %s1 = inlined_call_operand.vmem [shape: f32[2,128], index: 1, kind: input, shape index: {}]
  %s2 = inlined_call_operand.vmem [shape: bf16[9,128,128], index: 2, kind: input, shape index: {}]
  %s3 = inlined_call_operand.vmem [shape: bf16[2,16,16,128], index: 3, kind: output, shape index: {0}]
  %s4 = inlined_call_operand.vmem [shape: f32[2,2,128], index: 4, kind: output, shape index: {1}]
  %5 = xla_tuple %s3, %s4
  %s6 = sld [smem:[#allocation0]]
  $region53: #{encoder_block_forward.4} parent=0
    _
  %s8 = ssub.s32 1, %s6
  %s9 = scalar_select 0, %s8, %s6
  loop: start=0, step=1, limit=4
  $region2: #{encoder_block_forward.4} parent=0 // loop_pre_header
    _
  $region3: #{encoder_block_forward.4} parent=0 // loop_header
    %s11 = sphi 0, %s15
    %p12 = scmp.ge.s32.totalorder %s11, 4
    %s21 = sphi 0, %s23
    %s24 = sphi 0, %s21
    %s25 = sphi 0, %s24
    %s41 = sphi 0, %s25
    %s45 = sphi 0, %s45
    %s47 = sphi 0, %s45
    %s48 = sphi 0, %s47
    %s62 = sphi 0, %s48
    %s66 = sphi 0, %s66
    %s68 = sphi 0, %s66
    %s69 = sphi 0, %s68
    %s83 = sphi 0, %s69
    %s89 = sphi 0, %s91
    %s92 = sphi 0, %s89
    %s93 = sphi 0, %s92
    %s109 = sphi 0, %s93
    %s115 = sphi 0, %s117
    %s118 = sphi 0, %s115
    %s119 = sphi 0, %s118
    %s135 = sphi 0, %s119
  $region4: #{encoder_block_forward.4} parent=0 // loop_header_branch
    %14 = sbr.rel (%p12) target = $region8
  $region5: #{encoder_block_forward.4} parent=0 // loop_body
    %s16 = ssub.s32 %s11, 1
    %s17 = ssub.s32 %s11, 2
    %s18 = sadd.s32 %s11, 1
    %s19 = ssub.s32 %s11, %s18
    %p20 = scmp.eq.s32.totalorder %s19, 0
    %s22 = sadd.s32 %s21, 1
    %s23 = scalar_select %p20, %s21, %s22
    %p26 = pneg %p20
    %p27 = scmp.eq.s32.totalorder %s11, 1
    %p28 = por %p26, %p27
    %p29 = scmp.ne.s32.totalorder %s21, %s24
    %p30 = scmp.eq.s32.totalorder %s11, 0
    %p31 = por %p29, %p30
    %p32 = scmp.ne.s32.totalorder %s21, %s24
    %p33 = scmp.eq.s32.totalorder %s16, 1
    %p34 = por %p32, %p33
    %p35 = scmp.ne.s32.totalorder %s24, %s25
    %p36 = scmp.eq.s32.totalorder %s16, 0
    %p37 = por %p35, %p36
    %p38 = scmp.ne.s32.totalorder %s24, %s25
    %p39 = scmp.eq.s32.totalorder %s17, 1
    %p40 = por %p38, %p39
    %p42 = scmp.ne.s32.totalorder %s25, %s41
    %p43 = scmp.eq.s32.totalorder %s17, 0
    %p44 = por %p42, %p43
    %s46 = sadd.s32 %s45, 1
    %p49 = scmp.eq.s32.totalorder %s11, 1
    %p50 = scmp.ne.s32.totalorder %s45, %s47
    %p51 = scmp.eq.s32.totalorder %s11, 0
    %p52 = por %p50, %p51
    %p53 = scmp.ne.s32.totalorder %s45, %s47
    %p54 = scmp.eq.s32.totalorder %s16, 1
    %p55 = por %p53, %p54
    %p56 = scmp.ne.s32.totalorder %s47, %s48
    %p57 = scmp.eq.s32.totalorder %s16, 0
    %p58 = por %p56, %p57
    %p59 = scmp.ne.s32.totalorder %s47, %s48
    %p60 = scmp.eq.s32.totalorder %s17, 1
    %p61 = por %p59, %p60
    %p63 = scmp.ne.s32.totalorder %s48, %s62
    %p64 = scmp.eq.s32.totalorder %s17, 0
    %p65 = por %p63, %p64
    %s67 = sadd.s32 %s66, 1
    %p70 = scmp.eq.s32.totalorder %s11, 1
    %p71 = scmp.ne.s32.totalorder %s66, %s68
    %p72 = scmp.eq.s32.totalorder %s11, 0
    %p73 = por %p71, %p72
    %p74 = scmp.ne.s32.totalorder %s66, %s68
    %p75 = scmp.eq.s32.totalorder %s16, 1
    %p76 = por %p74, %p75
    %p77 = scmp.ne.s32.totalorder %s68, %s69
    %p78 = scmp.eq.s32.totalorder %s16, 0
    %p79 = por %p77, %p78
    %p80 = scmp.ne.s32.totalorder %s68, %s69
    %p81 = scmp.eq.s32.totalorder %s17, 1
    %p82 = por %p80, %p81
    %p84 = scmp.ne.s32.totalorder %s69, %s83
    %p85 = scmp.eq.s32.totalorder %s17, 0
    %p86 = por %p84, %p85
    %s87 = ssub.s32 %s11, %s18
    %p88 = scmp.eq.s32.totalorder %s87, 0
    %s90 = sadd.s32 %s89, 1
    %s91 = scalar_select %p88, %s89, %s90
    %p94 = pneg %p88
    %p95 = scmp.eq.s32.totalorder %s11, 1
    %p96 = por %p94, %p95
    %p97 = scmp.ne.s32.totalorder %s89, %s92
    %p98 = scmp.eq.s32.totalorder %s11, 0
    %p99 = por %p97, %p98
    %p100 = scmp.ne.s32.totalorder %s89, %s92
    %p101 = scmp.eq.s32.totalorder %s16, 1
    %p102 = por %p100, %p101
    %p103 = scmp.ne.s32.totalorder %s92, %s93
    %p104 = scmp.eq.s32.totalorder %s16, 0
    %p105 = por %p103, %p104
    %p106 = scmp.ne.s32.totalorder %s92, %s93
    %p107 = scmp.eq.s32.totalorder %s17, 1
    %p108 = por %p106, %p107
    %p110 = scmp.ne.s32.totalorder %s93, %s109
    %p111 = scmp.eq.s32.totalorder %s17, 0
    %p112 = por %p110, %p111
    %s113 = ssub.s32 %s11, %s18
    %p114 = scmp.eq.s32.totalorder %s113, 0
    %s116 = sadd.s32 %s115, 1
    %s117 = scalar_select %p114, %s115, %s116
    %p120 = pneg %p114
    %p121 = scmp.eq.s32.totalorder %s11, 1
    %p122 = por %p120, %p121
    %p123 = scmp.ne.s32.totalorder %s115, %s118
    %p124 = scmp.eq.s32.totalorder %s11, 0
    %p125 = por %p123, %p124
    %p126 = scmp.ne.s32.totalorder %s115, %s118
    %p127 = scmp.eq.s32.totalorder %s16, 1
    %p128 = por %p126, %p127
    %p129 = scmp.ne.s32.totalorder %s118, %s119
    %p130 = scmp.eq.s32.totalorder %s16, 0
    %p131 = por %p129, %p130
    %p132 = scmp.ne.s32.totalorder %s118, %s119
    %p133 = scmp.eq.s32.totalorder %s17, 1
    %p134 = por %p132, %p133
    %p136 = scmp.ne.s32.totalorder %s119, %s135
    %p137 = scmp.eq.s32.totalorder %s17, 0
    %p138 = por %p136, %p137
    %p139 = scmp.le.s32.totalorder 1, %s11
    %p140 = scmp.lt.s32.totalorder %s11, 3
    %p141 = pnand %p139, %p140
    %p142 = pneg %p141
    // Predicated region
    $region9: #{encoder_block_forward.4} parent=5 // pred_check
      _
    $region10: #{encoder_block_forward.4} parent=5 // pred_check_branch
      %144 = sbr.rel (%p141) target = $region12
    $region11: #{encoder_block_forward.4} parent=5 // pred_region
      %s145 = ssub.s32 %s11, 1
      // Predicated region
      $region13: #{encoder_block_forward.4} parent=11 // pred_check
        %p146 = pneg %p58
      $region14: #{encoder_block_forward.4} parent=11 // pred_check_branch
        %148 = sbr.rel (%p146) target = $region16
      $region15: #{encoder_block_forward.4} parent=11 // pred_region
        _
      $region16: #{encoder_block_forward.4} parent=11 // pred_fallthru
        _
      // Predicated region
      $region17: #{encoder_block_forward.4} parent=11 // pred_check
        %p149 = pneg %p79
      $region18: #{encoder_block_forward.4} parent=11 // pred_check_branch
        %151 = sbr.rel (%p149) target = $region20
      $region19: #{encoder_block_forward.4} parent=11 // pred_region
        _
      $region20: #{encoder_block_forward.4} parent=11 // pred_fallthru
        _
    $region12: #{encoder_block_forward.4} parent=5 // pred_fallthru
      _
    %p152 = scmp.lt.s32.totalorder %s11, 2
    // Predicated region
    $region21: #{encoder_block_forward.4} parent=5 // pred_check
      %p153 = pneg %p152
    $region22: #{encoder_block_forward.4} parent=5 // pred_check_branch
      %155 = sbr.rel (%p153) target = $region24
    $region23: #{encoder_block_forward.4} parent=5 // pred_region
      // Predicated region
      $region25: #{encoder_block_forward.4} parent=23 // pred_check
        %p156 = pneg %p31
      $region26: #{encoder_block_forward.4} parent=23 // pred_check_branch
        %158 = sbr.rel (%p156) target = $region28
      $region27: #{encoder_block_forward.4} parent=23 // pred_region
        %p159 = scmp.lt.s32.totalorder %s11, 1
        %s160 = scalar_select %p159, %s11, 1
        %s161 = smul.addr %s160, 32
        %s162 = smul.addr %s161, 4
        %s163 = scalar_lea.vmem %s0, %s162
      $region28: #{encoder_block_forward.4} parent=23 // pred_fallthru
        _
    $region24: #{encoder_block_forward.4} parent=5 // pred_fallthru
      _
    %p164 = scmp.le.s32.totalorder 1, %s11
    %p165 = scmp.lt.s32.totalorder %s11, 3
    %p166 = pnand %p164, %p165
    %p167 = pneg %p166
    // Predicated region
    $region29: #{encoder_block_forward.4} parent=5 // pred_check
      _
    $region30: #{encoder_block_forward.4} parent=5 // pred_check_branch
      %169 = sbr.rel (%p166) target = $region32
    $region31: #{encoder_block_forward.4} parent=5 // pred_region
      %s170 = ssub.s32 %s11, 1
      %p171 = scmp.lt.s32.totalorder %s16, 1
      %s172 = scalar_select %p171, %s16, 1
      %s173 = smul.addr %s172, 32
      %s174 = smul.addr %s173, 4
      %s175 = scalar_lea.vmem %s0, %s174
      %p176 = pneg %p37
      %p177 = pneg %p34
      %p178 = pneg %p58
      %p179 = pneg %p55
      %p180 = pneg %p79
      %p181 = pneg %p76
      %p182 = pneg %p105
      %p183 = pneg %p102
      %p184 = scmp.lt.s32.totalorder %s16, 1
      %s185 = scalar_select %p184, %s16, 1
      %s186 = smul.addr %s185, 32
      %s187 = smul.addr %s186, 4
      %s188 = scalar_lea.vmem %s3, %s187
      %p189 = pneg %p131
      %p190 = pneg %p128
      %p191 = scmp.lt.s32.totalorder %s16, 1
      %s192 = scalar_select %p191, %s16, 1
      %s193 = smul.addr %s192, 2
      %s194 = scalar_lea.vmem %s4, %s193
      %p195 = scmp.lt.s32.totalorder %s16, 1
      %s196 = scalar_select %p195, %s16, 1
      %s197 = smul.addr %s196, 32
      %s198 = smul.addr %s197, 4
      %s199 = scalar_lea.vmem %s0, %s198
      %p200 = scmp.lt.s32.totalorder %s16, 1
      %s201 = scalar_select %p200, %s16, 1
      %s202 = smul.addr %s201, 32
      %s203 = smul.addr %s202, 4
      %s204 = scalar_lea.vmem %s3, %s203
      %p205 = scmp.lt.s32.totalorder %s16, 1
      %s206 = scalar_select %p205, %s16, 1
      %s207 = smul.addr %s206, 2
      %s208 = scalar_lea.vmem %s4, %s207
      %v210 = vld [vmem:[%s1] sm:$0x1]
      %v211 = vld [vmem:[%s1 + $0x1] sm:$0x1]
      %v212 = vld [vmem:[%s199] sm:$0xf]
      %v213 = vld [vmem:[%s199 + $0x4] sm:$0xf]
      %v214 = vld [vmem:[%s199 + $0x8] sm:$0xf]
      %v215 = vld [vmem:[%s199 + $0xc] sm:$0xf]
      %v216 = vld [vmem:[%s199 + $0x10] sm:$0xf]
      %v217 = vld [vmem:[%s199 + $0x14] sm:$0xf]
      %v218 = vld [vmem:[%s199 + $0x18] sm:$0xf]
      %v219 = vld [vmem:[%s199 + $0x1c] sm:$0xf]
      %v220 = vld [vmem:[%s199 + $0x20] sm:$0xf]
      %v221 = vld [vmem:[%s199 + $0x24] sm:$0xf]
      %v222 = vld [vmem:[%s199 + $0x28] sm:$0xf]
      %v223 = vld [vmem:[%s199 + $0x2c] sm:$0xf]
      %v224 = vld [vmem:[%s199 + $0x30] sm:$0xf]
      %v225 = vld [vmem:[%s199 + $0x34] sm:$0xf]
      %v226 = vld [vmem:[%s199 + $0x38] sm:$0xf]
      %v227 = vld [vmem:[%s199 + $0x3c] sm:$0xf]
      %v228 = vld [vmem:[%s199 + $0x40] sm:$0xf]
      %v229 = vld [vmem:[%s199 + $0x44] sm:$0xf]
      %v230 = vld [vmem:[%s199 + $0x48] sm:$0xf]
      %v231 = vld [vmem:[%s199 + $0x4c] sm:$0xf]
      %v232 = vld [vmem:[%s199 + $0x50] sm:$0xf]
      %v233 = vld [vmem:[%s199 + $0x54] sm:$0xf]
      %v234 = vld [vmem:[%s199 + $0x58] sm:$0xf]
      %v235 = vld [vmem:[%s199 + $0x5c] sm:$0xf]
      %v236 = vld [vmem:[%s199 + $0x60] sm:$0xf]
      %v237 = vld [vmem:[%s199 + $0x64] sm:$0xf]
      %v238 = vld [vmem:[%s199 + $0x68] sm:$0xf]
      %v239 = vld [vmem:[%s199 + $0x6c] sm:$0xf]
      %v240 = vld [vmem:[%s199 + $0x70] sm:$0xf]
      %v241 = vld [vmem:[%s199 + $0x74] sm:$0xf]
      %v242 = vld [vmem:[%s199 + $0x78] sm:$0xf]
      %v243 = vld [vmem:[%s199 + $0x7c] sm:$0xf]
      %v244 = vunpack.c.l.bf16 %v212
      %v245 = vunpack.c.l.bf16 %v213
      %v246 = vunpack.c.l.bf16 %v214
      %v247 = vunpack.c.l.bf16 %v215
      %v248 = vunpack.c.l.bf16 %v216
      %v249 = vunpack.c.l.bf16 %v217
      %v250 = vunpack.c.l.bf16 %v218
      %v251 = vunpack.c.l.bf16 %v219
      %v252 = vunpack.c.l.bf16 %v220
      %v253 = vunpack.c.l.bf16 %v221
      %v254 = vunpack.c.l.bf16 %v222
      %v255 = vunpack.c.l.bf16 %v223
      %v256 = vunpack.c.l.bf16 %v224
      %v257 = vunpack.c.l.bf16 %v225
      %v258 = vunpack.c.l.bf16 %v226
      %v259 = vunpack.c.l.bf16 %v227
      %v260 = vunpack.c.l.bf16 %v228
      %v261 = vunpack.c.l.bf16 %v229
      %v262 = vunpack.c.l.bf16 %v230
      %v263 = vunpack.c.l.bf16 %v231
      %v264 = vunpack.c.l.bf16 %v232
      %v265 = vunpack.c.l.bf16 %v233
      %v266 = vunpack.c.l.bf16 %v234
      %v267 = vunpack.c.l.bf16 %v235
      %v268 = vunpack.c.l.bf16 %v236
      %v269 = vunpack.c.l.bf16 %v237
      %v270 = vunpack.c.l.bf16 %v238
      %v271 = vunpack.c.l.bf16 %v239
      %v272 = vunpack.c.l.bf16 %v240
      %v273 = vunpack.c.l.bf16 %v241
      %v274 = vunpack.c.l.bf16 %v242
      %v275 = vunpack.c.l.bf16 %v243
      %v276 = vlaneseq
      %v277 = vshrl.u32 %v276, 7
      %v278 = vsub.s32 0, %v277
      %v279 = vrot.slane %v210, %v278
      %v280 = vmul.f32 %v244, %v279
      %v281 = vmul.f32 %v245, %v279
      %v282 = vmul.f32 %v246, %v279
      %v283 = vmul.f32 %v247, %v279
      %v284 = vmul.f32 %v248, %v279
      %v285 = vmul.f32 %v249, %v279
      %v286 = vmul.f32 %v250, %v279
      %v287 = vmul.f32 %v251, %v279
      %v288 = vmul.f32 %v252, %v279
      %v289 = vmul.f32 %v253, %v279
      %v290 = vmul.f32 %v254, %v279
      %v291 = vmul.f32 %v255, %v279
      %v292 = vmul.f32 %v256, %v279
      %v293 = vmul.f32 %v257, %v279
      %v294 = vmul.f32 %v258, %v279
      %v295 = vmul.f32 %v259, %v279
      %v296 = vmul.f32 %v260, %v279
      %v297 = vmul.f32 %v261, %v279
      %v298 = vmul.f32 %v262, %v279
      %v299 = vmul.f32 %v263, %v279
      %v300 = vmul.f32 %v264, %v279
      %v301 = vmul.f32 %v265, %v279
      %v302 = vmul.f32 %v266, %v279
      %v303 = vmul.f32 %v267, %v279
      %v304 = vmul.f32 %v268, %v279
      %v305 = vmul.f32 %v269, %v279
      %v306 = vmul.f32 %v270, %v279
      %v307 = vmul.f32 %v271, %v279
      %v308 = vmul.f32 %v272, %v279
      %v309 = vmul.f32 %v273, %v279
      %v310 = vmul.f32 %v274, %v279
      %v311 = vmul.f32 %v275, %v279
      %v312 = vlaneseq
      %v313 = vshrl.u32 %v312, 7
      %v314 = vsub.s32 0, %v313
      %v315 = vrot.slane %v211, %v314
      %v316 = vadd.f32 %v280, %v315
      %v317 = vadd.f32 %v281, %v315
      %v318 = vadd.f32 %v282, %v315
      %v319 = vadd.f32 %v283, %v315
      %v320 = vadd.f32 %v284, %v315
      %v321 = vadd.f32 %v285, %v315
      %v322 = vadd.f32 %v286, %v315
      %v323 = vadd.f32 %v287, %v315
      %v324 = vadd.f32 %v288, %v315
      %v325 = vadd.f32 %v289, %v315
      %v326 = vadd.f32 %v290, %v315
      %v327 = vadd.f32 %v291, %v315
      %v328 = vadd.f32 %v292, %v315
      %v329 = vadd.f32 %v293, %v315
      %v330 = vadd.f32 %v294, %v315
      %v331 = vadd.f32 %v295, %v315
      %v332 = vadd.f32 %v296, %v315
      %v333 = vadd.f32 %v297, %v315
      %v334 = vadd.f32 %v298, %v315
      %v335 = vadd.f32 %v299, %v315
      %v336 = vadd.f32 %v300, %v315
      %v337 = vadd.f32 %v301, %v315
      %v338 = vadd.f32 %v302, %v315
      %v339 = vadd.f32 %v303, %v315
      %v340 = vadd.f32 %v304, %v315
      %v341 = vadd.f32 %v305, %v315
      %v342 = vadd.f32 %v306, %v315
      %v343 = vadd.f32 %v307, %v315
      %v344 = vadd.f32 %v308, %v315
      %v345 = vadd.f32 %v309, %v315
      %v346 = vadd.f32 %v310, %v315
      %v347 = vadd.f32 %v311, %v315
      %v348 = vmax.f32 %v316, 0.0
      %v349 = vmax.f32 %v317, 0.0
      %v350 = vmax.f32 %v318, 0.0
      %v351 = vmax.f32 %v319, 0.0
      %v352 = vmax.f32 %v320, 0.0
      %v353 = vmax.f32 %v321, 0.0
      %v354 = vmax.f32 %v322, 0.0
      %v355 = vmax.f32 %v323, 0.0
      %v356 = vmax.f32 %v324, 0.0
      %v357 = vmax.f32 %v325, 0.0
      %v358 = vmax.f32 %v326, 0.0
      %v359 = vmax.f32 %v327, 0.0
      %v360 = vmax.f32 %v328, 0.0
      %v361 = vmax.f32 %v329, 0.0
      %v362 = vmax.f32 %v330, 0.0
      %v363 = vmax.f32 %v331, 0.0
      %v364 = vmax.f32 %v332, 0.0
      %v365 = vmax.f32 %v333, 0.0
      %v366 = vmax.f32 %v334, 0.0
      %v367 = vmax.f32 %v335, 0.0
      %v368 = vmax.f32 %v336, 0.0
      %v369 = vmax.f32 %v337, 0.0
      %v370 = vmax.f32 %v338, 0.0
      %v371 = vmax.f32 %v339, 0.0
      %v372 = vmax.f32 %v340, 0.0
      %v373 = vmax.f32 %v341, 0.0
      %v374 = vmax.f32 %v342, 0.0
      %v375 = vmax.f32 %v343, 0.0
      %v376 = vmax.f32 %v344, 0.0
      %v377 = vmax.f32 %v345, 0.0
      %v378 = vmax.f32 %v346, 0.0
      %v379 = vmax.f32 %v347, 0.0
      %380 = vst [vmem:[#allocation2] sm:$0xf] 0
      %381 = vst [vmem:[#allocation2 + $0x4] sm:$0xf] 0
      %382 = vst [vmem:[#allocation2 + $0x8] sm:$0x1] 0
      %s383 = scalar_lea.vmem [#allocation2], 204
      %384 = vst [vmem:[%s383] sm:$0xf] 0
      %385 = vst [vmem:[%s383 + $0x4] sm:$0xf] 0
      %386 = vst [vmem:[%s383 + $0x8] sm:$0x1] 0
      %vm387 = vcmask 1040384
      %vm388 = vsmask.f32 256
      %vm389 = vmand %vm387, %vm388
      %v390 = vld [vmem:[#allocation2] sm:$0x1]
      %v391 = vsel %vm389, 0, %v390
      %392 = vst [vmem:[#allocation2] sm:$0x1] %v391
      %v393 = vld [vmem:[#allocation2 + $0xc] sm:$0x1]
      %v394 = vsel %vm389, 0, %v393
      %395 = vst [vmem:[#allocation2 + $0xc] sm:$0x1] %v394
      %v396 = vld [vmem:[#allocation2 + $0x18] sm:$0x1]
      %v397 = vsel %vm389, 0, %v396
      %398 = vst [vmem:[#allocation2 + $0x18] sm:$0x1] %v397
      %v399 = vld [vmem:[#allocation2 + $0x24] sm:$0x1]
      %v400 = vsel %vm389, 0, %v399
      %401 = vst [vmem:[#allocation2 + $0x24] sm:$0x1] %v400
      %v402 = vld [vmem:[#allocation2 + $0x30] sm:$0x1]
      %v403 = vsel %vm389, 0, %v402
      %404 = vst [vmem:[#allocation2 + $0x30] sm:$0x1] %v403
      %v405 = vld [vmem:[#allocation2 + $0x3c] sm:$0x1]
      %v406 = vsel %vm389, 0, %v405
      %407 = vst [vmem:[#allocation2 + $0x3c] sm:$0x1] %v406
      %v408 = vld [vmem:[#allocation2 + $0x48] sm:$0x1]
      %v409 = vsel %vm389, 0, %v408
      %410 = vst [vmem:[#allocation2 + $0x48] sm:$0x1] %v409
      %v411 = vld [vmem:[#allocation2 + $0x54] sm:$0x1]
      %v412 = vsel %vm389, 0, %v411
      %413 = vst [vmem:[#allocation2 + $0x54] sm:$0x1] %v412
      %v414 = vld [vmem:[#allocation2 + $0x60] sm:$0x1]
      %v415 = vsel %vm389, 0, %v414
      %416 = vst [vmem:[#allocation2 + $0x60] sm:$0x1] %v415
      %v417 = vld [vmem:[#allocation2 + $0x6c] sm:$0x1]
      %v418 = vsel %vm389, 0, %v417
      %419 = vst [vmem:[#allocation2 + $0x6c] sm:$0x1] %v418
      %v420 = vld [vmem:[#allocation2 + $0x78] sm:$0x1]
      %v421 = vsel %vm389, 0, %v420
      %422 = vst [vmem:[#allocation2 + $0x78] sm:$0x1] %v421
      %v423 = vld [vmem:[#allocation2 + $0x84] sm:$0x1]
      %v424 = vsel %vm389, 0, %v423
      %425 = vst [vmem:[#allocation2 + $0x84] sm:$0x1] %v424
      %v426 = vld [vmem:[#allocation2 + $0x90] sm:$0x1]
      %v427 = vsel %vm389, 0, %v426
      %428 = vst [vmem:[#allocation2 + $0x90] sm:$0x1] %v427
      %v429 = vld [vmem:[#allocation2 + $0x9c] sm:$0x1]
      %v430 = vsel %vm389, 0, %v429
      %431 = vst [vmem:[#allocation2 + $0x9c] sm:$0x1] %v430
      %v432 = vld [vmem:[#allocation2 + $0xa8] sm:$0x1]
      %v433 = vsel %vm389, 0, %v432
      %434 = vst [vmem:[#allocation2 + $0xa8] sm:$0x1] %v433
      %v435 = vld [vmem:[#allocation2 + $0xb4] sm:$0x1]
      %v436 = vsel %vm389, 0, %v435
      %437 = vst [vmem:[#allocation2 + $0xb4] sm:$0x1] %v436
      %v438 = vld [vmem:[#allocation2 + $0xc0] sm:$0x1]
      %v439 = vsel %vm389, 0, %v438
      %440 = vst [vmem:[#allocation2 + $0xc0] sm:$0x1] %v439
      %v441 = vld [vmem:[#allocation2 + $0xcc] sm:$0x1]
      %v442 = vsel %vm389, 0, %v441
      %443 = vst [vmem:[#allocation2 + $0xcc] sm:$0x1] %v442
      %vm444 = vsmask.f32 7938
      %vm445 = vmand %vm387, %vm444
      %v446 = vld [vmem:[#allocation2 + $0x8] sm:$0x1]
      %v447 = vsel %vm445, 0, %v446
      %448 = vst [vmem:[#allocation2 + $0x8] sm:$0x1] %v447
      %v449 = vld [vmem:[#allocation2 + $0x14] sm:$0x1]
      %v450 = vsel %vm445, 0, %v449
      %451 = vst [vmem:[#allocation2 + $0x14] sm:$0x1] %v450
      %v452 = vld [vmem:[#allocation2 + $0x20] sm:$0x1]
      %v453 = vsel %vm445, 0, %v452
      %454 = vst [vmem:[#allocation2 + $0x20] sm:$0x1] %v453
      %v455 = vld [vmem:[#allocation2 + $0x2c] sm:$0x1]
      %v456 = vsel %vm445, 0, %v455
      %457 = vst [vmem:[#allocation2 + $0x2c] sm:$0x1] %v456
      %v458 = vld [vmem:[#allocation2 + $0x38] sm:$0x1]
      %v459 = vsel %vm445, 0, %v458
      %460 = vst [vmem:[#allocation2 + $0x38] sm:$0x1] %v459
      %v461 = vld [vmem:[#allocation2 + $0x44] sm:$0x1]
      %v462 = vsel %vm445, 0, %v461
      %463 = vst [vmem:[#allocation2 + $0x44] sm:$0x1] %v462
      %v464 = vld [vmem:[#allocation2 + $0x50] sm:$0x1]
      %v465 = vsel %vm445, 0, %v464
      %466 = vst [vmem:[#allocation2 + $0x50] sm:$0x1] %v465
      %v467 = vld [vmem:[#allocation2 + $0x5c] sm:$0x1]
      %v468 = vsel %vm445, 0, %v467
      %469 = vst [vmem:[#allocation2 + $0x5c] sm:$0x1] %v468
      %v470 = vld [vmem:[#allocation2 + $0x68] sm:$0x1]
      %v471 = vsel %vm445, 0, %v470
      %472 = vst [vmem:[#allocation2 + $0x68] sm:$0x1] %v471
      %v473 = vld [vmem:[#allocation2 + $0x74] sm:$0x1]
      %v474 = vsel %vm445, 0, %v473
      %475 = vst [vmem:[#allocation2 + $0x74] sm:$0x1] %v474
      %v476 = vld [vmem:[#allocation2 + $0x80] sm:$0x1]
      %v477 = vsel %vm445, 0, %v476
      %478 = vst [vmem:[#allocation2 + $0x80] sm:$0x1] %v477
      %v479 = vld [vmem:[#allocation2 + $0x8c] sm:$0x1]
      %v480 = vsel %vm445, 0, %v479
      %481 = vst [vmem:[#allocation2 + $0x8c] sm:$0x1] %v480
      %v482 = vld [vmem:[#allocation2 + $0x98] sm:$0x1]
      %v483 = vsel %vm445, 0, %v482
      %484 = vst [vmem:[#allocation2 + $0x98] sm:$0x1] %v483
      %v485 = vld [vmem:[#allocation2 + $0xa4] sm:$0x1]
      %v486 = vsel %vm445, 0, %v485
      %487 = vst [vmem:[#allocation2 + $0xa4] sm:$0x1] %v486
      %v488 = vld [vmem:[#allocation2 + $0xb0] sm:$0x1]
      %v489 = vsel %vm445, 0, %v488
      %490 = vst [vmem:[#allocation2 + $0xb0] sm:$0x1] %v489
      %v491 = vld [vmem:[#allocation2 + $0xbc] sm:$0x1]
      %v492 = vsel %vm445, 0, %v491
      %493 = vst [vmem:[#allocation2 + $0xbc] sm:$0x1] %v492
      %v494 = vld [vmem:[#allocation2 + $0xc8] sm:$0x1]
      %v495 = vsel %vm445, 0, %v494
      %496 = vst [vmem:[#allocation2 + $0xc8] sm:$0x1] %v495
      %v497 = vld [vmem:[#allocation2 + $0xd4] sm:$0x1]
      %v498 = vsel %vm445, 0, %v497
      %499 = vst [vmem:[#allocation2 + $0xd4] sm:$0x1] %v498
      %v500 = vpack.c.bf16 %v349, %v348
      %v501 = vpack.c.bf16 %v351, %v350
      %v502 = vpack.c.bf16 %v353, %v352
      %v503 = vpack.c.bf16 %v355, %v354
      %v504 = vpack.c.bf16 %v357, %v356
      %v505 = vpack.c.bf16 %v359, %v358
      %v506 = vpack.c.bf16 %v361, %v360
      %v507 = vpack.c.bf16 %v363, %v362
      %v508 = vpack.c.bf16 %v365, %v364
      %v509 = vpack.c.bf16 %v367, %v366
      %v510 = vpack.c.bf16 %v369, %v368
      %v511 = vpack.c.bf16 %v371, %v370
      %v512 = vpack.c.bf16 %v373, %v372
      %v513 = vpack.c.bf16 %v375, %v374
      %v514 = vpack.c.bf16 %v377, %v376
      %v515 = vpack.c.bf16 %v379, %v378
      %v532 = vunpack.c.l.b16 %v500
      %v533 = vunpack.c.h.b16 %v500
      %v534 = vunpack.c.l.b16 %v501
      %v535 = vunpack.c.h.b16 %v501
      %v536 = vunpack.c.l.b16 %v502
      %v537 = vunpack.c.h.b16 %v502
      %v538 = vunpack.c.l.b16 %v503
      %v539 = vunpack.c.h.b16 %v503
      %v540 = vunpack.c.l.b16 %v504
      %v541 = vunpack.c.h.b16 %v504
      %v542 = vunpack.c.l.b16 %v505
      %v543 = vunpack.c.h.b16 %v505
      %v544 = vunpack.c.l.b16 %v506
      %v545 = vunpack.c.h.b16 %v506
      %v546 = vunpack.c.l.b16 %v507
      %v547 = vunpack.c.h.b16 %v507
      %v548 = vunpack.c.l.b16 %v508
      %v549 = vunpack.c.h.b16 %v508
      %v550 = vunpack.c.l.b16 %v509
      %v551 = vunpack.c.h.b16 %v509
      %v552 = vunpack.c.l.b16 %v510
      %v553 = vunpack.c.h.b16 %v510
      %v554 = vunpack.c.l.b16 %v511
      %v555 = vunpack.c.h.b16 %v511
      %v556 = vunpack.c.l.b16 %v512
      %v557 = vunpack.c.h.b16 %v512
      %v558 = vunpack.c.l.b16 %v513
      %v559 = vunpack.c.h.b16 %v513
      %v560 = vunpack.c.l.b16 %v514
      %v561 = vunpack.c.h.b16 %v514
      %v562 = vunpack.c.l.b16 %v515
      %v563 = vunpack.c.h.b16 %v515
      %v564 = vpack.c.b16 %v532, %v532
      %v565 = vpack.c.b16 %v533, %v533
      %v566 = vpack.c.b16 %v534, %v534
      %v567 = vpack.c.b16 %v535, %v535
      %v568 = vpack.c.b16 %v536, %v536
      %v569 = vpack.c.b16 %v537, %v537
      %v570 = vpack.c.b16 %v538, %v538
      %v571 = vpack.c.b16 %v539, %v539
      %v572 = vpack.c.b16 %v540, %v540
      %v573 = vpack.c.b16 %v541, %v541
      %v574 = vpack.c.b16 %v542, %v542
      %v575 = vpack.c.b16 %v543, %v543
      %v576 = vpack.c.b16 %v544, %v544
      %v577 = vpack.c.b16 %v545, %v545
      %v578 = vpack.c.b16 %v546, %v546
      %v579 = vpack.c.b16 %v547, %v547
      %v580 = vpack.c.b16 %v548, %v548
      %v581 = vpack.c.b16 %v549, %v549
      %v582 = vpack.c.b16 %v550, %v550
      %v583 = vpack.c.b16 %v551, %v551
      %v584 = vpack.c.b16 %v552, %v552
      %v585 = vpack.c.b16 %v553, %v553
      %v586 = vpack.c.b16 %v554, %v554
      %v587 = vpack.c.b16 %v555, %v555
      %v588 = vpack.c.b16 %v556, %v556
      %v589 = vpack.c.b16 %v557, %v557
      %v590 = vpack.c.b16 %v558, %v558
      %v591 = vpack.c.b16 %v559, %v559
      %v592 = vpack.c.b16 %v560, %v560
      %v593 = vpack.c.b16 %v561, %v561
      %v594 = vpack.c.b16 %v562, %v562
      %v595 = vpack.c.b16 %v563, %v563
      %vm596 = vsmask.f32 4368
      %vm597 = vmor %vm388, %vm596
      %v599 = vshrl.u32 %v564, 16
      %v601 = vrot.slane %v599, 7
      %v602 = vshll.u32 %v564, 16
      %v604 = vor.u32 %v601, %v602
      %v605 = vrot.slane %v601, 4
      %v607 = vshrl.u32 %v565, 16
      %v609 = vrot.slane %v607, 7
      %v610 = vshll.u32 %v565, 16
      %v612 = vor.u32 %v609, %v610
      %v613 = vsel %vm597, %v605, %v612
      %v614 = vrot.slane %v609, 4
      %v616 = vshrl.u32 %v566, 16
      %v618 = vrot.slane %v616, 7
      %v619 = vshll.u32 %v566, 16
      %v621 = vor.u32 %v618, %v619
      %v622 = vrot.slane %v618, 4
      %v624 = vshrl.u32 %v567, 16
      %v626 = vrot.slane %v624, 7
      %v627 = vshll.u32 %v567, 16
      %v629 = vor.u32 %v626, %v627
      %v630 = vsel %vm597, %v622, %v629
      %v631 = vrot.slane %v626, 4
      %v633 = vshrl.u32 %v568, 16
      %v635 = vrot.slane %v633, 7
      %v636 = vshll.u32 %v568, 16
      %v638 = vor.u32 %v635, %v636
      %v639 = vrot.slane %v635, 4
      %v641 = vshrl.u32 %v569, 16
      %v643 = vrot.slane %v641, 7
      %v644 = vshll.u32 %v569, 16
      %v646 = vor.u32 %v643, %v644
      %v647 = vsel %vm597, %v639, %v646
      %v648 = vrot.slane %v643, 4
      %v650 = vshrl.u32 %v570, 16
      %v652 = vrot.slane %v650, 7
      %v653 = vshll.u32 %v570, 16
      %v655 = vor.u32 %v652, %v653
      %v656 = vrot.slane %v652, 4
      %v658 = vshrl.u32 %v571, 16
      %v660 = vrot.slane %v658, 7
      %v661 = vshll.u32 %v571, 16
      %v663 = vor.u32 %v660, %v661
      %v664 = vsel %vm597, %v656, %v663
      %v665 = vrot.slane %v660, 4
      %v667 = vshrl.u32 %v572, 16
      %v669 = vrot.slane %v667, 7
      %v670 = vshll.u32 %v572, 16
      %v672 = vor.u32 %v669, %v670
      %v673 = vrot.slane %v669, 4
      %v675 = vshrl.u32 %v573, 16
      %v677 = vrot.slane %v675, 7
      %v678 = vshll.u32 %v573, 16
      %v680 = vor.u32 %v677, %v678
      %v681 = vsel %vm597, %v673, %v680
      %v682 = vrot.slane %v677, 4
      %v684 = vshrl.u32 %v574, 16
      %v686 = vrot.slane %v684, 7
      %v687 = vshll.u32 %v574, 16
      %v689 = vor.u32 %v686, %v687
      %v690 = vrot.slane %v686, 4
      %v692 = vshrl.u32 %v575, 16
      %v694 = vrot.slane %v692, 7
      %v695 = vshll.u32 %v575, 16
      %v697 = vor.u32 %v694, %v695
      %v698 = vsel %vm597, %v690, %v697
      %v699 = vrot.slane %v694, 4
      %v701 = vshrl.u32 %v576, 16
      %v703 = vrot.slane %v701, 7
      %v704 = vshll.u32 %v576, 16
      %v706 = vor.u32 %v703, %v704
      %v707 = vrot.slane %v703, 4
      %v709 = vshrl.u32 %v577, 16
      %v711 = vrot.slane %v709, 7
      %v712 = vshll.u32 %v577, 16
      %v714 = vor.u32 %v711, %v712
      %v715 = vsel %vm597, %v707, %v714
      %v716 = vrot.slane %v711, 4
      %v718 = vshrl.u32 %v578, 16
      %v720 = vrot.slane %v718, 7
      %v721 = vshll.u32 %v578, 16
      %v723 = vor.u32 %v720, %v721
      %v724 = vrot.slane %v720, 4
      %v726 = vshrl.u32 %v579, 16
      %v728 = vrot.slane %v726, 7
      %v729 = vshll.u32 %v579, 16
      %v731 = vor.u32 %v728, %v729
      %v732 = vsel %vm597, %v724, %v731
      %v733 = vrot.slane %v728, 4
      %v735 = vshrl.u32 %v580, 16
      %v737 = vrot.slane %v735, 7
      %v738 = vshll.u32 %v580, 16
      %v740 = vor.u32 %v737, %v738
      %v741 = vrot.slane %v737, 4
      %v743 = vshrl.u32 %v581, 16
      %v745 = vrot.slane %v743, 7
      %v746 = vshll.u32 %v581, 16
      %v748 = vor.u32 %v745, %v746
      %v749 = vsel %vm597, %v741, %v748
      %v750 = vrot.slane %v745, 4
      %v752 = vshrl.u32 %v582, 16
      %v754 = vrot.slane %v752, 7
      %v755 = vshll.u32 %v582, 16
      %v757 = vor.u32 %v754, %v755
      %v758 = vrot.slane %v754, 4
      %v760 = vshrl.u32 %v583, 16
      %v762 = vrot.slane %v760, 7
      %v763 = vshll.u32 %v583, 16
      %v765 = vor.u32 %v762, %v763
      %v766 = vsel %vm597, %v758, %v765
      %v767 = vrot.slane %v762, 4
      %v769 = vshrl.u32 %v584, 16
      %v771 = vrot.slane %v769, 7
      %v772 = vshll.u32 %v584, 16
      %v774 = vor.u32 %v771, %v772
      %v775 = vrot.slane %v771, 4
      %v777 = vshrl.u32 %v585, 16
      %v779 = vrot.slane %v777, 7
      %v780 = vshll.u32 %v585, 16
      %v782 = vor.u32 %v779, %v780
      %v783 = vsel %vm597, %v775, %v782
      %v784 = vrot.slane %v779, 4
      %v786 = vshrl.u32 %v586, 16
      %v788 = vrot.slane %v786, 7
      %v789 = vshll.u32 %v586, 16
      %v791 = vor.u32 %v788, %v789
      %v792 = vrot.slane %v788, 4
      %v794 = vshrl.u32 %v587, 16
      %v796 = vrot.slane %v794, 7
      %v797 = vshll.u32 %v587, 16
      %v799 = vor.u32 %v796, %v797
      %v800 = vsel %vm597, %v792, %v799
      %v801 = vrot.slane %v796, 4
      %v803 = vshrl.u32 %v588, 16
      %v805 = vrot.slane %v803, 7
      %v806 = vshll.u32 %v588, 16
      %v808 = vor.u32 %v805, %v806
      %v809 = vrot.slane %v805, 4
      %v811 = vshrl.u32 %v589, 16
      %v813 = vrot.slane %v811, 7
      %v814 = vshll.u32 %v589, 16
      %v816 = vor.u32 %v813, %v814
      %v817 = vsel %vm597, %v809, %v816
      %v818 = vrot.slane %v813, 4
      %v820 = vshrl.u32 %v590, 16
      %v822 = vrot.slane %v820, 7
      %v823 = vshll.u32 %v590, 16
      %v825 = vor.u32 %v822, %v823
      %v826 = vrot.slane %v822, 4
      %v828 = vshrl.u32 %v591, 16
      %v830 = vrot.slane %v828, 7
      %v831 = vshll.u32 %v591, 16
      %v833 = vor.u32 %v830, %v831
      %v834 = vsel %vm597, %v826, %v833
      %v835 = vrot.slane %v830, 4
      %v837 = vshrl.u32 %v592, 16
      %v839 = vrot.slane %v837, 7
      %v840 = vshll.u32 %v592, 16
      %v842 = vor.u32 %v839, %v840
      %v843 = vrot.slane %v839, 4
      %v845 = vshrl.u32 %v593, 16
      %v847 = vrot.slane %v845, 7
      %v848 = vshll.u32 %v593, 16
      %v850 = vor.u32 %v847, %v848
      %v851 = vsel %vm597, %v843, %v850
      %v852 = vrot.slane %v847, 4
      %v854 = vshrl.u32 %v594, 16
      %v856 = vrot.slane %v854, 7
      %v857 = vshll.u32 %v594, 16
      %v859 = vor.u32 %v856, %v857
      %v860 = vrot.slane %v856, 4
      %v862 = vshrl.u32 %v595, 16
      %v864 = vrot.slane %v862, 7
      %v865 = vshll.u32 %v595, 16
      %v867 = vor.u32 %v864, %v865
      %v868 = vsel %vm597, %v860, %v867
      %v869 = vrot.slane %v864, 4
      %s918 = scalar_lea.vmem [#allocation2], 12
      %vm919 = vcmask 1043456
      %vm920 = vmand %vm919, %vm444
      %v921 = vld [vmem:[%s918] sm:$0xf]
      %v922 = vsel %vm920, %v604, %v921
      %923 = vst [vmem:[%s918] sm:$0xf] %v922
      %924 = vst [vmem:[%s918 + $0x4] sm:$0xf] %v613
      %v925 = vld [vmem:[%s918 + $0x8] sm:$0x1]
      %v926 = vsel %vm389, %v614, %v925
      %927 = vst [vmem:[%s918 + $0x8] sm:$0x1] %v926
      %v928 = vld [vmem:[%s918 + $0xc] sm:$0xf]
      %v929 = vsel %vm920, %v621, %v928
      %930 = vst [vmem:[%s918 + $0xc] sm:$0xf] %v929
      %931 = vst [vmem:[%s918 + $0x10] sm:$0xf] %v630
      %v932 = vld [vmem:[%s918 + $0x14] sm:$0x1]
      %v933 = vsel %vm389, %v631, %v932
      %934 = vst [vmem:[%s918 + $0x14] sm:$0x1] %v933
      %v935 = vld [vmem:[%s918 + $0x18] sm:$0xf]
      %v936 = vsel %vm920, %v638, %v935
      %937 = vst [vmem:[%s918 + $0x18] sm:$0xf] %v936
      %938 = vst [vmem:[%s918 + $0x1c] sm:$0xf] %v647
      %v939 = vld [vmem:[%s918 + $0x20] sm:$0x1]
      %v940 = vsel %vm389, %v648, %v939
      %941 = vst [vmem:[%s918 + $0x20] sm:$0x1] %v940
      %v942 = vld [vmem:[%s918 + $0x24] sm:$0xf]
      %v943 = vsel %vm920, %v655, %v942
      %944 = vst [vmem:[%s918 + $0x24] sm:$0xf] %v943
      %945 = vst [vmem:[%s918 + $0x28] sm:$0xf] %v664
      %v946 = vld [vmem:[%s918 + $0x2c] sm:$0x1]
      %v947 = vsel %vm389, %v665, %v946
      %948 = vst [vmem:[%s918 + $0x2c] sm:$0x1] %v947
      %v949 = vld [vmem:[%s918 + $0x30] sm:$0xf]
      %v950 = vsel %vm920, %v672, %v949
      %951 = vst [vmem:[%s918 + $0x30] sm:$0xf] %v950
      %952 = vst [vmem:[%s918 + $0x34] sm:$0xf] %v681
      %v953 = vld [vmem:[%s918 + $0x38] sm:$0x1]
      %v954 = vsel %vm389, %v682, %v953
      %955 = vst [vmem:[%s918 + $0x38] sm:$0x1] %v954
      %v956 = vld [vmem:[%s918 + $0x3c] sm:$0xf]
      %v957 = vsel %vm920, %v689, %v956
      %958 = vst [vmem:[%s918 + $0x3c] sm:$0xf] %v957
      %959 = vst [vmem:[%s918 + $0x40] sm:$0xf] %v698
      %v960 = vld [vmem:[%s918 + $0x44] sm:$0x1]
      %v961 = vsel %vm389, %v699, %v960
      %962 = vst [vmem:[%s918 + $0x44] sm:$0x1] %v961
      %v963 = vld [vmem:[%s918 + $0x48] sm:$0xf]
      %v964 = vsel %vm920, %v706, %v963
      %965 = vst [vmem:[%s918 + $0x48] sm:$0xf] %v964
      %966 = vst [vmem:[%s918 + $0x4c] sm:$0xf] %v715
      %v967 = vld [vmem:[%s918 + $0x50] sm:$0x1]
      %v968 = vsel %vm389, %v716, %v967
      %969 = vst [vmem:[%s918 + $0x50] sm:$0x1] %v968
      %v970 = vld [vmem:[%s918 + $0x54] sm:$0xf]
      %v971 = vsel %vm920, %v723, %v970
      %972 = vst [vmem:[%s918 + $0x54] sm:$0xf] %v971
      %973 = vst [vmem:[%s918 + $0x58] sm:$0xf] %v732
      %v974 = vld [vmem:[%s918 + $0x5c] sm:$0x1]
      %v975 = vsel %vm389, %v733, %v974
      %976 = vst [vmem:[%s918 + $0x5c] sm:$0x1] %v975
      %v977 = vld [vmem:[%s918 + $0x60] sm:$0xf]
      %v978 = vsel %vm920, %v740, %v977
      %979 = vst [vmem:[%s918 + $0x60] sm:$0xf] %v978
      %980 = vst [vmem:[%s918 + $0x64] sm:$0xf] %v749
      %v981 = vld [vmem:[%s918 + $0x68] sm:$0x1]
      %v982 = vsel %vm389, %v750, %v981
      %983 = vst [vmem:[%s918 + $0x68] sm:$0x1] %v982
      %v984 = vld [vmem:[%s918 + $0x6c] sm:$0xf]
      %v985 = vsel %vm920, %v757, %v984
      %986 = vst [vmem:[%s918 + $0x6c] sm:$0xf] %v985
      %987 = vst [vmem:[%s918 + $0x70] sm:$0xf] %v766
      %v988 = vld [vmem:[%s918 + $0x74] sm:$0x1]
      %v989 = vsel %vm389, %v767, %v988
      %990 = vst [vmem:[%s918 + $0x74] sm:$0x1] %v989
      %v991 = vld [vmem:[%s918 + $0x78] sm:$0xf]
      %v992 = vsel %vm920, %v774, %v991
      %993 = vst [vmem:[%s918 + $0x78] sm:$0xf] %v992
      %994 = vst [vmem:[%s918 + $0x7c] sm:$0xf] %v783
      %v995 = vld [vmem:[%s918 + $0x80] sm:$0x1]
      %v996 = vsel %vm389, %v784, %v995
      %997 = vst [vmem:[%s918 + $0x80] sm:$0x1] %v996
      %v998 = vld [vmem:[%s918 + $0x84] sm:$0xf]
      %v999 = vsel %vm920, %v791, %v998
      %1000 = vst [vmem:[%s918 + $0x84] sm:$0xf] %v999
      %1001 = vst [vmem:[%s918 + $0x88] sm:$0xf] %v800
      %v1002 = vld [vmem:[%s918 + $0x8c] sm:$0x1]
      %v1003 = vsel %vm389, %v801, %v1002
      %1004 = vst [vmem:[%s918 + $0x8c] sm:$0x1] %v1003
      %v1005 = vld [vmem:[%s918 + $0x90] sm:$0xf]
      %v1006 = vsel %vm920, %v808, %v1005
      %1007 = vst [vmem:[%s918 + $0x90] sm:$0xf] %v1006
      %1008 = vst [vmem:[%s918 + $0x94] sm:$0xf] %v817
      %v1009 = vld [vmem:[%s918 + $0x98] sm:$0x1]
      %v1010 = vsel %vm389, %v818, %v1009
      %1011 = vst [vmem:[%s918 + $0x98] sm:$0x1] %v1010
      %v1012 = vld [vmem:[%s918 + $0x9c] sm:$0xf]
      %v1013 = vsel %vm920, %v825, %v1012
      %1014 = vst [vmem:[%s918 + $0x9c] sm:$0xf] %v1013
      %1015 = vst [vmem:[%s918 + $0xa0] sm:$0xf] %v834
      %v1016 = vld [vmem:[%s918 + $0xa4] sm:$0x1]
      %v1017 = vsel %vm389, %v835, %v1016
      %1018 = vst [vmem:[%s918 + $0xa4] sm:$0x1] %v1017
      %v1019 = vld [vmem:[%s918 + $0xa8] sm:$0xf]
      %v1020 = vsel %vm920, %v842, %v1019
      %1021 = vst [vmem:[%s918 + $0xa8] sm:$0xf] %v1020
      %1022 = vst [vmem:[%s918 + $0xac] sm:$0xf] %v851
      %v1023 = vld [vmem:[%s918 + $0xb0] sm:$0x1]
      %v1024 = vsel %vm389, %v852, %v1023
      %1025 = vst [vmem:[%s918 + $0xb0] sm:$0x1] %v1024
      %v1026 = vld [vmem:[%s918 + $0xb4] sm:$0xf]
      %v1027 = vsel %vm920, %v859, %v1026
      %1028 = vst [vmem:[%s918 + $0xb4] sm:$0xf] %v1027
      %1029 = vst [vmem:[%s918 + $0xb8] sm:$0xf] %v868
      %v1030 = vld [vmem:[%s918 + $0xbc] sm:$0x1]
      %v1031 = vsel %vm389, %v869, %v1030
      %1032 = vst [vmem:[%s918 + $0xbc] sm:$0x1] %v1031
      %v1033 = vld [vmem:[#allocation2] sm:$0xf]
      %v1034 = vld [vmem:[#allocation2 + $0x4] sm:$0xf]
      %v1035 = vld [vmem:[#allocation2 + $0xc] sm:$0xf]
      %v1036 = vld [vmem:[#allocation2 + $0x10] sm:$0xf]
      %v1037 = vld [vmem:[#allocation2 + $0x18] sm:$0xf]
      %v1038 = vld [vmem:[#allocation2 + $0x1c] sm:$0xf]
      %v1039 = vld [vmem:[#allocation2 + $0x24] sm:$0xf]
      %v1040 = vld [vmem:[#allocation2 + $0x28] sm:$0xf]
      %v1041 = vld [vmem:[#allocation2 + $0x30] sm:$0xf]
      %v1042 = vld [vmem:[#allocation2 + $0x34] sm:$0xf]
      %v1043 = vld [vmem:[#allocation2 + $0x3c] sm:$0xf]
      %v1044 = vld [vmem:[#allocation2 + $0x40] sm:$0xf]
      %v1045 = vld [vmem:[#allocation2 + $0x48] sm:$0xf]
      %v1046 = vld [vmem:[#allocation2 + $0x4c] sm:$0xf]
      %v1047 = vld [vmem:[#allocation2 + $0x54] sm:$0xf]
      %v1048 = vld [vmem:[#allocation2 + $0x58] sm:$0xf]
      %v1049 = vld [vmem:[#allocation2 + $0x60] sm:$0xf]
      %v1050 = vld [vmem:[#allocation2 + $0x64] sm:$0xf]
      %v1051 = vld [vmem:[#allocation2 + $0x6c] sm:$0xf]
      %v1052 = vld [vmem:[#allocation2 + $0x70] sm:$0xf]
      %v1053 = vld [vmem:[#allocation2 + $0x78] sm:$0xf]
      %v1054 = vld [vmem:[#allocation2 + $0x7c] sm:$0xf]
      %v1055 = vld [vmem:[#allocation2 + $0x84] sm:$0xf]
      %v1056 = vld [vmem:[#allocation2 + $0x88] sm:$0xf]
      %v1057 = vld [vmem:[#allocation2 + $0x90] sm:$0xf]
      %v1058 = vld [vmem:[#allocation2 + $0x94] sm:$0xf]
      %v1059 = vld [vmem:[#allocation2 + $0x9c] sm:$0xf]
      %v1060 = vld [vmem:[#allocation2 + $0xa0] sm:$0xf]
      %v1061 = vld [vmem:[#allocation2 + $0xa8] sm:$0xf]
      %v1062 = vld [vmem:[#allocation2 + $0xac] sm:$0xf]
      %v1063 = vld [vmem:[#allocation2 + $0xb4] sm:$0xf]
      %v1064 = vld [vmem:[#allocation2 + $0xb8] sm:$0xf]
      %v1065 = vld [vmem:[%s2] sm:$0xf]
      %v1066 = vld [vmem:[%s2 + $0x4] sm:$0xf]
      %v1067 = vld [vmem:[%s2 + $0x8] sm:$0xf]
      %v1068 = vld [vmem:[%s2 + $0xc] sm:$0xf]
      %v1069 = vld [vmem:[%s2 + $0x10] sm:$0xf]
      %v1070 = vld [vmem:[%s2 + $0x14] sm:$0xf]
      %v1071 = vld [vmem:[%s2 + $0x18] sm:$0xf]
      %v1072 = vld [vmem:[%s2 + $0x1c] sm:$0xf]
      %v1073 = vld [vmem:[%s2 + $0x20] sm:$0xf]
      %v1074 = vld [vmem:[%s2 + $0x24] sm:$0xf]
      %v1075 = vld [vmem:[%s2 + $0x28] sm:$0xf]
      %v1076 = vld [vmem:[%s2 + $0x2c] sm:$0xf]
      %v1077 = vld [vmem:[%s2 + $0x30] sm:$0xf]
      %v1078 = vld [vmem:[%s2 + $0x34] sm:$0xf]
      %v1079 = vld [vmem:[%s2 + $0x38] sm:$0xf]
      %v1080 = vld [vmem:[%s2 + $0x3c] sm:$0xf]
      %v1081 = vld [vmem:[#allocation2 + $0x8] sm:$0x1]
      %v1082 = vld [vmem:[#allocation2 + $0x14] sm:$0x1]
      %v1083 = vld [vmem:[#allocation2 + $0x20] sm:$0x1]
      %v1084 = vld [vmem:[#allocation2 + $0x2c] sm:$0x1]
      %v1085 = vld [vmem:[#allocation2 + $0x38] sm:$0x1]
      %v1086 = vld [vmem:[#allocation2 + $0x44] sm:$0x1]
      %v1087 = vld [vmem:[#allocation2 + $0x50] sm:$0x1]
      %v1088 = vld [vmem:[#allocation2 + $0x5c] sm:$0x1]
      %v1089 = vld [vmem:[#allocation2 + $0x68] sm:$0x1]
      %v1090 = vld [vmem:[#allocation2 + $0x74] sm:$0x1]
      %v1091 = vld [vmem:[#allocation2 + $0x80] sm:$0x1]
      %v1092 = vld [vmem:[#allocation2 + $0x8c] sm:$0x1]
      %v1093 = vld [vmem:[#allocation2 + $0x98] sm:$0x1]
      %v1094 = vld [vmem:[#allocation2 + $0xa4] sm:$0x1]
      %v1095 = vld [vmem:[#allocation2 + $0xb0] sm:$0x1]
      %v1096 = vld [vmem:[#allocation2 + $0xbc] sm:$0x1]
      %vm1097 = vsmask.f32 3328
      %vm1098 = vsmask.f32 7440
      %vm1099 = vmor %vm1097, %vm1098
      %v1101 = vshrl.u32 %v1033, 16
      %v1103 = vrot.slane %v1101, 4
      %v1104 = vshll.u32 %v1033, 16
      %v1106 = vrot.slane %v1104, 5
      %v1107 = vor.u32 %v1103, %v1106
      %v1108 = vrot.slane %v1107, 4
      %v1110 = vshll.u32 %v1034, 16
      %v1112 = vrot.slane %v1110, 5
      %v1113 = vsel %vm1099, %v1108, %v1112
      %v1114 = vshrl.u32 %v1034, 16
      %v1116 = vrot.slane %v1114, 4
      %v1117 = vor.u32 %v1116, %v1112
      %v1118 = vrot.slane %v1117, 4
      %v1120 = vshll.u32 %v1081, 16
      %v1122 = vrot.slane %v1120, 5
      %v1123 = vsel %vm1099, %v1118, %v1122
      %v1125 = vshrl.u32 %v1035, 16
      %v1127 = vrot.slane %v1125, 4
      %v1128 = vshll.u32 %v1035, 16
      %v1130 = vrot.slane %v1128, 5
      %v1131 = vor.u32 %v1127, %v1130
      %v1132 = vrot.slane %v1131, 4
      %v1134 = vshll.u32 %v1036, 16
      %v1136 = vrot.slane %v1134, 5
      %v1137 = vsel %vm1099, %v1132, %v1136
      %v1138 = vshrl.u32 %v1036, 16
      %v1140 = vrot.slane %v1138, 4
      %v1141 = vor.u32 %v1140, %v1136
      %v1142 = vrot.slane %v1141, 4
      %v1144 = vshll.u32 %v1082, 16
      %v1146 = vrot.slane %v1144, 5
      %v1147 = vsel %vm1099, %v1142, %v1146
      %v1149 = vshrl.u32 %v1037, 16
      %v1151 = vrot.slane %v1149, 4
      %v1152 = vshll.u32 %v1037, 16
      %v1154 = vrot.slane %v1152, 5
      %v1155 = vor.u32 %v1151, %v1154
      %v1156 = vrot.slane %v1155, 4
      %v1158 = vshll.u32 %v1038, 16
      %v1160 = vrot.slane %v1158, 5
      %v1161 = vsel %vm1099, %v1156, %v1160
      %v1162 = vshrl.u32 %v1038, 16
      %v1164 = vrot.slane %v1162, 4
      %v1165 = vor.u32 %v1164, %v1160
      %v1166 = vrot.slane %v1165, 4
      %v1168 = vshll.u32 %v1083, 16
      %v1170 = vrot.slane %v1168, 5
      %v1171 = vsel %vm1099, %v1166, %v1170
      %v1173 = vshrl.u32 %v1039, 16
      %v1175 = vrot.slane %v1173, 4
      %v1176 = vshll.u32 %v1039, 16
      %v1178 = vrot.slane %v1176, 5
      %v1179 = vor.u32 %v1175, %v1178
      %v1180 = vrot.slane %v1179, 4
      %v1182 = vshll.u32 %v1040, 16
      %v1184 = vrot.slane %v1182, 5
      %v1185 = vsel %vm1099, %v1180, %v1184
      %v1186 = vshrl.u32 %v1040, 16
      %v1188 = vrot.slane %v1186, 4
      %v1189 = vor.u32 %v1188, %v1184
      %v1190 = vrot.slane %v1189, 4
      %v1192 = vshll.u32 %v1084, 16
      %v1194 = vrot.slane %v1192, 5
      %v1195 = vsel %vm1099, %v1190, %v1194
      %v1197 = vshrl.u32 %v1041, 16
      %v1199 = vrot.slane %v1197, 4
      %v1200 = vshll.u32 %v1041, 16
      %v1202 = vrot.slane %v1200, 5
      %v1203 = vor.u32 %v1199, %v1202
      %v1204 = vrot.slane %v1203, 4
      %v1206 = vshll.u32 %v1042, 16
      %v1208 = vrot.slane %v1206, 5
      %v1209 = vsel %vm1099, %v1204, %v1208
      %v1210 = vshrl.u32 %v1042, 16
      %v1212 = vrot.slane %v1210, 4
      %v1213 = vor.u32 %v1212, %v1208
      %v1214 = vrot.slane %v1213, 4
      %v1216 = vshll.u32 %v1085, 16
      %v1218 = vrot.slane %v1216, 5
      %v1219 = vsel %vm1099, %v1214, %v1218
      %v1221 = vshrl.u32 %v1043, 16
      %v1223 = vrot.slane %v1221, 4
      %v1224 = vshll.u32 %v1043, 16
      %v1226 = vrot.slane %v1224, 5
      %v1227 = vor.u32 %v1223, %v1226
      %v1228 = vrot.slane %v1227, 4
      %v1230 = vshll.u32 %v1044, 16
      %v1232 = vrot.slane %v1230, 5
      %v1233 = vsel %vm1099, %v1228, %v1232
      %v1234 = vshrl.u32 %v1044, 16
      %v1236 = vrot.slane %v1234, 4
      %v1237 = vor.u32 %v1236, %v1232
      %v1238 = vrot.slane %v1237, 4
      %v1240 = vshll.u32 %v1086, 16
      %v1242 = vrot.slane %v1240, 5
      %v1243 = vsel %vm1099, %v1238, %v1242
      %v1245 = vshrl.u32 %v1045, 16
      %v1247 = vrot.slane %v1245, 4
      %v1248 = vshll.u32 %v1045, 16
      %v1250 = vrot.slane %v1248, 5
      %v1251 = vor.u32 %v1247, %v1250
      %v1252 = vrot.slane %v1251, 4
      %v1254 = vshll.u32 %v1046, 16
      %v1256 = vrot.slane %v1254, 5
      %v1257 = vsel %vm1099, %v1252, %v1256
      %v1258 = vshrl.u32 %v1046, 16
      %v1260 = vrot.slane %v1258, 4
      %v1261 = vor.u32 %v1260, %v1256
      %v1262 = vrot.slane %v1261, 4
      %v1264 = vshll.u32 %v1087, 16
      %v1266 = vrot.slane %v1264, 5
      %v1267 = vsel %vm1099, %v1262, %v1266
      %v1269 = vshrl.u32 %v1047, 16
      %v1271 = vrot.slane %v1269, 4
      %v1272 = vshll.u32 %v1047, 16
      %v1274 = vrot.slane %v1272, 5
      %v1275 = vor.u32 %v1271, %v1274
      %v1276 = vrot.slane %v1275, 4
      %v1278 = vshll.u32 %v1048, 16
      %v1280 = vrot.slane %v1278, 5
      %v1281 = vsel %vm1099, %v1276, %v1280
      %v1282 = vshrl.u32 %v1048, 16
      %v1284 = vrot.slane %v1282, 4
      %v1285 = vor.u32 %v1284, %v1280
      %v1286 = vrot.slane %v1285, 4
      %v1288 = vshll.u32 %v1088, 16
      %v1290 = vrot.slane %v1288, 5
      %v1291 = vsel %vm1099, %v1286, %v1290
      %v1293 = vshrl.u32 %v1049, 16
      %v1295 = vrot.slane %v1293, 4
      %v1296 = vshll.u32 %v1049, 16
      %v1298 = vrot.slane %v1296, 5
      %v1299 = vor.u32 %v1295, %v1298
      %v1300 = vrot.slane %v1299, 4
      %v1302 = vshll.u32 %v1050, 16
      %v1304 = vrot.slane %v1302, 5
      %v1305 = vsel %vm1099, %v1300, %v1304
      %v1306 = vshrl.u32 %v1050, 16
      %v1308 = vrot.slane %v1306, 4
      %v1309 = vor.u32 %v1308, %v1304
      %v1310 = vrot.slane %v1309, 4
      %v1312 = vshll.u32 %v1089, 16
      %v1314 = vrot.slane %v1312, 5
      %v1315 = vsel %vm1099, %v1310, %v1314
      %v1317 = vshrl.u32 %v1051, 16
      %v1319 = vrot.slane %v1317, 4
      %v1320 = vshll.u32 %v1051, 16
      %v1322 = vrot.slane %v1320, 5
      %v1323 = vor.u32 %v1319, %v1322
      %v1324 = vrot.slane %v1323, 4
      %v1326 = vshll.u32 %v1052, 16
      %v1328 = vrot.slane %v1326, 5
      %v1329 = vsel %vm1099, %v1324, %v1328
      %v1330 = vshrl.u32 %v1052, 16
      %v1332 = vrot.slane %v1330, 4
      %v1333 = vor.u32 %v1332, %v1328
      %v1334 = vrot.slane %v1333, 4
      %v1336 = vshll.u32 %v1090, 16
      %v1338 = vrot.slane %v1336, 5
      %v1339 = vsel %vm1099, %v1334, %v1338
      %v1341 = vshrl.u32 %v1053, 16
      %v1343 = vrot.slane %v1341, 4
      %v1344 = vshll.u32 %v1053, 16
      %v1346 = vrot.slane %v1344, 5
      %v1347 = vor.u32 %v1343, %v1346
      %v1348 = vrot.slane %v1347, 4
      %v1350 = vshll.u32 %v1054, 16
      %v1352 = vrot.slane %v1350, 5
      %v1353 = vsel %vm1099, %v1348, %v1352
      %v1354 = vshrl.u32 %v1054, 16
      %v1356 = vrot.slane %v1354, 4
      %v1357 = vor.u32 %v1356, %v1352
      %v1358 = vrot.slane %v1357, 4
      %v1360 = vshll.u32 %v1091, 16
      %v1362 = vrot.slane %v1360, 5
      %v1363 = vsel %vm1099, %v1358, %v1362
      %v1365 = vshrl.u32 %v1055, 16
      %v1367 = vrot.slane %v1365, 4
      %v1368 = vshll.u32 %v1055, 16
      %v1370 = vrot.slane %v1368, 5
      %v1371 = vor.u32 %v1367, %v1370
      %v1372 = vrot.slane %v1371, 4
      %v1374 = vshll.u32 %v1056, 16
      %v1376 = vrot.slane %v1374, 5
      %v1377 = vsel %vm1099, %v1372, %v1376
      %v1378 = vshrl.u32 %v1056, 16
      %v1380 = vrot.slane %v1378, 4
      %v1381 = vor.u32 %v1380, %v1376
      %v1382 = vrot.slane %v1381, 4
      %v1384 = vshll.u32 %v1092, 16
      %v1386 = vrot.slane %v1384, 5
      %v1387 = vsel %vm1099, %v1382, %v1386
      %v1389 = vshrl.u32 %v1057, 16
      %v1391 = vrot.slane %v1389, 4
      %v1392 = vshll.u32 %v1057, 16
      %v1394 = vrot.slane %v1392, 5
      %v1395 = vor.u32 %v1391, %v1394
      %v1396 = vrot.slane %v1395, 4
      %v1398 = vshll.u32 %v1058, 16
      %v1400 = vrot.slane %v1398, 5
      %v1401 = vsel %vm1099, %v1396, %v1400
      %v1402 = vshrl.u32 %v1058, 16
      %v1404 = vrot.slane %v1402, 4
      %v1405 = vor.u32 %v1404, %v1400
      %v1406 = vrot.slane %v1405, 4
      %v1408 = vshll.u32 %v1093, 16
      %v1410 = vrot.slane %v1408, 5
      %v1411 = vsel %vm1099, %v1406, %v1410
      %v1413 = vshrl.u32 %v1059, 16
      %v1415 = vrot.slane %v1413, 4
      %v1416 = vshll.u32 %v1059, 16
      %v1418 = vrot.slane %v1416, 5
      %v1419 = vor.u32 %v1415, %v1418
      %v1420 = vrot.slane %v1419, 4
      %v1422 = vshll.u32 %v1060, 16
      %v1424 = vrot.slane %v1422, 5
      %v1425 = vsel %vm1099, %v1420, %v1424
      %v1426 = vshrl.u32 %v1060, 16
      %v1428 = vrot.slane %v1426, 4
      %v1429 = vor.u32 %v1428, %v1424
      %v1430 = vrot.slane %v1429, 4
      %v1432 = vshll.u32 %v1094, 16
      %v1434 = vrot.slane %v1432, 5
      %v1435 = vsel %vm1099, %v1430, %v1434
      %v1437 = vshrl.u32 %v1061, 16
      %v1439 = vrot.slane %v1437, 4
      %v1440 = vshll.u32 %v1061, 16
      %v1442 = vrot.slane %v1440, 5
      %v1443 = vor.u32 %v1439, %v1442
      %v1444 = vrot.slane %v1443, 4
      %v1446 = vshll.u32 %v1062, 16
      %v1448 = vrot.slane %v1446, 5
      %v1449 = vsel %vm1099, %v1444, %v1448
      %v1450 = vshrl.u32 %v1062, 16
      %v1452 = vrot.slane %v1450, 4
      %v1453 = vor.u32 %v1452, %v1448
      %v1454 = vrot.slane %v1453, 4
      %v1456 = vshll.u32 %v1095, 16
      %v1458 = vrot.slane %v1456, 5
      %v1459 = vsel %vm1099, %v1454, %v1458
      %v1461 = vshrl.u32 %v1063, 16
      %v1463 = vrot.slane %v1461, 4
      %v1464 = vshll.u32 %v1063, 16
      %v1466 = vrot.slane %v1464, 5
      %v1467 = vor.u32 %v1463, %v1466
      %v1468 = vrot.slane %v1467, 4
      %v1470 = vshll.u32 %v1064, 16
      %v1472 = vrot.slane %v1470, 5
      %v1473 = vsel %vm1099, %v1468, %v1472
      %v1474 = vshrl.u32 %v1064, 16
      %v1476 = vrot.slane %v1474, 4
      %v1477 = vor.u32 %v1476, %v1472
      %v1478 = vrot.slane %v1477, 4
      %v1480 = vshll.u32 %v1096, 16
      %v1482 = vrot.slane %v1480, 5
      %v1483 = vsel %vm1099, %v1478, %v1482
      %s1484 = scalar_lea.vmem %s2, 64
      %v1485 = vld [vmem:[%s1484] sm:$0xf]
      %v1486 = vld [vmem:[%s1484 + $0x4] sm:$0xf]
      %v1487 = vld [vmem:[%s1484 + $0x8] sm:$0xf]
      %v1488 = vld [vmem:[%s1484 + $0xc] sm:$0xf]
      %v1489 = vld [vmem:[%s1484 + $0x10] sm:$0xf]
      %v1490 = vld [vmem:[%s1484 + $0x14] sm:$0xf]
      %v1491 = vld [vmem:[%s1484 + $0x18] sm:$0xf]
      %v1492 = vld [vmem:[%s1484 + $0x1c] sm:$0xf]
      %v1493 = vld [vmem:[%s1484 + $0x20] sm:$0xf]
      %v1494 = vld [vmem:[%s1484 + $0x24] sm:$0xf]
      %v1495 = vld [vmem:[%s1484 + $0x28] sm:$0xf]
      %v1496 = vld [vmem:[%s1484 + $0x2c] sm:$0xf]
      %v1497 = vld [vmem:[%s1484 + $0x30] sm:$0xf]
      %v1498 = vld [vmem:[%s1484 + $0x34] sm:$0xf]
      %v1499 = vld [vmem:[%s1484 + $0x38] sm:$0xf]
      %v1500 = vld [vmem:[%s1484 + $0x3c] sm:$0xf]
      %v1501 = vunpack.c.l.b16 %v1113
      %v1502 = vunpack.c.l.b16 %v1123
      %v1503 = vunpack.c.l.b16 %v1137
      %v1504 = vunpack.c.l.b16 %v1147
      %v1505 = vunpack.c.l.b16 %v1161
      %v1506 = vunpack.c.l.b16 %v1171
      %v1507 = vunpack.c.l.b16 %v1185
      %v1508 = vunpack.c.l.b16 %v1195
      %v1509 = vunpack.c.l.b16 %v1209
      %v1510 = vunpack.c.l.b16 %v1219
      %v1511 = vunpack.c.l.b16 %v1233
      %v1512 = vunpack.c.l.b16 %v1243
      %v1513 = vunpack.c.l.b16 %v1257
      %v1514 = vunpack.c.l.b16 %v1267
      %v1515 = vunpack.c.l.b16 %v1281
      %v1516 = vunpack.c.l.b16 %v1291
      %v1517 = vunpack.c.l.b16 %v1305
      %v1518 = vunpack.c.l.b16 %v1315
      %v1519 = vunpack.c.l.b16 %v1329
      %v1520 = vunpack.c.l.b16 %v1339
      %v1521 = vunpack.c.l.b16 %v1353
      %v1522 = vunpack.c.l.b16 %v1363
      %v1523 = vunpack.c.l.b16 %v1377
      %v1524 = vunpack.c.l.b16 %v1387
      %v1525 = vunpack.c.l.b16 %v1401
      %v1526 = vunpack.c.l.b16 %v1411
      %v1527 = vunpack.c.l.b16 %v1425
      %v1528 = vunpack.c.l.b16 %v1435
      %v1529 = vunpack.c.l.b16 %v1449
      %v1530 = vunpack.c.l.b16 %v1459
      %v1531 = vunpack.c.l.b16 %v1473
      %v1532 = vunpack.c.l.b16 %v1483
      %v1533 = vpack.c.b16 %v1502, %v1501
      %v1534 = vpack.c.b16 %v1504, %v1503
      %v1535 = vpack.c.b16 %v1506, %v1505
      %v1536 = vpack.c.b16 %v1508, %v1507
      %v1537 = vpack.c.b16 %v1510, %v1509
      %v1538 = vpack.c.b16 %v1512, %v1511
      %v1539 = vpack.c.b16 %v1514, %v1513
      %v1540 = vpack.c.b16 %v1516, %v1515
      %v1541 = vpack.c.b16 %v1518, %v1517
      %v1542 = vpack.c.b16 %v1520, %v1519
      %v1543 = vpack.c.b16 %v1522, %v1521
      %v1544 = vpack.c.b16 %v1524, %v1523
      %v1545 = vpack.c.b16 %v1526, %v1525
      %v1546 = vpack.c.b16 %v1528, %v1527
      %v1547 = vpack.c.b16 %v1530, %v1529
      %v1548 = vpack.c.b16 %v1532, %v1531
      %v1581 = vunpack.c.l.b16 %v1485
      %v1582 = vunpack.c.l.b16 %v1486
      %v1583 = vunpack.c.l.b16 %v1487
      %v1584 = vunpack.c.l.b16 %v1488
      %v1585 = vunpack.c.l.b16 %v1489
      %v1586 = vunpack.c.l.b16 %v1490
      %v1587 = vunpack.c.l.b16 %v1491
      %v1588 = vunpack.c.l.b16 %v1492
      %v1589 = vunpack.c.l.b16 %v1493
      %v1590 = vunpack.c.l.b16 %v1494
      %v1591 = vunpack.c.l.b16 %v1495
      %v1592 = vunpack.c.l.b16 %v1496
      %v1593 = vunpack.c.l.b16 %v1497
      %v1594 = vunpack.c.l.b16 %v1498
      %v1595 = vunpack.c.l.b16 %v1499
      %v1596 = vunpack.c.l.b16 %v1500
      %v1597 = vpack.c.b16 %v1582, %v1581
      %v1598 = vpack.c.b16 %v1584, %v1583
      %v1599 = vpack.c.b16 %v1586, %v1585
      %v1600 = vpack.c.b16 %v1588, %v1587
      %v1601 = vpack.c.b16 %v1590, %v1589
      %v1602 = vpack.c.b16 %v1592, %v1591
      %v1603 = vpack.c.b16 %v1594, %v1593
      %v1604 = vpack.c.b16 %v1596, %v1595
      %1613 = vmatprep.subr.bf16.mxu0 0
      %1614 = vmatpush1.bf16.msra.mxu0 %v1604
      %1615 = vmatprep.subr.bf16.mxu0 0
      %1616 = vmatpush1.bf16.msra.mxu0 %v1603
      %1617 = vmatprep.subr.bf16.mxu0 0
      %1618 = vmatpush1.bf16.msra.mxu0 %v1602
      %1619 = vmatprep.subr.bf16.mxu0 0
      %1620 = vmatpush1.bf16.msra.mxu0 %v1601
      %1621 = vmatprep.subr.bf16.mxu0 0
      %1622 = vmatpush1.bf16.msra.mxu0 %v1600
      %1623 = vmatprep.subr.bf16.mxu0 0
      %1624 = vmatpush1.bf16.msra.mxu0 %v1599
      %1625 = vmatprep.subr.bf16.mxu0 0
      %1626 = vmatpush1.bf16.msra.mxu0 %v1598
      %1627 = vmatprep.subr.bf16.mxu0 0
      %1628 = vmatpush1.bf16.msra.mxu0 %v1597
      %1629 = vmatprep.subr.bf16.mxu0 0
      %1630 = vmatpush2.bf16.msra.mxu0 0
      %1631 = vmatprep.subr.bf16.mxu0 0
      %1632 = vmatpush2.bf16.msra.mxu0 0
      %1633 = vmatprep.subr.bf16.mxu0 0
      %1634 = vmatpush2.bf16.msra.mxu0 0
      %1635 = vmatprep.subr.bf16.mxu0 0
      %1636 = vmatpush2.bf16.msra.mxu0 0
      %1637 = vmatprep.subr.bf16.mxu0 0
      %1638 = vmatpush2.bf16.msra.mxu0 0
      %1639 = vmatprep.subr.bf16.mxu0 0
      %1640 = vmatpush2.bf16.msra.mxu0 0
      %1641 = vmatprep.subr.bf16.mxu0 0
      %1642 = vmatpush2.bf16.msra.mxu0 0
      %1643 = vmatprep.subr.bf16.mxu0 0
      %1644 = vmatpush2.bf16.msra.mxu0 0
      %1645 = vmatprep.mubr.bf16.mxu0 0
      %1646 = vmatmul.mubr.bf16.gmra.mxu0 %v1533
      %v1647 = vpop.f32.mrf.mxu0
      %v1648 = vadd.f32 0.0, %v1647
      %v1649 = vpop.f32.mrf.mxu0
      %v1650 = vpop.f32.mrf.mxu0
      %v1651 = vadd.f32 0.0, %v1650
      %v1652 = vpop.f32.mrf.mxu0
      %1653 = vmatprep.mubr.bf16.mxu0 0
      %1654 = vmatmul.mubr.bf16.gmra.mxu0 %v1534
      %v1655 = vpop.f32.mrf.mxu0
      %v1656 = vadd.f32 0.0, %v1655
      %v1657 = vpop.f32.mrf.mxu0
      %v1658 = vpop.f32.mrf.mxu0
      %v1659 = vadd.f32 0.0, %v1658
      %v1660 = vpop.f32.mrf.mxu0
      %1661 = vmatprep.mubr.bf16.mxu0 0
      %1662 = vmatmul.mubr.bf16.gmra.mxu0 %v1535
      %v1663 = vpop.f32.mrf.mxu0
      %v1664 = vadd.f32 0.0, %v1663
      %v1665 = vpop.f32.mrf.mxu0
      %v1666 = vpop.f32.mrf.mxu0
      %v1667 = vadd.f32 0.0, %v1666
      %v1668 = vpop.f32.mrf.mxu0
      %1669 = vmatprep.mubr.bf16.mxu0 0
      %1670 = vmatmul.mubr.bf16.gmra.mxu0 %v1536
      %v1671 = vpop.f32.mrf.mxu0
      %v1672 = vadd.f32 0.0, %v1671
      %v1673 = vpop.f32.mrf.mxu0
      %v1674 = vpop.f32.mrf.mxu0
      %v1675 = vadd.f32 0.0, %v1674
      %v1676 = vpop.f32.mrf.mxu0
      %1677 = vmatprep.mubr.bf16.mxu0 0
      %1678 = vmatmul.mubr.bf16.gmra.mxu0 %v1537
      %v1679 = vpop.f32.mrf.mxu0
      %v1680 = vadd.f32 0.0, %v1679
      %v1681 = vpop.f32.mrf.mxu0
      %v1682 = vpop.f32.mrf.mxu0
      %v1683 = vadd.f32 0.0, %v1682
      %v1684 = vpop.f32.mrf.mxu0
      %1685 = vmatprep.mubr.bf16.mxu0 0
      %1686 = vmatmul.mubr.bf16.gmra.mxu0 %v1538
      %v1687 = vpop.f32.mrf.mxu0
      %v1688 = vadd.f32 0.0, %v1687
      %v1689 = vpop.f32.mrf.mxu0
      %v1690 = vpop.f32.mrf.mxu0
      %v1691 = vadd.f32 0.0, %v1690
      %v1692 = vpop.f32.mrf.mxu0
      %1693 = vmatprep.mubr.bf16.mxu0 0
      %1694 = vmatmul.mubr.bf16.gmra.mxu0 %v1539
      %v1695 = vpop.f32.mrf.mxu0
      %v1696 = vadd.f32 0.0, %v1695
      %v1697 = vpop.f32.mrf.mxu0
      %v1698 = vpop.f32.mrf.mxu0
      %v1699 = vadd.f32 0.0, %v1698
      %v1700 = vpop.f32.mrf.mxu0
      %1701 = vmatprep.mubr.bf16.mxu0 0
      %1702 = vmatmul.mubr.bf16.gmra.mxu0 %v1540
      %v1703 = vpop.f32.mrf.mxu0
      %v1704 = vadd.f32 0.0, %v1703
      %v1705 = vpop.f32.mrf.mxu0
      %v1706 = vpop.f32.mrf.mxu0
      %v1707 = vadd.f32 0.0, %v1706
      %v1708 = vpop.f32.mrf.mxu0
      %1709 = vmatprep.mubr.bf16.mxu0 0
      %1710 = vmatmul.mubr.bf16.gmra.mxu0 %v1541
      %v1711 = vpop.f32.mrf.mxu0
      %v1712 = vadd.f32 0.0, %v1711
      %v1713 = vpop.f32.mrf.mxu0
      %v1714 = vpop.f32.mrf.mxu0
      %v1715 = vadd.f32 0.0, %v1714
      %v1716 = vpop.f32.mrf.mxu0
      %1717 = vmatprep.mubr.bf16.mxu0 0
      %1718 = vmatmul.mubr.bf16.gmra.mxu0 %v1542
      %v1719 = vpop.f32.mrf.mxu0
      %v1720 = vadd.f32 0.0, %v1719
      %v1721 = vpop.f32.mrf.mxu0
      %v1722 = vpop.f32.mrf.mxu0
      %v1723 = vadd.f32 0.0, %v1722
      %v1724 = vpop.f32.mrf.mxu0
      %1725 = vmatprep.mubr.bf16.mxu0 0
      %1726 = vmatmul.mubr.bf16.gmra.mxu0 %v1543
      %v1727 = vpop.f32.mrf.mxu0
      %v1728 = vadd.f32 0.0, %v1727
      %v1729 = vpop.f32.mrf.mxu0
      %v1730 = vpop.f32.mrf.mxu0
      %v1731 = vadd.f32 0.0, %v1730
      %v1732 = vpop.f32.mrf.mxu0
      %1733 = vmatprep.mubr.bf16.mxu0 0
      %1734 = vmatmul.mubr.bf16.gmra.mxu0 %v1544
      %v1735 = vpop.f32.mrf.mxu0
      %v1736 = vadd.f32 0.0, %v1735
      %v1737 = vpop.f32.mrf.mxu0
      %v1738 = vpop.f32.mrf.mxu0
      %v1739 = vadd.f32 0.0, %v1738
      %v1740 = vpop.f32.mrf.mxu0
      %1741 = vmatprep.mubr.bf16.mxu0 0
      %1742 = vmatmul.mubr.bf16.gmra.mxu0 %v1545
      %v1743 = vpop.f32.mrf.mxu0
      %v1744 = vadd.f32 0.0, %v1743
      %v1745 = vpop.f32.mrf.mxu0
      %v1746 = vpop.f32.mrf.mxu0
      %v1747 = vadd.f32 0.0, %v1746
      %v1748 = vpop.f32.mrf.mxu0
      %1749 = vmatprep.mubr.bf16.mxu0 0
      %1750 = vmatmul.mubr.bf16.gmra.mxu0 %v1546
      %v1751 = vpop.f32.mrf.mxu0
      %v1752 = vadd.f32 0.0, %v1751
      %v1753 = vpop.f32.mrf.mxu0
      %v1754 = vpop.f32.mrf.mxu0
      %v1755 = vadd.f32 0.0, %v1754
      %v1756 = vpop.f32.mrf.mxu0
      %1757 = vmatprep.mubr.bf16.mxu0 0
      %1758 = vmatmul.mubr.bf16.gmra.mxu0 %v1547
      %v1759 = vpop.f32.mrf.mxu0
      %v1760 = vadd.f32 0.0, %v1759
      %v1761 = vpop.f32.mrf.mxu0
      %v1762 = vpop.f32.mrf.mxu0
      %v1763 = vadd.f32 0.0, %v1762
      %v1764 = vpop.f32.mrf.mxu0
      %1765 = vmatprep.mubr.bf16.mxu0 0
      %1766 = vmatmul.mubr.bf16.gmra.mxu0 %v1548
      %v1767 = vpop.f32.mrf.mxu0
      %v1768 = vadd.f32 0.0, %v1767
      %v1769 = vpop.f32.mrf.mxu0
      %v1770 = vpop.f32.mrf.mxu0
      %v1771 = vadd.f32 0.0, %v1770
      %v1772 = vpop.f32.mrf.mxu0
      %1773 = vdwg.mxu0
      %v1806 = vunpack.c.l.b16 %v1033
      %v1807 = vunpack.c.l.b16 %v1034
      %v1808 = vunpack.c.l.b16 %v1035
      %v1809 = vunpack.c.l.b16 %v1036
      %v1810 = vunpack.c.l.b16 %v1037
      %v1811 = vunpack.c.l.b16 %v1038
      %v1812 = vunpack.c.l.b16 %v1039
      %v1813 = vunpack.c.l.b16 %v1040
      %v1814 = vunpack.c.l.b16 %v1041
      %v1815 = vunpack.c.l.b16 %v1042
      %v1816 = vunpack.c.l.b16 %v1043
      %v1817 = vunpack.c.l.b16 %v1044
      %v1818 = vunpack.c.l.b16 %v1045
      %v1819 = vunpack.c.l.b16 %v1046
      %v1820 = vunpack.c.l.b16 %v1047
      %v1821 = vunpack.c.l.b16 %v1048
      %v1822 = vunpack.c.l.b16 %v1049
      %v1823 = vunpack.c.l.b16 %v1050
      %v1824 = vunpack.c.l.b16 %v1051
      %v1825 = vunpack.c.l.b16 %v1052
      %v1826 = vunpack.c.l.b16 %v1053
      %v1827 = vunpack.c.l.b16 %v1054
      %v1828 = vunpack.c.l.b16 %v1055
      %v1829 = vunpack.c.l.b16 %v1056
      %v1830 = vunpack.c.l.b16 %v1057
      %v1831 = vunpack.c.l.b16 %v1058
      %v1832 = vunpack.c.l.b16 %v1059
      %v1833 = vunpack.c.l.b16 %v1060
      %v1834 = vunpack.c.l.b16 %v1061
      %v1835 = vunpack.c.l.b16 %v1062
      %v1836 = vunpack.c.l.b16 %v1063
      %v1837 = vunpack.c.l.b16 %v1064
      %v1838 = vpack.c.b16 %v1807, %v1806
      %v1839 = vpack.c.b16 %v1809, %v1808
      %v1840 = vpack.c.b16 %v1811, %v1810
      %v1841 = vpack.c.b16 %v1813, %v1812
      %v1842 = vpack.c.b16 %v1815, %v1814
      %v1843 = vpack.c.b16 %v1817, %v1816
      %v1844 = vpack.c.b16 %v1819, %v1818
      %v1845 = vpack.c.b16 %v1821, %v1820
      %v1846 = vpack.c.b16 %v1823, %v1822
      %v1847 = vpack.c.b16 %v1825, %v1824
      %v1848 = vpack.c.b16 %v1827, %v1826
      %v1849 = vpack.c.b16 %v1829, %v1828
      %v1850 = vpack.c.b16 %v1831, %v1830
      %v1851 = vpack.c.b16 %v1833, %v1832
      %v1852 = vpack.c.b16 %v1835, %v1834
      %v1853 = vpack.c.b16 %v1837, %v1836
      %v1886 = vunpack.c.l.b16 %v1065
      %v1887 = vunpack.c.l.b16 %v1066
      %v1888 = vunpack.c.l.b16 %v1067
      %v1889 = vunpack.c.l.b16 %v1068
      %v1890 = vunpack.c.l.b16 %v1069
      %v1891 = vunpack.c.l.b16 %v1070
      %v1892 = vunpack.c.l.b16 %v1071
      %v1893 = vunpack.c.l.b16 %v1072
      %v1894 = vunpack.c.l.b16 %v1073
      %v1895 = vunpack.c.l.b16 %v1074
      %v1896 = vunpack.c.l.b16 %v1075
      %v1897 = vunpack.c.l.b16 %v1076
      %v1898 = vunpack.c.l.b16 %v1077
      %v1899 = vunpack.c.l.b16 %v1078
      %v1900 = vunpack.c.l.b16 %v1079
      %v1901 = vunpack.c.l.b16 %v1080
      %v1902 = vpack.c.b16 %v1887, %v1886
      %v1903 = vpack.c.b16 %v1889, %v1888
      %v1904 = vpack.c.b16 %v1891, %v1890
      %v1905 = vpack.c.b16 %v1893, %v1892
      %v1906 = vpack.c.b16 %v1895, %v1894
      %v1907 = vpack.c.b16 %v1897, %v1896
      %v1908 = vpack.c.b16 %v1899, %v1898
      %v1909 = vpack.c.b16 %v1901, %v1900
      %1918 = vmatprep.subr.bf16.mxu0 0
      %1919 = vmatpush1.bf16.msra.mxu0 %v1909
      %1920 = vmatprep.subr.bf16.mxu0 0
      %1921 = vmatpush1.bf16.msra.mxu0 %v1908
      %1922 = vmatprep.subr.bf16.mxu0 0
      %1923 = vmatpush1.bf16.msra.mxu0 %v1907
      %1924 = vmatprep.subr.bf16.mxu0 0
      %1925 = vmatpush1.bf16.msra.mxu0 %v1906
      %1926 = vmatprep.subr.bf16.mxu0 0
      %1927 = vmatpush1.bf16.msra.mxu0 %v1905
      %1928 = vmatprep.subr.bf16.mxu0 0
      %1929 = vmatpush1.bf16.msra.mxu0 %v1904
      %1930 = vmatprep.subr.bf16.mxu0 0
      %1931 = vmatpush1.bf16.msra.mxu0 %v1903
      %1932 = vmatprep.subr.bf16.mxu0 0
      %1933 = vmatpush1.bf16.msra.mxu0 %v1902
      %1934 = vmatprep.subr.bf16.mxu0 0
      %1935 = vmatpush2.bf16.msra.mxu0 0
      %1936 = vmatprep.subr.bf16.mxu0 0
      %1937 = vmatpush2.bf16.msra.mxu0 0
      %1938 = vmatprep.subr.bf16.mxu0 0
      %1939 = vmatpush2.bf16.msra.mxu0 0
      %1940 = vmatprep.subr.bf16.mxu0 0
      %1941 = vmatpush2.bf16.msra.mxu0 0
      %1942 = vmatprep.subr.bf16.mxu0 0
      %1943 = vmatpush2.bf16.msra.mxu0 0
      %1944 = vmatprep.subr.bf16.mxu0 0
      %1945 = vmatpush2.bf16.msra.mxu0 0
      %1946 = vmatprep.subr.bf16.mxu0 0
      %1947 = vmatpush2.bf16.msra.mxu0 0
      %1948 = vmatprep.subr.bf16.mxu0 0
      %1949 = vmatpush2.bf16.msra.mxu0 0
      %1950 = vmatprep.mubr.bf16.mxu0 0
      %1951 = vmatmul.mubr.bf16.gmra.mxu0 %v1838
      %v1952 = vpop.f32.mrf.mxu0
      %v1953 = vadd.f32 %v1648, %v1952
      %v1954 = vpop.f32.mrf.mxu0
      %v1955 = vpop.f32.mrf.mxu0
      %v1956 = vadd.f32 %v1651, %v1955
      %v1957 = vpop.f32.mrf.mxu0
      %1958 = vmatprep.mubr.bf16.mxu0 0
      %1959 = vmatmul.mubr.bf16.gmra.mxu0 %v1839
      %v1960 = vpop.f32.mrf.mxu0
      %v1961 = vadd.f32 %v1656, %v1960
      %v1962 = vpop.f32.mrf.mxu0
      %v1963 = vpop.f32.mrf.mxu0
      %v1964 = vadd.f32 %v1659, %v1963
      %v1965 = vpop.f32.mrf.mxu0
      %1966 = vmatprep.mubr.bf16.mxu0 0
      %1967 = vmatmul.mubr.bf16.gmra.mxu0 %v1840
      %v1968 = vpop.f32.mrf.mxu0
      %v1969 = vadd.f32 %v1664, %v1968
      %v1970 = vpop.f32.mrf.mxu0
      %v1971 = vpop.f32.mrf.mxu0
      %v1972 = vadd.f32 %v1667, %v1971
      %v1973 = vpop.f32.mrf.mxu0
      %1974 = vmatprep.mubr.bf16.mxu0 0
      %1975 = vmatmul.mubr.bf16.gmra.mxu0 %v1841
      %v1976 = vpop.f32.mrf.mxu0
      %v1977 = vadd.f32 %v1672, %v1976
      %v1978 = vpop.f32.mrf.mxu0
      %v1979 = vpop.f32.mrf.mxu0
      %v1980 = vadd.f32 %v1675, %v1979
      %v1981 = vpop.f32.mrf.mxu0
      %1982 = vmatprep.mubr.bf16.mxu0 0
      %1983 = vmatmul.mubr.bf16.gmra.mxu0 %v1842
      %v1984 = vpop.f32.mrf.mxu0
      %v1985 = vadd.f32 %v1680, %v1984
      %v1986 = vpop.f32.mrf.mxu0
      %v1987 = vpop.f32.mrf.mxu0
      %v1988 = vadd.f32 %v1683, %v1987
      %v1989 = vpop.f32.mrf.mxu0
      %1990 = vmatprep.mubr.bf16.mxu0 0
      %1991 = vmatmul.mubr.bf16.gmra.mxu0 %v1843
      %v1992 = vpop.f32.mrf.mxu0
      %v1993 = vadd.f32 %v1688, %v1992
      %v1994 = vpop.f32.mrf.mxu0
      %v1995 = vpop.f32.mrf.mxu0
      %v1996 = vadd.f32 %v1691, %v1995
      %v1997 = vpop.f32.mrf.mxu0
      %1998 = vmatprep.mubr.bf16.mxu0 0
      %1999 = vmatmul.mubr.bf16.gmra.mxu0 %v1844
      %v2000 = vpop.f32.mrf.mxu0
      %v2001 = vadd.f32 %v1696, %v2000
      %v2002 = vpop.f32.mrf.mxu0
      %v2003 = vpop.f32.mrf.mxu0
      %v2004 = vadd.f32 %v1699, %v2003
      %v2005 = vpop.f32.mrf.mxu0
      %2006 = vmatprep.mubr.bf16.mxu0 0
      %2007 = vmatmul.mubr.bf16.gmra.mxu0 %v1845
      %v2008 = vpop.f32.mrf.mxu0
      %v2009 = vadd.f32 %v1704, %v2008
      %v2010 = vpop.f32.mrf.mxu0
      %v2011 = vpop.f32.mrf.mxu0
      %v2012 = vadd.f32 %v1707, %v2011
      %v2013 = vpop.f32.mrf.mxu0
      %2014 = vmatprep.mubr.bf16.mxu0 0
      %2015 = vmatmul.mubr.bf16.gmra.mxu0 %v1846
      %v2016 = vpop.f32.mrf.mxu0
      %v2017 = vadd.f32 %v1712, %v2016
      %v2018 = vpop.f32.mrf.mxu0
      %v2019 = vpop.f32.mrf.mxu0
      %v2020 = vadd.f32 %v1715, %v2019
      %v2021 = vpop.f32.mrf.mxu0
      %2022 = vmatprep.mubr.bf16.mxu0 0
      %2023 = vmatmul.mubr.bf16.gmra.mxu0 %v1847
      %v2024 = vpop.f32.mrf.mxu0
      %v2025 = vadd.f32 %v1720, %v2024
      %v2026 = vpop.f32.mrf.mxu0
      %v2027 = vpop.f32.mrf.mxu0
      %v2028 = vadd.f32 %v1723, %v2027
      %v2029 = vpop.f32.mrf.mxu0
      %2030 = vmatprep.mubr.bf16.mxu0 0
      %2031 = vmatmul.mubr.bf16.gmra.mxu0 %v1848
      %v2032 = vpop.f32.mrf.mxu0
      %v2033 = vadd.f32 %v1728, %v2032
      %v2034 = vpop.f32.mrf.mxu0
      %v2035 = vpop.f32.mrf.mxu0
      %v2036 = vadd.f32 %v1731, %v2035
      %v2037 = vpop.f32.mrf.mxu0
      %2038 = vmatprep.mubr.bf16.mxu0 0
      %2039 = vmatmul.mubr.bf16.gmra.mxu0 %v1849
      %v2040 = vpop.f32.mrf.mxu0
      %v2041 = vadd.f32 %v1736, %v2040
      %v2042 = vpop.f32.mrf.mxu0
      %v2043 = vpop.f32.mrf.mxu0
      %v2044 = vadd.f32 %v1739, %v2043
      %v2045 = vpop.f32.mrf.mxu0
      %2046 = vmatprep.mubr.bf16.mxu0 0
      %2047 = vmatmul.mubr.bf16.gmra.mxu0 %v1850
      %v2048 = vpop.f32.mrf.mxu0
      %v2049 = vadd.f32 %v1744, %v2048
      %v2050 = vpop.f32.mrf.mxu0
      %v2051 = vpop.f32.mrf.mxu0
      %v2052 = vadd.f32 %v1747, %v2051
      %v2053 = vpop.f32.mrf.mxu0
      %2054 = vmatprep.mubr.bf16.mxu0 0
      %2055 = vmatmul.mubr.bf16.gmra.mxu0 %v1851
      %v2056 = vpop.f32.mrf.mxu0
      %v2057 = vadd.f32 %v1752, %v2056
      %v2058 = vpop.f32.mrf.mxu0
      %v2059 = vpop.f32.mrf.mxu0
      %v2060 = vadd.f32 %v1755, %v2059
      %v2061 = vpop.f32.mrf.mxu0
      %2062 = vmatprep.mubr.bf16.mxu0 0
      %2063 = vmatmul.mubr.bf16.gmra.mxu0 %v1852
      %v2064 = vpop.f32.mrf.mxu0
      %v2065 = vadd.f32 %v1760, %v2064
      %v2066 = vpop.f32.mrf.mxu0
      %v2067 = vpop.f32.mrf.mxu0
      %v2068 = vadd.f32 %v1763, %v2067
      %v2069 = vpop.f32.mrf.mxu0
      %2070 = vmatprep.mubr.bf16.mxu0 0
      %2071 = vmatmul.mubr.bf16.gmra.mxu0 %v1853
      %v2072 = vpop.f32.mrf.mxu0
      %v2073 = vadd.f32 %v1768, %v2072
      %v2074 = vpop.f32.mrf.mxu0
      %v2075 = vpop.f32.mrf.mxu0
      %v2076 = vadd.f32 %v1771, %v2075
      %v2077 = vpop.f32.mrf.mxu0
      %2078 = vdwg.mxu0
      %v2079 = vld [vmem:[#allocation2] sm:$0xe]
      %v2080 = vld [vmem:[#allocation2 + $0xc] sm:$0xe]
      %v2081 = vld [vmem:[#allocation2 + $0x18] sm:$0xe]
      %v2082 = vld [vmem:[#allocation2 + $0x24] sm:$0xe]
      %v2083 = vld [vmem:[#allocation2 + $0x30] sm:$0xe]
      %v2084 = vld [vmem:[#allocation2 + $0x3c] sm:$0xe]
      %v2085 = vld [vmem:[#allocation2 + $0x48] sm:$0xe]
      %v2086 = vld [vmem:[#allocation2 + $0x54] sm:$0xe]
      %v2087 = vld [vmem:[#allocation2 + $0x60] sm:$0xe]
      %v2088 = vld [vmem:[#allocation2 + $0x6c] sm:$0xe]
      %v2089 = vld [vmem:[#allocation2 + $0x78] sm:$0xe]
      %v2090 = vld [vmem:[#allocation2 + $0x84] sm:$0xe]
      %v2091 = vld [vmem:[#allocation2 + $0x90] sm:$0xe]
      %v2092 = vld [vmem:[#allocation2 + $0x9c] sm:$0xe]
      %v2093 = vld [vmem:[#allocation2 + $0xa8] sm:$0xe]
      %v2094 = vld [vmem:[#allocation2 + $0xb4] sm:$0xe]
      %vm2127 = vcmask 1042432
      %vm2128 = vcmask 1046532
      %vm2129 = vmor %vm2127, %vm2128
      %v2130 = vrot.slane %v2079, 5
      %v2131 = vrot.slane %v2130, 4
      %v2132 = vrot.slane %v1034, 5
      %v2133 = vsel %vm2129, %v2131, %v2132
      %v2134 = vrot.slane %v2132, 4
      %v2135 = vrot.slane %v1081, 5
      %v2136 = vsel %vm2129, %v2134, %v2135
      %v2137 = vrot.slane %v2080, 5
      %v2138 = vrot.slane %v2137, 4
      %v2139 = vrot.slane %v1036, 5
      %v2140 = vsel %vm2129, %v2138, %v2139
      %v2141 = vrot.slane %v2139, 4
      %v2142 = vrot.slane %v1082, 5
      %v2143 = vsel %vm2129, %v2141, %v2142
      %v2144 = vrot.slane %v2081, 5
      %v2145 = vrot.slane %v2144, 4
      %v2146 = vrot.slane %v1038, 5
      %v2147 = vsel %vm2129, %v2145, %v2146
      %v2148 = vrot.slane %v2146, 4
      %v2149 = vrot.slane %v1083, 5
      %v2150 = vsel %vm2129, %v2148, %v2149
      %v2151 = vrot.slane %v2082, 5
      %v2152 = vrot.slane %v2151, 4
      %v2153 = vrot.slane %v1040, 5
      %v2154 = vsel %vm2129, %v2152, %v2153
      %v2155 = vrot.slane %v2153, 4
      %v2156 = vrot.slane %v1084, 5
      %v2157 = vsel %vm2129, %v2155, %v2156
      %v2158 = vrot.slane %v2083, 5
      %v2159 = vrot.slane %v2158, 4
      %v2160 = vrot.slane %v1042, 5
      %v2161 = vsel %vm2129, %v2159, %v2160
      %v2162 = vrot.slane %v2160, 4
      %v2163 = vrot.slane %v1085, 5
      %v2164 = vsel %vm2129, %v2162, %v2163
      %v2165 = vrot.slane %v2084, 5
      %v2166 = vrot.slane %v2165, 4
      %v2167 = vrot.slane %v1044, 5
      %v2168 = vsel %vm2129, %v2166, %v2167
      %v2169 = vrot.slane %v2167, 4
      %v2170 = vrot.slane %v1086, 5
      %v2171 = vsel %vm2129, %v2169, %v2170
      %v2172 = vrot.slane %v2085, 5
      %v2173 = vrot.slane %v2172, 4
      %v2174 = vrot.slane %v1046, 5
      %v2175 = vsel %vm2129, %v2173, %v2174
      %v2176 = vrot.slane %v2174, 4
      %v2177 = vrot.slane %v1087, 5
      %v2178 = vsel %vm2129, %v2176, %v2177
      %v2179 = vrot.slane %v2086, 5
      %v2180 = vrot.slane %v2179, 4
      %v2181 = vrot.slane %v1048, 5
      %v2182 = vsel %vm2129, %v2180, %v2181
      %v2183 = vrot.slane %v2181, 4
      %v2184 = vrot.slane %v1088, 5
      %v2185 = vsel %vm2129, %v2183, %v2184
      %v2186 = vrot.slane %v2087, 5
      %v2187 = vrot.slane %v2186, 4
      %v2188 = vrot.slane %v1050, 5
      %v2189 = vsel %vm2129, %v2187, %v2188
      %v2190 = vrot.slane %v2188, 4
      %v2191 = vrot.slane %v1089, 5
      %v2192 = vsel %vm2129, %v2190, %v2191
      %v2193 = vrot.slane %v2088, 5
      %v2194 = vrot.slane %v2193, 4
      %v2195 = vrot.slane %v1052, 5
      %v2196 = vsel %vm2129, %v2194, %v2195
      %v2197 = vrot.slane %v2195, 4
      %v2198 = vrot.slane %v1090, 5
      %v2199 = vsel %vm2129, %v2197, %v2198
      %v2200 = vrot.slane %v2089, 5
      %v2201 = vrot.slane %v2200, 4
      %v2202 = vrot.slane %v1054, 5
      %v2203 = vsel %vm2129, %v2201, %v2202
      %v2204 = vrot.slane %v2202, 4
      %v2205 = vrot.slane %v1091, 5
      %v2206 = vsel %vm2129, %v2204, %v2205
      %v2207 = vrot.slane %v2090, 5
      %v2208 = vrot.slane %v2207, 4
      %v2209 = vrot.slane %v1056, 5
      %v2210 = vsel %vm2129, %v2208, %v2209
      %v2211 = vrot.slane %v2209, 4
      %v2212 = vrot.slane %v1092, 5
      %v2213 = vsel %vm2129, %v2211, %v2212
      %v2214 = vrot.slane %v2091, 5
      %v2215 = vrot.slane %v2214, 4
      %v2216 = vrot.slane %v1058, 5
      %v2217 = vsel %vm2129, %v2215, %v2216
      %v2218 = vrot.slane %v2216, 4
      %v2219 = vrot.slane %v1093, 5
      %v2220 = vsel %vm2129, %v2218, %v2219
      %v2221 = vrot.slane %v2092, 5
      %v2222 = vrot.slane %v2221, 4
      %v2223 = vrot.slane %v1060, 5
      %v2224 = vsel %vm2129, %v2222, %v2223
      %v2225 = vrot.slane %v2223, 4
      %v2226 = vrot.slane %v1094, 5
      %v2227 = vsel %vm2129, %v2225, %v2226
      %v2228 = vrot.slane %v2093, 5
      %v2229 = vrot.slane %v2228, 4
      %v2230 = vrot.slane %v1062, 5
      %v2231 = vsel %vm2129, %v2229, %v2230
      %v2232 = vrot.slane %v2230, 4
      %v2233 = vrot.slane %v1095, 5
      %v2234 = vsel %vm2129, %v2232, %v2233
      %v2235 = vrot.slane %v2094, 5
      %v2236 = vrot.slane %v2235, 4
      %v2237 = vrot.slane %v1064, 5
      %v2238 = vsel %vm2129, %v2236, %v2237
      %v2239 = vrot.slane %v2237, 4
      %v2240 = vrot.slane %v1096, 5
      %v2241 = vsel %vm2129, %v2239, %v2240
      %s2242 = scalar_lea.vmem %s2, 128
      %v2243 = vld [vmem:[%s2242] sm:$0xf]
      %v2244 = vld [vmem:[%s2242 + $0x4] sm:$0xf]
      %v2245 = vld [vmem:[%s2242 + $0x8] sm:$0xf]
      %v2246 = vld [vmem:[%s2242 + $0xc] sm:$0xf]
      %v2247 = vld [vmem:[%s2242 + $0x10] sm:$0xf]
      %v2248 = vld [vmem:[%s2242 + $0x14] sm:$0xf]
      %v2249 = vld [vmem:[%s2242 + $0x18] sm:$0xf]
      %v2250 = vld [vmem:[%s2242 + $0x1c] sm:$0xf]
      %v2251 = vld [vmem:[%s2242 + $0x20] sm:$0xf]
      %v2252 = vld [vmem:[%s2242 + $0x24] sm:$0xf]
      %v2253 = vld [vmem:[%s2242 + $0x28] sm:$0xf]
      %v2254 = vld [vmem:[%s2242 + $0x2c] sm:$0xf]
      %v2255 = vld [vmem:[%s2242 + $0x30] sm:$0xf]
      %v2256 = vld [vmem:[%s2242 + $0x34] sm:$0xf]
      %v2257 = vld [vmem:[%s2242 + $0x38] sm:$0xf]
      %v2258 = vld [vmem:[%s2242 + $0x3c] sm:$0xf]
      %v2259 = vunpack.c.l.b16 %v2133
      %v2260 = vunpack.c.l.b16 %v2136
      %v2261 = vunpack.c.l.b16 %v2140
      %v2262 = vunpack.c.l.b16 %v2143
      %v2263 = vunpack.c.l.b16 %v2147
      %v2264 = vunpack.c.l.b16 %v2150
      %v2265 = vunpack.c.l.b16 %v2154
      %v2266 = vunpack.c.l.b16 %v2157
      %v2267 = vunpack.c.l.b16 %v2161
      %v2268 = vunpack.c.l.b16 %v2164
      %v2269 = vunpack.c.l.b16 %v2168
      %v2270 = vunpack.c.l.b16 %v2171
      %v2271 = vunpack.c.l.b16 %v2175
      %v2272 = vunpack.c.l.b16 %v2178
      %v2273 = vunpack.c.l.b16 %v2182
      %v2274 = vunpack.c.l.b16 %v2185
      %v2275 = vunpack.c.l.b16 %v2189
      %v2276 = vunpack.c.l.b16 %v2192
      %v2277 = vunpack.c.l.b16 %v2196
      %v2278 = vunpack.c.l.b16 %v2199
      %v2279 = vunpack.c.l.b16 %v2203
      %v2280 = vunpack.c.l.b16 %v2206
      %v2281 = vunpack.c.l.b16 %v2210
      %v2282 = vunpack.c.l.b16 %v2213
      %v2283 = vunpack.c.l.b16 %v2217
      %v2284 = vunpack.c.l.b16 %v2220
      %v2285 = vunpack.c.l.b16 %v2224
      %v2286 = vunpack.c.l.b16 %v2227
      %v2287 = vunpack.c.l.b16 %v2231
      %v2288 = vunpack.c.l.b16 %v2234
      %v2289 = vunpack.c.l.b16 %v2238
      %v2290 = vunpack.c.l.b16 %v2241
      %v2291 = vpack.c.b16 %v2260, %v2259
      %v2292 = vpack.c.b16 %v2262, %v2261
      %v2293 = vpack.c.b16 %v2264, %v2263
      %v2294 = vpack.c.b16 %v2266, %v2265
      %v2295 = vpack.c.b16 %v2268, %v2267
      %v2296 = vpack.c.b16 %v2270, %v2269
      %v2297 = vpack.c.b16 %v2272, %v2271
      %v2298 = vpack.c.b16 %v2274, %v2273
      %v2299 = vpack.c.b16 %v2276, %v2275
      %v2300 = vpack.c.b16 %v2278, %v2277
      %v2301 = vpack.c.b16 %v2280, %v2279
      %v2302 = vpack.c.b16 %v2282, %v2281
      %v2303 = vpack.c.b16 %v2284, %v2283
      %v2304 = vpack.c.b16 %v2286, %v2285
      %v2305 = vpack.c.b16 %v2288, %v2287
      %v2306 = vpack.c.b16 %v2290, %v2289
      %v2339 = vunpack.c.l.b16 %v2243
      %v2340 = vunpack.c.l.b16 %v2244
      %v2341 = vunpack.c.l.b16 %v2245
      %v2342 = vunpack.c.l.b16 %v2246
      %v2343 = vunpack.c.l.b16 %v2247
      %v2344 = vunpack.c.l.b16 %v2248
      %v2345 = vunpack.c.l.b16 %v2249
      %v2346 = vunpack.c.l.b16 %v2250
      %v2347 = vunpack.c.l.b16 %v2251
      %v2348 = vunpack.c.l.b16 %v2252
      %v2349 = vunpack.c.l.b16 %v2253
      %v2350 = vunpack.c.l.b16 %v2254
      %v2351 = vunpack.c.l.b16 %v2255
      %v2352 = vunpack.c.l.b16 %v2256
      %v2353 = vunpack.c.l.b16 %v2257
      %v2354 = vunpack.c.l.b16 %v2258
      %v2355 = vpack.c.b16 %v2340, %v2339
      %v2356 = vpack.c.b16 %v2342, %v2341
      %v2357 = vpack.c.b16 %v2344, %v2343
      %v2358 = vpack.c.b16 %v2346, %v2345
      %v2359 = vpack.c.b16 %v2348, %v2347
      %v2360 = vpack.c.b16 %v2350, %v2349
      %v2361 = vpack.c.b16 %v2352, %v2351
      %v2362 = vpack.c.b16 %v2354, %v2353
      %2371 = vmatprep.subr.bf16.mxu0 0
      %2372 = vmatpush1.bf16.msra.mxu0 %v2362
      %2373 = vmatprep.subr.bf16.mxu0 0
      %2374 = vmatpush1.bf16.msra.mxu0 %v2361
      %2375 = vmatprep.subr.bf16.mxu0 0
      %2376 = vmatpush1.bf16.msra.mxu0 %v2360
      %2377 = vmatprep.subr.bf16.mxu0 0
      %2378 = vmatpush1.bf16.msra.mxu0 %v2359
      %2379 = vmatprep.subr.bf16.mxu0 0
      %2380 = vmatpush1.bf16.msra.mxu0 %v2358
      %2381 = vmatprep.subr.bf16.mxu0 0
      %2382 = vmatpush1.bf16.msra.mxu0 %v2357
      %2383 = vmatprep.subr.bf16.mxu0 0
      %2384 = vmatpush1.bf16.msra.mxu0 %v2356
      %2385 = vmatprep.subr.bf16.mxu0 0
      %2386 = vmatpush1.bf16.msra.mxu0 %v2355
      %2387 = vmatprep.subr.bf16.mxu0 0
      %2388 = vmatpush2.bf16.msra.mxu0 0
      %2389 = vmatprep.subr.bf16.mxu0 0
      %2390 = vmatpush2.bf16.msra.mxu0 0
      %2391 = vmatprep.subr.bf16.mxu0 0
      %2392 = vmatpush2.bf16.msra.mxu0 0
      %2393 = vmatprep.subr.bf16.mxu0 0
      %2394 = vmatpush2.bf16.msra.mxu0 0
      %2395 = vmatprep.subr.bf16.mxu0 0
      %2396 = vmatpush2.bf16.msra.mxu0 0
      %2397 = vmatprep.subr.bf16.mxu0 0
      %2398 = vmatpush2.bf16.msra.mxu0 0
      %2399 = vmatprep.subr.bf16.mxu0 0
      %2400 = vmatpush2.bf16.msra.mxu0 0
      %2401 = vmatprep.subr.bf16.mxu0 0
      %2402 = vmatpush2.bf16.msra.mxu0 0
      %2403 = vmatprep.mubr.bf16.mxu0 0
      %2404 = vmatmul.mubr.bf16.gmra.mxu0 %v2291
      %v2405 = vpop.f32.mrf.mxu0
      %v2406 = vadd.f32 0.0, %v2405
      %v2407 = vpop.f32.mrf.mxu0
      %v2408 = vpop.f32.mrf.mxu0
      %v2409 = vadd.f32 0.0, %v2408
      %v2410 = vpop.f32.mrf.mxu0
      %2411 = vmatprep.mubr.bf16.mxu0 0
      %2412 = vmatmul.mubr.bf16.gmra.mxu0 %v2292
      %v2413 = vpop.f32.mrf.mxu0
      %v2414 = vadd.f32 0.0, %v2413
      %v2415 = vpop.f32.mrf.mxu0
      %v2416 = vpop.f32.mrf.mxu0
      %v2417 = vadd.f32 0.0, %v2416
      %v2418 = vpop.f32.mrf.mxu0
      %2419 = vmatprep.mubr.bf16.mxu0 0
      %2420 = vmatmul.mubr.bf16.gmra.mxu0 %v2293
      %v2421 = vpop.f32.mrf.mxu0
      %v2422 = vadd.f32 0.0, %v2421
      %v2423 = vpop.f32.mrf.mxu0
      %v2424 = vpop.f32.mrf.mxu0
      %v2425 = vadd.f32 0.0, %v2424
      %v2426 = vpop.f32.mrf.mxu0
      %2427 = vmatprep.mubr.bf16.mxu0 0
      %2428 = vmatmul.mubr.bf16.gmra.mxu0 %v2294
      %v2429 = vpop.f32.mrf.mxu0
      %v2430 = vadd.f32 0.0, %v2429
      %v2431 = vpop.f32.mrf.mxu0
      %v2432 = vpop.f32.mrf.mxu0
      %v2433 = vadd.f32 0.0, %v2432
      %v2434 = vpop.f32.mrf.mxu0
      %2435 = vmatprep.mubr.bf16.mxu0 0
      %2436 = vmatmul.mubr.bf16.gmra.mxu0 %v2295
      %v2437 = vpop.f32.mrf.mxu0
      %v2438 = vadd.f32 0.0, %v2437
      %v2439 = vpop.f32.mrf.mxu0
      %v2440 = vpop.f32.mrf.mxu0
      %v2441 = vadd.f32 0.0, %v2440
      %v2442 = vpop.f32.mrf.mxu0
      %2443 = vmatprep.mubr.bf16.mxu0 0
      %2444 = vmatmul.mubr.bf16.gmra.mxu0 %v2296
      %v2445 = vpop.f32.mrf.mxu0
      %v2446 = vadd.f32 0.0, %v2445
      %v2447 = vpop.f32.mrf.mxu0
      %v2448 = vpop.f32.mrf.mxu0
      %v2449 = vadd.f32 0.0, %v2448
      %v2450 = vpop.f32.mrf.mxu0
      %2451 = vmatprep.mubr.bf16.mxu0 0
      %2452 = vmatmul.mubr.bf16.gmra.mxu0 %v2297
      %v2453 = vpop.f32.mrf.mxu0
      %v2454 = vadd.f32 0.0, %v2453
      %v2455 = vpop.f32.mrf.mxu0
      %v2456 = vpop.f32.mrf.mxu0
      %v2457 = vadd.f32 0.0, %v2456
      %v2458 = vpop.f32.mrf.mxu0
      %2459 = vmatprep.mubr.bf16.mxu0 0
      %2460 = vmatmul.mubr.bf16.gmra.mxu0 %v2298
      %v2461 = vpop.f32.mrf.mxu0
      %v2462 = vadd.f32 0.0, %v2461
      %v2463 = vpop.f32.mrf.mxu0
      %v2464 = vpop.f32.mrf.mxu0
      %v2465 = vadd.f32 0.0, %v2464
      %v2466 = vpop.f32.mrf.mxu0
      %2467 = vmatprep.mubr.bf16.mxu0 0
      %2468 = vmatmul.mubr.bf16.gmra.mxu0 %v2299
      %v2469 = vpop.f32.mrf.mxu0
      %v2470 = vadd.f32 0.0, %v2469
      %v2471 = vpop.f32.mrf.mxu0
      %v2472 = vpop.f32.mrf.mxu0
      %v2473 = vadd.f32 0.0, %v2472
      %v2474 = vpop.f32.mrf.mxu0
      %2475 = vmatprep.mubr.bf16.mxu0 0
      %2476 = vmatmul.mubr.bf16.gmra.mxu0 %v2300
      %v2477 = vpop.f32.mrf.mxu0
      %v2478 = vadd.f32 0.0, %v2477
      %v2479 = vpop.f32.mrf.mxu0
      %v2480 = vpop.f32.mrf.mxu0
      %v2481 = vadd.f32 0.0, %v2480
      %v2482 = vpop.f32.mrf.mxu0
      %2483 = vmatprep.mubr.bf16.mxu0 0
      %2484 = vmatmul.mubr.bf16.gmra.mxu0 %v2301
      %v2485 = vpop.f32.mrf.mxu0
      %v2486 = vadd.f32 0.0, %v2485
      %v2487 = vpop.f32.mrf.mxu0
      %v2488 = vpop.f32.mrf.mxu0
      %v2489 = vadd.f32 0.0, %v2488
      %v2490 = vpop.f32.mrf.mxu0
      %2491 = vmatprep.mubr.bf16.mxu0 0
      %2492 = vmatmul.mubr.bf16.gmra.mxu0 %v2302
      %v2493 = vpop.f32.mrf.mxu0
      %v2494 = vadd.f32 0.0, %v2493
      %v2495 = vpop.f32.mrf.mxu0
      %v2496 = vpop.f32.mrf.mxu0
      %v2497 = vadd.f32 0.0, %v2496
      %v2498 = vpop.f32.mrf.mxu0
      %2499 = vmatprep.mubr.bf16.mxu0 0
      %2500 = vmatmul.mubr.bf16.gmra.mxu0 %v2303
      %v2501 = vpop.f32.mrf.mxu0
      %v2502 = vadd.f32 0.0, %v2501
      %v2503 = vpop.f32.mrf.mxu0
      %v2504 = vpop.f32.mrf.mxu0
      %v2505 = vadd.f32 0.0, %v2504
      %v2506 = vpop.f32.mrf.mxu0
      %2507 = vmatprep.mubr.bf16.mxu0 0
      %2508 = vmatmul.mubr.bf16.gmra.mxu0 %v2304
      %v2509 = vpop.f32.mrf.mxu0
      %v2510 = vadd.f32 0.0, %v2509
      %v2511 = vpop.f32.mrf.mxu0
      %v2512 = vpop.f32.mrf.mxu0
      %v2513 = vadd.f32 0.0, %v2512
      %v2514 = vpop.f32.mrf.mxu0
      %2515 = vmatprep.mubr.bf16.mxu0 0
      %2516 = vmatmul.mubr.bf16.gmra.mxu0 %v2305
      %v2517 = vpop.f32.mrf.mxu0
      %v2518 = vadd.f32 0.0, %v2517
      %v2519 = vpop.f32.mrf.mxu0
      %v2520 = vpop.f32.mrf.mxu0
      %v2521 = vadd.f32 0.0, %v2520
      %v2522 = vpop.f32.mrf.mxu0
      %2523 = vmatprep.mubr.bf16.mxu0 0
      %2524 = vmatmul.mubr.bf16.gmra.mxu0 %v2306
      %v2525 = vpop.f32.mrf.mxu0
      %v2526 = vadd.f32 0.0, %v2525
      %v2527 = vpop.f32.mrf.mxu0
      %v2528 = vpop.f32.mrf.mxu0
      %v2529 = vadd.f32 0.0, %v2528
      %v2530 = vpop.f32.mrf.mxu0
      %2531 = vdwg.mxu0
      %v2532 = vadd.f32 %v1953, %v2406
      %v2533 = vadd.f32 %v1956, %v2409
      %v2534 = vadd.f32 %v1961, %v2414
      %v2535 = vadd.f32 %v1964, %v2417
      %v2536 = vadd.f32 %v1969, %v2422
      %v2537 = vadd.f32 %v1972, %v2425
      %v2538 = vadd.f32 %v1977, %v2430
      %v2539 = vadd.f32 %v1980, %v2433
      %v2540 = vadd.f32 %v1985, %v2438
      %v2541 = vadd.f32 %v1988, %v2441
      %v2542 = vadd.f32 %v1993, %v2446
      %v2543 = vadd.f32 %v1996, %v2449
      %v2544 = vadd.f32 %v2001, %v2454
      %v2545 = vadd.f32 %v2004, %v2457
      %v2546 = vadd.f32 %v2009, %v2462
      %v2547 = vadd.f32 %v2012, %v2465
      %v2548 = vadd.f32 %v2017, %v2470
      %v2549 = vadd.f32 %v2020, %v2473
      %v2550 = vadd.f32 %v2025, %v2478
      %v2551 = vadd.f32 %v2028, %v2481
      %v2552 = vadd.f32 %v2033, %v2486
      %v2553 = vadd.f32 %v2036, %v2489
      %v2554 = vadd.f32 %v2041, %v2494
      %v2555 = vadd.f32 %v2044, %v2497
      %v2556 = vadd.f32 %v2049, %v2502
      %v2557 = vadd.f32 %v2052, %v2505
      %v2558 = vadd.f32 %v2057, %v2510
      %v2559 = vadd.f32 %v2060, %v2513
      %v2560 = vadd.f32 %v2065, %v2518
      %v2561 = vadd.f32 %v2068, %v2521
      %v2562 = vadd.f32 %v2073, %v2526
      %v2563 = vadd.f32 %v2076, %v2529
      %v2564 = vld [vmem:[%s918] sm:$0xf]
      %v2565 = vld [vmem:[%s918 + $0x4] sm:$0xf]
      %v2566 = vld [vmem:[%s918 + $0xc] sm:$0xf]
      %v2567 = vld [vmem:[%s918 + $0x10] sm:$0xf]
      %v2568 = vld [vmem:[%s918 + $0x18] sm:$0xf]
      %v2569 = vld [vmem:[%s918 + $0x1c] sm:$0xf]
      %v2570 = vld [vmem:[%s918 + $0x24] sm:$0xf]
      %v2571 = vld [vmem:[%s918 + $0x28] sm:$0xf]
      %v2572 = vld [vmem:[%s918 + $0x30] sm:$0xf]
      %v2573 = vld [vmem:[%s918 + $0x34] sm:$0xf]
      %v2574 = vld [vmem:[%s918 + $0x3c] sm:$0xf]
      %v2575 = vld [vmem:[%s918 + $0x40] sm:$0xf]
      %v2576 = vld [vmem:[%s918 + $0x48] sm:$0xf]
      %v2577 = vld [vmem:[%s918 + $0x4c] sm:$0xf]
      %v2578 = vld [vmem:[%s918 + $0x54] sm:$0xf]
      %v2579 = vld [vmem:[%s918 + $0x58] sm:$0xf]
      %v2580 = vld [vmem:[%s918 + $0x60] sm:$0xf]
      %v2581 = vld [vmem:[%s918 + $0x64] sm:$0xf]
      %v2582 = vld [vmem:[%s918 + $0x6c] sm:$0xf]
      %v2583 = vld [vmem:[%s918 + $0x70] sm:$0xf]
      %v2584 = vld [vmem:[%s918 + $0x78] sm:$0xf]
      %v2585 = vld [vmem:[%s918 + $0x7c] sm:$0xf]
      %v2586 = vld [vmem:[%s918 + $0x84] sm:$0xf]
      %v2587 = vld [vmem:[%s918 + $0x88] sm:$0xf]
      %v2588 = vld [vmem:[%s918 + $0x90] sm:$0xf]
      %v2589 = vld [vmem:[%s918 + $0x94] sm:$0xf]
      %v2590 = vld [vmem:[%s918 + $0x9c] sm:$0xf]
      %v2591 = vld [vmem:[%s918 + $0xa0] sm:$0xf]
      %v2592 = vld [vmem:[%s918 + $0xa8] sm:$0xf]
      %v2593 = vld [vmem:[%s918 + $0xac] sm:$0xf]
      %v2594 = vld [vmem:[%s918 + $0xb4] sm:$0xf]
      %v2595 = vld [vmem:[%s918 + $0xb8] sm:$0xf]
      %s2596 = scalar_lea.vmem %s2, 192
      %v2597 = vld [vmem:[%s2596] sm:$0xf]
      %v2598 = vld [vmem:[%s2596 + $0x4] sm:$0xf]
      %v2599 = vld [vmem:[%s2596 + $0x8] sm:$0xf]
      %v2600 = vld [vmem:[%s2596 + $0xc] sm:$0xf]
      %v2601 = vld [vmem:[%s2596 + $0x10] sm:$0xf]
      %v2602 = vld [vmem:[%s2596 + $0x14] sm:$0xf]
      %v2603 = vld [vmem:[%s2596 + $0x18] sm:$0xf]
      %v2604 = vld [vmem:[%s2596 + $0x1c] sm:$0xf]
      %v2605 = vld [vmem:[%s2596 + $0x20] sm:$0xf]
      %v2606 = vld [vmem:[%s2596 + $0x24] sm:$0xf]
      %v2607 = vld [vmem:[%s2596 + $0x28] sm:$0xf]
      %v2608 = vld [vmem:[%s2596 + $0x2c] sm:$0xf]
      %v2609 = vld [vmem:[%s2596 + $0x30] sm:$0xf]
      %v2610 = vld [vmem:[%s2596 + $0x34] sm:$0xf]
      %v2611 = vld [vmem:[%s2596 + $0x38] sm:$0xf]
      %v2612 = vld [vmem:[%s2596 + $0x3c] sm:$0xf]
      %v2645 = vunpack.c.l.b16 %v2564
      %v2646 = vunpack.c.l.b16 %v2565
      %v2647 = vunpack.c.l.b16 %v2566
      %v2648 = vunpack.c.l.b16 %v2567
      %v2649 = vunpack.c.l.b16 %v2568
      %v2650 = vunpack.c.l.b16 %v2569
      %v2651 = vunpack.c.l.b16 %v2570
      %v2652 = vunpack.c.l.b16 %v2571
      %v2653 = vunpack.c.l.b16 %v2572
      %v2654 = vunpack.c.l.b16 %v2573
      %v2655 = vunpack.c.l.b16 %v2574
      %v2656 = vunpack.c.l.b16 %v2575
      %v2657 = vunpack.c.l.b16 %v2576
      %v2658 = vunpack.c.l.b16 %v2577
      %v2659 = vunpack.c.l.b16 %v2578
      %v2660 = vunpack.c.l.b16 %v2579
      %v2661 = vunpack.c.l.b16 %v2580
      %v2662 = vunpack.c.l.b16 %v2581
      %v2663 = vunpack.c.l.b16 %v2582
      %v2664 = vunpack.c.l.b16 %v2583
      %v2665 = vunpack.c.l.b16 %v2584
      %v2666 = vunpack.c.l.b16 %v2585
      %v2667 = vunpack.c.l.b16 %v2586
      %v2668 = vunpack.c.l.b16 %v2587
      %v2669 = vunpack.c.l.b16 %v2588
      %v2670 = vunpack.c.l.b16 %v2589
      %v2671 = vunpack.c.l.b16 %v2590
      %v2672 = vunpack.c.l.b16 %v2591
      %v2673 = vunpack.c.l.b16 %v2592
      %v2674 = vunpack.c.l.b16 %v2593
      %v2675 = vunpack.c.l.b16 %v2594
      %v2676 = vunpack.c.l.b16 %v2595
      %v2677 = vpack.c.b16 %v2646, %v2645
      %v2678 = vpack.c.b16 %v2648, %v2647
      %v2679 = vpack.c.b16 %v2650, %v2649
      %v2680 = vpack.c.b16 %v2652, %v2651
      %v2681 = vpack.c.b16 %v2654, %v2653
      %v2682 = vpack.c.b16 %v2656, %v2655
      %v2683 = vpack.c.b16 %v2658, %v2657
      %v2684 = vpack.c.b16 %v2660, %v2659
      %v2685 = vpack.c.b16 %v2662, %v2661
      %v2686 = vpack.c.b16 %v2664, %v2663
      %v2687 = vpack.c.b16 %v2666, %v2665
      %v2688 = vpack.c.b16 %v2668, %v2667
      %v2689 = vpack.c.b16 %v2670, %v2669
      %v2690 = vpack.c.b16 %v2672, %v2671
      %v2691 = vpack.c.b16 %v2674, %v2673
      %v2692 = vpack.c.b16 %v2676, %v2675
      %v2725 = vunpack.c.l.b16 %v2597
      %v2726 = vunpack.c.l.b16 %v2598
      %v2727 = vunpack.c.l.b16 %v2599
      %v2728 = vunpack.c.l.b16 %v2600
      %v2729 = vunpack.c.l.b16 %v2601
      %v2730 = vunpack.c.l.b16 %v2602
      %v2731 = vunpack.c.l.b16 %v2603
      %v2732 = vunpack.c.l.b16 %v2604
      %v2733 = vunpack.c.l.b16 %v2605
      %v2734 = vunpack.c.l.b16 %v2606
      %v2735 = vunpack.c.l.b16 %v2607
      %v2736 = vunpack.c.l.b16 %v2608
      %v2737 = vunpack.c.l.b16 %v2609
      %v2738 = vunpack.c.l.b16 %v2610
      %v2739 = vunpack.c.l.b16 %v2611
      %v2740 = vunpack.c.l.b16 %v2612
      %v2741 = vpack.c.b16 %v2726, %v2725
      %v2742 = vpack.c.b16 %v2728, %v2727
      %v2743 = vpack.c.b16 %v2730, %v2729
      %v2744 = vpack.c.b16 %v2732, %v2731
      %v2745 = vpack.c.b16 %v2734, %v2733
      %v2746 = vpack.c.b16 %v2736, %v2735
      %v2747 = vpack.c.b16 %v2738, %v2737
      %v2748 = vpack.c.b16 %v2740, %v2739
      %2757 = vmatprep.subr.bf16.mxu0 0
      %2758 = vmatpush1.bf16.msra.mxu0 %v2748
      %2759 = vmatprep.subr.bf16.mxu0 0
      %2760 = vmatpush1.bf16.msra.mxu0 %v2747
      %2761 = vmatprep.subr.bf16.mxu0 0
      %2762 = vmatpush1.bf16.msra.mxu0 %v2746
      %2763 = vmatprep.subr.bf16.mxu0 0
      %2764 = vmatpush1.bf16.msra.mxu0 %v2745
      %2765 = vmatprep.subr.bf16.mxu0 0
      %2766 = vmatpush1.bf16.msra.mxu0 %v2744
      %2767 = vmatprep.subr.bf16.mxu0 0
      %2768 = vmatpush1.bf16.msra.mxu0 %v2743
      %2769 = vmatprep.subr.bf16.mxu0 0
      %2770 = vmatpush1.bf16.msra.mxu0 %v2742
      %2771 = vmatprep.subr.bf16.mxu0 0
      %2772 = vmatpush1.bf16.msra.mxu0 %v2741
      %2773 = vmatprep.subr.bf16.mxu0 0
      %2774 = vmatpush2.bf16.msra.mxu0 0
      %2775 = vmatprep.subr.bf16.mxu0 0
      %2776 = vmatpush2.bf16.msra.mxu0 0
      %2777 = vmatprep.subr.bf16.mxu0 0
      %2778 = vmatpush2.bf16.msra.mxu0 0
      %2779 = vmatprep.subr.bf16.mxu0 0
      %2780 = vmatpush2.bf16.msra.mxu0 0
      %2781 = vmatprep.subr.bf16.mxu0 0
      %2782 = vmatpush2.bf16.msra.mxu0 0
      %2783 = vmatprep.subr.bf16.mxu0 0
      %2784 = vmatpush2.bf16.msra.mxu0 0
      %2785 = vmatprep.subr.bf16.mxu0 0
      %2786 = vmatpush2.bf16.msra.mxu0 0
      %2787 = vmatprep.subr.bf16.mxu0 0
      %2788 = vmatpush2.bf16.msra.mxu0 0
      %2789 = vmatprep.mubr.bf16.mxu0 0
      %2790 = vmatmul.mubr.bf16.gmra.mxu0 %v2677
      %v2791 = vpop.f32.mrf.mxu0
      %v2792 = vadd.f32 0.0, %v2791
      %v2793 = vpop.f32.mrf.mxu0
      %v2794 = vpop.f32.mrf.mxu0
      %v2795 = vadd.f32 0.0, %v2794
      %v2796 = vpop.f32.mrf.mxu0
      %2797 = vmatprep.mubr.bf16.mxu0 0
      %2798 = vmatmul.mubr.bf16.gmra.mxu0 %v2678
      %v2799 = vpop.f32.mrf.mxu0
      %v2800 = vadd.f32 0.0, %v2799
      %v2801 = vpop.f32.mrf.mxu0
      %v2802 = vpop.f32.mrf.mxu0
      %v2803 = vadd.f32 0.0, %v2802
      %v2804 = vpop.f32.mrf.mxu0
      %2805 = vmatprep.mubr.bf16.mxu0 0
      %2806 = vmatmul.mubr.bf16.gmra.mxu0 %v2679
      %v2807 = vpop.f32.mrf.mxu0
      %v2808 = vadd.f32 0.0, %v2807
      %v2809 = vpop.f32.mrf.mxu0
      %v2810 = vpop.f32.mrf.mxu0
      %v2811 = vadd.f32 0.0, %v2810
      %v2812 = vpop.f32.mrf.mxu0
      %2813 = vmatprep.mubr.bf16.mxu0 0
      %2814 = vmatmul.mubr.bf16.gmra.mxu0 %v2680
      %v2815 = vpop.f32.mrf.mxu0
      %v2816 = vadd.f32 0.0, %v2815
      %v2817 = vpop.f32.mrf.mxu0
      %v2818 = vpop.f32.mrf.mxu0
      %v2819 = vadd.f32 0.0, %v2818
      %v2820 = vpop.f32.mrf.mxu0
      %2821 = vmatprep.mubr.bf16.mxu0 0
      %2822 = vmatmul.mubr.bf16.gmra.mxu0 %v2681
      %v2823 = vpop.f32.mrf.mxu0
      %v2824 = vadd.f32 0.0, %v2823
      %v2825 = vpop.f32.mrf.mxu0
      %v2826 = vpop.f32.mrf.mxu0
      %v2827 = vadd.f32 0.0, %v2826
      %v2828 = vpop.f32.mrf.mxu0
      %2829 = vmatprep.mubr.bf16.mxu0 0
      %2830 = vmatmul.mubr.bf16.gmra.mxu0 %v2682
      %v2831 = vpop.f32.mrf.mxu0
      %v2832 = vadd.f32 0.0, %v2831
      %v2833 = vpop.f32.mrf.mxu0
      %v2834 = vpop.f32.mrf.mxu0
      %v2835 = vadd.f32 0.0, %v2834
      %v2836 = vpop.f32.mrf.mxu0
      %2837 = vmatprep.mubr.bf16.mxu0 0
      %2838 = vmatmul.mubr.bf16.gmra.mxu0 %v2683
      %v2839 = vpop.f32.mrf.mxu0
      %v2840 = vadd.f32 0.0, %v2839
      %v2841 = vpop.f32.mrf.mxu0
      %v2842 = vpop.f32.mrf.mxu0
      %v2843 = vadd.f32 0.0, %v2842
      %v2844 = vpop.f32.mrf.mxu0
      %2845 = vmatprep.mubr.bf16.mxu0 0
      %2846 = vmatmul.mubr.bf16.gmra.mxu0 %v2684
      %v2847 = vpop.f32.mrf.mxu0
      %v2848 = vadd.f32 0.0, %v2847
      %v2849 = vpop.f32.mrf.mxu0
      %v2850 = vpop.f32.mrf.mxu0
      %v2851 = vadd.f32 0.0, %v2850
      %v2852 = vpop.f32.mrf.mxu0
      %2853 = vmatprep.mubr.bf16.mxu0 0
      %2854 = vmatmul.mubr.bf16.gmra.mxu0 %v2685
      %v2855 = vpop.f32.mrf.mxu0
      %v2856 = vadd.f32 0.0, %v2855
      %v2857 = vpop.f32.mrf.mxu0
      %v2858 = vpop.f32.mrf.mxu0
      %v2859 = vadd.f32 0.0, %v2858
      %v2860 = vpop.f32.mrf.mxu0
      %2861 = vmatprep.mubr.bf16.mxu0 0
      %2862 = vmatmul.mubr.bf16.gmra.mxu0 %v2686
      %v2863 = vpop.f32.mrf.mxu0
      %v2864 = vadd.f32 0.0, %v2863
      %v2865 = vpop.f32.mrf.mxu0
      %v2866 = vpop.f32.mrf.mxu0
      %v2867 = vadd.f32 0.0, %v2866
      %v2868 = vpop.f32.mrf.mxu0
      %2869 = vmatprep.mubr.bf16.mxu0 0
      %2870 = vmatmul.mubr.bf16.gmra.mxu0 %v2687
      %v2871 = vpop.f32.mrf.mxu0
      %v2872 = vadd.f32 0.0, %v2871
      %v2873 = vpop.f32.mrf.mxu0
      %v2874 = vpop.f32.mrf.mxu0
      %v2875 = vadd.f32 0.0, %v2874
      %v2876 = vpop.f32.mrf.mxu0
      %2877 = vmatprep.mubr.bf16.mxu0 0
      %2878 = vmatmul.mubr.bf16.gmra.mxu0 %v2688
      %v2879 = vpop.f32.mrf.mxu0
      %v2880 = vadd.f32 0.0, %v2879
      %v2881 = vpop.f32.mrf.mxu0
      %v2882 = vpop.f32.mrf.mxu0
      %v2883 = vadd.f32 0.0, %v2882
      %v2884 = vpop.f32.mrf.mxu0
      %2885 = vmatprep.mubr.bf16.mxu0 0
      %2886 = vmatmul.mubr.bf16.gmra.mxu0 %v2689
      %v2887 = vpop.f32.mrf.mxu0
      %v2888 = vadd.f32 0.0, %v2887
      %v2889 = vpop.f32.mrf.mxu0
      %v2890 = vpop.f32.mrf.mxu0
      %v2891 = vadd.f32 0.0, %v2890
      %v2892 = vpop.f32.mrf.mxu0
      %2893 = vmatprep.mubr.bf16.mxu0 0
      %2894 = vmatmul.mubr.bf16.gmra.mxu0 %v2690
      %v2895 = vpop.f32.mrf.mxu0
      %v2896 = vadd.f32 0.0, %v2895
      %v2897 = vpop.f32.mrf.mxu0
      %v2898 = vpop.f32.mrf.mxu0
      %v2899 = vadd.f32 0.0, %v2898
      %v2900 = vpop.f32.mrf.mxu0
      %2901 = vmatprep.mubr.bf16.mxu0 0
      %2902 = vmatmul.mubr.bf16.gmra.mxu0 %v2691
      %v2903 = vpop.f32.mrf.mxu0
      %v2904 = vadd.f32 0.0, %v2903
      %v2905 = vpop.f32.mrf.mxu0
      %v2906 = vpop.f32.mrf.mxu0
      %v2907 = vadd.f32 0.0, %v2906
      %v2908 = vpop.f32.mrf.mxu0
      %2909 = vmatprep.mubr.bf16.mxu0 0
      %2910 = vmatmul.mubr.bf16.gmra.mxu0 %v2692
      %v2911 = vpop.f32.mrf.mxu0
      %v2912 = vadd.f32 0.0, %v2911
      %v2913 = vpop.f32.mrf.mxu0
      %v2914 = vpop.f32.mrf.mxu0
      %v2915 = vadd.f32 0.0, %v2914
      %v2916 = vpop.f32.mrf.mxu0
      %2917 = vdwg.mxu0
      %v2918 = vadd.f32 %v2532, %v2792
      %v2919 = vadd.f32 %v2533, %v2795
      %v2920 = vadd.f32 %v2534, %v2800
      %v2921 = vadd.f32 %v2535, %v2803
      %v2922 = vadd.f32 %v2536, %v2808
      %v2923 = vadd.f32 %v2537, %v2811
      %v2924 = vadd.f32 %v2538, %v2816
      %v2925 = vadd.f32 %v2539, %v2819
      %v2926 = vadd.f32 %v2540, %v2824
      %v2927 = vadd.f32 %v2541, %v2827
      %v2928 = vadd.f32 %v2542, %v2832
      %v2929 = vadd.f32 %v2543, %v2835
      %v2930 = vadd.f32 %v2544, %v2840
      %v2931 = vadd.f32 %v2545, %v2843
      %v2932 = vadd.f32 %v2546, %v2848
      %v2933 = vadd.f32 %v2547, %v2851
      %v2934 = vadd.f32 %v2548, %v2856
      %v2935 = vadd.f32 %v2549, %v2859
      %v2936 = vadd.f32 %v2550, %v2864
      %v2937 = vadd.f32 %v2551, %v2867
      %v2938 = vadd.f32 %v2552, %v2872
      %v2939 = vadd.f32 %v2553, %v2875
      %v2940 = vadd.f32 %v2554, %v2880
      %v2941 = vadd.f32 %v2555, %v2883
      %v2942 = vadd.f32 %v2556, %v2888
      %v2943 = vadd.f32 %v2557, %v2891
      %v2944 = vadd.f32 %v2558, %v2896
      %v2945 = vadd.f32 %v2559, %v2899
      %v2946 = vadd.f32 %v2560, %v2904
      %v2947 = vadd.f32 %v2561, %v2907
      %v2948 = vadd.f32 %v2562, %v2912
      %v2949 = vadd.f32 %v2563, %v2915
      %v2950 = vld [vmem:[%s918] sm:$0xf]
      %v2951 = vld [vmem:[%s918 + $0x4] sm:$0xf]
      %v2952 = vld [vmem:[%s918 + $0x8] sm:$0x1]
      %v2953 = vld [vmem:[%s918 + $0xc] sm:$0xf]
      %v2954 = vld [vmem:[%s918 + $0x10] sm:$0xf]
      %v2955 = vld [vmem:[%s918 + $0x14] sm:$0x1]
      %v2956 = vld [vmem:[%s918 + $0x18] sm:$0xf]
      %v2957 = vld [vmem:[%s918 + $0x1c] sm:$0xf]
      %v2958 = vld [vmem:[%s918 + $0x20] sm:$0x1]
      %v2959 = vld [vmem:[%s918 + $0x24] sm:$0xf]
      %v2960 = vld [vmem:[%s918 + $0x28] sm:$0xf]
      %v2961 = vld [vmem:[%s918 + $0x2c] sm:$0x1]
      %v2962 = vld [vmem:[%s918 + $0x30] sm:$0xf]
      %v2963 = vld [vmem:[%s918 + $0x34] sm:$0xf]
      %v2964 = vld [vmem:[%s918 + $0x38] sm:$0x1]
      %v2965 = vld [vmem:[%s918 + $0x3c] sm:$0xf]
      %v2966 = vld [vmem:[%s918 + $0x40] sm:$0xf]
      %v2967 = vld [vmem:[%s918 + $0x44] sm:$0x1]
      %v2968 = vld [vmem:[%s918 + $0x48] sm:$0xf]
      %v2969 = vld [vmem:[%s918 + $0x4c] sm:$0xf]
      %v2970 = vld [vmem:[%s918 + $0x50] sm:$0x1]
      %v2971 = vld [vmem:[%s918 + $0x54] sm:$0xf]
      %v2972 = vld [vmem:[%s918 + $0x58] sm:$0xf]
      %v2973 = vld [vmem:[%s918 + $0x5c] sm:$0x1]
      %v2974 = vld [vmem:[%s918 + $0x60] sm:$0xf]
      %v2975 = vld [vmem:[%s918 + $0x64] sm:$0xf]
      %v2976 = vld [vmem:[%s918 + $0x68] sm:$0x1]
      %v2977 = vld [vmem:[%s918 + $0x6c] sm:$0xf]
      %v2978 = vld [vmem:[%s918 + $0x70] sm:$0xf]
      %v2979 = vld [vmem:[%s918 + $0x74] sm:$0x1]
      %v2980 = vld [vmem:[%s918 + $0x78] sm:$0xf]
      %v2981 = vld [vmem:[%s918 + $0x7c] sm:$0xf]
      %v2982 = vld [vmem:[%s918 + $0x80] sm:$0x1]
      %v2983 = vld [vmem:[%s918 + $0x84] sm:$0xf]
      %v2984 = vld [vmem:[%s918 + $0x88] sm:$0xf]
      %v2985 = vld [vmem:[%s918 + $0x8c] sm:$0x1]
      %v2986 = vld [vmem:[%s918 + $0x90] sm:$0xf]
      %v2987 = vld [vmem:[%s918 + $0x94] sm:$0xf]
      %v2988 = vld [vmem:[%s918 + $0x98] sm:$0x1]
      %v2989 = vld [vmem:[%s918 + $0x9c] sm:$0xf]
      %v2990 = vld [vmem:[%s918 + $0xa0] sm:$0xf]
      %v2991 = vld [vmem:[%s918 + $0xa4] sm:$0x1]
      %v2992 = vld [vmem:[%s918 + $0xa8] sm:$0xf]
      %v2993 = vld [vmem:[%s918 + $0xac] sm:$0xf]
      %v2994 = vld [vmem:[%s918 + $0xb0] sm:$0x1]
      %v2995 = vld [vmem:[%s918 + $0xb4] sm:$0xf]
      %v2996 = vld [vmem:[%s918 + $0xb8] sm:$0xf]
      %v2997 = vld [vmem:[%s918 + $0xbc] sm:$0x1]
      %v2999 = vshrl.u32 %v2950, 16
      %v3001 = vrot.slane %v2999, 4
      %v3002 = vshll.u32 %v2950, 16
      %v3004 = vrot.slane %v3002, 5
      %v3005 = vor.u32 %v3001, %v3004
      %v3006 = vrot.slane %v3005, 4
      %v3008 = vshll.u32 %v2951, 16
      %v3010 = vrot.slane %v3008, 5
      %v3011 = vsel %vm1099, %v3006, %v3010
      %v3012 = vshrl.u32 %v2951, 16
      %v3014 = vrot.slane %v3012, 4
      %v3015 = vor.u32 %v3014, %v3010
      %v3016 = vrot.slane %v3015, 4
      %v3018 = vshll.u32 %v2952, 16
      %v3020 = vrot.slane %v3018, 5
      %v3021 = vsel %vm1099, %v3016, %v3020
      %v3023 = vshrl.u32 %v2953, 16
      %v3025 = vrot.slane %v3023, 4
      %v3026 = vshll.u32 %v2953, 16
      %v3028 = vrot.slane %v3026, 5
      %v3029 = vor.u32 %v3025, %v3028
      %v3030 = vrot.slane %v3029, 4
      %v3032 = vshll.u32 %v2954, 16
      %v3034 = vrot.slane %v3032, 5
      %v3035 = vsel %vm1099, %v3030, %v3034
      %v3036 = vshrl.u32 %v2954, 16
      %v3038 = vrot.slane %v3036, 4
      %v3039 = vor.u32 %v3038, %v3034
      %v3040 = vrot.slane %v3039, 4
      %v3042 = vshll.u32 %v2955, 16
      %v3044 = vrot.slane %v3042, 5
      %v3045 = vsel %vm1099, %v3040, %v3044
      %v3047 = vshrl.u32 %v2956, 16
      %v3049 = vrot.slane %v3047, 4
      %v3050 = vshll.u32 %v2956, 16
      %v3052 = vrot.slane %v3050, 5
      %v3053 = vor.u32 %v3049, %v3052
      %v3054 = vrot.slane %v3053, 4
      %v3056 = vshll.u32 %v2957, 16
      %v3058 = vrot.slane %v3056, 5
      %v3059 = vsel %vm1099, %v3054, %v3058
      %v3060 = vshrl.u32 %v2957, 16
      %v3062 = vrot.slane %v3060, 4
      %v3063 = vor.u32 %v3062, %v3058
      %v3064 = vrot.slane %v3063, 4
      %v3066 = vshll.u32 %v2958, 16
      %v3068 = vrot.slane %v3066, 5
      %v3069 = vsel %vm1099, %v3064, %v3068
      %v3071 = vshrl.u32 %v2959, 16
      %v3073 = vrot.slane %v3071, 4
      %v3074 = vshll.u32 %v2959, 16
      %v3076 = vrot.slane %v3074, 5
      %v3077 = vor.u32 %v3073, %v3076
      %v3078 = vrot.slane %v3077, 4
      %v3080 = vshll.u32 %v2960, 16
      %v3082 = vrot.slane %v3080, 5
      %v3083 = vsel %vm1099, %v3078, %v3082
      %v3084 = vshrl.u32 %v2960, 16
      %v3086 = vrot.slane %v3084, 4
      %v3087 = vor.u32 %v3086, %v3082
      %v3088 = vrot.slane %v3087, 4
      %v3090 = vshll.u32 %v2961, 16
      %v3092 = vrot.slane %v3090, 5
      %v3093 = vsel %vm1099, %v3088, %v3092
      %v3095 = vshrl.u32 %v2962, 16
      %v3097 = vrot.slane %v3095, 4
      %v3098 = vshll.u32 %v2962, 16
      %v3100 = vrot.slane %v3098, 5
      %v3101 = vor.u32 %v3097, %v3100
      %v3102 = vrot.slane %v3101, 4
      %v3104 = vshll.u32 %v2963, 16
      %v3106 = vrot.slane %v3104, 5
      %v3107 = vsel %vm1099, %v3102, %v3106
      %v3108 = vshrl.u32 %v2963, 16
      %v3110 = vrot.slane %v3108, 4
      %v3111 = vor.u32 %v3110, %v3106
      %v3112 = vrot.slane %v3111, 4
      %v3114 = vshll.u32 %v2964, 16
      %v3116 = vrot.slane %v3114, 5
      %v3117 = vsel %vm1099, %v3112, %v3116
      %v3119 = vshrl.u32 %v2965, 16
      %v3121 = vrot.slane %v3119, 4
      %v3122 = vshll.u32 %v2965, 16
      %v3124 = vrot.slane %v3122, 5
      %v3125 = vor.u32 %v3121, %v3124
      %v3126 = vrot.slane %v3125, 4
      %v3128 = vshll.u32 %v2966, 16
      %v3130 = vrot.slane %v3128, 5
      %v3131 = vsel %vm1099, %v3126, %v3130
      %v3132 = vshrl.u32 %v2966, 16
      %v3134 = vrot.slane %v3132, 4
      %v3135 = vor.u32 %v3134, %v3130
      %v3136 = vrot.slane %v3135, 4
      %v3138 = vshll.u32 %v2967, 16
      %v3140 = vrot.slane %v3138, 5
      %v3141 = vsel %vm1099, %v3136, %v3140
      %v3143 = vshrl.u32 %v2968, 16
      %v3145 = vrot.slane %v3143, 4
      %v3146 = vshll.u32 %v2968, 16
      %v3148 = vrot.slane %v3146, 5
      %v3149 = vor.u32 %v3145, %v3148
      %v3150 = vrot.slane %v3149, 4
      %v3152 = vshll.u32 %v2969, 16
      %v3154 = vrot.slane %v3152, 5
      %v3155 = vsel %vm1099, %v3150, %v3154
      %v3156 = vshrl.u32 %v2969, 16
      %v3158 = vrot.slane %v3156, 4
      %v3159 = vor.u32 %v3158, %v3154
      %v3160 = vrot.slane %v3159, 4
      %v3162 = vshll.u32 %v2970, 16
      %v3164 = vrot.slane %v3162, 5
      %v3165 = vsel %vm1099, %v3160, %v3164
      %v3167 = vshrl.u32 %v2971, 16
      %v3169 = vrot.slane %v3167, 4
      %v3170 = vshll.u32 %v2971, 16
      %v3172 = vrot.slane %v3170, 5
      %v3173 = vor.u32 %v3169, %v3172
      %v3174 = vrot.slane %v3173, 4
      %v3176 = vshll.u32 %v2972, 16
      %v3178 = vrot.slane %v3176, 5
      %v3179 = vsel %vm1099, %v3174, %v3178
      %v3180 = vshrl.u32 %v2972, 16
      %v3182 = vrot.slane %v3180, 4
      %v3183 = vor.u32 %v3182, %v3178
      %v3184 = vrot.slane %v3183, 4
      %v3186 = vshll.u32 %v2973, 16
      %v3188 = vrot.slane %v3186, 5
      %v3189 = vsel %vm1099, %v3184, %v3188
      %v3191 = vshrl.u32 %v2974, 16
      %v3193 = vrot.slane %v3191, 4
      %v3194 = vshll.u32 %v2974, 16
      %v3196 = vrot.slane %v3194, 5
      %v3197 = vor.u32 %v3193, %v3196
      %v3198 = vrot.slane %v3197, 4
      %v3200 = vshll.u32 %v2975, 16
      %v3202 = vrot.slane %v3200, 5
      %v3203 = vsel %vm1099, %v3198, %v3202
      %v3204 = vshrl.u32 %v2975, 16
      %v3206 = vrot.slane %v3204, 4
      %v3207 = vor.u32 %v3206, %v3202
      %v3208 = vrot.slane %v3207, 4
      %v3210 = vshll.u32 %v2976, 16
      %v3212 = vrot.slane %v3210, 5
      %v3213 = vsel %vm1099, %v3208, %v3212
      %v3215 = vshrl.u32 %v2977, 16
      %v3217 = vrot.slane %v3215, 4
      %v3218 = vshll.u32 %v2977, 16
      %v3220 = vrot.slane %v3218, 5
      %v3221 = vor.u32 %v3217, %v3220
      %v3222 = vrot.slane %v3221, 4
      %v3224 = vshll.u32 %v2978, 16
      %v3226 = vrot.slane %v3224, 5
      %v3227 = vsel %vm1099, %v3222, %v3226
      %v3228 = vshrl.u32 %v2978, 16
      %v3230 = vrot.slane %v3228, 4
      %v3231 = vor.u32 %v3230, %v3226
      %v3232 = vrot.slane %v3231, 4
      %v3234 = vshll.u32 %v2979, 16
      %v3236 = vrot.slane %v3234, 5
      %v3237 = vsel %vm1099, %v3232, %v3236
      %v3239 = vshrl.u32 %v2980, 16
      %v3241 = vrot.slane %v3239, 4
      %v3242 = vshll.u32 %v2980, 16
      %v3244 = vrot.slane %v3242, 5
      %v3245 = vor.u32 %v3241, %v3244
      %v3246 = vrot.slane %v3245, 4
      %v3248 = vshll.u32 %v2981, 16
      %v3250 = vrot.slane %v3248, 5
      %v3251 = vsel %vm1099, %v3246, %v3250
      %v3252 = vshrl.u32 %v2981, 16
      %v3254 = vrot.slane %v3252, 4
      %v3255 = vor.u32 %v3254, %v3250
      %v3256 = vrot.slane %v3255, 4
      %v3258 = vshll.u32 %v2982, 16
      %v3260 = vrot.slane %v3258, 5
      %v3261 = vsel %vm1099, %v3256, %v3260
      %v3263 = vshrl.u32 %v2983, 16
      %v3265 = vrot.slane %v3263, 4
      %v3266 = vshll.u32 %v2983, 16
      %v3268 = vrot.slane %v3266, 5
      %v3269 = vor.u32 %v3265, %v3268
      %v3270 = vrot.slane %v3269, 4
      %v3272 = vshll.u32 %v2984, 16
      %v3274 = vrot.slane %v3272, 5
      %v3275 = vsel %vm1099, %v3270, %v3274
      %v3276 = vshrl.u32 %v2984, 16
      %v3278 = vrot.slane %v3276, 4
      %v3279 = vor.u32 %v3278, %v3274
      %v3280 = vrot.slane %v3279, 4
      %v3282 = vshll.u32 %v2985, 16
      %v3284 = vrot.slane %v3282, 5
      %v3285 = vsel %vm1099, %v3280, %v3284
      %v3287 = vshrl.u32 %v2986, 16
      %v3289 = vrot.slane %v3287, 4
      %v3290 = vshll.u32 %v2986, 16
      %v3292 = vrot.slane %v3290, 5
      %v3293 = vor.u32 %v3289, %v3292
      %v3294 = vrot.slane %v3293, 4
      %v3296 = vshll.u32 %v2987, 16
      %v3298 = vrot.slane %v3296, 5
      %v3299 = vsel %vm1099, %v3294, %v3298
      %v3300 = vshrl.u32 %v2987, 16
      %v3302 = vrot.slane %v3300, 4
      %v3303 = vor.u32 %v3302, %v3298
      %v3304 = vrot.slane %v3303, 4
      %v3306 = vshll.u32 %v2988, 16
      %v3308 = vrot.slane %v3306, 5
      %v3309 = vsel %vm1099, %v3304, %v3308
      %v3311 = vshrl.u32 %v2989, 16
      %v3313 = vrot.slane %v3311, 4
      %v3314 = vshll.u32 %v2989, 16
      %v3316 = vrot.slane %v3314, 5
      %v3317 = vor.u32 %v3313, %v3316
      %v3318 = vrot.slane %v3317, 4
      %v3320 = vshll.u32 %v2990, 16
      %v3322 = vrot.slane %v3320, 5
      %v3323 = vsel %vm1099, %v3318, %v3322
      %v3324 = vshrl.u32 %v2990, 16
      %v3326 = vrot.slane %v3324, 4
      %v3327 = vor.u32 %v3326, %v3322
      %v3328 = vrot.slane %v3327, 4
      %v3330 = vshll.u32 %v2991, 16
      %v3332 = vrot.slane %v3330, 5
      %v3333 = vsel %vm1099, %v3328, %v3332
      %v3335 = vshrl.u32 %v2992, 16
      %v3337 = vrot.slane %v3335, 4
      %v3338 = vshll.u32 %v2992, 16
      %v3340 = vrot.slane %v3338, 5
      %v3341 = vor.u32 %v3337, %v3340
      %v3342 = vrot.slane %v3341, 4
      %v3344 = vshll.u32 %v2993, 16
      %v3346 = vrot.slane %v3344, 5
      %v3347 = vsel %vm1099, %v3342, %v3346
      %v3348 = vshrl.u32 %v2993, 16
      %v3350 = vrot.slane %v3348, 4
      %v3351 = vor.u32 %v3350, %v3346
      %v3352 = vrot.slane %v3351, 4
      %v3354 = vshll.u32 %v2994, 16
      %v3356 = vrot.slane %v3354, 5
      %v3357 = vsel %vm1099, %v3352, %v3356
      %v3359 = vshrl.u32 %v2995, 16
      %v3361 = vrot.slane %v3359, 4
      %v3362 = vshll.u32 %v2995, 16
      %v3364 = vrot.slane %v3362, 5
      %v3365 = vor.u32 %v3361, %v3364
      %v3366 = vrot.slane %v3365, 4
      %v3368 = vshll.u32 %v2996, 16
      %v3370 = vrot.slane %v3368, 5
      %v3371 = vsel %vm1099, %v3366, %v3370
      %v3372 = vshrl.u32 %v2996, 16
      %v3374 = vrot.slane %v3372, 4
      %v3375 = vor.u32 %v3374, %v3370
      %v3376 = vrot.slane %v3375, 4
      %v3378 = vshll.u32 %v2997, 16
      %v3380 = vrot.slane %v3378, 5
      %v3381 = vsel %vm1099, %v3376, %v3380
      %s3382 = scalar_lea.vmem %s2, 256
      %v3383 = vld [vmem:[%s3382] sm:$0xf]
      %v3384 = vld [vmem:[%s3382 + $0x4] sm:$0xf]
      %v3385 = vld [vmem:[%s3382 + $0x8] sm:$0xf]
      %v3386 = vld [vmem:[%s3382 + $0xc] sm:$0xf]
      %v3387 = vld [vmem:[%s3382 + $0x10] sm:$0xf]
      %v3388 = vld [vmem:[%s3382 + $0x14] sm:$0xf]
      %v3389 = vld [vmem:[%s3382 + $0x18] sm:$0xf]
      %v3390 = vld [vmem:[%s3382 + $0x1c] sm:$0xf]
      %v3391 = vld [vmem:[%s3382 + $0x20] sm:$0xf]
      %v3392 = vld [vmem:[%s3382 + $0x24] sm:$0xf]
      %v3393 = vld [vmem:[%s3382 + $0x28] sm:$0xf]
      %v3394 = vld [vmem:[%s3382 + $0x2c] sm:$0xf]
      %v3395 = vld [vmem:[%s3382 + $0x30] sm:$0xf]
      %v3396 = vld [vmem:[%s3382 + $0x34] sm:$0xf]
      %v3397 = vld [vmem:[%s3382 + $0x38] sm:$0xf]
      %v3398 = vld [vmem:[%s3382 + $0x3c] sm:$0xf]
      %v3399 = vunpack.c.l.b16 %v3011
      %v3400 = vunpack.c.l.b16 %v3021
      %v3401 = vunpack.c.l.b16 %v3035
      %v3402 = vunpack.c.l.b16 %v3045
      %v3403 = vunpack.c.l.b16 %v3059
      %v3404 = vunpack.c.l.b16 %v3069
      %v3405 = vunpack.c.l.b16 %v3083
      %v3406 = vunpack.c.l.b16 %v3093
      %v3407 = vunpack.c.l.b16 %v3107
      %v3408 = vunpack.c.l.b16 %v3117
      %v3409 = vunpack.c.l.b16 %v3131
      %v3410 = vunpack.c.l.b16 %v3141
      %v3411 = vunpack.c.l.b16 %v3155
      %v3412 = vunpack.c.l.b16 %v3165
      %v3413 = vunpack.c.l.b16 %v3179
      %v3414 = vunpack.c.l.b16 %v3189
      %v3415 = vunpack.c.l.b16 %v3203
      %v3416 = vunpack.c.l.b16 %v3213
      %v3417 = vunpack.c.l.b16 %v3227
      %v3418 = vunpack.c.l.b16 %v3237
      %v3419 = vunpack.c.l.b16 %v3251
      %v3420 = vunpack.c.l.b16 %v3261
      %v3421 = vunpack.c.l.b16 %v3275
      %v3422 = vunpack.c.l.b16 %v3285
      %v3423 = vunpack.c.l.b16 %v3299
      %v3424 = vunpack.c.l.b16 %v3309
      %v3425 = vunpack.c.l.b16 %v3323
      %v3426 = vunpack.c.l.b16 %v3333
      %v3427 = vunpack.c.l.b16 %v3347
      %v3428 = vunpack.c.l.b16 %v3357
      %v3429 = vunpack.c.l.b16 %v3371
      %v3430 = vunpack.c.l.b16 %v3381
      %v3431 = vpack.c.b16 %v3400, %v3399
      %v3432 = vpack.c.b16 %v3402, %v3401
      %v3433 = vpack.c.b16 %v3404, %v3403
      %v3434 = vpack.c.b16 %v3406, %v3405
      %v3435 = vpack.c.b16 %v3408, %v3407
      %v3436 = vpack.c.b16 %v3410, %v3409
      %v3437 = vpack.c.b16 %v3412, %v3411
      %v3438 = vpack.c.b16 %v3414, %v3413
      %v3439 = vpack.c.b16 %v3416, %v3415
      %v3440 = vpack.c.b16 %v3418, %v3417
      %v3441 = vpack.c.b16 %v3420, %v3419
      %v3442 = vpack.c.b16 %v3422, %v3421
      %v3443 = vpack.c.b16 %v3424, %v3423
      %v3444 = vpack.c.b16 %v3426, %v3425
      %v3445 = vpack.c.b16 %v3428, %v3427
      %v3446 = vpack.c.b16 %v3430, %v3429
      %v3479 = vunpack.c.l.b16 %v3383
      %v3480 = vunpack.c.l.b16 %v3384
      %v3481 = vunpack.c.l.b16 %v3385
      %v3482 = vunpack.c.l.b16 %v3386
      %v3483 = vunpack.c.l.b16 %v3387
      %v3484 = vunpack.c.l.b16 %v3388
      %v3485 = vunpack.c.l.b16 %v3389
      %v3486 = vunpack.c.l.b16 %v3390
      %v3487 = vunpack.c.l.b16 %v3391
      %v3488 = vunpack.c.l.b16 %v3392
      %v3489 = vunpack.c.l.b16 %v3393
      %v3490 = vunpack.c.l.b16 %v3394
      %v3491 = vunpack.c.l.b16 %v3395
      %v3492 = vunpack.c.l.b16 %v3396
      %v3493 = vunpack.c.l.b16 %v3397
      %v3494 = vunpack.c.l.b16 %v3398
      %v3495 = vpack.c.b16 %v3480, %v3479
      %v3496 = vpack.c.b16 %v3482, %v3481
      %v3497 = vpack.c.b16 %v3484, %v3483
      %v3498 = vpack.c.b16 %v3486, %v3485
      %v3499 = vpack.c.b16 %v3488, %v3487
      %v3500 = vpack.c.b16 %v3490, %v3489
      %v3501 = vpack.c.b16 %v3492, %v3491
      %v3502 = vpack.c.b16 %v3494, %v3493
      %3511 = vmatprep.subr.bf16.mxu0 0
      %3512 = vmatpush1.bf16.msra.mxu0 %v3502
      %3513 = vmatprep.subr.bf16.mxu0 0
      %3514 = vmatpush1.bf16.msra.mxu0 %v3501
      %3515 = vmatprep.subr.bf16.mxu0 0
      %3516 = vmatpush1.bf16.msra.mxu0 %v3500
      %3517 = vmatprep.subr.bf16.mxu0 0
      %3518 = vmatpush1.bf16.msra.mxu0 %v3499
      %3519 = vmatprep.subr.bf16.mxu0 0
      %3520 = vmatpush1.bf16.msra.mxu0 %v3498
      %3521 = vmatprep.subr.bf16.mxu0 0
      %3522 = vmatpush1.bf16.msra.mxu0 %v3497
      %3523 = vmatprep.subr.bf16.mxu0 0
      %3524 = vmatpush1.bf16.msra.mxu0 %v3496
      %3525 = vmatprep.subr.bf16.mxu0 0
      %3526 = vmatpush1.bf16.msra.mxu0 %v3495
      %3527 = vmatprep.subr.bf16.mxu0 0
      %3528 = vmatpush2.bf16.msra.mxu0 0
      %3529 = vmatprep.subr.bf16.mxu0 0
      %3530 = vmatpush2.bf16.msra.mxu0 0
      %3531 = vmatprep.subr.bf16.mxu0 0
      %3532 = vmatpush2.bf16.msra.mxu0 0
      %3533 = vmatprep.subr.bf16.mxu0 0
      %3534 = vmatpush2.bf16.msra.mxu0 0
      %3535 = vmatprep.subr.bf16.mxu0 0
      %3536 = vmatpush2.bf16.msra.mxu0 0
      %3537 = vmatprep.subr.bf16.mxu0 0
      %3538 = vmatpush2.bf16.msra.mxu0 0
      %3539 = vmatprep.subr.bf16.mxu0 0
      %3540 = vmatpush2.bf16.msra.mxu0 0
      %3541 = vmatprep.subr.bf16.mxu0 0
      %3542 = vmatpush2.bf16.msra.mxu0 0
      %3543 = vmatprep.mubr.bf16.mxu0 0
      %3544 = vmatmul.mubr.bf16.gmra.mxu0 %v3431
      %v3545 = vpop.f32.mrf.mxu0
      %v3546 = vadd.f32 0.0, %v3545
      %v3547 = vpop.f32.mrf.mxu0
      %v3548 = vpop.f32.mrf.mxu0
      %v3549 = vadd.f32 0.0, %v3548
      %v3550 = vpop.f32.mrf.mxu0
      %3551 = vmatprep.mubr.bf16.mxu0 0
      %3552 = vmatmul.mubr.bf16.gmra.mxu0 %v3432
      %v3553 = vpop.f32.mrf.mxu0
      %v3554 = vadd.f32 0.0, %v3553
      %v3555 = vpop.f32.mrf.mxu0
      %v3556 = vpop.f32.mrf.mxu0
      %v3557 = vadd.f32 0.0, %v3556
      %v3558 = vpop.f32.mrf.mxu0
      %3559 = vmatprep.mubr.bf16.mxu0 0
      %3560 = vmatmul.mubr.bf16.gmra.mxu0 %v3433
      %v3561 = vpop.f32.mrf.mxu0
      %v3562 = vadd.f32 0.0, %v3561
      %v3563 = vpop.f32.mrf.mxu0
      %v3564 = vpop.f32.mrf.mxu0
      %v3565 = vadd.f32 0.0, %v3564
      %v3566 = vpop.f32.mrf.mxu0
      %3567 = vmatprep.mubr.bf16.mxu0 0
      %3568 = vmatmul.mubr.bf16.gmra.mxu0 %v3434
      %v3569 = vpop.f32.mrf.mxu0
      %v3570 = vadd.f32 0.0, %v3569
      %v3571 = vpop.f32.mrf.mxu0
      %v3572 = vpop.f32.mrf.mxu0
      %v3573 = vadd.f32 0.0, %v3572
      %v3574 = vpop.f32.mrf.mxu0
      %3575 = vmatprep.mubr.bf16.mxu0 0
      %3576 = vmatmul.mubr.bf16.gmra.mxu0 %v3435
      %v3577 = vpop.f32.mrf.mxu0
      %v3578 = vadd.f32 0.0, %v3577
      %v3579 = vpop.f32.mrf.mxu0
      %v3580 = vpop.f32.mrf.mxu0
      %v3581 = vadd.f32 0.0, %v3580
      %v3582 = vpop.f32.mrf.mxu0
      %3583 = vmatprep.mubr.bf16.mxu0 0
      %3584 = vmatmul.mubr.bf16.gmra.mxu0 %v3436
      %v3585 = vpop.f32.mrf.mxu0
      %v3586 = vadd.f32 0.0, %v3585
      %v3587 = vpop.f32.mrf.mxu0
      %v3588 = vpop.f32.mrf.mxu0
      %v3589 = vadd.f32 0.0, %v3588
      %v3590 = vpop.f32.mrf.mxu0
      %3591 = vmatprep.mubr.bf16.mxu0 0
      %3592 = vmatmul.mubr.bf16.gmra.mxu0 %v3437
      %v3593 = vpop.f32.mrf.mxu0
      %v3594 = vadd.f32 0.0, %v3593
      %v3595 = vpop.f32.mrf.mxu0
      %v3596 = vpop.f32.mrf.mxu0
      %v3597 = vadd.f32 0.0, %v3596
      %v3598 = vpop.f32.mrf.mxu0
      %3599 = vmatprep.mubr.bf16.mxu0 0
      %3600 = vmatmul.mubr.bf16.gmra.mxu0 %v3438
      %v3601 = vpop.f32.mrf.mxu0
      %v3602 = vadd.f32 0.0, %v3601
      %v3603 = vpop.f32.mrf.mxu0
      %v3604 = vpop.f32.mrf.mxu0
      %v3605 = vadd.f32 0.0, %v3604
      %v3606 = vpop.f32.mrf.mxu0
      %3607 = vmatprep.mubr.bf16.mxu0 0
      %3608 = vmatmul.mubr.bf16.gmra.mxu0 %v3439
      %v3609 = vpop.f32.mrf.mxu0
      %v3610 = vadd.f32 0.0, %v3609
      %v3611 = vpop.f32.mrf.mxu0
      %v3612 = vpop.f32.mrf.mxu0
      %v3613 = vadd.f32 0.0, %v3612
      %v3614 = vpop.f32.mrf.mxu0
      %3615 = vmatprep.mubr.bf16.mxu0 0
      %3616 = vmatmul.mubr.bf16.gmra.mxu0 %v3440
      %v3617 = vpop.f32.mrf.mxu0
      %v3618 = vadd.f32 0.0, %v3617
      %v3619 = vpop.f32.mrf.mxu0
      %v3620 = vpop.f32.mrf.mxu0
      %v3621 = vadd.f32 0.0, %v3620
      %v3622 = vpop.f32.mrf.mxu0
      %3623 = vmatprep.mubr.bf16.mxu0 0
      %3624 = vmatmul.mubr.bf16.gmra.mxu0 %v3441
      %v3625 = vpop.f32.mrf.mxu0
      %v3626 = vadd.f32 0.0, %v3625
      %v3627 = vpop.f32.mrf.mxu0
      %v3628 = vpop.f32.mrf.mxu0
      %v3629 = vadd.f32 0.0, %v3628
      %v3630 = vpop.f32.mrf.mxu0
      %3631 = vmatprep.mubr.bf16.mxu0 0
      %3632 = vmatmul.mubr.bf16.gmra.mxu0 %v3442
      %v3633 = vpop.f32.mrf.mxu0
      %v3634 = vadd.f32 0.0, %v3633
      %v3635 = vpop.f32.mrf.mxu0
      %v3636 = vpop.f32.mrf.mxu0
      %v3637 = vadd.f32 0.0, %v3636
      %v3638 = vpop.f32.mrf.mxu0
      %3639 = vmatprep.mubr.bf16.mxu0 0
      %3640 = vmatmul.mubr.bf16.gmra.mxu0 %v3443
      %v3641 = vpop.f32.mrf.mxu0
      %v3642 = vadd.f32 0.0, %v3641
      %v3643 = vpop.f32.mrf.mxu0
      %v3644 = vpop.f32.mrf.mxu0
      %v3645 = vadd.f32 0.0, %v3644
      %v3646 = vpop.f32.mrf.mxu0
      %3647 = vmatprep.mubr.bf16.mxu0 0
      %3648 = vmatmul.mubr.bf16.gmra.mxu0 %v3444
      %v3649 = vpop.f32.mrf.mxu0
      %v3650 = vadd.f32 0.0, %v3649
      %v3651 = vpop.f32.mrf.mxu0
      %v3652 = vpop.f32.mrf.mxu0
      %v3653 = vadd.f32 0.0, %v3652
      %v3654 = vpop.f32.mrf.mxu0
      %3655 = vmatprep.mubr.bf16.mxu0 0
      %3656 = vmatmul.mubr.bf16.gmra.mxu0 %v3445
      %v3657 = vpop.f32.mrf.mxu0
      %v3658 = vadd.f32 0.0, %v3657
      %v3659 = vpop.f32.mrf.mxu0
      %v3660 = vpop.f32.mrf.mxu0
      %v3661 = vadd.f32 0.0, %v3660
      %v3662 = vpop.f32.mrf.mxu0
      %3663 = vmatprep.mubr.bf16.mxu0 0
      %3664 = vmatmul.mubr.bf16.gmra.mxu0 %v3446
      %v3665 = vpop.f32.mrf.mxu0
      %v3666 = vadd.f32 0.0, %v3665
      %v3667 = vpop.f32.mrf.mxu0
      %v3668 = vpop.f32.mrf.mxu0
      %v3669 = vadd.f32 0.0, %v3668
      %v3670 = vpop.f32.mrf.mxu0
      %3671 = vdwg.mxu0
      %v3672 = vadd.f32 %v2918, %v3546
      %v3673 = vadd.f32 %v2919, %v3549
      %v3674 = vadd.f32 %v2920, %v3554
      %v3675 = vadd.f32 %v2921, %v3557
      %v3676 = vadd.f32 %v2922, %v3562
      %v3677 = vadd.f32 %v2923, %v3565
      %v3678 = vadd.f32 %v2924, %v3570
      %v3679 = vadd.f32 %v2925, %v3573
      %v3680 = vadd.f32 %v2926, %v3578
      %v3681 = vadd.f32 %v2927, %v3581
      %v3682 = vadd.f32 %v2928, %v3586
      %v3683 = vadd.f32 %v2929, %v3589
      %v3684 = vadd.f32 %v2930, %v3594
      %v3685 = vadd.f32 %v2931, %v3597
      %v3686 = vadd.f32 %v2932, %v3602
      %v3687 = vadd.f32 %v2933, %v3605
      %v3688 = vadd.f32 %v2934, %v3610
      %v3689 = vadd.f32 %v2935, %v3613
      %v3690 = vadd.f32 %v2936, %v3618
      %v3691 = vadd.f32 %v2937, %v3621
      %v3692 = vadd.f32 %v2938, %v3626
      %v3693 = vadd.f32 %v2939, %v3629
      %v3694 = vadd.f32 %v2940, %v3634
      %v3695 = vadd.f32 %v2941, %v3637
      %v3696 = vadd.f32 %v2942, %v3642
      %v3697 = vadd.f32 %v2943, %v3645
      %v3698 = vadd.f32 %v2944, %v3650
      %v3699 = vadd.f32 %v2945, %v3653
      %v3700 = vadd.f32 %v2946, %v3658
      %v3701 = vadd.f32 %v2947, %v3661
      %v3702 = vadd.f32 %v2948, %v3666
      %v3703 = vadd.f32 %v2949, %v3669
      %v3704 = vld [vmem:[%s918] sm:$0xe]
      %v3705 = vld [vmem:[%s918 + $0xc] sm:$0xe]
      %v3706 = vld [vmem:[%s918 + $0x18] sm:$0xe]
      %v3707 = vld [vmem:[%s918 + $0x24] sm:$0xe]
      %v3708 = vld [vmem:[%s918 + $0x30] sm:$0xe]
      %v3709 = vld [vmem:[%s918 + $0x3c] sm:$0xe]
      %v3710 = vld [vmem:[%s918 + $0x48] sm:$0xe]
      %v3711 = vld [vmem:[%s918 + $0x54] sm:$0xe]
      %v3712 = vld [vmem:[%s918 + $0x60] sm:$0xe]
      %v3713 = vld [vmem:[%s918 + $0x6c] sm:$0xe]
      %v3714 = vld [vmem:[%s918 + $0x78] sm:$0xe]
      %v3715 = vld [vmem:[%s918 + $0x84] sm:$0xe]
      %v3716 = vld [vmem:[%s918 + $0x90] sm:$0xe]
      %v3717 = vld [vmem:[%s918 + $0x9c] sm:$0xe]
      %v3718 = vld [vmem:[%s918 + $0xa8] sm:$0xe]
      %v3719 = vld [vmem:[%s918 + $0xb4] sm:$0xe]
      %v3768 = vrot.slane %v3704, 5
      %v3769 = vrot.slane %v3768, 4
      %v3770 = vrot.slane %v2951, 5
      %v3771 = vsel %vm2129, %v3769, %v3770
      %v3772 = vrot.slane %v3770, 4
      %v3773 = vrot.slane %v2952, 5
      %v3774 = vsel %vm2129, %v3772, %v3773
      %v3775 = vrot.slane %v3705, 5
      %v3776 = vrot.slane %v3775, 4
      %v3777 = vrot.slane %v2954, 5
      %v3778 = vsel %vm2129, %v3776, %v3777
      %v3779 = vrot.slane %v3777, 4
      %v3780 = vrot.slane %v2955, 5
      %v3781 = vsel %vm2129, %v3779, %v3780
      %v3782 = vrot.slane %v3706, 5
      %v3783 = vrot.slane %v3782, 4
      %v3784 = vrot.slane %v2957, 5
      %v3785 = vsel %vm2129, %v3783, %v3784
      %v3786 = vrot.slane %v3784, 4
      %v3787 = vrot.slane %v2958, 5
      %v3788 = vsel %vm2129, %v3786, %v3787
      %v3789 = vrot.slane %v3707, 5
      %v3790 = vrot.slane %v3789, 4
      %v3791 = vrot.slane %v2960, 5
      %v3792 = vsel %vm2129, %v3790, %v3791
      %v3793 = vrot.slane %v3791, 4
      %v3794 = vrot.slane %v2961, 5
      %v3795 = vsel %vm2129, %v3793, %v3794
      %v3796 = vrot.slane %v3708, 5
      %v3797 = vrot.slane %v3796, 4
      %v3798 = vrot.slane %v2963, 5
      %v3799 = vsel %vm2129, %v3797, %v3798
      %v3800 = vrot.slane %v3798, 4
      %v3801 = vrot.slane %v2964, 5
      %v3802 = vsel %vm2129, %v3800, %v3801
      %v3803 = vrot.slane %v3709, 5
      %v3804 = vrot.slane %v3803, 4
      %v3805 = vrot.slane %v2966, 5
      %v3806 = vsel %vm2129, %v3804, %v3805
      %v3807 = vrot.slane %v3805, 4
      %v3808 = vrot.slane %v2967, 5
      %v3809 = vsel %vm2129, %v3807, %v3808
      %v3810 = vrot.slane %v3710, 5
      %v3811 = vrot.slane %v3810, 4
      %v3812 = vrot.slane %v2969, 5
      %v3813 = vsel %vm2129, %v3811, %v3812
      %v3814 = vrot.slane %v3812, 4
      %v3815 = vrot.slane %v2970, 5
      %v3816 = vsel %vm2129, %v3814, %v3815
      %v3817 = vrot.slane %v3711, 5
      %v3818 = vrot.slane %v3817, 4
      %v3819 = vrot.slane %v2972, 5
      %v3820 = vsel %vm2129, %v3818, %v3819
      %v3821 = vrot.slane %v3819, 4
      %v3822 = vrot.slane %v2973, 5
      %v3823 = vsel %vm2129, %v3821, %v3822
      %v3824 = vrot.slane %v3712, 5
      %v3825 = vrot.slane %v3824, 4
      %v3826 = vrot.slane %v2975, 5
      %v3827 = vsel %vm2129, %v3825, %v3826
      %v3828 = vrot.slane %v3826, 4
      %v3829 = vrot.slane %v2976, 5
      %v3830 = vsel %vm2129, %v3828, %v3829
      %v3831 = vrot.slane %v3713, 5
      %v3832 = vrot.slane %v3831, 4
      %v3833 = vrot.slane %v2978, 5
      %v3834 = vsel %vm2129, %v3832, %v3833
      %v3835 = vrot.slane %v3833, 4
      %v3836 = vrot.slane %v2979, 5
      %v3837 = vsel %vm2129, %v3835, %v3836
      %v3838 = vrot.slane %v3714, 5
      %v3839 = vrot.slane %v3838, 4
      %v3840 = vrot.slane %v2981, 5
      %v3841 = vsel %vm2129, %v3839, %v3840
      %v3842 = vrot.slane %v3840, 4
      %v3843 = vrot.slane %v2982, 5
      %v3844 = vsel %vm2129, %v3842, %v3843
      %v3845 = vrot.slane %v3715, 5
      %v3846 = vrot.slane %v3845, 4
      %v3847 = vrot.slane %v2984, 5
      %v3848 = vsel %vm2129, %v3846, %v3847
      %v3849 = vrot.slane %v3847, 4
      %v3850 = vrot.slane %v2985, 5
      %v3851 = vsel %vm2129, %v3849, %v3850
      %v3852 = vrot.slane %v3716, 5
      %v3853 = vrot.slane %v3852, 4
      %v3854 = vrot.slane %v2987, 5
      %v3855 = vsel %vm2129, %v3853, %v3854
      %v3856 = vrot.slane %v3854, 4
      %v3857 = vrot.slane %v2988, 5
      %v3858 = vsel %vm2129, %v3856, %v3857
      %v3859 = vrot.slane %v3717, 5
      %v3860 = vrot.slane %v3859, 4
      %v3861 = vrot.slane %v2990, 5
      %v3862 = vsel %vm2129, %v3860, %v3861
      %v3863 = vrot.slane %v3861, 4
      %v3864 = vrot.slane %v2991, 5
      %v3865 = vsel %vm2129, %v3863, %v3864
      %v3866 = vrot.slane %v3718, 5
      %v3867 = vrot.slane %v3866, 4
      %v3868 = vrot.slane %v2993, 5
      %v3869 = vsel %vm2129, %v3867, %v3868
      %v3870 = vrot.slane %v3868, 4
      %v3871 = vrot.slane %v2994, 5
      %v3872 = vsel %vm2129, %v3870, %v3871
      %v3873 = vrot.slane %v3719, 5
      %v3874 = vrot.slane %v3873, 4
      %v3875 = vrot.slane %v2996, 5
      %v3876 = vsel %vm2129, %v3874, %v3875
      %v3877 = vrot.slane %v3875, 4
      %v3878 = vrot.slane %v2997, 5
      %v3879 = vsel %vm2129, %v3877, %v3878
      %s3880 = scalar_lea.vmem %s2, 320
      %v3881 = vld [vmem:[%s3880] sm:$0xf]
      %v3882 = vld [vmem:[%s3880 + $0x4] sm:$0xf]
      %v3883 = vld [vmem:[%s3880 + $0x8] sm:$0xf]
      %v3884 = vld [vmem:[%s3880 + $0xc] sm:$0xf]
      %v3885 = vld [vmem:[%s3880 + $0x10] sm:$0xf]
      %v3886 = vld [vmem:[%s3880 + $0x14] sm:$0xf]
      %v3887 = vld [vmem:[%s3880 + $0x18] sm:$0xf]
      %v3888 = vld [vmem:[%s3880 + $0x1c] sm:$0xf]
      %v3889 = vld [vmem:[%s3880 + $0x20] sm:$0xf]
      %v3890 = vld [vmem:[%s3880 + $0x24] sm:$0xf]
      %v3891 = vld [vmem:[%s3880 + $0x28] sm:$0xf]
      %v3892 = vld [vmem:[%s3880 + $0x2c] sm:$0xf]
      %v3893 = vld [vmem:[%s3880 + $0x30] sm:$0xf]
      %v3894 = vld [vmem:[%s3880 + $0x34] sm:$0xf]
      %v3895 = vld [vmem:[%s3880 + $0x38] sm:$0xf]
      %v3896 = vld [vmem:[%s3880 + $0x3c] sm:$0xf]
      %v3897 = vunpack.c.l.b16 %v3771
      %v3898 = vunpack.c.l.b16 %v3774
      %v3899 = vunpack.c.l.b16 %v3778
      %v3900 = vunpack.c.l.b16 %v3781
      %v3901 = vunpack.c.l.b16 %v3785
      %v3902 = vunpack.c.l.b16 %v3788
      %v3903 = vunpack.c.l.b16 %v3792
      %v3904 = vunpack.c.l.b16 %v3795
      %v3905 = vunpack.c.l.b16 %v3799
      %v3906 = vunpack.c.l.b16 %v3802
      %v3907 = vunpack.c.l.b16 %v3806
      %v3908 = vunpack.c.l.b16 %v3809
      %v3909 = vunpack.c.l.b16 %v3813
      %v3910 = vunpack.c.l.b16 %v3816
      %v3911 = vunpack.c.l.b16 %v3820
      %v3912 = vunpack.c.l.b16 %v3823
      %v3913 = vunpack.c.l.b16 %v3827
      %v3914 = vunpack.c.l.b16 %v3830
      %v3915 = vunpack.c.l.b16 %v3834
      %v3916 = vunpack.c.l.b16 %v3837
      %v3917 = vunpack.c.l.b16 %v3841
      %v3918 = vunpack.c.l.b16 %v3844
      %v3919 = vunpack.c.l.b16 %v3848
      %v3920 = vunpack.c.l.b16 %v3851
      %v3921 = vunpack.c.l.b16 %v3855
      %v3922 = vunpack.c.l.b16 %v3858
      %v3923 = vunpack.c.l.b16 %v3862
      %v3924 = vunpack.c.l.b16 %v3865
      %v3925 = vunpack.c.l.b16 %v3869
      %v3926 = vunpack.c.l.b16 %v3872
      %v3927 = vunpack.c.l.b16 %v3876
      %v3928 = vunpack.c.l.b16 %v3879
      %v3929 = vpack.c.b16 %v3898, %v3897
      %v3930 = vpack.c.b16 %v3900, %v3899
      %v3931 = vpack.c.b16 %v3902, %v3901
      %v3932 = vpack.c.b16 %v3904, %v3903
      %v3933 = vpack.c.b16 %v3906, %v3905
      %v3934 = vpack.c.b16 %v3908, %v3907
      %v3935 = vpack.c.b16 %v3910, %v3909
      %v3936 = vpack.c.b16 %v3912, %v3911
      %v3937 = vpack.c.b16 %v3914, %v3913
      %v3938 = vpack.c.b16 %v3916, %v3915
      %v3939 = vpack.c.b16 %v3918, %v3917
      %v3940 = vpack.c.b16 %v3920, %v3919
      %v3941 = vpack.c.b16 %v3922, %v3921
      %v3942 = vpack.c.b16 %v3924, %v3923
      %v3943 = vpack.c.b16 %v3926, %v3925
      %v3944 = vpack.c.b16 %v3928, %v3927
      %v3977 = vunpack.c.l.b16 %v3881
      %v3978 = vunpack.c.l.b16 %v3882
      %v3979 = vunpack.c.l.b16 %v3883
      %v3980 = vunpack.c.l.b16 %v3884
      %v3981 = vunpack.c.l.b16 %v3885
      %v3982 = vunpack.c.l.b16 %v3886
      %v3983 = vunpack.c.l.b16 %v3887
      %v3984 = vunpack.c.l.b16 %v3888
      %v3985 = vunpack.c.l.b16 %v3889
      %v3986 = vunpack.c.l.b16 %v3890
      %v3987 = vunpack.c.l.b16 %v3891
      %v3988 = vunpack.c.l.b16 %v3892
      %v3989 = vunpack.c.l.b16 %v3893
      %v3990 = vunpack.c.l.b16 %v3894
      %v3991 = vunpack.c.l.b16 %v3895
      %v3992 = vunpack.c.l.b16 %v3896
      %v3993 = vpack.c.b16 %v3978, %v3977
      %v3994 = vpack.c.b16 %v3980, %v3979
      %v3995 = vpack.c.b16 %v3982, %v3981
      %v3996 = vpack.c.b16 %v3984, %v3983
      %v3997 = vpack.c.b16 %v3986, %v3985
      %v3998 = vpack.c.b16 %v3988, %v3987
      %v3999 = vpack.c.b16 %v3990, %v3989
      %v4000 = vpack.c.b16 %v3992, %v3991
      %4009 = vmatprep.subr.bf16.mxu0 0
      %4010 = vmatpush1.bf16.msra.mxu0 %v4000
      %4011 = vmatprep.subr.bf16.mxu0 0
      %4012 = vmatpush1.bf16.msra.mxu0 %v3999
      %4013 = vmatprep.subr.bf16.mxu0 0
      %4014 = vmatpush1.bf16.msra.mxu0 %v3998
      %4015 = vmatprep.subr.bf16.mxu0 0
      %4016 = vmatpush1.bf16.msra.mxu0 %v3997
      %4017 = vmatprep.subr.bf16.mxu0 0
      %4018 = vmatpush1.bf16.msra.mxu0 %v3996
      %4019 = vmatprep.subr.bf16.mxu0 0
      %4020 = vmatpush1.bf16.msra.mxu0 %v3995
      %4021 = vmatprep.subr.bf16.mxu0 0
      %4022 = vmatpush1.bf16.msra.mxu0 %v3994
      %4023 = vmatprep.subr.bf16.mxu0 0
      %4024 = vmatpush1.bf16.msra.mxu0 %v3993
      %4025 = vmatprep.subr.bf16.mxu0 0
      %4026 = vmatpush2.bf16.msra.mxu0 0
      %4027 = vmatprep.subr.bf16.mxu0 0
      %4028 = vmatpush2.bf16.msra.mxu0 0
      %4029 = vmatprep.subr.bf16.mxu0 0
      %4030 = vmatpush2.bf16.msra.mxu0 0
      %4031 = vmatprep.subr.bf16.mxu0 0
      %4032 = vmatpush2.bf16.msra.mxu0 0
      %4033 = vmatprep.subr.bf16.mxu0 0
      %4034 = vmatpush2.bf16.msra.mxu0 0
      %4035 = vmatprep.subr.bf16.mxu0 0
      %4036 = vmatpush2.bf16.msra.mxu0 0
      %4037 = vmatprep.subr.bf16.mxu0 0
      %4038 = vmatpush2.bf16.msra.mxu0 0
      %4039 = vmatprep.subr.bf16.mxu0 0
      %4040 = vmatpush2.bf16.msra.mxu0 0
      %4041 = vmatprep.mubr.bf16.mxu0 0
      %4042 = vmatmul.mubr.bf16.gmra.mxu0 %v3929
      %v4043 = vpop.f32.mrf.mxu0
      %v4044 = vadd.f32 0.0, %v4043
      %v4045 = vpop.f32.mrf.mxu0
      %v4046 = vpop.f32.mrf.mxu0
      %v4047 = vadd.f32 0.0, %v4046
      %v4048 = vpop.f32.mrf.mxu0
      %4049 = vmatprep.mubr.bf16.mxu0 0
      %4050 = vmatmul.mubr.bf16.gmra.mxu0 %v3930
      %v4051 = vpop.f32.mrf.mxu0
      %v4052 = vadd.f32 0.0, %v4051
      %v4053 = vpop.f32.mrf.mxu0
      %v4054 = vpop.f32.mrf.mxu0
      %v4055 = vadd.f32 0.0, %v4054
      %v4056 = vpop.f32.mrf.mxu0
      %4057 = vmatprep.mubr.bf16.mxu0 0
      %4058 = vmatmul.mubr.bf16.gmra.mxu0 %v3931
      %v4059 = vpop.f32.mrf.mxu0
      %v4060 = vadd.f32 0.0, %v4059
      %v4061 = vpop.f32.mrf.mxu0
      %v4062 = vpop.f32.mrf.mxu0
      %v4063 = vadd.f32 0.0, %v4062
      %v4064 = vpop.f32.mrf.mxu0
      %4065 = vmatprep.mubr.bf16.mxu0 0
      %4066 = vmatmul.mubr.bf16.gmra.mxu0 %v3932
      %v4067 = vpop.f32.mrf.mxu0
      %v4068 = vadd.f32 0.0, %v4067
      %v4069 = vpop.f32.mrf.mxu0
      %v4070 = vpop.f32.mrf.mxu0
      %v4071 = vadd.f32 0.0, %v4070
      %v4072 = vpop.f32.mrf.mxu0
      %4073 = vmatprep.mubr.bf16.mxu0 0
      %4074 = vmatmul.mubr.bf16.gmra.mxu0 %v3933
      %v4075 = vpop.f32.mrf.mxu0
      %v4076 = vadd.f32 0.0, %v4075
      %v4077 = vpop.f32.mrf.mxu0
      %v4078 = vpop.f32.mrf.mxu0
      %v4079 = vadd.f32 0.0, %v4078
      %v4080 = vpop.f32.mrf.mxu0
      %4081 = vmatprep.mubr.bf16.mxu0 0
      %4082 = vmatmul.mubr.bf16.gmra.mxu0 %v3934
      %v4083 = vpop.f32.mrf.mxu0
      %v4084 = vadd.f32 0.0, %v4083
      %v4085 = vpop.f32.mrf.mxu0
      %v4086 = vpop.f32.mrf.mxu0
      %v4087 = vadd.f32 0.0, %v4086
      %v4088 = vpop.f32.mrf.mxu0
      %4089 = vmatprep.mubr.bf16.mxu0 0
      %4090 = vmatmul.mubr.bf16.gmra.mxu0 %v3935
      %v4091 = vpop.f32.mrf.mxu0
      %v4092 = vadd.f32 0.0, %v4091
      %v4093 = vpop.f32.mrf.mxu0
      %v4094 = vpop.f32.mrf.mxu0
      %v4095 = vadd.f32 0.0, %v4094
      %v4096 = vpop.f32.mrf.mxu0
      %4097 = vmatprep.mubr.bf16.mxu0 0
      %4098 = vmatmul.mubr.bf16.gmra.mxu0 %v3936
      %v4099 = vpop.f32.mrf.mxu0
      %v4100 = vadd.f32 0.0, %v4099
      %v4101 = vpop.f32.mrf.mxu0
      %v4102 = vpop.f32.mrf.mxu0
      %v4103 = vadd.f32 0.0, %v4102
      %v4104 = vpop.f32.mrf.mxu0
      %4105 = vmatprep.mubr.bf16.mxu0 0
      %4106 = vmatmul.mubr.bf16.gmra.mxu0 %v3937
      %v4107 = vpop.f32.mrf.mxu0
      %v4108 = vadd.f32 0.0, %v4107
      %v4109 = vpop.f32.mrf.mxu0
      %v4110 = vpop.f32.mrf.mxu0
      %v4111 = vadd.f32 0.0, %v4110
      %v4112 = vpop.f32.mrf.mxu0
      %4113 = vmatprep.mubr.bf16.mxu0 0
      %4114 = vmatmul.mubr.bf16.gmra.mxu0 %v3938
      %v4115 = vpop.f32.mrf.mxu0
      %v4116 = vadd.f32 0.0, %v4115
      %v4117 = vpop.f32.mrf.mxu0
      %v4118 = vpop.f32.mrf.mxu0
      %v4119 = vadd.f32 0.0, %v4118
      %v4120 = vpop.f32.mrf.mxu0
      %4121 = vmatprep.mubr.bf16.mxu0 0
      %4122 = vmatmul.mubr.bf16.gmra.mxu0 %v3939
      %v4123 = vpop.f32.mrf.mxu0
      %v4124 = vadd.f32 0.0, %v4123
      %v4125 = vpop.f32.mrf.mxu0
      %v4126 = vpop.f32.mrf.mxu0
      %v4127 = vadd.f32 0.0, %v4126
      %v4128 = vpop.f32.mrf.mxu0
      %4129 = vmatprep.mubr.bf16.mxu0 0
      %4130 = vmatmul.mubr.bf16.gmra.mxu0 %v3940
      %v4131 = vpop.f32.mrf.mxu0
      %v4132 = vadd.f32 0.0, %v4131
      %v4133 = vpop.f32.mrf.mxu0
      %v4134 = vpop.f32.mrf.mxu0
      %v4135 = vadd.f32 0.0, %v4134
      %v4136 = vpop.f32.mrf.mxu0
      %4137 = vmatprep.mubr.bf16.mxu0 0
      %4138 = vmatmul.mubr.bf16.gmra.mxu0 %v3941
      %v4139 = vpop.f32.mrf.mxu0
      %v4140 = vadd.f32 0.0, %v4139
      %v4141 = vpop.f32.mrf.mxu0
      %v4142 = vpop.f32.mrf.mxu0
      %v4143 = vadd.f32 0.0, %v4142
      %v4144 = vpop.f32.mrf.mxu0
      %4145 = vmatprep.mubr.bf16.mxu0 0
      %4146 = vmatmul.mubr.bf16.gmra.mxu0 %v3942
      %v4147 = vpop.f32.mrf.mxu0
      %v4148 = vadd.f32 0.0, %v4147
      %v4149 = vpop.f32.mrf.mxu0
      %v4150 = vpop.f32.mrf.mxu0
      %v4151 = vadd.f32 0.0, %v4150
      %v4152 = vpop.f32.mrf.mxu0
      %4153 = vmatprep.mubr.bf16.mxu0 0
      %4154 = vmatmul.mubr.bf16.gmra.mxu0 %v3943
      %v4155 = vpop.f32.mrf.mxu0
      %v4156 = vadd.f32 0.0, %v4155
      %v4157 = vpop.f32.mrf.mxu0
      %v4158 = vpop.f32.mrf.mxu0
      %v4159 = vadd.f32 0.0, %v4158
      %v4160 = vpop.f32.mrf.mxu0
      %4161 = vmatprep.mubr.bf16.mxu0 0
      %4162 = vmatmul.mubr.bf16.gmra.mxu0 %v3944
      %v4163 = vpop.f32.mrf.mxu0
      %v4164 = vadd.f32 0.0, %v4163
      %v4165 = vpop.f32.mrf.mxu0
      %v4166 = vpop.f32.mrf.mxu0
      %v4167 = vadd.f32 0.0, %v4166
      %v4168 = vpop.f32.mrf.mxu0
      %4169 = vdwg.mxu0
      %v4170 = vadd.f32 %v3672, %v4044
      %v4171 = vadd.f32 %v3673, %v4047
      %v4172 = vadd.f32 %v3674, %v4052
      %v4173 = vadd.f32 %v3675, %v4055
      %v4174 = vadd.f32 %v3676, %v4060
      %v4175 = vadd.f32 %v3677, %v4063
      %v4176 = vadd.f32 %v3678, %v4068
      %v4177 = vadd.f32 %v3679, %v4071
      %v4178 = vadd.f32 %v3680, %v4076
      %v4179 = vadd.f32 %v3681, %v4079
      %v4180 = vadd.f32 %v3682, %v4084
      %v4181 = vadd.f32 %v3683, %v4087
      %v4182 = vadd.f32 %v3684, %v4092
      %v4183 = vadd.f32 %v3685, %v4095
      %v4184 = vadd.f32 %v3686, %v4100
      %v4185 = vadd.f32 %v3687, %v4103
      %v4186 = vadd.f32 %v3688, %v4108
      %v4187 = vadd.f32 %v3689, %v4111
      %v4188 = vadd.f32 %v3690, %v4116
      %v4189 = vadd.f32 %v3691, %v4119
      %v4190 = vadd.f32 %v3692, %v4124
      %v4191 = vadd.f32 %v3693, %v4127
      %v4192 = vadd.f32 %v3694, %v4132
      %v4193 = vadd.f32 %v3695, %v4135
      %v4194 = vadd.f32 %v3696, %v4140
      %v4195 = vadd.f32 %v3697, %v4143
      %v4196 = vadd.f32 %v3698, %v4148
      %v4197 = vadd.f32 %v3699, %v4151
      %v4198 = vadd.f32 %v3700, %v4156
      %v4199 = vadd.f32 %v3701, %v4159
      %v4200 = vadd.f32 %v3702, %v4164
      %v4201 = vadd.f32 %v3703, %v4167
      %s4202 = scalar_lea.vmem [#allocation2], 24
      %v4203 = vld [vmem:[%s4202] sm:$0xf]
      %v4204 = vld [vmem:[%s4202 + $0x4] sm:$0xf]
      %v4205 = vld [vmem:[%s4202 + $0xc] sm:$0xf]
      %v4206 = vld [vmem:[%s4202 + $0x10] sm:$0xf]
      %v4207 = vld [vmem:[%s4202 + $0x18] sm:$0xf]
      %v4208 = vld [vmem:[%s4202 + $0x1c] sm:$0xf]
      %v4209 = vld [vmem:[%s4202 + $0x24] sm:$0xf]
      %v4210 = vld [vmem:[%s4202 + $0x28] sm:$0xf]
      %v4211 = vld [vmem:[%s4202 + $0x30] sm:$0xf]
      %v4212 = vld [vmem:[%s4202 + $0x34] sm:$0xf]
      %v4213 = vld [vmem:[%s4202 + $0x3c] sm:$0xf]
      %v4214 = vld [vmem:[%s4202 + $0x40] sm:$0xf]
      %v4215 = vld [vmem:[%s4202 + $0x48] sm:$0xf]
      %v4216 = vld [vmem:[%s4202 + $0x4c] sm:$0xf]
      %v4217 = vld [vmem:[%s4202 + $0x54] sm:$0xf]
      %v4218 = vld [vmem:[%s4202 + $0x58] sm:$0xf]
      %v4219 = vld [vmem:[%s4202 + $0x60] sm:$0xf]
      %v4220 = vld [vmem:[%s4202 + $0x64] sm:$0xf]
      %v4221 = vld [vmem:[%s4202 + $0x6c] sm:$0xf]
      %v4222 = vld [vmem:[%s4202 + $0x70] sm:$0xf]
      %v4223 = vld [vmem:[%s4202 + $0x78] sm:$0xf]
      %v4224 = vld [vmem:[%s4202 + $0x7c] sm:$0xf]
      %v4225 = vld [vmem:[%s4202 + $0x84] sm:$0xf]
      %v4226 = vld [vmem:[%s4202 + $0x88] sm:$0xf]
      %v4227 = vld [vmem:[%s4202 + $0x90] sm:$0xf]
      %v4228 = vld [vmem:[%s4202 + $0x94] sm:$0xf]
      %v4229 = vld [vmem:[%s4202 + $0x9c] sm:$0xf]
      %v4230 = vld [vmem:[%s4202 + $0xa0] sm:$0xf]
      %v4231 = vld [vmem:[%s4202 + $0xa8] sm:$0xf]
      %v4232 = vld [vmem:[%s4202 + $0xac] sm:$0xf]
      %v4233 = vld [vmem:[%s4202 + $0xb4] sm:$0xf]
      %v4234 = vld [vmem:[%s4202 + $0xb8] sm:$0xf]
      %s4235 = scalar_lea.vmem %s2, 384
      %v4236 = vld [vmem:[%s4235] sm:$0xf]
      %v4237 = vld [vmem:[%s4235 + $0x4] sm:$0xf]
      %v4238 = vld [vmem:[%s4235 + $0x8] sm:$0xf]
      %v4239 = vld [vmem:[%s4235 + $0xc] sm:$0xf]
      %v4240 = vld [vmem:[%s4235 + $0x10] sm:$0xf]
      %v4241 = vld [vmem:[%s4235 + $0x14] sm:$0xf]
      %v4242 = vld [vmem:[%s4235 + $0x18] sm:$0xf]
      %v4243 = vld [vmem:[%s4235 + $0x1c] sm:$0xf]
      %v4244 = vld [vmem:[%s4235 + $0x20] sm:$0xf]
      %v4245 = vld [vmem:[%s4235 + $0x24] sm:$0xf]
      %v4246 = vld [vmem:[%s4235 + $0x28] sm:$0xf]
      %v4247 = vld [vmem:[%s4235 + $0x2c] sm:$0xf]
      %v4248 = vld [vmem:[%s4235 + $0x30] sm:$0xf]
      %v4249 = vld [vmem:[%s4235 + $0x34] sm:$0xf]
      %v4250 = vld [vmem:[%s4235 + $0x38] sm:$0xf]
      %v4251 = vld [vmem:[%s4235 + $0x3c] sm:$0xf]
      %v4284 = vunpack.c.l.b16 %v4203
      %v4285 = vunpack.c.l.b16 %v4204
      %v4286 = vunpack.c.l.b16 %v4205
      %v4287 = vunpack.c.l.b16 %v4206
      %v4288 = vunpack.c.l.b16 %v4207
      %v4289 = vunpack.c.l.b16 %v4208
      %v4290 = vunpack.c.l.b16 %v4209
      %v4291 = vunpack.c.l.b16 %v4210
      %v4292 = vunpack.c.l.b16 %v4211
      %v4293 = vunpack.c.l.b16 %v4212
      %v4294 = vunpack.c.l.b16 %v4213
      %v4295 = vunpack.c.l.b16 %v4214
      %v4296 = vunpack.c.l.b16 %v4215
      %v4297 = vunpack.c.l.b16 %v4216
      %v4298 = vunpack.c.l.b16 %v4217
      %v4299 = vunpack.c.l.b16 %v4218
      %v4300 = vunpack.c.l.b16 %v4219
      %v4301 = vunpack.c.l.b16 %v4220
      %v4302 = vunpack.c.l.b16 %v4221
      %v4303 = vunpack.c.l.b16 %v4222
      %v4304 = vunpack.c.l.b16 %v4223
      %v4305 = vunpack.c.l.b16 %v4224
      %v4306 = vunpack.c.l.b16 %v4225
      %v4307 = vunpack.c.l.b16 %v4226
      %v4308 = vunpack.c.l.b16 %v4227
      %v4309 = vunpack.c.l.b16 %v4228
      %v4310 = vunpack.c.l.b16 %v4229
      %v4311 = vunpack.c.l.b16 %v4230
      %v4312 = vunpack.c.l.b16 %v4231
      %v4313 = vunpack.c.l.b16 %v4232
      %v4314 = vunpack.c.l.b16 %v4233
      %v4315 = vunpack.c.l.b16 %v4234
      %v4316 = vpack.c.b16 %v4285, %v4284
      %v4317 = vpack.c.b16 %v4287, %v4286
      %v4318 = vpack.c.b16 %v4289, %v4288
      %v4319 = vpack.c.b16 %v4291, %v4290
      %v4320 = vpack.c.b16 %v4293, %v4292
      %v4321 = vpack.c.b16 %v4295, %v4294
      %v4322 = vpack.c.b16 %v4297, %v4296
      %v4323 = vpack.c.b16 %v4299, %v4298
      %v4324 = vpack.c.b16 %v4301, %v4300
      %v4325 = vpack.c.b16 %v4303, %v4302
      %v4326 = vpack.c.b16 %v4305, %v4304
      %v4327 = vpack.c.b16 %v4307, %v4306
      %v4328 = vpack.c.b16 %v4309, %v4308
      %v4329 = vpack.c.b16 %v4311, %v4310
      %v4330 = vpack.c.b16 %v4313, %v4312
      %v4331 = vpack.c.b16 %v4315, %v4314
      %v4364 = vunpack.c.l.b16 %v4236
      %v4365 = vunpack.c.l.b16 %v4237
      %v4366 = vunpack.c.l.b16 %v4238
      %v4367 = vunpack.c.l.b16 %v4239
      %v4368 = vunpack.c.l.b16 %v4240
      %v4369 = vunpack.c.l.b16 %v4241
      %v4370 = vunpack.c.l.b16 %v4242
      %v4371 = vunpack.c.l.b16 %v4243
      %v4372 = vunpack.c.l.b16 %v4244
      %v4373 = vunpack.c.l.b16 %v4245
      %v4374 = vunpack.c.l.b16 %v4246
      %v4375 = vunpack.c.l.b16 %v4247
      %v4376 = vunpack.c.l.b16 %v4248
      %v4377 = vunpack.c.l.b16 %v4249
      %v4378 = vunpack.c.l.b16 %v4250
      %v4379 = vunpack.c.l.b16 %v4251
      %v4380 = vpack.c.b16 %v4365, %v4364
      %v4381 = vpack.c.b16 %v4367, %v4366
      %v4382 = vpack.c.b16 %v4369, %v4368
      %v4383 = vpack.c.b16 %v4371, %v4370
      %v4384 = vpack.c.b16 %v4373, %v4372
      %v4385 = vpack.c.b16 %v4375, %v4374
      %v4386 = vpack.c.b16 %v4377, %v4376
      %v4387 = vpack.c.b16 %v4379, %v4378
      %4396 = vmatprep.subr.bf16.mxu0 0
      %4397 = vmatpush1.bf16.msra.mxu0 %v4387
      %4398 = vmatprep.subr.bf16.mxu0 0
      %4399 = vmatpush1.bf16.msra.mxu0 %v4386
      %4400 = vmatprep.subr.bf16.mxu0 0
      %4401 = vmatpush1.bf16.msra.mxu0 %v4385
      %4402 = vmatprep.subr.bf16.mxu0 0
      %4403 = vmatpush1.bf16.msra.mxu0 %v4384
      %4404 = vmatprep.subr.bf16.mxu0 0
      %4405 = vmatpush1.bf16.msra.mxu0 %v4383
      %4406 = vmatprep.subr.bf16.mxu0 0
      %4407 = vmatpush1.bf16.msra.mxu0 %v4382
      %4408 = vmatprep.subr.bf16.mxu0 0
      %4409 = vmatpush1.bf16.msra.mxu0 %v4381
      %4410 = vmatprep.subr.bf16.mxu0 0
      %4411 = vmatpush1.bf16.msra.mxu0 %v4380
      %4412 = vmatprep.subr.bf16.mxu0 0
      %4413 = vmatpush2.bf16.msra.mxu0 0
      %4414 = vmatprep.subr.bf16.mxu0 0
      %4415 = vmatpush2.bf16.msra.mxu0 0
      %4416 = vmatprep.subr.bf16.mxu0 0
      %4417 = vmatpush2.bf16.msra.mxu0 0
      %4418 = vmatprep.subr.bf16.mxu0 0
      %4419 = vmatpush2.bf16.msra.mxu0 0
      %4420 = vmatprep.subr.bf16.mxu0 0
      %4421 = vmatpush2.bf16.msra.mxu0 0
      %4422 = vmatprep.subr.bf16.mxu0 0
      %4423 = vmatpush2.bf16.msra.mxu0 0
      %4424 = vmatprep.subr.bf16.mxu0 0
      %4425 = vmatpush2.bf16.msra.mxu0 0
      %4426 = vmatprep.subr.bf16.mxu0 0
      %4427 = vmatpush2.bf16.msra.mxu0 0
      %4428 = vmatprep.mubr.bf16.mxu0 0
      %4429 = vmatmul.mubr.bf16.gmra.mxu0 %v4316
      %v4430 = vpop.f32.mrf.mxu0
      %v4431 = vadd.f32 0.0, %v4430
      %v4432 = vpop.f32.mrf.mxu0
      %v4433 = vpop.f32.mrf.mxu0
      %v4434 = vadd.f32 0.0, %v4433
      %v4435 = vpop.f32.mrf.mxu0
      %4436 = vmatprep.mubr.bf16.mxu0 0
      %4437 = vmatmul.mubr.bf16.gmra.mxu0 %v4317
      %v4438 = vpop.f32.mrf.mxu0
      %v4439 = vadd.f32 0.0, %v4438
      %v4440 = vpop.f32.mrf.mxu0
      %v4441 = vpop.f32.mrf.mxu0
      %v4442 = vadd.f32 0.0, %v4441
      %v4443 = vpop.f32.mrf.mxu0
      %4444 = vmatprep.mubr.bf16.mxu0 0
      %4445 = vmatmul.mubr.bf16.gmra.mxu0 %v4318
      %v4446 = vpop.f32.mrf.mxu0
      %v4447 = vadd.f32 0.0, %v4446
      %v4448 = vpop.f32.mrf.mxu0
      %v4449 = vpop.f32.mrf.mxu0
      %v4450 = vadd.f32 0.0, %v4449
      %v4451 = vpop.f32.mrf.mxu0
      %4452 = vmatprep.mubr.bf16.mxu0 0
      %4453 = vmatmul.mubr.bf16.gmra.mxu0 %v4319
      %v4454 = vpop.f32.mrf.mxu0
      %v4455 = vadd.f32 0.0, %v4454
      %v4456 = vpop.f32.mrf.mxu0
      %v4457 = vpop.f32.mrf.mxu0
      %v4458 = vadd.f32 0.0, %v4457
      %v4459 = vpop.f32.mrf.mxu0
      %4460 = vmatprep.mubr.bf16.mxu0 0
      %4461 = vmatmul.mubr.bf16.gmra.mxu0 %v4320
      %v4462 = vpop.f32.mrf.mxu0
      %v4463 = vadd.f32 0.0, %v4462
      %v4464 = vpop.f32.mrf.mxu0
      %v4465 = vpop.f32.mrf.mxu0
      %v4466 = vadd.f32 0.0, %v4465
      %v4467 = vpop.f32.mrf.mxu0
      %4468 = vmatprep.mubr.bf16.mxu0 0
      %4469 = vmatmul.mubr.bf16.gmra.mxu0 %v4321
      %v4470 = vpop.f32.mrf.mxu0
      %v4471 = vadd.f32 0.0, %v4470
      %v4472 = vpop.f32.mrf.mxu0
      %v4473 = vpop.f32.mrf.mxu0
      %v4474 = vadd.f32 0.0, %v4473
      %v4475 = vpop.f32.mrf.mxu0
      %4476 = vmatprep.mubr.bf16.mxu0 0
      %4477 = vmatmul.mubr.bf16.gmra.mxu0 %v4322
      %v4478 = vpop.f32.mrf.mxu0
      %v4479 = vadd.f32 0.0, %v4478
      %v4480 = vpop.f32.mrf.mxu0
      %v4481 = vpop.f32.mrf.mxu0
      %v4482 = vadd.f32 0.0, %v4481
      %v4483 = vpop.f32.mrf.mxu0
      %4484 = vmatprep.mubr.bf16.mxu0 0
      %4485 = vmatmul.mubr.bf16.gmra.mxu0 %v4323
      %v4486 = vpop.f32.mrf.mxu0
      %v4487 = vadd.f32 0.0, %v4486
      %v4488 = vpop.f32.mrf.mxu0
      %v4489 = vpop.f32.mrf.mxu0
      %v4490 = vadd.f32 0.0, %v4489
      %v4491 = vpop.f32.mrf.mxu0
      %4492 = vmatprep.mubr.bf16.mxu0 0
      %4493 = vmatmul.mubr.bf16.gmra.mxu0 %v4324
      %v4494 = vpop.f32.mrf.mxu0
      %v4495 = vadd.f32 0.0, %v4494
      %v4496 = vpop.f32.mrf.mxu0
      %v4497 = vpop.f32.mrf.mxu0
      %v4498 = vadd.f32 0.0, %v4497
      %v4499 = vpop.f32.mrf.mxu0
      %4500 = vmatprep.mubr.bf16.mxu0 0
      %4501 = vmatmul.mubr.bf16.gmra.mxu0 %v4325
      %v4502 = vpop.f32.mrf.mxu0
      %v4503 = vadd.f32 0.0, %v4502
      %v4504 = vpop.f32.mrf.mxu0
      %v4505 = vpop.f32.mrf.mxu0
      %v4506 = vadd.f32 0.0, %v4505
      %v4507 = vpop.f32.mrf.mxu0
      %4508 = vmatprep.mubr.bf16.mxu0 0
      %4509 = vmatmul.mubr.bf16.gmra.mxu0 %v4326
      %v4510 = vpop.f32.mrf.mxu0
      %v4511 = vadd.f32 0.0, %v4510
      %v4512 = vpop.f32.mrf.mxu0
      %v4513 = vpop.f32.mrf.mxu0
      %v4514 = vadd.f32 0.0, %v4513
      %v4515 = vpop.f32.mrf.mxu0
      %4516 = vmatprep.mubr.bf16.mxu0 0
      %4517 = vmatmul.mubr.bf16.gmra.mxu0 %v4327
      %v4518 = vpop.f32.mrf.mxu0
      %v4519 = vadd.f32 0.0, %v4518
      %v4520 = vpop.f32.mrf.mxu0
      %v4521 = vpop.f32.mrf.mxu0
      %v4522 = vadd.f32 0.0, %v4521
      %v4523 = vpop.f32.mrf.mxu0
      %4524 = vmatprep.mubr.bf16.mxu0 0
      %4525 = vmatmul.mubr.bf16.gmra.mxu0 %v4328
      %v4526 = vpop.f32.mrf.mxu0
      %v4527 = vadd.f32 0.0, %v4526
      %v4528 = vpop.f32.mrf.mxu0
      %v4529 = vpop.f32.mrf.mxu0
      %v4530 = vadd.f32 0.0, %v4529
      %v4531 = vpop.f32.mrf.mxu0
      %4532 = vmatprep.mubr.bf16.mxu0 0
      %4533 = vmatmul.mubr.bf16.gmra.mxu0 %v4329
      %v4534 = vpop.f32.mrf.mxu0
      %v4535 = vadd.f32 0.0, %v4534
      %v4536 = vpop.f32.mrf.mxu0
      %v4537 = vpop.f32.mrf.mxu0
      %v4538 = vadd.f32 0.0, %v4537
      %v4539 = vpop.f32.mrf.mxu0
      %4540 = vmatprep.mubr.bf16.mxu0 0
      %4541 = vmatmul.mubr.bf16.gmra.mxu0 %v4330
      %v4542 = vpop.f32.mrf.mxu0
      %v4543 = vadd.f32 0.0, %v4542
      %v4544 = vpop.f32.mrf.mxu0
      %v4545 = vpop.f32.mrf.mxu0
      %v4546 = vadd.f32 0.0, %v4545
      %v4547 = vpop.f32.mrf.mxu0
      %4548 = vmatprep.mubr.bf16.mxu0 0
      %4549 = vmatmul.mubr.bf16.gmra.mxu0 %v4331
      %v4550 = vpop.f32.mrf.mxu0
      %v4551 = vadd.f32 0.0, %v4550
      %v4552 = vpop.f32.mrf.mxu0
      %v4553 = vpop.f32.mrf.mxu0
      %v4554 = vadd.f32 0.0, %v4553
      %v4555 = vpop.f32.mrf.mxu0
      %4556 = vdwg.mxu0
      %v4557 = vadd.f32 %v4170, %v4431
      %v4558 = vadd.f32 %v4171, %v4434
      %v4559 = vadd.f32 %v4172, %v4439
      %v4560 = vadd.f32 %v4173, %v4442
      %v4561 = vadd.f32 %v4174, %v4447
      %v4562 = vadd.f32 %v4175, %v4450
      %v4563 = vadd.f32 %v4176, %v4455
      %v4564 = vadd.f32 %v4177, %v4458
      %v4565 = vadd.f32 %v4178, %v4463
      %v4566 = vadd.f32 %v4179, %v4466
      %v4567 = vadd.f32 %v4180, %v4471
      %v4568 = vadd.f32 %v4181, %v4474
      %v4569 = vadd.f32 %v4182, %v4479
      %v4570 = vadd.f32 %v4183, %v4482
      %v4571 = vadd.f32 %v4184, %v4487
      %v4572 = vadd.f32 %v4185, %v4490
      %v4573 = vadd.f32 %v4186, %v4495
      %v4574 = vadd.f32 %v4187, %v4498
      %v4575 = vadd.f32 %v4188, %v4503
      %v4576 = vadd.f32 %v4189, %v4506
      %v4577 = vadd.f32 %v4190, %v4511
      %v4578 = vadd.f32 %v4191, %v4514
      %v4579 = vadd.f32 %v4192, %v4519
      %v4580 = vadd.f32 %v4193, %v4522
      %v4581 = vadd.f32 %v4194, %v4527
      %v4582 = vadd.f32 %v4195, %v4530
      %v4583 = vadd.f32 %v4196, %v4535
      %v4584 = vadd.f32 %v4197, %v4538
      %v4585 = vadd.f32 %v4198, %v4543
      %v4586 = vadd.f32 %v4199, %v4546
      %v4587 = vadd.f32 %v4200, %v4551
      %v4588 = vadd.f32 %v4201, %v4554
      %v4589 = vld [vmem:[%s4202] sm:$0xf]
      %v4590 = vld [vmem:[%s4202 + $0x4] sm:$0xf]
      %v4591 = vld [vmem:[%s4202 + $0x8] sm:$0x1]
      %v4592 = vld [vmem:[%s4202 + $0xc] sm:$0xf]
      %v4593 = vld [vmem:[%s4202 + $0x10] sm:$0xf]
      %v4594 = vld [vmem:[%s4202 + $0x14] sm:$0x1]
      %v4595 = vld [vmem:[%s4202 + $0x18] sm:$0xf]
      %v4596 = vld [vmem:[%s4202 + $0x1c] sm:$0xf]
      %v4597 = vld [vmem:[%s4202 + $0x20] sm:$0x1]
      %v4598 = vld [vmem:[%s4202 + $0x24] sm:$0xf]
      %v4599 = vld [vmem:[%s4202 + $0x28] sm:$0xf]
      %v4600 = vld [vmem:[%s4202 + $0x2c] sm:$0x1]
      %v4601 = vld [vmem:[%s4202 + $0x30] sm:$0xf]
      %v4602 = vld [vmem:[%s4202 + $0x34] sm:$0xf]
      %v4603 = vld [vmem:[%s4202 + $0x38] sm:$0x1]
      %v4604 = vld [vmem:[%s4202 + $0x3c] sm:$0xf]
      %v4605 = vld [vmem:[%s4202 + $0x40] sm:$0xf]
      %v4606 = vld [vmem:[%s4202 + $0x44] sm:$0x1]
      %v4607 = vld [vmem:[%s4202 + $0x48] sm:$0xf]
      %v4608 = vld [vmem:[%s4202 + $0x4c] sm:$0xf]
      %v4609 = vld [vmem:[%s4202 + $0x50] sm:$0x1]
      %v4610 = vld [vmem:[%s4202 + $0x54] sm:$0xf]
      %v4611 = vld [vmem:[%s4202 + $0x58] sm:$0xf]
      %v4612 = vld [vmem:[%s4202 + $0x5c] sm:$0x1]
      %v4613 = vld [vmem:[%s4202 + $0x60] sm:$0xf]
      %v4614 = vld [vmem:[%s4202 + $0x64] sm:$0xf]
      %v4615 = vld [vmem:[%s4202 + $0x68] sm:$0x1]
      %v4616 = vld [vmem:[%s4202 + $0x6c] sm:$0xf]
      %v4617 = vld [vmem:[%s4202 + $0x70] sm:$0xf]
      %v4618 = vld [vmem:[%s4202 + $0x74] sm:$0x1]
      %v4619 = vld [vmem:[%s4202 + $0x78] sm:$0xf]
      %v4620 = vld [vmem:[%s4202 + $0x7c] sm:$0xf]
      %v4621 = vld [vmem:[%s4202 + $0x80] sm:$0x1]
      %v4622 = vld [vmem:[%s4202 + $0x84] sm:$0xf]
      %v4623 = vld [vmem:[%s4202 + $0x88] sm:$0xf]
      %v4624 = vld [vmem:[%s4202 + $0x8c] sm:$0x1]
      %v4625 = vld [vmem:[%s4202 + $0x90] sm:$0xf]
      %v4626 = vld [vmem:[%s4202 + $0x94] sm:$0xf]
      %v4627 = vld [vmem:[%s4202 + $0x98] sm:$0x1]
      %v4628 = vld [vmem:[%s4202 + $0x9c] sm:$0xf]
      %v4629 = vld [vmem:[%s4202 + $0xa0] sm:$0xf]
      %v4630 = vld [vmem:[%s4202 + $0xa4] sm:$0x1]
      %v4631 = vld [vmem:[%s4202 + $0xa8] sm:$0xf]
      %v4632 = vld [vmem:[%s4202 + $0xac] sm:$0xf]
      %v4633 = vld [vmem:[%s4202 + $0xb0] sm:$0x1]
      %v4634 = vld [vmem:[%s4202 + $0xb4] sm:$0xf]
      %v4635 = vld [vmem:[%s4202 + $0xb8] sm:$0xf]
      %v4636 = vld [vmem:[%s4202 + $0xbc] sm:$0x1]
      %v4638 = vshrl.u32 %v4589, 16
      %v4640 = vrot.slane %v4638, 4
      %v4641 = vshll.u32 %v4589, 16
      %v4643 = vrot.slane %v4641, 5
      %v4644 = vor.u32 %v4640, %v4643
      %v4645 = vrot.slane %v4644, 4
      %v4647 = vshll.u32 %v4590, 16
      %v4649 = vrot.slane %v4647, 5
      %v4650 = vsel %vm1099, %v4645, %v4649
      %v4651 = vshrl.u32 %v4590, 16
      %v4653 = vrot.slane %v4651, 4
      %v4654 = vor.u32 %v4653, %v4649
      %v4655 = vrot.slane %v4654, 4
      %v4657 = vshll.u32 %v4591, 16
      %v4659 = vrot.slane %v4657, 5
      %v4660 = vsel %vm1099, %v4655, %v4659
      %v4662 = vshrl.u32 %v4592, 16
      %v4664 = vrot.slane %v4662, 4
      %v4665 = vshll.u32 %v4592, 16
      %v4667 = vrot.slane %v4665, 5
      %v4668 = vor.u32 %v4664, %v4667
      %v4669 = vrot.slane %v4668, 4
      %v4671 = vshll.u32 %v4593, 16
      %v4673 = vrot.slane %v4671, 5
      %v4674 = vsel %vm1099, %v4669, %v4673
      %v4675 = vshrl.u32 %v4593, 16
      %v4677 = vrot.slane %v4675, 4
      %v4678 = vor.u32 %v4677, %v4673
      %v4679 = vrot.slane %v4678, 4
      %v4681 = vshll.u32 %v4594, 16
      %v4683 = vrot.slane %v4681, 5
      %v4684 = vsel %vm1099, %v4679, %v4683
      %v4686 = vshrl.u32 %v4595, 16
      %v4688 = vrot.slane %v4686, 4
      %v4689 = vshll.u32 %v4595, 16
      %v4691 = vrot.slane %v4689, 5
      %v4692 = vor.u32 %v4688, %v4691
      %v4693 = vrot.slane %v4692, 4
      %v4695 = vshll.u32 %v4596, 16
      %v4697 = vrot.slane %v4695, 5
      %v4698 = vsel %vm1099, %v4693, %v4697
      %v4699 = vshrl.u32 %v4596, 16
      %v4701 = vrot.slane %v4699, 4
      %v4702 = vor.u32 %v4701, %v4697
      %v4703 = vrot.slane %v4702, 4
      %v4705 = vshll.u32 %v4597, 16
      %v4707 = vrot.slane %v4705, 5
      %v4708 = vsel %vm1099, %v4703, %v4707
      %v4710 = vshrl.u32 %v4598, 16
      %v4712 = vrot.slane %v4710, 4
      %v4713 = vshll.u32 %v4598, 16
      %v4715 = vrot.slane %v4713, 5
      %v4716 = vor.u32 %v4712, %v4715
      %v4717 = vrot.slane %v4716, 4
      %v4719 = vshll.u32 %v4599, 16
      %v4721 = vrot.slane %v4719, 5
      %v4722 = vsel %vm1099, %v4717, %v4721
      %v4723 = vshrl.u32 %v4599, 16
      %v4725 = vrot.slane %v4723, 4
      %v4726 = vor.u32 %v4725, %v4721
      %v4727 = vrot.slane %v4726, 4
      %v4729 = vshll.u32 %v4600, 16
      %v4731 = vrot.slane %v4729, 5
      %v4732 = vsel %vm1099, %v4727, %v4731
      %v4734 = vshrl.u32 %v4601, 16
      %v4736 = vrot.slane %v4734, 4
      %v4737 = vshll.u32 %v4601, 16
      %v4739 = vrot.slane %v4737, 5
      %v4740 = vor.u32 %v4736, %v4739
      %v4741 = vrot.slane %v4740, 4
      %v4743 = vshll.u32 %v4602, 16
      %v4745 = vrot.slane %v4743, 5
      %v4746 = vsel %vm1099, %v4741, %v4745
      %v4747 = vshrl.u32 %v4602, 16
      %v4749 = vrot.slane %v4747, 4
      %v4750 = vor.u32 %v4749, %v4745
      %v4751 = vrot.slane %v4750, 4
      %v4753 = vshll.u32 %v4603, 16
      %v4755 = vrot.slane %v4753, 5
      %v4756 = vsel %vm1099, %v4751, %v4755
      %v4758 = vshrl.u32 %v4604, 16
      %v4760 = vrot.slane %v4758, 4
      %v4761 = vshll.u32 %v4604, 16
      %v4763 = vrot.slane %v4761, 5
      %v4764 = vor.u32 %v4760, %v4763
      %v4765 = vrot.slane %v4764, 4
      %v4767 = vshll.u32 %v4605, 16
      %v4769 = vrot.slane %v4767, 5
      %v4770 = vsel %vm1099, %v4765, %v4769
      %v4771 = vshrl.u32 %v4605, 16
      %v4773 = vrot.slane %v4771, 4
      %v4774 = vor.u32 %v4773, %v4769
      %v4775 = vrot.slane %v4774, 4
      %v4777 = vshll.u32 %v4606, 16
      %v4779 = vrot.slane %v4777, 5
      %v4780 = vsel %vm1099, %v4775, %v4779
      %v4782 = vshrl.u32 %v4607, 16
      %v4784 = vrot.slane %v4782, 4
      %v4785 = vshll.u32 %v4607, 16
      %v4787 = vrot.slane %v4785, 5
      %v4788 = vor.u32 %v4784, %v4787
      %v4789 = vrot.slane %v4788, 4
      %v4791 = vshll.u32 %v4608, 16
      %v4793 = vrot.slane %v4791, 5
      %v4794 = vsel %vm1099, %v4789, %v4793
      %v4795 = vshrl.u32 %v4608, 16
      %v4797 = vrot.slane %v4795, 4
      %v4798 = vor.u32 %v4797, %v4793
      %v4799 = vrot.slane %v4798, 4
      %v4801 = vshll.u32 %v4609, 16
      %v4803 = vrot.slane %v4801, 5
      %v4804 = vsel %vm1099, %v4799, %v4803
      %v4806 = vshrl.u32 %v4610, 16
      %v4808 = vrot.slane %v4806, 4
      %v4809 = vshll.u32 %v4610, 16
      %v4811 = vrot.slane %v4809, 5
      %v4812 = vor.u32 %v4808, %v4811
      %v4813 = vrot.slane %v4812, 4
      %v4815 = vshll.u32 %v4611, 16
      %v4817 = vrot.slane %v4815, 5
      %v4818 = vsel %vm1099, %v4813, %v4817
      %v4819 = vshrl.u32 %v4611, 16
      %v4821 = vrot.slane %v4819, 4
      %v4822 = vor.u32 %v4821, %v4817
      %v4823 = vrot.slane %v4822, 4
      %v4825 = vshll.u32 %v4612, 16
      %v4827 = vrot.slane %v4825, 5
      %v4828 = vsel %vm1099, %v4823, %v4827
      %v4830 = vshrl.u32 %v4613, 16
      %v4832 = vrot.slane %v4830, 4
      %v4833 = vshll.u32 %v4613, 16
      %v4835 = vrot.slane %v4833, 5
      %v4836 = vor.u32 %v4832, %v4835
      %v4837 = vrot.slane %v4836, 4
      %v4839 = vshll.u32 %v4614, 16
      %v4841 = vrot.slane %v4839, 5
      %v4842 = vsel %vm1099, %v4837, %v4841
      %v4843 = vshrl.u32 %v4614, 16
      %v4845 = vrot.slane %v4843, 4
      %v4846 = vor.u32 %v4845, %v4841
      %v4847 = vrot.slane %v4846, 4
      %v4849 = vshll.u32 %v4615, 16
      %v4851 = vrot.slane %v4849, 5
      %v4852 = vsel %vm1099, %v4847, %v4851
      %v4854 = vshrl.u32 %v4616, 16
      %v4856 = vrot.slane %v4854, 4
      %v4857 = vshll.u32 %v4616, 16
      %v4859 = vrot.slane %v4857, 5
      %v4860 = vor.u32 %v4856, %v4859
      %v4861 = vrot.slane %v4860, 4
      %v4863 = vshll.u32 %v4617, 16
      %v4865 = vrot.slane %v4863, 5
      %v4866 = vsel %vm1099, %v4861, %v4865
      %v4867 = vshrl.u32 %v4617, 16
      %v4869 = vrot.slane %v4867, 4
      %v4870 = vor.u32 %v4869, %v4865
      %v4871 = vrot.slane %v4870, 4
      %v4873 = vshll.u32 %v4618, 16
      %v4875 = vrot.slane %v4873, 5
      %v4876 = vsel %vm1099, %v4871, %v4875
      %v4878 = vshrl.u32 %v4619, 16
      %v4880 = vrot.slane %v4878, 4
      %v4881 = vshll.u32 %v4619, 16
      %v4883 = vrot.slane %v4881, 5
      %v4884 = vor.u32 %v4880, %v4883
      %v4885 = vrot.slane %v4884, 4
      %v4887 = vshll.u32 %v4620, 16
      %v4889 = vrot.slane %v4887, 5
      %v4890 = vsel %vm1099, %v4885, %v4889
      %v4891 = vshrl.u32 %v4620, 16
      %v4893 = vrot.slane %v4891, 4
      %v4894 = vor.u32 %v4893, %v4889
      %v4895 = vrot.slane %v4894, 4
      %v4897 = vshll.u32 %v4621, 16
      %v4899 = vrot.slane %v4897, 5
      %v4900 = vsel %vm1099, %v4895, %v4899
      %v4902 = vshrl.u32 %v4622, 16
      %v4904 = vrot.slane %v4902, 4
      %v4905 = vshll.u32 %v4622, 16
      %v4907 = vrot.slane %v4905, 5
      %v4908 = vor.u32 %v4904, %v4907
      %v4909 = vrot.slane %v4908, 4
      %v4911 = vshll.u32 %v4623, 16
      %v4913 = vrot.slane %v4911, 5
      %v4914 = vsel %vm1099, %v4909, %v4913
      %v4915 = vshrl.u32 %v4623, 16
      %v4917 = vrot.slane %v4915, 4
      %v4918 = vor.u32 %v4917, %v4913
      %v4919 = vrot.slane %v4918, 4
      %v4921 = vshll.u32 %v4624, 16
      %v4923 = vrot.slane %v4921, 5
      %v4924 = vsel %vm1099, %v4919, %v4923
      %v4926 = vshrl.u32 %v4625, 16
      %v4928 = vrot.slane %v4926, 4
      %v4929 = vshll.u32 %v4625, 16
      %v4931 = vrot.slane %v4929, 5
      %v4932 = vor.u32 %v4928, %v4931
      %v4933 = vrot.slane %v4932, 4
      %v4935 = vshll.u32 %v4626, 16
      %v4937 = vrot.slane %v4935, 5
      %v4938 = vsel %vm1099, %v4933, %v4937
      %v4939 = vshrl.u32 %v4626, 16
      %v4941 = vrot.slane %v4939, 4
      %v4942 = vor.u32 %v4941, %v4937
      %v4943 = vrot.slane %v4942, 4
      %v4945 = vshll.u32 %v4627, 16
      %v4947 = vrot.slane %v4945, 5
      %v4948 = vsel %vm1099, %v4943, %v4947
      %v4950 = vshrl.u32 %v4628, 16
      %v4952 = vrot.slane %v4950, 4
      %v4953 = vshll.u32 %v4628, 16
      %v4955 = vrot.slane %v4953, 5
      %v4956 = vor.u32 %v4952, %v4955
      %v4957 = vrot.slane %v4956, 4
      %v4959 = vshll.u32 %v4629, 16
      %v4961 = vrot.slane %v4959, 5
      %v4962 = vsel %vm1099, %v4957, %v4961
      %v4963 = vshrl.u32 %v4629, 16
      %v4965 = vrot.slane %v4963, 4
      %v4966 = vor.u32 %v4965, %v4961
      %v4967 = vrot.slane %v4966, 4
      %v4969 = vshll.u32 %v4630, 16
      %v4971 = vrot.slane %v4969, 5
      %v4972 = vsel %vm1099, %v4967, %v4971
      %v4974 = vshrl.u32 %v4631, 16
      %v4976 = vrot.slane %v4974, 4
      %v4977 = vshll.u32 %v4631, 16
      %v4979 = vrot.slane %v4977, 5
      %v4980 = vor.u32 %v4976, %v4979
      %v4981 = vrot.slane %v4980, 4
      %v4983 = vshll.u32 %v4632, 16
      %v4985 = vrot.slane %v4983, 5
      %v4986 = vsel %vm1099, %v4981, %v4985
      %v4987 = vshrl.u32 %v4632, 16
      %v4989 = vrot.slane %v4987, 4
      %v4990 = vor.u32 %v4989, %v4985
      %v4991 = vrot.slane %v4990, 4
      %v4993 = vshll.u32 %v4633, 16
      %v4995 = vrot.slane %v4993, 5
      %v4996 = vsel %vm1099, %v4991, %v4995
      %v4998 = vshrl.u32 %v4634, 16
      %v5000 = vrot.slane %v4998, 4
      %v5001 = vshll.u32 %v4634, 16
      %v5003 = vrot.slane %v5001, 5
      %v5004 = vor.u32 %v5000, %v5003
      %v5005 = vrot.slane %v5004, 4
      %v5007 = vshll.u32 %v4635, 16
      %v5009 = vrot.slane %v5007, 5
      %v5010 = vsel %vm1099, %v5005, %v5009
      %v5011 = vshrl.u32 %v4635, 16
      %v5013 = vrot.slane %v5011, 4
      %v5014 = vor.u32 %v5013, %v5009
      %v5015 = vrot.slane %v5014, 4
      %v5017 = vshll.u32 %v4636, 16
      %v5019 = vrot.slane %v5017, 5
      %v5020 = vsel %vm1099, %v5015, %v5019
      %s5021 = scalar_lea.vmem %s2, 448
      %v5022 = vld [vmem:[%s5021] sm:$0xf]
      %v5023 = vld [vmem:[%s5021 + $0x4] sm:$0xf]
      %v5024 = vld [vmem:[%s5021 + $0x8] sm:$0xf]
      %v5025 = vld [vmem:[%s5021 + $0xc] sm:$0xf]
      %v5026 = vld [vmem:[%s5021 + $0x10] sm:$0xf]
      %v5027 = vld [vmem:[%s5021 + $0x14] sm:$0xf]
      %v5028 = vld [vmem:[%s5021 + $0x18] sm:$0xf]
      %v5029 = vld [vmem:[%s5021 + $0x1c] sm:$0xf]
      %v5030 = vld [vmem:[%s5021 + $0x20] sm:$0xf]
      %v5031 = vld [vmem:[%s5021 + $0x24] sm:$0xf]
      %v5032 = vld [vmem:[%s5021 + $0x28] sm:$0xf]
      %v5033 = vld [vmem:[%s5021 + $0x2c] sm:$0xf]
      %v5034 = vld [vmem:[%s5021 + $0x30] sm:$0xf]
      %v5035 = vld [vmem:[%s5021 + $0x34] sm:$0xf]
      %v5036 = vld [vmem:[%s5021 + $0x38] sm:$0xf]
      %v5037 = vld [vmem:[%s5021 + $0x3c] sm:$0xf]
      %v5038 = vunpack.c.l.b16 %v4650
      %v5039 = vunpack.c.l.b16 %v4660
      %v5040 = vunpack.c.l.b16 %v4674
      %v5041 = vunpack.c.l.b16 %v4684
      %v5042 = vunpack.c.l.b16 %v4698
      %v5043 = vunpack.c.l.b16 %v4708
      %v5044 = vunpack.c.l.b16 %v4722
      %v5045 = vunpack.c.l.b16 %v4732
      %v5046 = vunpack.c.l.b16 %v4746
      %v5047 = vunpack.c.l.b16 %v4756
      %v5048 = vunpack.c.l.b16 %v4770
      %v5049 = vunpack.c.l.b16 %v4780
      %v5050 = vunpack.c.l.b16 %v4794
      %v5051 = vunpack.c.l.b16 %v4804
      %v5052 = vunpack.c.l.b16 %v4818
      %v5053 = vunpack.c.l.b16 %v4828
      %v5054 = vunpack.c.l.b16 %v4842
      %v5055 = vunpack.c.l.b16 %v4852
      %v5056 = vunpack.c.l.b16 %v4866
      %v5057 = vunpack.c.l.b16 %v4876
      %v5058 = vunpack.c.l.b16 %v4890
      %v5059 = vunpack.c.l.b16 %v4900
      %v5060 = vunpack.c.l.b16 %v4914
      %v5061 = vunpack.c.l.b16 %v4924
      %v5062 = vunpack.c.l.b16 %v4938
      %v5063 = vunpack.c.l.b16 %v4948
      %v5064 = vunpack.c.l.b16 %v4962
      %v5065 = vunpack.c.l.b16 %v4972
      %v5066 = vunpack.c.l.b16 %v4986
      %v5067 = vunpack.c.l.b16 %v4996
      %v5068 = vunpack.c.l.b16 %v5010
      %v5069 = vunpack.c.l.b16 %v5020
      %v5070 = vpack.c.b16 %v5039, %v5038
      %v5071 = vpack.c.b16 %v5041, %v5040
      %v5072 = vpack.c.b16 %v5043, %v5042
      %v5073 = vpack.c.b16 %v5045, %v5044
      %v5074 = vpack.c.b16 %v5047, %v5046
      %v5075 = vpack.c.b16 %v5049, %v5048
      %v5076 = vpack.c.b16 %v5051, %v5050
      %v5077 = vpack.c.b16 %v5053, %v5052
      %v5078 = vpack.c.b16 %v5055, %v5054
      %v5079 = vpack.c.b16 %v5057, %v5056
      %v5080 = vpack.c.b16 %v5059, %v5058
      %v5081 = vpack.c.b16 %v5061, %v5060
      %v5082 = vpack.c.b16 %v5063, %v5062
      %v5083 = vpack.c.b16 %v5065, %v5064
      %v5084 = vpack.c.b16 %v5067, %v5066
      %v5085 = vpack.c.b16 %v5069, %v5068
      %v5118 = vunpack.c.l.b16 %v5022
      %v5119 = vunpack.c.l.b16 %v5023
      %v5120 = vunpack.c.l.b16 %v5024
      %v5121 = vunpack.c.l.b16 %v5025
      %v5122 = vunpack.c.l.b16 %v5026
      %v5123 = vunpack.c.l.b16 %v5027
      %v5124 = vunpack.c.l.b16 %v5028
      %v5125 = vunpack.c.l.b16 %v5029
      %v5126 = vunpack.c.l.b16 %v5030
      %v5127 = vunpack.c.l.b16 %v5031
      %v5128 = vunpack.c.l.b16 %v5032
      %v5129 = vunpack.c.l.b16 %v5033
      %v5130 = vunpack.c.l.b16 %v5034
      %v5131 = vunpack.c.l.b16 %v5035
      %v5132 = vunpack.c.l.b16 %v5036
      %v5133 = vunpack.c.l.b16 %v5037
      %v5134 = vpack.c.b16 %v5119, %v5118
      %v5135 = vpack.c.b16 %v5121, %v5120
      %v5136 = vpack.c.b16 %v5123, %v5122
      %v5137 = vpack.c.b16 %v5125, %v5124
      %v5138 = vpack.c.b16 %v5127, %v5126
      %v5139 = vpack.c.b16 %v5129, %v5128
      %v5140 = vpack.c.b16 %v5131, %v5130
      %v5141 = vpack.c.b16 %v5133, %v5132
      %5150 = vmatprep.subr.bf16.mxu0 0
      %5151 = vmatpush1.bf16.msra.mxu0 %v5141
      %5152 = vmatprep.subr.bf16.mxu0 0
      %5153 = vmatpush1.bf16.msra.mxu0 %v5140
      %5154 = vmatprep.subr.bf16.mxu0 0
      %5155 = vmatpush1.bf16.msra.mxu0 %v5139
      %5156 = vmatprep.subr.bf16.mxu0 0
      %5157 = vmatpush1.bf16.msra.mxu0 %v5138
      %5158 = vmatprep.subr.bf16.mxu0 0
      %5159 = vmatpush1.bf16.msra.mxu0 %v5137
      %5160 = vmatprep.subr.bf16.mxu0 0
      %5161 = vmatpush1.bf16.msra.mxu0 %v5136
      %5162 = vmatprep.subr.bf16.mxu0 0
      %5163 = vmatpush1.bf16.msra.mxu0 %v5135
      %5164 = vmatprep.subr.bf16.mxu0 0
      %5165 = vmatpush1.bf16.msra.mxu0 %v5134
      %5166 = vmatprep.subr.bf16.mxu0 0
      %5167 = vmatpush2.bf16.msra.mxu0 0
      %5168 = vmatprep.subr.bf16.mxu0 0
      %5169 = vmatpush2.bf16.msra.mxu0 0
      %5170 = vmatprep.subr.bf16.mxu0 0
      %5171 = vmatpush2.bf16.msra.mxu0 0
      %5172 = vmatprep.subr.bf16.mxu0 0
      %5173 = vmatpush2.bf16.msra.mxu0 0
      %5174 = vmatprep.subr.bf16.mxu0 0
      %5175 = vmatpush2.bf16.msra.mxu0 0
      %5176 = vmatprep.subr.bf16.mxu0 0
      %5177 = vmatpush2.bf16.msra.mxu0 0
      %5178 = vmatprep.subr.bf16.mxu0 0
      %5179 = vmatpush2.bf16.msra.mxu0 0
      %5180 = vmatprep.subr.bf16.mxu0 0
      %5181 = vmatpush2.bf16.msra.mxu0 0
      %5182 = vmatprep.mubr.bf16.mxu0 0
      %5183 = vmatmul.mubr.bf16.gmra.mxu0 %v5070
      %v5184 = vpop.f32.mrf.mxu0
      %v5185 = vadd.f32 0.0, %v5184
      %v5186 = vpop.f32.mrf.mxu0
      %v5187 = vpop.f32.mrf.mxu0
      %v5188 = vadd.f32 0.0, %v5187
      %v5189 = vpop.f32.mrf.mxu0
      %5190 = vmatprep.mubr.bf16.mxu0 0
      %5191 = vmatmul.mubr.bf16.gmra.mxu0 %v5071
      %v5192 = vpop.f32.mrf.mxu0
      %v5193 = vadd.f32 0.0, %v5192
      %v5194 = vpop.f32.mrf.mxu0
      %v5195 = vpop.f32.mrf.mxu0
      %v5196 = vadd.f32 0.0, %v5195
      %v5197 = vpop.f32.mrf.mxu0
      %5198 = vmatprep.mubr.bf16.mxu0 0
      %5199 = vmatmul.mubr.bf16.gmra.mxu0 %v5072
      %v5200 = vpop.f32.mrf.mxu0
      %v5201 = vadd.f32 0.0, %v5200
      %v5202 = vpop.f32.mrf.mxu0
      %v5203 = vpop.f32.mrf.mxu0
      %v5204 = vadd.f32 0.0, %v5203
      %v5205 = vpop.f32.mrf.mxu0
      %5206 = vmatprep.mubr.bf16.mxu0 0
      %5207 = vmatmul.mubr.bf16.gmra.mxu0 %v5073
      %v5208 = vpop.f32.mrf.mxu0
      %v5209 = vadd.f32 0.0, %v5208
      %v5210 = vpop.f32.mrf.mxu0
      %v5211 = vpop.f32.mrf.mxu0
      %v5212 = vadd.f32 0.0, %v5211
      %v5213 = vpop.f32.mrf.mxu0
      %5214 = vmatprep.mubr.bf16.mxu0 0
      %5215 = vmatmul.mubr.bf16.gmra.mxu0 %v5074
      %v5216 = vpop.f32.mrf.mxu0
      %v5217 = vadd.f32 0.0, %v5216
      %v5218 = vpop.f32.mrf.mxu0
      %v5219 = vpop.f32.mrf.mxu0
      %v5220 = vadd.f32 0.0, %v5219
      %v5221 = vpop.f32.mrf.mxu0
      %5222 = vmatprep.mubr.bf16.mxu0 0
      %5223 = vmatmul.mubr.bf16.gmra.mxu0 %v5075
      %v5224 = vpop.f32.mrf.mxu0
      %v5225 = vadd.f32 0.0, %v5224
      %v5226 = vpop.f32.mrf.mxu0
      %v5227 = vpop.f32.mrf.mxu0
      %v5228 = vadd.f32 0.0, %v5227
      %v5229 = vpop.f32.mrf.mxu0
      %5230 = vmatprep.mubr.bf16.mxu0 0
      %5231 = vmatmul.mubr.bf16.gmra.mxu0 %v5076
      %v5232 = vpop.f32.mrf.mxu0
      %v5233 = vadd.f32 0.0, %v5232
      %v5234 = vpop.f32.mrf.mxu0
      %v5235 = vpop.f32.mrf.mxu0
      %v5236 = vadd.f32 0.0, %v5235
      %v5237 = vpop.f32.mrf.mxu0
      %5238 = vmatprep.mubr.bf16.mxu0 0
      %5239 = vmatmul.mubr.bf16.gmra.mxu0 %v5077
      %v5240 = vpop.f32.mrf.mxu0
      %v5241 = vadd.f32 0.0, %v5240
      %v5242 = vpop.f32.mrf.mxu0
      %v5243 = vpop.f32.mrf.mxu0
      %v5244 = vadd.f32 0.0, %v5243
      %v5245 = vpop.f32.mrf.mxu0
      %5246 = vmatprep.mubr.bf16.mxu0 0
      %5247 = vmatmul.mubr.bf16.gmra.mxu0 %v5078
      %v5248 = vpop.f32.mrf.mxu0
      %v5249 = vadd.f32 0.0, %v5248
      %v5250 = vpop.f32.mrf.mxu0
      %v5251 = vpop.f32.mrf.mxu0
      %v5252 = vadd.f32 0.0, %v5251
      %v5253 = vpop.f32.mrf.mxu0
      %5254 = vmatprep.mubr.bf16.mxu0 0
      %5255 = vmatmul.mubr.bf16.gmra.mxu0 %v5079
      %v5256 = vpop.f32.mrf.mxu0
      %v5257 = vadd.f32 0.0, %v5256
      %v5258 = vpop.f32.mrf.mxu0
      %v5259 = vpop.f32.mrf.mxu0
      %v5260 = vadd.f32 0.0, %v5259
      %v5261 = vpop.f32.mrf.mxu0
      %5262 = vmatprep.mubr.bf16.mxu0 0
      %5263 = vmatmul.mubr.bf16.gmra.mxu0 %v5080
      %v5264 = vpop.f32.mrf.mxu0
      %v5265 = vadd.f32 0.0, %v5264
      %v5266 = vpop.f32.mrf.mxu0
      %v5267 = vpop.f32.mrf.mxu0
      %v5268 = vadd.f32 0.0, %v5267
      %v5269 = vpop.f32.mrf.mxu0
      %5270 = vmatprep.mubr.bf16.mxu0 0
      %5271 = vmatmul.mubr.bf16.gmra.mxu0 %v5081
      %v5272 = vpop.f32.mrf.mxu0
      %v5273 = vadd.f32 0.0, %v5272
      %v5274 = vpop.f32.mrf.mxu0
      %v5275 = vpop.f32.mrf.mxu0
      %v5276 = vadd.f32 0.0, %v5275
      %v5277 = vpop.f32.mrf.mxu0
      %5278 = vmatprep.mubr.bf16.mxu0 0
      %5279 = vmatmul.mubr.bf16.gmra.mxu0 %v5082
      %v5280 = vpop.f32.mrf.mxu0
      %v5281 = vadd.f32 0.0, %v5280
      %v5282 = vpop.f32.mrf.mxu0
      %v5283 = vpop.f32.mrf.mxu0
      %v5284 = vadd.f32 0.0, %v5283
      %v5285 = vpop.f32.mrf.mxu0
      %5286 = vmatprep.mubr.bf16.mxu0 0
      %5287 = vmatmul.mubr.bf16.gmra.mxu0 %v5083
      %v5288 = vpop.f32.mrf.mxu0
      %v5289 = vadd.f32 0.0, %v5288
      %v5290 = vpop.f32.mrf.mxu0
      %v5291 = vpop.f32.mrf.mxu0
      %v5292 = vadd.f32 0.0, %v5291
      %v5293 = vpop.f32.mrf.mxu0
      %5294 = vmatprep.mubr.bf16.mxu0 0
      %5295 = vmatmul.mubr.bf16.gmra.mxu0 %v5084
      %v5296 = vpop.f32.mrf.mxu0
      %v5297 = vadd.f32 0.0, %v5296
      %v5298 = vpop.f32.mrf.mxu0
      %v5299 = vpop.f32.mrf.mxu0
      %v5300 = vadd.f32 0.0, %v5299
      %v5301 = vpop.f32.mrf.mxu0
      %5302 = vmatprep.mubr.bf16.mxu0 0
      %5303 = vmatmul.mubr.bf16.gmra.mxu0 %v5085
      %v5304 = vpop.f32.mrf.mxu0
      %v5305 = vadd.f32 0.0, %v5304
      %v5306 = vpop.f32.mrf.mxu0
      %v5307 = vpop.f32.mrf.mxu0
      %v5308 = vadd.f32 0.0, %v5307
      %v5309 = vpop.f32.mrf.mxu0
      %5310 = vdwg.mxu0
      %v5311 = vadd.f32 %v4557, %v5185
      %v5312 = vadd.f32 %v4558, %v5188
      %v5313 = vadd.f32 %v4559, %v5193
      %v5314 = vadd.f32 %v4560, %v5196
      %v5315 = vadd.f32 %v4561, %v5201
      %v5316 = vadd.f32 %v4562, %v5204
      %v5317 = vadd.f32 %v4563, %v5209
      %v5318 = vadd.f32 %v4564, %v5212
      %v5319 = vadd.f32 %v4565, %v5217
      %v5320 = vadd.f32 %v4566, %v5220
      %v5321 = vadd.f32 %v4567, %v5225
      %v5322 = vadd.f32 %v4568, %v5228
      %v5323 = vadd.f32 %v4569, %v5233
      %v5324 = vadd.f32 %v4570, %v5236
      %v5325 = vadd.f32 %v4571, %v5241
      %v5326 = vadd.f32 %v4572, %v5244
      %v5327 = vadd.f32 %v4573, %v5249
      %v5328 = vadd.f32 %v4574, %v5252
      %v5329 = vadd.f32 %v4575, %v5257
      %v5330 = vadd.f32 %v4576, %v5260
      %v5331 = vadd.f32 %v4577, %v5265
      %v5332 = vadd.f32 %v4578, %v5268
      %v5333 = vadd.f32 %v4579, %v5273
      %v5334 = vadd.f32 %v4580, %v5276
      %v5335 = vadd.f32 %v4581, %v5281
      %v5336 = vadd.f32 %v4582, %v5284
      %v5337 = vadd.f32 %v4583, %v5289
      %v5338 = vadd.f32 %v4584, %v5292
      %v5339 = vadd.f32 %v4585, %v5297
      %v5340 = vadd.f32 %v4586, %v5300
      %v5341 = vadd.f32 %v4587, %v5305
      %v5342 = vadd.f32 %v4588, %v5308
      %v5343 = vld [vmem:[%s4202] sm:$0xe]
      %v5344 = vld [vmem:[%s4202 + $0xc] sm:$0xe]
      %v5345 = vld [vmem:[%s4202 + $0x18] sm:$0xe]
      %v5346 = vld [vmem:[%s4202 + $0x24] sm:$0xe]
      %v5347 = vld [vmem:[%s4202 + $0x30] sm:$0xe]
      %v5348 = vld [vmem:[%s4202 + $0x3c] sm:$0xe]
      %v5349 = vld [vmem:[%s4202 + $0x48] sm:$0xe]
      %v5350 = vld [vmem:[%s4202 + $0x54] sm:$0xe]
      %v5351 = vld [vmem:[%s4202 + $0x60] sm:$0xe]
      %v5352 = vld [vmem:[%s4202 + $0x6c] sm:$0xe]
      %v5353 = vld [vmem:[%s4202 + $0x78] sm:$0xe]
      %v5354 = vld [vmem:[%s4202 + $0x84] sm:$0xe]
      %v5355 = vld [vmem:[%s4202 + $0x90] sm:$0xe]
      %v5356 = vld [vmem:[%s4202 + $0x9c] sm:$0xe]
      %v5357 = vld [vmem:[%s4202 + $0xa8] sm:$0xe]
      %v5358 = vld [vmem:[%s4202 + $0xb4] sm:$0xe]
      %v5407 = vrot.slane %v5343, 5
      %v5408 = vrot.slane %v5407, 4
      %v5409 = vrot.slane %v4590, 5
      %v5410 = vsel %vm2129, %v5408, %v5409
      %v5411 = vrot.slane %v5409, 4
      %v5412 = vrot.slane %v4591, 5
      %v5413 = vsel %vm2129, %v5411, %v5412
      %v5414 = vrot.slane %v5344, 5
      %v5415 = vrot.slane %v5414, 4
      %v5416 = vrot.slane %v4593, 5
      %v5417 = vsel %vm2129, %v5415, %v5416
      %v5418 = vrot.slane %v5416, 4
      %v5419 = vrot.slane %v4594, 5
      %v5420 = vsel %vm2129, %v5418, %v5419
      %v5421 = vrot.slane %v5345, 5
      %v5422 = vrot.slane %v5421, 4
      %v5423 = vrot.slane %v4596, 5
      %v5424 = vsel %vm2129, %v5422, %v5423
      %v5425 = vrot.slane %v5423, 4
      %v5426 = vrot.slane %v4597, 5
      %v5427 = vsel %vm2129, %v5425, %v5426
      %v5428 = vrot.slane %v5346, 5
      %v5429 = vrot.slane %v5428, 4
      %v5430 = vrot.slane %v4599, 5
      %v5431 = vsel %vm2129, %v5429, %v5430
      %v5432 = vrot.slane %v5430, 4
      %v5433 = vrot.slane %v4600, 5
      %v5434 = vsel %vm2129, %v5432, %v5433
      %v5435 = vrot.slane %v5347, 5
      %v5436 = vrot.slane %v5435, 4
      %v5437 = vrot.slane %v4602, 5
      %v5438 = vsel %vm2129, %v5436, %v5437
      %v5439 = vrot.slane %v5437, 4
      %v5440 = vrot.slane %v4603, 5
      %v5441 = vsel %vm2129, %v5439, %v5440
      %v5442 = vrot.slane %v5348, 5
      %v5443 = vrot.slane %v5442, 4
      %v5444 = vrot.slane %v4605, 5
      %v5445 = vsel %vm2129, %v5443, %v5444
      %v5446 = vrot.slane %v5444, 4
      %v5447 = vrot.slane %v4606, 5
      %v5448 = vsel %vm2129, %v5446, %v5447
      %v5449 = vrot.slane %v5349, 5
      %v5450 = vrot.slane %v5449, 4
      %v5451 = vrot.slane %v4608, 5
      %v5452 = vsel %vm2129, %v5450, %v5451
      %v5453 = vrot.slane %v5451, 4
      %v5454 = vrot.slane %v4609, 5
      %v5455 = vsel %vm2129, %v5453, %v5454
      %v5456 = vrot.slane %v5350, 5
      %v5457 = vrot.slane %v5456, 4
      %v5458 = vrot.slane %v4611, 5
      %v5459 = vsel %vm2129, %v5457, %v5458
      %v5460 = vrot.slane %v5458, 4
      %v5461 = vrot.slane %v4612, 5
      %v5462 = vsel %vm2129, %v5460, %v5461
      %v5463 = vrot.slane %v5351, 5
      %v5464 = vrot.slane %v5463, 4
      %v5465 = vrot.slane %v4614, 5
      %v5466 = vsel %vm2129, %v5464, %v5465
      %v5467 = vrot.slane %v5465, 4
      %v5468 = vrot.slane %v4615, 5
      %v5469 = vsel %vm2129, %v5467, %v5468
      %v5470 = vrot.slane %v5352, 5
      %v5471 = vrot.slane %v5470, 4
      %v5472 = vrot.slane %v4617, 5
      %v5473 = vsel %vm2129, %v5471, %v5472
      %v5474 = vrot.slane %v5472, 4
      %v5475 = vrot.slane %v4618, 5
      %v5476 = vsel %vm2129, %v5474, %v5475
      %v5477 = vrot.slane %v5353, 5
      %v5478 = vrot.slane %v5477, 4
      %v5479 = vrot.slane %v4620, 5
      %v5480 = vsel %vm2129, %v5478, %v5479
      %v5481 = vrot.slane %v5479, 4
      %v5482 = vrot.slane %v4621, 5
      %v5483 = vsel %vm2129, %v5481, %v5482
      %v5484 = vrot.slane %v5354, 5
      %v5485 = vrot.slane %v5484, 4
      %v5486 = vrot.slane %v4623, 5
      %v5487 = vsel %vm2129, %v5485, %v5486
      %v5488 = vrot.slane %v5486, 4
      %v5489 = vrot.slane %v4624, 5
      %v5490 = vsel %vm2129, %v5488, %v5489
      %v5491 = vrot.slane %v5355, 5
      %v5492 = vrot.slane %v5491, 4
      %v5493 = vrot.slane %v4626, 5
      %v5494 = vsel %vm2129, %v5492, %v5493
      %v5495 = vrot.slane %v5493, 4
      %v5496 = vrot.slane %v4627, 5
      %v5497 = vsel %vm2129, %v5495, %v5496
      %v5498 = vrot.slane %v5356, 5
      %v5499 = vrot.slane %v5498, 4
      %v5500 = vrot.slane %v4629, 5
      %v5501 = vsel %vm2129, %v5499, %v5500
      %v5502 = vrot.slane %v5500, 4
      %v5503 = vrot.slane %v4630, 5
      %v5504 = vsel %vm2129, %v5502, %v5503
      %v5505 = vrot.slane %v5357, 5
      %v5506 = vrot.slane %v5505, 4
      %v5507 = vrot.slane %v4632, 5
      %v5508 = vsel %vm2129, %v5506, %v5507
      %v5509 = vrot.slane %v5507, 4
      %v5510 = vrot.slane %v4633, 5
      %v5511 = vsel %vm2129, %v5509, %v5510
      %v5512 = vrot.slane %v5358, 5
      %v5513 = vrot.slane %v5512, 4
      %v5514 = vrot.slane %v4635, 5
      %v5515 = vsel %vm2129, %v5513, %v5514
      %v5516 = vrot.slane %v5514, 4
      %v5517 = vrot.slane %v4636, 5
      %v5518 = vsel %vm2129, %v5516, %v5517
      %s5519 = scalar_lea.vmem %s2, 512
      %v5520 = vld [vmem:[%s5519] sm:$0xf]
      %v5521 = vld [vmem:[%s5519 + $0x4] sm:$0xf]
      %v5522 = vld [vmem:[%s5519 + $0x8] sm:$0xf]
      %v5523 = vld [vmem:[%s5519 + $0xc] sm:$0xf]
      %v5524 = vld [vmem:[%s5519 + $0x10] sm:$0xf]
      %v5525 = vld [vmem:[%s5519 + $0x14] sm:$0xf]
      %v5526 = vld [vmem:[%s5519 + $0x18] sm:$0xf]
      %v5527 = vld [vmem:[%s5519 + $0x1c] sm:$0xf]
      %v5528 = vld [vmem:[%s5519 + $0x20] sm:$0xf]
      %v5529 = vld [vmem:[%s5519 + $0x24] sm:$0xf]
      %v5530 = vld [vmem:[%s5519 + $0x28] sm:$0xf]
      %v5531 = vld [vmem:[%s5519 + $0x2c] sm:$0xf]
      %v5532 = vld [vmem:[%s5519 + $0x30] sm:$0xf]
      %v5533 = vld [vmem:[%s5519 + $0x34] sm:$0xf]
      %v5534 = vld [vmem:[%s5519 + $0x38] sm:$0xf]
      %v5535 = vld [vmem:[%s5519 + $0x3c] sm:$0xf]
      %v5536 = vunpack.c.l.b16 %v5410
      %v5537 = vunpack.c.l.b16 %v5413
      %v5538 = vunpack.c.l.b16 %v5417
      %v5539 = vunpack.c.l.b16 %v5420
      %v5540 = vunpack.c.l.b16 %v5424
      %v5541 = vunpack.c.l.b16 %v5427
      %v5542 = vunpack.c.l.b16 %v5431
      %v5543 = vunpack.c.l.b16 %v5434
      %v5544 = vunpack.c.l.b16 %v5438
      %v5545 = vunpack.c.l.b16 %v5441
      %v5546 = vunpack.c.l.b16 %v5445
      %v5547 = vunpack.c.l.b16 %v5448
      %v5548 = vunpack.c.l.b16 %v5452
      %v5549 = vunpack.c.l.b16 %v5455
      %v5550 = vunpack.c.l.b16 %v5459
      %v5551 = vunpack.c.l.b16 %v5462
      %v5552 = vunpack.c.l.b16 %v5466
      %v5553 = vunpack.c.l.b16 %v5469
      %v5554 = vunpack.c.l.b16 %v5473
      %v5555 = vunpack.c.l.b16 %v5476
      %v5556 = vunpack.c.l.b16 %v5480
      %v5557 = vunpack.c.l.b16 %v5483
      %v5558 = vunpack.c.l.b16 %v5487
      %v5559 = vunpack.c.l.b16 %v5490
      %v5560 = vunpack.c.l.b16 %v5494
      %v5561 = vunpack.c.l.b16 %v5497
      %v5562 = vunpack.c.l.b16 %v5501
      %v5563 = vunpack.c.l.b16 %v5504
      %v5564 = vunpack.c.l.b16 %v5508
      %v5565 = vunpack.c.l.b16 %v5511
      %v5566 = vunpack.c.l.b16 %v5515
      %v5567 = vunpack.c.l.b16 %v5518
      %v5568 = vpack.c.b16 %v5537, %v5536
      %v5569 = vpack.c.b16 %v5539, %v5538
      %v5570 = vpack.c.b16 %v5541, %v5540
      %v5571 = vpack.c.b16 %v5543, %v5542
      %v5572 = vpack.c.b16 %v5545, %v5544
      %v5573 = vpack.c.b16 %v5547, %v5546
      %v5574 = vpack.c.b16 %v5549, %v5548
      %v5575 = vpack.c.b16 %v5551, %v5550
      %v5576 = vpack.c.b16 %v5553, %v5552
      %v5577 = vpack.c.b16 %v5555, %v5554
      %v5578 = vpack.c.b16 %v5557, %v5556
      %v5579 = vpack.c.b16 %v5559, %v5558
      %v5580 = vpack.c.b16 %v5561, %v5560
      %v5581 = vpack.c.b16 %v5563, %v5562
      %v5582 = vpack.c.b16 %v5565, %v5564
      %v5583 = vpack.c.b16 %v5567, %v5566
      %v5616 = vunpack.c.l.b16 %v5520
      %v5617 = vunpack.c.l.b16 %v5521
      %v5618 = vunpack.c.l.b16 %v5522
      %v5619 = vunpack.c.l.b16 %v5523
      %v5620 = vunpack.c.l.b16 %v5524
      %v5621 = vunpack.c.l.b16 %v5525
      %v5622 = vunpack.c.l.b16 %v5526
      %v5623 = vunpack.c.l.b16 %v5527
      %v5624 = vunpack.c.l.b16 %v5528
      %v5625 = vunpack.c.l.b16 %v5529
      %v5626 = vunpack.c.l.b16 %v5530
      %v5627 = vunpack.c.l.b16 %v5531
      %v5628 = vunpack.c.l.b16 %v5532
      %v5629 = vunpack.c.l.b16 %v5533
      %v5630 = vunpack.c.l.b16 %v5534
      %v5631 = vunpack.c.l.b16 %v5535
      %v5632 = vpack.c.b16 %v5617, %v5616
      %v5633 = vpack.c.b16 %v5619, %v5618
      %v5634 = vpack.c.b16 %v5621, %v5620
      %v5635 = vpack.c.b16 %v5623, %v5622
      %v5636 = vpack.c.b16 %v5625, %v5624
      %v5637 = vpack.c.b16 %v5627, %v5626
      %v5638 = vpack.c.b16 %v5629, %v5628
      %v5639 = vpack.c.b16 %v5631, %v5630
      %5648 = vmatprep.subr.bf16.mxu0 0
      %5649 = vmatpush1.bf16.msra.mxu0 %v5639
      %5650 = vmatprep.subr.bf16.mxu0 0
      %5651 = vmatpush1.bf16.msra.mxu0 %v5638
      %5652 = vmatprep.subr.bf16.mxu0 0
      %5653 = vmatpush1.bf16.msra.mxu0 %v5637
      %5654 = vmatprep.subr.bf16.mxu0 0
      %5655 = vmatpush1.bf16.msra.mxu0 %v5636
      %5656 = vmatprep.subr.bf16.mxu0 0
      %5657 = vmatpush1.bf16.msra.mxu0 %v5635
      %5658 = vmatprep.subr.bf16.mxu0 0
      %5659 = vmatpush1.bf16.msra.mxu0 %v5634
      %5660 = vmatprep.subr.bf16.mxu0 0
      %5661 = vmatpush1.bf16.msra.mxu0 %v5633
      %5662 = vmatprep.subr.bf16.mxu0 0
      %5663 = vmatpush1.bf16.msra.mxu0 %v5632
      %5664 = vmatprep.subr.bf16.mxu0 0
      %5665 = vmatpush2.bf16.msra.mxu0 0
      %5666 = vmatprep.subr.bf16.mxu0 0
      %5667 = vmatpush2.bf16.msra.mxu0 0
      %5668 = vmatprep.subr.bf16.mxu0 0
      %5669 = vmatpush2.bf16.msra.mxu0 0
      %5670 = vmatprep.subr.bf16.mxu0 0
      %5671 = vmatpush2.bf16.msra.mxu0 0
      %5672 = vmatprep.subr.bf16.mxu0 0
      %5673 = vmatpush2.bf16.msra.mxu0 0
      %5674 = vmatprep.subr.bf16.mxu0 0
      %5675 = vmatpush2.bf16.msra.mxu0 0
      %5676 = vmatprep.subr.bf16.mxu0 0
      %5677 = vmatpush2.bf16.msra.mxu0 0
      %5678 = vmatprep.subr.bf16.mxu0 0
      %5679 = vmatpush2.bf16.msra.mxu0 0
      %5680 = vmatprep.mubr.bf16.mxu0 0
      %5681 = vmatmul.mubr.bf16.gmra.mxu0 %v5568
      %v5682 = vpop.f32.mrf.mxu0
      %v5683 = vadd.f32 0.0, %v5682
      %v5684 = vpop.f32.mrf.mxu0
      %v5685 = vpop.f32.mrf.mxu0
      %v5686 = vadd.f32 0.0, %v5685
      %v5687 = vpop.f32.mrf.mxu0
      %5688 = vmatprep.mubr.bf16.mxu0 0
      %5689 = vmatmul.mubr.bf16.gmra.mxu0 %v5569
      %v5690 = vpop.f32.mrf.mxu0
      %v5691 = vadd.f32 0.0, %v5690
      %v5692 = vpop.f32.mrf.mxu0
      %v5693 = vpop.f32.mrf.mxu0
      %v5694 = vadd.f32 0.0, %v5693
      %v5695 = vpop.f32.mrf.mxu0
      %5696 = vmatprep.mubr.bf16.mxu0 0
      %5697 = vmatmul.mubr.bf16.gmra.mxu0 %v5570
      %v5698 = vpop.f32.mrf.mxu0
      %v5699 = vadd.f32 0.0, %v5698
      %v5700 = vpop.f32.mrf.mxu0
      %v5701 = vpop.f32.mrf.mxu0
      %v5702 = vadd.f32 0.0, %v5701
      %v5703 = vpop.f32.mrf.mxu0
      %5704 = vmatprep.mubr.bf16.mxu0 0
      %5705 = vmatmul.mubr.bf16.gmra.mxu0 %v5571
      %v5706 = vpop.f32.mrf.mxu0
      %v5707 = vadd.f32 0.0, %v5706
      %v5708 = vpop.f32.mrf.mxu0
      %v5709 = vpop.f32.mrf.mxu0
      %v5710 = vadd.f32 0.0, %v5709
      %v5711 = vpop.f32.mrf.mxu0
      %5712 = vmatprep.mubr.bf16.mxu0 0
      %5713 = vmatmul.mubr.bf16.gmra.mxu0 %v5572
      %v5714 = vpop.f32.mrf.mxu0
      %v5715 = vadd.f32 0.0, %v5714
      %v5716 = vpop.f32.mrf.mxu0
      %v5717 = vpop.f32.mrf.mxu0
      %v5718 = vadd.f32 0.0, %v5717
      %v5719 = vpop.f32.mrf.mxu0
      %5720 = vmatprep.mubr.bf16.mxu0 0
      %5721 = vmatmul.mubr.bf16.gmra.mxu0 %v5573
      %v5722 = vpop.f32.mrf.mxu0
      %v5723 = vadd.f32 0.0, %v5722
      %v5724 = vpop.f32.mrf.mxu0
      %v5725 = vpop.f32.mrf.mxu0
      %v5726 = vadd.f32 0.0, %v5725
      %v5727 = vpop.f32.mrf.mxu0
      %5728 = vmatprep.mubr.bf16.mxu0 0
      %5729 = vmatmul.mubr.bf16.gmra.mxu0 %v5574
      %v5730 = vpop.f32.mrf.mxu0
      %v5731 = vadd.f32 0.0, %v5730
      %v5732 = vpop.f32.mrf.mxu0
      %v5733 = vpop.f32.mrf.mxu0
      %v5734 = vadd.f32 0.0, %v5733
      %v5735 = vpop.f32.mrf.mxu0
      %5736 = vmatprep.mubr.bf16.mxu0 0
      %5737 = vmatmul.mubr.bf16.gmra.mxu0 %v5575
      %v5738 = vpop.f32.mrf.mxu0
      %v5739 = vadd.f32 0.0, %v5738
      %v5740 = vpop.f32.mrf.mxu0
      %v5741 = vpop.f32.mrf.mxu0
      %v5742 = vadd.f32 0.0, %v5741
      %v5743 = vpop.f32.mrf.mxu0
      %5744 = vmatprep.mubr.bf16.mxu0 0
      %5745 = vmatmul.mubr.bf16.gmra.mxu0 %v5576
      %v5746 = vpop.f32.mrf.mxu0
      %v5747 = vadd.f32 0.0, %v5746
      %v5748 = vpop.f32.mrf.mxu0
      %v5749 = vpop.f32.mrf.mxu0
      %v5750 = vadd.f32 0.0, %v5749
      %v5751 = vpop.f32.mrf.mxu0
      %5752 = vmatprep.mubr.bf16.mxu0 0
      %5753 = vmatmul.mubr.bf16.gmra.mxu0 %v5577
      %v5754 = vpop.f32.mrf.mxu0
      %v5755 = vadd.f32 0.0, %v5754
      %v5756 = vpop.f32.mrf.mxu0
      %v5757 = vpop.f32.mrf.mxu0
      %v5758 = vadd.f32 0.0, %v5757
      %v5759 = vpop.f32.mrf.mxu0
      %5760 = vmatprep.mubr.bf16.mxu0 0
      %5761 = vmatmul.mubr.bf16.gmra.mxu0 %v5578
      %v5762 = vpop.f32.mrf.mxu0
      %v5763 = vadd.f32 0.0, %v5762
      %v5764 = vpop.f32.mrf.mxu0
      %v5765 = vpop.f32.mrf.mxu0
      %v5766 = vadd.f32 0.0, %v5765
      %v5767 = vpop.f32.mrf.mxu0
      %5768 = vmatprep.mubr.bf16.mxu0 0
      %5769 = vmatmul.mubr.bf16.gmra.mxu0 %v5579
      %v5770 = vpop.f32.mrf.mxu0
      %v5771 = vadd.f32 0.0, %v5770
      %v5772 = vpop.f32.mrf.mxu0
      %v5773 = vpop.f32.mrf.mxu0
      %v5774 = vadd.f32 0.0, %v5773
      %v5775 = vpop.f32.mrf.mxu0
      %5776 = vmatprep.mubr.bf16.mxu0 0
      %5777 = vmatmul.mubr.bf16.gmra.mxu0 %v5580
      %v5778 = vpop.f32.mrf.mxu0
      %v5779 = vadd.f32 0.0, %v5778
      %v5780 = vpop.f32.mrf.mxu0
      %v5781 = vpop.f32.mrf.mxu0
      %v5782 = vadd.f32 0.0, %v5781
      %v5783 = vpop.f32.mrf.mxu0
      %5784 = vmatprep.mubr.bf16.mxu0 0
      %5785 = vmatmul.mubr.bf16.gmra.mxu0 %v5581
      %v5786 = vpop.f32.mrf.mxu0
      %v5787 = vadd.f32 0.0, %v5786
      %v5788 = vpop.f32.mrf.mxu0
      %v5789 = vpop.f32.mrf.mxu0
      %v5790 = vadd.f32 0.0, %v5789
      %v5791 = vpop.f32.mrf.mxu0
      %5792 = vmatprep.mubr.bf16.mxu0 0
      %5793 = vmatmul.mubr.bf16.gmra.mxu0 %v5582
      %v5794 = vpop.f32.mrf.mxu0
      %v5795 = vadd.f32 0.0, %v5794
      %v5796 = vpop.f32.mrf.mxu0
      %v5797 = vpop.f32.mrf.mxu0
      %v5798 = vadd.f32 0.0, %v5797
      %v5799 = vpop.f32.mrf.mxu0
      %5800 = vmatprep.mubr.bf16.mxu0 0
      %5801 = vmatmul.mubr.bf16.gmra.mxu0 %v5583
      %v5802 = vpop.f32.mrf.mxu0
      %v5803 = vadd.f32 0.0, %v5802
      %v5804 = vpop.f32.mrf.mxu0
      %v5805 = vpop.f32.mrf.mxu0
      %v5806 = vadd.f32 0.0, %v5805
      %v5807 = vpop.f32.mrf.mxu0
      %5808 = vdwg.mxu0
      %v5809 = vadd.f32 %v5311, %v5683
      %v5810 = vadd.f32 %v5312, %v5686
      %v5811 = vadd.f32 %v5313, %v5691
      %v5812 = vadd.f32 %v5314, %v5694
      %v5813 = vadd.f32 %v5315, %v5699
      %v5814 = vadd.f32 %v5316, %v5702
      %v5815 = vadd.f32 %v5317, %v5707
      %v5816 = vadd.f32 %v5318, %v5710
      %v5817 = vadd.f32 %v5319, %v5715
      %v5818 = vadd.f32 %v5320, %v5718
      %v5819 = vadd.f32 %v5321, %v5723
      %v5820 = vadd.f32 %v5322, %v5726
      %v5821 = vadd.f32 %v5323, %v5731
      %v5822 = vadd.f32 %v5324, %v5734
      %v5823 = vadd.f32 %v5325, %v5739
      %v5824 = vadd.f32 %v5326, %v5742
      %v5825 = vadd.f32 %v5327, %v5747
      %v5826 = vadd.f32 %v5328, %v5750
      %v5827 = vadd.f32 %v5329, %v5755
      %v5828 = vadd.f32 %v5330, %v5758
      %v5829 = vadd.f32 %v5331, %v5763
      %v5830 = vadd.f32 %v5332, %v5766
      %v5831 = vadd.f32 %v5333, %v5771
      %v5832 = vadd.f32 %v5334, %v5774
      %v5833 = vadd.f32 %v5335, %v5779
      %v5834 = vadd.f32 %v5336, %v5782
      %v5835 = vadd.f32 %v5337, %v5787
      %v5836 = vadd.f32 %v5338, %v5790
      %v5837 = vadd.f32 %v5339, %v5795
      %v5838 = vadd.f32 %v5340, %v5798
      %v5839 = vadd.f32 %v5341, %v5803
      %v5840 = vadd.f32 %v5342, %v5806
      %v5841 = vpack.c.bf16 %v5810, %v5809
      %v5842 = vpack.c.bf16 %v5812, %v5811
      %v5843 = vpack.c.bf16 %v5814, %v5813
      %v5844 = vpack.c.bf16 %v5816, %v5815
      %v5845 = vpack.c.bf16 %v5818, %v5817
      %v5846 = vpack.c.bf16 %v5820, %v5819
      %v5847 = vpack.c.bf16 %v5822, %v5821
      %v5848 = vpack.c.bf16 %v5824, %v5823
      %v5849 = vpack.c.bf16 %v5826, %v5825
      %v5850 = vpack.c.bf16 %v5828, %v5827
      %v5851 = vpack.c.bf16 %v5830, %v5829
      %v5852 = vpack.c.bf16 %v5832, %v5831
      %v5853 = vpack.c.bf16 %v5834, %v5833
      %v5854 = vpack.c.bf16 %v5836, %v5835
      %v5855 = vpack.c.bf16 %v5838, %v5837
      %v5856 = vpack.c.bf16 %v5840, %v5839
      %v5873 = vunpack.c.l.b16 %v5841
      %v5874 = vunpack.c.h.b16 %v5841
      %v5875 = vunpack.c.l.b16 %v5842
      %v5876 = vunpack.c.h.b16 %v5842
      %v5877 = vunpack.c.l.b16 %v5843
      %v5878 = vunpack.c.h.b16 %v5843
      %v5879 = vunpack.c.l.b16 %v5844
      %v5880 = vunpack.c.h.b16 %v5844
      %v5881 = vunpack.c.l.b16 %v5845
      %v5882 = vunpack.c.h.b16 %v5845
      %v5883 = vunpack.c.l.b16 %v5846
      %v5884 = vunpack.c.h.b16 %v5846
      %v5885 = vunpack.c.l.b16 %v5847
      %v5886 = vunpack.c.h.b16 %v5847
      %v5887 = vunpack.c.l.b16 %v5848
      %v5888 = vunpack.c.h.b16 %v5848
      %v5889 = vunpack.c.l.b16 %v5849
      %v5890 = vunpack.c.h.b16 %v5849
      %v5891 = vunpack.c.l.b16 %v5850
      %v5892 = vunpack.c.h.b16 %v5850
      %v5893 = vunpack.c.l.b16 %v5851
      %v5894 = vunpack.c.h.b16 %v5851
      %v5895 = vunpack.c.l.b16 %v5852
      %v5896 = vunpack.c.h.b16 %v5852
      %v5897 = vunpack.c.l.b16 %v5853
      %v5898 = vunpack.c.h.b16 %v5853
      %v5899 = vunpack.c.l.b16 %v5854
      %v5900 = vunpack.c.h.b16 %v5854
      %v5901 = vunpack.c.l.b16 %v5855
      %v5902 = vunpack.c.h.b16 %v5855
      %v5903 = vunpack.c.l.b16 %v5856
      %v5904 = vunpack.c.h.b16 %v5856
      %v5905 = vpack.c.b16 %v5873, %v5873
      %v5906 = vpack.c.b16 %v5874, %v5874
      %v5907 = vpack.c.b16 %v5875, %v5875
      %v5908 = vpack.c.b16 %v5876, %v5876
      %v5909 = vpack.c.b16 %v5877, %v5877
      %v5910 = vpack.c.b16 %v5878, %v5878
      %v5911 = vpack.c.b16 %v5879, %v5879
      %v5912 = vpack.c.b16 %v5880, %v5880
      %v5913 = vpack.c.b16 %v5881, %v5881
      %v5914 = vpack.c.b16 %v5882, %v5882
      %v5915 = vpack.c.b16 %v5883, %v5883
      %v5916 = vpack.c.b16 %v5884, %v5884
      %v5917 = vpack.c.b16 %v5885, %v5885
      %v5918 = vpack.c.b16 %v5886, %v5886
      %v5919 = vpack.c.b16 %v5887, %v5887
      %v5920 = vpack.c.b16 %v5888, %v5888
      %v5921 = vpack.c.b16 %v5889, %v5889
      %v5922 = vpack.c.b16 %v5890, %v5890
      %v5923 = vpack.c.b16 %v5891, %v5891
      %v5924 = vpack.c.b16 %v5892, %v5892
      %v5925 = vpack.c.b16 %v5893, %v5893
      %v5926 = vpack.c.b16 %v5894, %v5894
      %v5927 = vpack.c.b16 %v5895, %v5895
      %v5928 = vpack.c.b16 %v5896, %v5896
      %v5929 = vpack.c.b16 %v5897, %v5897
      %v5930 = vpack.c.b16 %v5898, %v5898
      %v5931 = vpack.c.b16 %v5899, %v5899
      %v5932 = vpack.c.b16 %v5900, %v5900
      %v5933 = vpack.c.b16 %v5901, %v5901
      %v5934 = vpack.c.b16 %v5902, %v5902
      %v5935 = vpack.c.b16 %v5903, %v5903
      %v5936 = vpack.c.b16 %v5904, %v5904
      %5969 = vst [vmem:[%s204] sm:$0xf] %v5905
      %5970 = vst [vmem:[%s204 + $0x4] sm:$0xf] %v5906
      %5971 = vst [vmem:[%s204 + $0x8] sm:$0xf] %v5907
      %5972 = vst [vmem:[%s204 + $0xc] sm:$0xf] %v5908
      %5973 = vst [vmem:[%s204 + $0x10] sm:$0xf] %v5909
      %5974 = vst [vmem:[%s204 + $0x14] sm:$0xf] %v5910
      %5975 = vst [vmem:[%s204 + $0x18] sm:$0xf] %v5911
      %5976 = vst [vmem:[%s204 + $0x1c] sm:$0xf] %v5912
      %5977 = vst [vmem:[%s204 + $0x20] sm:$0xf] %v5913
      %5978 = vst [vmem:[%s204 + $0x24] sm:$0xf] %v5914
      %5979 = vst [vmem:[%s204 + $0x28] sm:$0xf] %v5915
      %5980 = vst [vmem:[%s204 + $0x2c] sm:$0xf] %v5916
      %5981 = vst [vmem:[%s204 + $0x30] sm:$0xf] %v5917
      %5982 = vst [vmem:[%s204 + $0x34] sm:$0xf] %v5918
      %5983 = vst [vmem:[%s204 + $0x38] sm:$0xf] %v5919
      %5984 = vst [vmem:[%s204 + $0x3c] sm:$0xf] %v5920
      %5985 = vst [vmem:[%s204 + $0x40] sm:$0xf] %v5921
      %5986 = vst [vmem:[%s204 + $0x44] sm:$0xf] %v5922
      %5987 = vst [vmem:[%s204 + $0x48] sm:$0xf] %v5923
      %5988 = vst [vmem:[%s204 + $0x4c] sm:$0xf] %v5924
      %5989 = vst [vmem:[%s204 + $0x50] sm:$0xf] %v5925
      %5990 = vst [vmem:[%s204 + $0x54] sm:$0xf] %v5926
      %5991 = vst [vmem:[%s204 + $0x58] sm:$0xf] %v5927
      %5992 = vst [vmem:[%s204 + $0x5c] sm:$0xf] %v5928
      %5993 = vst [vmem:[%s204 + $0x60] sm:$0xf] %v5929
      %5994 = vst [vmem:[%s204 + $0x64] sm:$0xf] %v5930
      %5995 = vst [vmem:[%s204 + $0x68] sm:$0xf] %v5931
      %5996 = vst [vmem:[%s204 + $0x6c] sm:$0xf] %v5932
      %5997 = vst [vmem:[%s204 + $0x70] sm:$0xf] %v5933
      %5998 = vst [vmem:[%s204 + $0x74] sm:$0xf] %v5934
      %5999 = vst [vmem:[%s204 + $0x78] sm:$0xf] %v5935
      %6000 = vst [vmem:[%s204 + $0x7c] sm:$0xf] %v5936
      %v6001 = vadd.f32 %v5809, %v5810
      %v6002 = vadd.f32 %v6001, %v5811
      %v6003 = vadd.f32 %v6002, %v5812
      %v6004 = vadd.f32 %v6003, %v5813
      %v6005 = vadd.f32 %v6004, %v5814
      %v6006 = vadd.f32 %v6005, %v5815
      %v6007 = vadd.f32 %v6006, %v5816
      %v6008 = vadd.f32 %v6007, %v5817
      %v6009 = vadd.f32 %v6008, %v5818
      %v6010 = vadd.f32 %v6009, %v5819
      %v6011 = vadd.f32 %v6010, %v5820
      %v6012 = vadd.f32 %v6011, %v5821
      %v6013 = vadd.f32 %v6012, %v5822
      %v6014 = vadd.f32 %v6013, %v5823
      %v6015 = vadd.f32 %v6014, %v5824
      %v6016 = vadd.f32 %v6015, %v5825
      %v6017 = vadd.f32 %v6016, %v5826
      %v6018 = vadd.f32 %v6017, %v5827
      %v6019 = vadd.f32 %v6018, %v5828
      %v6020 = vadd.f32 %v6019, %v5829
      %v6021 = vadd.f32 %v6020, %v5830
      %v6022 = vadd.f32 %v6021, %v5831
      %v6023 = vadd.f32 %v6022, %v5832
      %v6024 = vadd.f32 %v6023, %v5833
      %v6025 = vadd.f32 %v6024, %v5834
      %v6026 = vadd.f32 %v6025, %v5835
      %v6027 = vadd.f32 %v6026, %v5836
      %v6028 = vadd.f32 %v6027, %v5837
      %v6029 = vadd.f32 %v6028, %v5838
      %v6030 = vadd.f32 %v6029, %v5839
      %v6031 = vadd.f32 %v6030, %v5840
      %v6032 = vrot.slane %v6031, 4
      %v6033 = vadd.f32 %v6031, %v6032
      %v6034 = vrot.slane %v6033, 2
      %v6035 = vadd.f32 %v6033, %v6034
      %v6036 = vrot.slane %v6035, 1
      %v6037 = vadd.f32 %v6035, %v6036
      %v6038 = vmul.f32 %v5809, %v5809
      %v6039 = vmul.f32 %v5810, %v5810
      %v6040 = vmul.f32 %v5811, %v5811
      %v6041 = vmul.f32 %v5812, %v5812
      %v6042 = vmul.f32 %v5813, %v5813
      %v6043 = vmul.f32 %v5814, %v5814
      %v6044 = vmul.f32 %v5815, %v5815
      %v6045 = vmul.f32 %v5816, %v5816
      %v6046 = vmul.f32 %v5817, %v5817
      %v6047 = vmul.f32 %v5818, %v5818
      %v6048 = vmul.f32 %v5819, %v5819
      %v6049 = vmul.f32 %v5820, %v5820
      %v6050 = vmul.f32 %v5821, %v5821
      %v6051 = vmul.f32 %v5822, %v5822
      %v6052 = vmul.f32 %v5823, %v5823
      %v6053 = vmul.f32 %v5824, %v5824
      %v6054 = vmul.f32 %v5825, %v5825
      %v6055 = vmul.f32 %v5826, %v5826
      %v6056 = vmul.f32 %v5827, %v5827
      %v6057 = vmul.f32 %v5828, %v5828
      %v6058 = vmul.f32 %v5829, %v5829
      %v6059 = vmul.f32 %v5830, %v5830
      %v6060 = vmul.f32 %v5831, %v5831
      %v6061 = vmul.f32 %v5832, %v5832
      %v6062 = vmul.f32 %v5833, %v5833
      %v6063 = vmul.f32 %v5834, %v5834
      %v6064 = vmul.f32 %v5835, %v5835
      %v6065 = vmul.f32 %v5836, %v5836
      %v6066 = vmul.f32 %v5837, %v5837
      %v6067 = vmul.f32 %v5838, %v5838
      %v6068 = vmul.f32 %v5839, %v5839
      %v6069 = vmul.f32 %v5840, %v5840
      %v6070 = vadd.f32 %v6038, %v6039
      %v6071 = vadd.f32 %v6070, %v6040
      %v6072 = vadd.f32 %v6071, %v6041
      %v6073 = vadd.f32 %v6072, %v6042
      %v6074 = vadd.f32 %v6073, %v6043
      %v6075 = vadd.f32 %v6074, %v6044
      %v6076 = vadd.f32 %v6075, %v6045
      %v6077 = vadd.f32 %v6076, %v6046
      %v6078 = vadd.f32 %v6077, %v6047
      %v6079 = vadd.f32 %v6078, %v6048
      %v6080 = vadd.f32 %v6079, %v6049
      %v6081 = vadd.f32 %v6080, %v6050
      %v6082 = vadd.f32 %v6081, %v6051
      %v6083 = vadd.f32 %v6082, %v6052
      %v6084 = vadd.f32 %v6083, %v6053
      %v6085 = vadd.f32 %v6084, %v6054
      %v6086 = vadd.f32 %v6085, %v6055
      %v6087 = vadd.f32 %v6086, %v6056
      %v6088 = vadd.f32 %v6087, %v6057
      %v6089 = vadd.f32 %v6088, %v6058
      %v6090 = vadd.f32 %v6089, %v6059
      %v6091 = vadd.f32 %v6090, %v6060
      %v6092 = vadd.f32 %v6091, %v6061
      %v6093 = vadd.f32 %v6092, %v6062
      %v6094 = vadd.f32 %v6093, %v6063
      %v6095 = vadd.f32 %v6094, %v6064
      %v6096 = vadd.f32 %v6095, %v6065
      %v6097 = vadd.f32 %v6096, %v6066
      %v6098 = vadd.f32 %v6097, %v6067
      %v6099 = vadd.f32 %v6098, %v6068
      %v6100 = vadd.f32 %v6099, %v6069
      %v6101 = vrot.slane %v6100, 4
      %v6102 = vadd.f32 %v6100, %v6101
      %v6103 = vrot.slane %v6102, 2
      %v6104 = vadd.f32 %v6102, %v6103
      %v6105 = vrot.slane %v6104, 1
      %v6106 = vadd.f32 %v6104, %v6105
      %vm6107 = vcmask 1040384
      %v6108 = vsel %vm6107, %v6037, %v6106
      %6109 = vst [vmem:[%s208] sm:$0x3] %v6108
      %p6110 = scmp.lt.s32.totalorder %s16, 1
      %s6111 = scalar_select %p6110, %s16, 1
      %s6112 = smul.addr %s6111, 32
      %s6113 = smul.addr %s6112, 4
      %s6114 = scalar_lea.vmem %s3, %s6113
      %p6115 = scmp.lt.s32.totalorder %s16, 1
      %s6116 = scalar_select %p6115, %s16, 1
      %s6117 = smul.addr %s6116, 2
      %s6118 = scalar_lea.vmem %s4, %s6117
      // Predicated region
      $region33: #{encoder_block_forward.4} parent=31 // pred_check
        %p6119 = pneg %p102
      $region34: #{encoder_block_forward.4} parent=31 // pred_check_branch
        %6121 = sbr.rel (%p6119) target = $region36
      $region35: #{encoder_block_forward.4} parent=31 // pred_region
        _
      $region36: #{encoder_block_forward.4} parent=31 // pred_fallthru
        _
      // Predicated region
      $region37: #{encoder_block_forward.4} parent=31 // pred_check
        %p6122 = pneg %p128
      $region38: #{encoder_block_forward.4} parent=31 // pred_check_branch
        %6124 = sbr.rel (%p6122) target = $region40
      $region39: #{encoder_block_forward.4} parent=31 // pred_region
        _
      $region40: #{encoder_block_forward.4} parent=31 // pred_fallthru
        _
    $region32: #{encoder_block_forward.4} parent=5 // pred_fallthru
      _
    %p6125 = scmp.le.s32.totalorder 2, %s11
    // Predicated region
    $region41: #{encoder_block_forward.4} parent=5 // pred_check
      %p6126 = pneg %p6125
    $region42: #{encoder_block_forward.4} parent=5 // pred_check_branch
      %6128 = sbr.rel (%p6126) target = $region44
    $region43: #{encoder_block_forward.4} parent=5 // pred_region
      %s6129 = ssub.s32 %s11, 2
      // Predicated region
      $region45: #{encoder_block_forward.4} parent=43 // pred_check
        %p6130 = pneg %p108
      $region46: #{encoder_block_forward.4} parent=43 // pred_check_branch
        %6132 = sbr.rel (%p6130) target = $region48
      $region47: #{encoder_block_forward.4} parent=43 // pred_region
        %p6133 = scmp.lt.s32.totalorder %s17, 1
        %s6134 = scalar_select %p6133, %s17, 1
        %s6135 = smul.addr %s6134, 32
        %s6136 = smul.addr %s6135, 4
        %s6137 = scalar_lea.vmem %s3, %s6136
      $region48: #{encoder_block_forward.4} parent=43 // pred_fallthru
        _
      // Predicated region
      $region49: #{encoder_block_forward.4} parent=43 // pred_check
        %p6138 = pneg %p134
      $region50: #{encoder_block_forward.4} parent=43 // pred_check_branch
        %6140 = sbr.rel (%p6138) target = $region52
      $region51: #{encoder_block_forward.4} parent=43 // pred_region
        %p6141 = scmp.lt.s32.totalorder %s17, 1
        %s6142 = scalar_select %p6141, %s17, 1
        %s6143 = smul.addr %s6142, 2
        %s6144 = scalar_lea.vmem %s4, %s6143
      $region52: #{encoder_block_forward.4} parent=43 // pred_fallthru
        _
    $region44: #{encoder_block_forward.4} parent=5 // pred_fallthru
      _
  $region6: #{encoder_block_forward.4} parent=0 // loop_footer
    %s15 = sadd.s32 1, %s11
  $region7: #{encoder_block_forward.4} parent=0 // loop_footer_branch
    %10 = sbr.rel target = $region3
  $region8: #{encoder_block_forward.4} parent=0 // loop_exit
    _

</llo_original>
